<compile_context>
chip_gen: v6e
topology: v6e:2x2x1
jax: 0.10.0
libtpu: 0.0.40
codegen_flags: <defaults>
</compile_context>

<pallas_src>
import functools

import numpy as np

import jax
import jax.numpy as jnp
from jax.experimental import pallas as pl
from jax.experimental.pallas import tpu as pltpu


# Tap order matches the (Cout, kh, kw, Cin) -> (Cout, 9*Cin) weight reshape.
_TAPS = tuple((dh, dw) for dh in (-1, 0, 1) for dw in (-1, 0, 1))


def _tap_masks(H, W):
    """(9, H*W) f32 masks: 1 where the shifted source pixel is in-bounds."""
    idx = np.arange(H * W)
    h, w = idx // W, idx % W
    m = np.stack([
        ((h + dh >= 0) & (h + dh < H) & (w + dw >= 0) & (w + dw < W))
        for dh, dw in _TAPS
    ]).astype(np.float32)
    return jnp.asarray(m)


def _conv3x3(x, w, b, tap_masks, *, W, relu):
    """3x3 stride-1 'same' conv (cross-correlation) on a (Cin, L) slab.

    x:         (Cin, L) f32, channels on sublanes, L = IMGS*H*W pixels on lanes.
    w:         (Cout, 9*Cin) folded weights (tap-major, input channel minor).
    b:         (Cout, 1) bias column.
    tap_masks: tuple of 9 entries, each (1, L) border mask or None (all-ones).
    """
    Cin, L = x.shape
    Cout = w.shape[0]

    if Cin == 1:
        # Layer 1: stack the 9 masked taps -> one (Cout,9)x(9,L) MXU matmul.
        taps = []
        for k, (dh, dw) in enumerate(_TAPS):
            s = dh * W + dw                         # want out[:, i] = x[:, i + s]
            r = x if s == 0 else pltpu.roll(x, shift=(-s) % L, axis=1)
            taps.append(r if tap_masks[k] is None else r * tap_masks[k])
        col = jnp.concatenate(taps, axis=0)         # (9, L)
        acc = jnp.dot(w, col, preferred_element_type=jnp.float32)
    else:
        # Middle layers and layer 5: per-tap accumulating matmuls.  Only one
        # masked tap is live at a time (no 288-row im2col concat / spills).
        acc = jnp.zeros((Cout, L), jnp.float32)
        for k, (dh, dw) in enumerate(_TAPS):
            s = dh * W + dw
            r = x if s == 0 else pltpu.roll(x, shift=(-s) % L, axis=1)
            t = r if tap_masks[k] is None else r * tap_masks[k]
            acc = acc + jnp.dot(w[:, k * Cin:(k + 1) * Cin], t,
                                preferred_element_type=jnp.float32)

    acc = acc + b
    if relu:
        acc = jnp.maximum(acc, 0.0)
    return acc


def _teacher_kernel(x_ref, m_ref,
                    w1_ref, b1_ref, w2_ref, b2_ref, w3_ref, b3_ref,
                    w4_ref, b4_ref, w5_ref, b5_ref,
                    o1_ref, o2_ref, o3_ref, o4_ref, o5_ref, *, W):
    # Hoist the nine mask rows out of the per-layer loop (built once per grid
    # step).  Center tap (dh == dw == 0) is all-ones -> skip its multiply.
    tap_masks = tuple(
        None if (dh == 0 and dw == 0) else m_ref[k:k + 1, :]
        for k, (dh, dw) in enumerate(_TAPS))

    a = x_ref[0].astype(jnp.float32)                # (1, L)
    a = _conv3x3(a, w1_ref[...], b1_ref[...], tap_masks, W=W, relu=True)
    o1_ref[0] = a.astype(o1_ref.dtype)
    a = _conv3x3(a, w2_ref[...], b2_ref[...], tap_masks, W=W, relu=True)
    o2_ref[0] = a.astype(o2_ref.dtype)
    a = _conv3x3(a, w3_ref[...], b3_ref[...], tap_masks, W=W, relu=True)
    o3_ref[0] = a.astype(o3_ref.dtype)
    a = _conv3x3(a, w4_ref[...], b4_ref[...], tap_masks, W=W, relu=True)
    o4_ref[0] = a.astype(o4_ref.dtype)
    a = _conv3x3(a, w5_ref[...], b5_ref[...], tap_masks, W=W, relu=False)
    o5_ref[0] = a.astype(o5_ref.dtype)


def teacher_net_forward(x_nchw, params, *, imgs_per_step=8):
    """Forward pass of TeacherNet; returns (x1, x2, x3, x4, x5) in NCHW."""
    N, Cin0, H, W = x_nchw.shape
    assert Cin0 == 1, "TeacherNet input has a single channel"
    HW = H * W

    # Images stacked on the lane axis per grid step.  Keep >=2 grid steps when
    # N >= 2 (both v7x TensorCores get work); cap for v5e VMEM headroom
    # (~550 KiB per image including double-buffered outputs).
    imgs = max(1, min(imgs_per_step, N // 2))
    grid_n = -(-N // imgs)                          # cdiv
    n_pad = grid_n * imgs
    if n_pad != N:
        x_nchw = jnp.pad(x_nchw, ((0, n_pad - N), (0, 0), (0, 0), (0, 0)))
    L = imgs * HW

    # With Cin=1, a group of `imgs` consecutive NCHW images flattens directly
    # to (1, imgs*H*W) with lane index = img*HW + pixel (pure reshape).
    x_flat = x_nchw.reshape(grid_n, Cin0, L)
    # Border masks tiled per image so cross-image roll wraparound is zeroed.
    masks = jnp.tile(_tap_masks(H, W), (1, imgs))   # (9, L)

    args = [x_flat, masks]
    in_specs = [
        pl.BlockSpec((1, Cin0, L), lambda g: (g, 0, 0)),
        pl.BlockSpec((9, L), lambda g: (0, 0)),
    ]
    couts = []
    for (w, b) in params:
        cin, cout = int(w.shape[2]), int(w.shape[3])
        couts.append(cout)
        # HWIO (3,3,Cin,Cout) -> (Cout, 9*Cin), tap-major then channel minor;
        # matches the per-tap w[:, k*Cin:(k+1)*Cin] slices in the kernel.
        w_mat = jnp.transpose(w, (3, 0, 1, 2)).reshape(cout, 9 * cin)
        b_col = b.reshape(cout, 1)
        args += [w_mat, b_col]
        in_specs += [
            pl.BlockSpec(w_mat.shape, lambda g: (0, 0)),
            pl.BlockSpec(b_col.shape, lambda g: (0, 0)),
        ]

    out_shape = tuple(jax.ShapeDtypeStruct((grid_n, c, L), x_nchw.dtype)
                      for c in couts)
    out_specs = tuple(pl.BlockSpec((1, c, L), lambda g: (g, 0, 0))
                      for c in couts)

    flops = 2 * n_pad * HW * sum(9 * int(w.shape[2]) * int(w.shape[3])
                                 for w, _ in params)
    out_elems = sum(grid_n * c * L for c in couts)
    bytes_accessed = 4 * (x_flat.size + masks.size + out_elems
                          + sum(int(w.size) + int(b.size) for w, b in params))
    cost = pl.CostEstimate(flops=flops, transcendentals=0,
                           bytes_accessed=bytes_accessed)

    outs = pl.pallas_call(
        functools.partial(_teacher_kernel, W=W),
        out_shape=out_shape,
        grid=(grid_n,),
        in_specs=in_specs,
        out_specs=out_specs,
        compiler_params=pltpu.CompilerParams(
            dimension_semantics=("parallel",)),     # image groups -> both TCs
        cost_estimate=cost,
    )(*args)

    # Un-stack images from the lane axis: (grid_n, C, imgs*HW) -> (N, C, H, W).
    results = []
    for o, c in zip(outs, couts):
        y = o.reshape(grid_n, c, imgs, H, W)
        y = jnp.transpose(y, (0, 2, 1, 3, 4)).reshape(n_pad, c, H, W)
        results.append(y[:N])
    return tuple(results)


def init_teacher_params(key):
    """Deterministic init matching nn.Conv2d shapes (HWIO weights)."""
    channels = [(1, 32), (32, 32), (32, 32), (32, 32), (32, 1)]
    params = []
    for i, (cin, cout) in enumerate(channels):
        kw_key, kb_key = jax.random.split(jax.random.fold_in(key, i))
        fan_in = cin * 3 * 3
        bound = 1.0 / (fan_in ** 0.5)               # same bound PyTorch uses
        w = jax.random.uniform(kw_key, (3, 3, cin, cout), jnp.float32,
                               -bound, bound)
        b = jax.random.uniform(kb_key, (cout,), jnp.float32, -bound, bound)
        params.append((w, b))
    return params


def reference_forward(x_nchw, params):
    """Plain-JAX reference (lax conv) for correctness checking."""
    x = x_nchw
    outs = []
    for i, (w, b) in enumerate(params):
        y = jax.lax.conv_general_dilated(
            x, w, window_strides=(1, 1), padding="SAME",
            dimension_numbers=("NCHW", "HWIO", "NCHW"))
        y = y + b.reshape(1, -1, 1, 1)
        if i < 4:
            y = jnp.maximum(y, 0.0)
        outs.append(y)
        x = y
    return tuple(outs)


if __name__ == "__main__":
    key = jax.random.PRNGKey(0)
    pkey, xkey = jax.random.split(key)

    params = init_teacher_params(pkey)
    # N=5 exercises both the lane-axis image stacking (imgs=2, 3 grid steps)
    # and the batch-padding path.
    x = jax.random.normal(xkey, (5, 1, 16, 16), jnp.float32)   # NCHW, 1 channel

    outs = teacher_net_forward(x, params)
    outs = jax.block_until_ready(outs)

    refs = reference_forward(x, params)
    expected_channels = [32, 32, 32, 32, 1]
    for i, (o, r) in enumerate(zip(outs, refs)):
        assert o.shape == (5, expected_channels[i], 16, 16), o.shape
        assert o.shape == r.shape
        assert float(jnp.max(jnp.abs(o - r))) < 1e-4, f"layer {i} mismatch"

    print("KERNEL_OK")
</pallas_src>

<mosaic_0001>
module attributes {stable_mosaic.version = 11 : i64} {
  func.func @_teacher_kernel(%arg0: i32, %arg1: memref<1x1x512xf32, #tpu.memory_space<vmem>>, %arg2: memref<9x512xf32, #tpu.memory_space<vmem>>, %arg3: memref<32x9xf32, #tpu.memory_space<vmem>>, %arg4: memref<32x1xf32, #tpu.memory_space<vmem>>, %arg5: memref<32x288xf32, #tpu.memory_space<vmem>>, %arg6: memref<32x1xf32, #tpu.memory_space<vmem>>, %arg7: memref<32x288xf32, #tpu.memory_space<vmem>>, %arg8: memref<32x1xf32, #tpu.memory_space<vmem>>, %arg9: memref<32x288xf32, #tpu.memory_space<vmem>>, %arg10: memref<32x1xf32, #tpu.memory_space<vmem>>, %arg11: memref<1x288xf32, #tpu.memory_space<vmem>>, %arg12: memref<1x1xf32, #tpu.memory_space<vmem>>, %arg13: memref<1x32x512xf32, #tpu.memory_space<vmem>>, %arg14: memref<1x32x512xf32, #tpu.memory_space<vmem>>, %arg15: memref<1x32x512xf32, #tpu.memory_space<vmem>>, %arg16: memref<1x32x512xf32, #tpu.memory_space<vmem>>, %arg17: memref<1x1x512xf32, #tpu.memory_space<vmem>>) attributes {dimension_semantics = [#tpu.dimension_semantics<parallel>], iteration_bounds = array<i64: 3>, scalar_prefetch = 0 : i64, scratch_operands = 0 : i64, tpu.core_type = #tpu.core_type<tc>, window_params = [{transform_indices = @transform_0, window_bounds = array<i64: 1, 1, 512>}, {pipeline_mode = #tpu.pipeline_mode<synchronous>, transform_indices = @transform_1, window_bounds = array<i64: 9, 512>}, {pipeline_mode = #tpu.pipeline_mode<synchronous>, transform_indices = @transform_2, window_bounds = array<i64: 32, 9>}, {pipeline_mode = #tpu.pipeline_mode<synchronous>, transform_indices = @transform_3, window_bounds = array<i64: 32, 1>}, {pipeline_mode = #tpu.pipeline_mode<synchronous>, transform_indices = @transform_4, window_bounds = array<i64: 32, 288>}, {pipeline_mode = #tpu.pipeline_mode<synchronous>, transform_indices = @transform_5, window_bounds = array<i64: 32, 1>}, {pipeline_mode = #tpu.pipeline_mode<synchronous>, transform_indices = @transform_6, window_bounds = array<i64: 32, 288>}, {pipeline_mode = #tpu.pipeline_mode<synchronous>, transform_indices = @transform_7, window_bounds = array<i64: 32, 1>}, {pipeline_mode = #tpu.pipeline_mode<synchronous>, transform_indices = @transform_8, window_bounds = array<i64: 32, 288>}, {pipeline_mode = #tpu.pipeline_mode<synchronous>, transform_indices = @transform_9, window_bounds = array<i64: 32, 1>}, {pipeline_mode = #tpu.pipeline_mode<synchronous>, transform_indices = @transform_10, window_bounds = array<i64: 1, 288>}, {pipeline_mode = #tpu.pipeline_mode<synchronous>, transform_indices = @transform_11, window_bounds = array<i64: 1, 1>}, {transform_indices = @transform_12, window_bounds = array<i64: 1, 32, 512>}, {transform_indices = @transform_13, window_bounds = array<i64: 1, 32, 512>}, {transform_indices = @transform_14, window_bounds = array<i64: 1, 32, 512>}, {transform_indices = @transform_15, window_bounds = array<i64: 1, 32, 512>}, {transform_indices = @transform_16, window_bounds = array<i64: 1, 1, 512>}]} {
    %c0 = arith.constant 0 : index
    %c0_0 = arith.constant 0 : index
    %0 = vector.load %arg2[%c0, %c0_0] : memref<9x512xf32, #tpu.memory_space<vmem>>, vector<1x512xf32>
    %c1 = arith.constant 1 : index
    %c0_1 = arith.constant 0 : index
    %1 = vector.load %arg2[%c1, %c0_1] : memref<9x512xf32, #tpu.memory_space<vmem>>, vector<1x512xf32>
    %c2 = arith.constant 2 : index
    %c0_2 = arith.constant 0 : index
    %2 = vector.load %arg2[%c2, %c0_2] : memref<9x512xf32, #tpu.memory_space<vmem>>, vector<1x512xf32>
    %c3 = arith.constant 3 : index
    %c0_3 = arith.constant 0 : index
    %3 = vector.load %arg2[%c3, %c0_3] : memref<9x512xf32, #tpu.memory_space<vmem>>, vector<1x512xf32>
    %c5 = arith.constant 5 : index
    %c0_4 = arith.constant 0 : index
    %4 = vector.load %arg2[%c5, %c0_4] : memref<9x512xf32, #tpu.memory_space<vmem>>, vector<1x512xf32>
    %c6 = arith.constant 6 : index
    %c0_5 = arith.constant 0 : index
    %5 = vector.load %arg2[%c6, %c0_5] : memref<9x512xf32, #tpu.memory_space<vmem>>, vector<1x512xf32>
    %c7 = arith.constant 7 : index
    %c0_6 = arith.constant 0 : index
    %6 = vector.load %arg2[%c7, %c0_6] : memref<9x512xf32, #tpu.memory_space<vmem>>, vector<1x512xf32>
    %c8 = arith.constant 8 : index
    %c0_7 = arith.constant 0 : index
    %7 = vector.load %arg2[%c8, %c0_7] : memref<9x512xf32, #tpu.memory_space<vmem>>, vector<1x512xf32>
    %c0_8 = arith.constant 0 : index
    %c0_9 = arith.constant 0 : index
    %c0_10 = arith.constant 0 : index
    %8 = vector.load %arg1[%c0_8, %c0_9, %c0_10] : memref<1x1x512xf32, #tpu.memory_space<vmem>>, vector<1x1x512xf32>
    %9 = vector.shape_cast %8 : vector<1x1x512xf32> to vector<1x512xf32>
    %c0_11 = arith.constant 0 : index
    %c0_12 = arith.constant 0 : index
    %10 = vector.load %arg3[%c0_11, %c0_12] : memref<32x9xf32, #tpu.memory_space<vmem>>, vector<32x9xf32>
    %c0_13 = arith.constant 0 : index
    %c0_14 = arith.constant 0 : index
    %11 = vector.load %arg4[%c0_13, %c0_14] : memref<32x1xf32, #tpu.memory_space<vmem>>, vector<32x1xf32>
    %c17_i32 = arith.constant 17 : i32
    %12 = tpu.dynamic_rotate %9 by %c17_i32 dim 1 : vector<1x512xf32>, i32 -> vector<1x512xf32>
    %13 = arith.mulf %12, %0 : vector<1x512xf32>
    %c16_i32 = arith.constant 16 : i32
    %14 = tpu.dynamic_rotate %9 by %c16_i32 dim 1 : vector<1x512xf32>, i32 -> vector<1x512xf32>
    %15 = arith.mulf %14, %1 : vector<1x512xf32>
    %c15_i32 = arith.constant 15 : i32
    %16 = tpu.dynamic_rotate %9 by %c15_i32 dim 1 : vector<1x512xf32>, i32 -> vector<1x512xf32>
    %17 = arith.mulf %16, %2 : vector<1x512xf32>
    %c1_i32 = arith.constant 1 : i32
    %18 = tpu.dynamic_rotate %9 by %c1_i32 dim 1 : vector<1x512xf32>, i32 -> vector<1x512xf32>
    %19 = arith.mulf %18, %3 : vector<1x512xf32>
    %c511_i32 = arith.constant 511 : i32
    %20 = tpu.dynamic_rotate %9 by %c511_i32 dim 1 : vector<1x512xf32>, i32 -> vector<1x512xf32>
    %21 = arith.mulf %20, %4 : vector<1x512xf32>
    %c497_i32 = arith.constant 497 : i32
    %22 = tpu.dynamic_rotate %9 by %c497_i32 dim 1 : vector<1x512xf32>, i32 -> vector<1x512xf32>
    %23 = arith.mulf %22, %5 : vector<1x512xf32>
    %c496_i32 = arith.constant 496 : i32
    %24 = tpu.dynamic_rotate %9 by %c496_i32 dim 1 : vector<1x512xf32>, i32 -> vector<1x512xf32>
    %25 = arith.mulf %24, %6 : vector<1x512xf32>
    %c495_i32 = arith.constant 495 : i32
    %26 = tpu.dynamic_rotate %9 by %c495_i32 dim 1 : vector<1x512xf32>, i32 -> vector<1x512xf32>
    %27 = arith.mulf %26, %7 : vector<1x512xf32>
    %28 = tpu.concatenate %13, %15, %17, %19, %9, %21, %23, %25, %27 in 0 : vector<1x512xf32>, vector<1x512xf32>, vector<1x512xf32>, vector<1x512xf32>, vector<1x512xf32>, vector<1x512xf32>, vector<1x512xf32>, vector<1x512xf32>, vector<1x512xf32> -> vector<9x512xf32>
    %cst = arith.constant dense<0.000000e+00> : vector<32x512xf32>
    %29 = tpu.matmul %10, %28, %cst {dimension_numbers = #tpu.dot_dimension_numbers<[1], [0], [0], [1], [0, 0, 1, 1], [], []>} : vector<32x9xf32>, vector<9x512xf32>, vector<32x512xf32> -> vector<32x512xf32>
    %30 = vector.broadcast %11 : vector<32x1xf32> to vector<32x512xf32>
    %31 = arith.addf %29, %30 : vector<32x512xf32>
    %cst_15 = arith.constant 0.000000e+00 : f32
    %32 = vector.broadcast %cst_15 : f32 to vector<32x512xf32>
    %33 = arith.maximumf %31, %32 : vector<32x512xf32>
    %c0_16 = arith.constant 0 : index
    %c0_17 = arith.constant 0 : index
    %c0_18 = arith.constant 0 : index
    %34 = vector.load %arg13[%c0_16, %c0_17, %c0_18] : memref<1x32x512xf32, #tpu.memory_space<vmem>>, vector<1x32x512xf32>
    %35 = vector.shape_cast %34 : vector<1x32x512xf32> to vector<32x512xf32>
    %36 = vector.shape_cast %33 : vector<32x512xf32> to vector<1x32x512xf32>
    tpu.vector_store %arg13[%c0_16, %c0_17, %c0_18], %36 {strides = array<i32>} : memref<1x32x512xf32, #tpu.memory_space<vmem>>, vector<1x32x512xf32>,
    %c0_19 = arith.constant 0 : index
    %c0_20 = arith.constant 0 : index
    %37 = vector.load %arg5[%c0_19, %c0_20] : memref<32x288xf32, #tpu.memory_space<vmem>>, vector<32x288xf32>
    %c0_21 = arith.constant 0 : index
    %c0_22 = arith.constant 0 : index
    %38 = vector.load %arg6[%c0_21, %c0_22] : memref<32x1xf32, #tpu.memory_space<vmem>>, vector<32x1xf32>
    %cst_23 = arith.constant 0.000000e+00 : f32
    %39 = vector.broadcast %cst_23 : f32 to vector<32x512xf32>
    %c17_i32_24 = arith.constant 17 : i32
    %40 = tpu.dynamic_rotate %33 by %c17_i32_24 dim 1 : vector<32x512xf32>, i32 -> vector<32x512xf32>
    %41 = vector.broadcast %0 : vector<1x512xf32> to vector<32x512xf32>
    %42 = arith.mulf %40, %41 : vector<32x512xf32>
    %43 = vector.extract_strided_slice %37 {offsets = [0, 0], sizes = [32, 32], strides = [1, 1]} : vector<32x288xf32> to vector<32x32xf32>
    %cst_25 = arith.constant dense<0.000000e+00> : vector<32x512xf32>
    %44 = tpu.matmul %43, %42, %cst_25 {dimension_numbers = #tpu.dot_dimension_numbers<[1], [0], [0], [1], [0, 0, 1, 1], [], []>} : vector<32x32xf32>, vector<32x512xf32>, vector<32x512xf32> -> vector<32x512xf32>
    %45 = arith.addf %39, %44 : vector<32x512xf32>
    %c16_i32_26 = arith.constant 16 : i32
    %46 = tpu.dynamic_rotate %33 by %c16_i32_26 dim 1 : vector<32x512xf32>, i32 -> vector<32x512xf32>
    %47 = vector.broadcast %1 : vector<1x512xf32> to vector<32x512xf32>
    %48 = arith.mulf %46, %47 : vector<32x512xf32>
    %49 = vector.extract_strided_slice %37 {offsets = [0, 32], sizes = [32, 32], strides = [1, 1]} : vector<32x288xf32> to vector<32x32xf32>
    %cst_27 = arith.constant dense<0.000000e+00> : vector<32x512xf32>
    %50 = tpu.matmul %49, %48, %cst_27 {dimension_numbers = #tpu.dot_dimension_numbers<[1], [0], [0], [1], [0, 0, 1, 1], [], []>} : vector<32x32xf32>, vector<32x512xf32>, vector<32x512xf32> -> vector<32x512xf32>
    %51 = arith.addf %45, %50 : vector<32x512xf32>
    %c15_i32_28 = arith.constant 15 : i32
    %52 = tpu.dynamic_rotate %33 by %c15_i32_28 dim 1 : vector<32x512xf32>, i32 -> vector<32x512xf32>
    %53 = vector.broadcast %2 : vector<1x512xf32> to vector<32x512xf32>
    %54 = arith.mulf %52, %53 : vector<32x512xf32>
    %55 = vector.extract_strided_slice %37 {offsets = [0, 64], sizes = [32, 32], strides = [1, 1]} : vector<32x288xf32> to vector<32x32xf32>
    %cst_29 = arith.constant dense<0.000000e+00> : vector<32x512xf32>
    %56 = tpu.matmul %55, %54, %cst_29 {dimension_numbers = #tpu.dot_dimension_numbers<[1], [0], [0], [1], [0, 0, 1, 1], [], []>} : vector<32x32xf32>, vector<32x512xf32>, vector<32x512xf32> -> vector<32x512xf32>
    %57 = arith.addf %51, %56 : vector<32x512xf32>
    %c1_i32_30 = arith.constant 1 : i32
    %58 = tpu.dynamic_rotate %33 by %c1_i32_30 dim 1 : vector<32x512xf32>, i32 -> vector<32x512xf32>
    %59 = vector.broadcast %3 : vector<1x512xf32> to vector<32x512xf32>
    %60 = arith.mulf %58, %59 : vector<32x512xf32>
    %61 = vector.extract_strided_slice %37 {offsets = [0, 96], sizes = [32, 32], strides = [1, 1]} : vector<32x288xf32> to vector<32x32xf32>
    %cst_31 = arith.constant dense<0.000000e+00> : vector<32x512xf32>
    %62 = tpu.matmul %61, %60, %cst_31 {dimension_numbers = #tpu.dot_dimension_numbers<[1], [0], [0], [1], [0, 0, 1, 1], [], []>} : vector<32x32xf32>, vector<32x512xf32>, vector<32x512xf32> -> vector<32x512xf32>
    %63 = arith.addf %57, %62 : vector<32x512xf32>
    %64 = vector.extract_strided_slice %37 {offsets = [0, 128], sizes = [32, 32], strides = [1, 1]} : vector<32x288xf32> to vector<32x32xf32>
    %cst_32 = arith.constant dense<0.000000e+00> : vector<32x512xf32>
    %65 = tpu.matmul %64, %33, %cst_32 {dimension_numbers = #tpu.dot_dimension_numbers<[1], [0], [0], [1], [0, 0, 1, 1], [], []>} : vector<32x32xf32>, vector<32x512xf32>, vector<32x512xf32> -> vector<32x512xf32>
    %66 = arith.addf %63, %65 : vector<32x512xf32>
    %c511_i32_33 = arith.constant 511 : i32
    %67 = tpu.dynamic_rotate %33 by %c511_i32_33 dim 1 : vector<32x512xf32>, i32 -> vector<32x512xf32>
    %68 = vector.broadcast %4 : vector<1x512xf32> to vector<32x512xf32>
    %69 = arith.mulf %67, %68 : vector<32x512xf32>
    %70 = vector.extract_strided_slice %37 {offsets = [0, 160], sizes = [32, 32], strides = [1, 1]} : vector<32x288xf32> to vector<32x32xf32>
    %cst_34 = arith.constant dense<0.000000e+00> : vector<32x512xf32>
    %71 = tpu.matmul %70, %69, %cst_34 {dimension_numbers = #tpu.dot_dimension_numbers<[1], [0], [0], [1], [0, 0, 1, 1], [], []>} : vector<32x32xf32>, vector<32x512xf32>, vector<32x512xf32> -> vector<32x512xf32>
    %72 = arith.addf %66, %71 : vector<32x512xf32>
    %c497_i32_35 = arith.constant 497 : i32
    %73 = tpu.dynamic_rotate %33 by %c497_i32_35 dim 1 : vector<32x512xf32>, i32 -> vector<32x512xf32>
    %74 = vector.broadcast %5 : vector<1x512xf32> to vector<32x512xf32>
    %75 = arith.mulf %73, %74 : vector<32x512xf32>
    %76 = vector.extract_strided_slice %37 {offsets = [0, 192], sizes = [32, 32], strides = [1, 1]} : vector<32x288xf32> to vector<32x32xf32>
    %cst_36 = arith.constant dense<0.000000e+00> : vector<32x512xf32>
    %77 = tpu.matmul %76, %75, %cst_36 {dimension_numbers = #tpu.dot_dimension_numbers<[1], [0], [0], [1], [0, 0, 1, 1], [], []>} : vector<32x32xf32>, vector<32x512xf32>, vector<32x512xf32> -> vector<32x512xf32>
    %78 = arith.addf %72, %77 : vector<32x512xf32>
    %c496_i32_37 = arith.constant 496 : i32
    %79 = tpu.dynamic_rotate %33 by %c496_i32_37 dim 1 : vector<32x512xf32>, i32 -> vector<32x512xf32>
    %80 = vector.broadcast %6 : vector<1x512xf32> to vector<32x512xf32>
    %81 = arith.mulf %79, %80 : vector<32x512xf32>
    %82 = vector.extract_strided_slice %37 {offsets = [0, 224], sizes = [32, 32], strides = [1, 1]} : vector<32x288xf32> to vector<32x32xf32>
    %cst_38 = arith.constant dense<0.000000e+00> : vector<32x512xf32>
    %83 = tpu.matmul %82, %81, %cst_38 {dimension_numbers = #tpu.dot_dimension_numbers<[1], [0], [0], [1], [0, 0, 1, 1], [], []>} : vector<32x32xf32>, vector<32x512xf32>, vector<32x512xf32> -> vector<32x512xf32>
    %84 = arith.addf %78, %83 : vector<32x512xf32>
    %c495_i32_39 = arith.constant 495 : i32
    %85 = tpu.dynamic_rotate %33 by %c495_i32_39 dim 1 : vector<32x512xf32>, i32 -> vector<32x512xf32>
    %86 = vector.broadcast %7 : vector<1x512xf32> to vector<32x512xf32>
    %87 = arith.mulf %85, %86 : vector<32x512xf32>
    %88 = vector.extract_strided_slice %37 {offsets = [0, 256], sizes = [32, 32], strides = [1, 1]} : vector<32x288xf32> to vector<32x32xf32>
    %cst_40 = arith.constant dense<0.000000e+00> : vector<32x512xf32>
    %89 = tpu.matmul %88, %87, %cst_40 {dimension_numbers = #tpu.dot_dimension_numbers<[1], [0], [0], [1], [0, 0, 1, 1], [], []>} : vector<32x32xf32>, vector<32x512xf32>, vector<32x512xf32> -> vector<32x512xf32>
    %90 = arith.addf %84, %89 : vector<32x512xf32>
    %91 = vector.broadcast %38 : vector<32x1xf32> to vector<32x512xf32>
    %92 = arith.addf %90, %91 : vector<32x512xf32>
    %cst_41 = arith.constant 0.000000e+00 : f32
    %93 = vector.broadcast %cst_41 : f32 to vector<32x512xf32>
    %94 = arith.maximumf %92, %93 : vector<32x512xf32>
    %c0_42 = arith.constant 0 : index
    %c0_43 = arith.constant 0 : index
    %c0_44 = arith.constant 0 : index
    %95 = vector.load %arg14[%c0_42, %c0_43, %c0_44] : memref<1x32x512xf32, #tpu.memory_space<vmem>>, vector<1x32x512xf32>
    %96 = vector.shape_cast %95 : vector<1x32x512xf32> to vector<32x512xf32>
    %97 = vector.shape_cast %94 : vector<32x512xf32> to vector<1x32x512xf32>
    tpu.vector_store %arg14[%c0_42, %c0_43, %c0_44], %97 {strides = array<i32>} : memref<1x32x512xf32, #tpu.memory_space<vmem>>, vector<1x32x512xf32>,
    %c0_45 = arith.constant 0 : index
    %c0_46 = arith.constant 0 : index
    %98 = vector.load %arg7[%c0_45, %c0_46] : memref<32x288xf32, #tpu.memory_space<vmem>>, vector<32x288xf32>
    %c0_47 = arith.constant 0 : index
    %c0_48 = arith.constant 0 : index
    %99 = vector.load %arg8[%c0_47, %c0_48] : memref<32x1xf32, #tpu.memory_space<vmem>>, vector<32x1xf32>
    %cst_49 = arith.constant 0.000000e+00 : f32
    %100 = vector.broadcast %cst_49 : f32 to vector<32x512xf32>
    %c17_i32_50 = arith.constant 17 : i32
    %101 = tpu.dynamic_rotate %94 by %c17_i32_50 dim 1 : vector<32x512xf32>, i32 -> vector<32x512xf32>
    %102 = vector.broadcast %0 : vector<1x512xf32> to vector<32x512xf32>
    %103 = arith.mulf %101, %102 : vector<32x512xf32>
    %104 = vector.extract_strided_slice %98 {offsets = [0, 0], sizes = [32, 32], strides = [1, 1]} : vector<32x288xf32> to vector<32x32xf32>
    %cst_51 = arith.constant dense<0.000000e+00> : vector<32x512xf32>
    %105 = tpu.matmul %104, %103, %cst_51 {dimension_numbers = #tpu.dot_dimension_numbers<[1], [0], [0], [1], [0, 0, 1, 1], [], []>} : vector<32x32xf32>, vector<32x512xf32>, vector<32x512xf32> -> vector<32x512xf32>
    %106 = arith.addf %100, %105 : vector<32x512xf32>
    %c16_i32_52 = arith.constant 16 : i32
    %107 = tpu.dynamic_rotate %94 by %c16_i32_52 dim 1 : vector<32x512xf32>, i32 -> vector<32x512xf32>
    %108 = vector.broadcast %1 : vector<1x512xf32> to vector<32x512xf32>
    %109 = arith.mulf %107, %108 : vector<32x512xf32>
    %110 = vector.extract_strided_slice %98 {offsets = [0, 32], sizes = [32, 32], strides = [1, 1]} : vector<32x288xf32> to vector<32x32xf32>
    %cst_53 = arith.constant dense<0.000000e+00> : vector<32x512xf32>
    %111 = tpu.matmul %110, %109, %cst_53 {dimension_numbers = #tpu.dot_dimension_numbers<[1], [0], [0], [1], [0, 0, 1, 1], [], []>} : vector<32x32xf32>, vector<32x512xf32>, vector<32x512xf32> -> vector<32x512xf32>
    %112 = arith.addf %106, %111 : vector<32x512xf32>
    %c15_i32_54 = arith.constant 15 : i32
    %113 = tpu.dynamic_rotate %94 by %c15_i32_54 dim 1 : vector<32x512xf32>, i32 -> vector<32x512xf32>
    %114 = vector.broadcast %2 : vector<1x512xf32> to vector<32x512xf32>
    %115 = arith.mulf %113, %114 : vector<32x512xf32>
    %116 = vector.extract_strided_slice %98 {offsets = [0, 64], sizes = [32, 32], strides = [1, 1]} : vector<32x288xf32> to vector<32x32xf32>
    %cst_55 = arith.constant dense<0.000000e+00> : vector<32x512xf32>
    %117 = tpu.matmul %116, %115, %cst_55 {dimension_numbers = #tpu.dot_dimension_numbers<[1], [0], [0], [1], [0, 0, 1, 1], [], []>} : vector<32x32xf32>, vector<32x512xf32>, vector<32x512xf32> -> vector<32x512xf32>
    %118 = arith.addf %112, %117 : vector<32x512xf32>
    %c1_i32_56 = arith.constant 1 : i32
    %119 = tpu.dynamic_rotate %94 by %c1_i32_56 dim 1 : vector<32x512xf32>, i32 -> vector<32x512xf32>
    %120 = vector.broadcast %3 : vector<1x512xf32> to vector<32x512xf32>
    %121 = arith.mulf %119, %120 : vector<32x512xf32>
    %122 = vector.extract_strided_slice %98 {offsets = [0, 96], sizes = [32, 32], strides = [1, 1]} : vector<32x288xf32> to vector<32x32xf32>
    %cst_57 = arith.constant dense<0.000000e+00> : vector<32x512xf32>
    %123 = tpu.matmul %122, %121, %cst_57 {dimension_numbers = #tpu.dot_dimension_numbers<[1], [0], [0], [1], [0, 0, 1, 1], [], []>} : vector<32x32xf32>, vector<32x512xf32>, vector<32x512xf32> -> vector<32x512xf32>
    %124 = arith.addf %118, %123 : vector<32x512xf32>
    %125 = vector.extract_strided_slice %98 {offsets = [0, 128], sizes = [32, 32], strides = [1, 1]} : vector<32x288xf32> to vector<32x32xf32>
    %cst_58 = arith.constant dense<0.000000e+00> : vector<32x512xf32>
    %126 = tpu.matmul %125, %94, %cst_58 {dimension_numbers = #tpu.dot_dimension_numbers<[1], [0], [0], [1], [0, 0, 1, 1], [], []>} : vector<32x32xf32>, vector<32x512xf32>, vector<32x512xf32> -> vector<32x512xf32>
    %127 = arith.addf %124, %126 : vector<32x512xf32>
    %c511_i32_59 = arith.constant 511 : i32
    %128 = tpu.dynamic_rotate %94 by %c511_i32_59 dim 1 : vector<32x512xf32>, i32 -> vector<32x512xf32>
    %129 = vector.broadcast %4 : vector<1x512xf32> to vector<32x512xf32>
    %130 = arith.mulf %128, %129 : vector<32x512xf32>
    %131 = vector.extract_strided_slice %98 {offsets = [0, 160], sizes = [32, 32], strides = [1, 1]} : vector<32x288xf32> to vector<32x32xf32>
    %cst_60 = arith.constant dense<0.000000e+00> : vector<32x512xf32>
    %132 = tpu.matmul %131, %130, %cst_60 {dimension_numbers = #tpu.dot_dimension_numbers<[1], [0], [0], [1], [0, 0, 1, 1], [], []>} : vector<32x32xf32>, vector<32x512xf32>, vector<32x512xf32> -> vector<32x512xf32>
    %133 = arith.addf %127, %132 : vector<32x512xf32>
    %c497_i32_61 = arith.constant 497 : i32
    %134 = tpu.dynamic_rotate %94 by %c497_i32_61 dim 1 : vector<32x512xf32>, i32 -> vector<32x512xf32>
    %135 = vector.broadcast %5 : vector<1x512xf32> to vector<32x512xf32>
    %136 = arith.mulf %134, %135 : vector<32x512xf32>
    %137 = vector.extract_strided_slice %98 {offsets = [0, 192], sizes = [32, 32], strides = [1, 1]} : vector<32x288xf32> to vector<32x32xf32>
    %cst_62 = arith.constant dense<0.000000e+00> : vector<32x512xf32>
    %138 = tpu.matmul %137, %136, %cst_62 {dimension_numbers = #tpu.dot_dimension_numbers<[1], [0], [0], [1], [0, 0, 1, 1], [], []>} : vector<32x32xf32>, vector<32x512xf32>, vector<32x512xf32> -> vector<32x512xf32>
    %139 = arith.addf %133, %138 : vector<32x512xf32>
    %c496_i32_63 = arith.constant 496 : i32
    %140 = tpu.dynamic_rotate %94 by %c496_i32_63 dim 1 : vector<32x512xf32>, i32 -> vector<32x512xf32>
    %141 = vector.broadcast %6 : vector<1x512xf32> to vector<32x512xf32>
    %142 = arith.mulf %140, %141 : vector<32x512xf32>
    %143 = vector.extract_strided_slice %98 {offsets = [0, 224], sizes = [32, 32], strides = [1, 1]} : vector<32x288xf32> to vector<32x32xf32>
    %cst_64 = arith.constant dense<0.000000e+00> : vector<32x512xf32>
    %144 = tpu.matmul %143, %142, %cst_64 {dimension_numbers = #tpu.dot_dimension_numbers<[1], [0], [0], [1], [0, 0, 1, 1], [], []>} : vector<32x32xf32>, vector<32x512xf32>, vector<32x512xf32> -> vector<32x512xf32>
    %145 = arith.addf %139, %144 : vector<32x512xf32>
    %c495_i32_65 = arith.constant 495 : i32
    %146 = tpu.dynamic_rotate %94 by %c495_i32_65 dim 1 : vector<32x512xf32>, i32 -> vector<32x512xf32>
    %147 = vector.broadcast %7 : vector<1x512xf32> to vector<32x512xf32>
    %148 = arith.mulf %146, %147 : vector<32x512xf32>
    %149 = vector.extract_strided_slice %98 {offsets = [0, 256], sizes = [32, 32], strides = [1, 1]} : vector<32x288xf32> to vector<32x32xf32>
    %cst_66 = arith.constant dense<0.000000e+00> : vector<32x512xf32>
    %150 = tpu.matmul %149, %148, %cst_66 {dimension_numbers = #tpu.dot_dimension_numbers<[1], [0], [0], [1], [0, 0, 1, 1], [], []>} : vector<32x32xf32>, vector<32x512xf32>, vector<32x512xf32> -> vector<32x512xf32>
    %151 = arith.addf %145, %150 : vector<32x512xf32>
    %152 = vector.broadcast %99 : vector<32x1xf32> to vector<32x512xf32>
    %153 = arith.addf %151, %152 : vector<32x512xf32>
    %cst_67 = arith.constant 0.000000e+00 : f32
    %154 = vector.broadcast %cst_67 : f32 to vector<32x512xf32>
    %155 = arith.maximumf %153, %154 : vector<32x512xf32>
    %c0_68 = arith.constant 0 : index
    %c0_69 = arith.constant 0 : index
    %c0_70 = arith.constant 0 : index
    %156 = vector.load %arg15[%c0_68, %c0_69, %c0_70] : memref<1x32x512xf32, #tpu.memory_space<vmem>>, vector<1x32x512xf32>
    %157 = vector.shape_cast %156 : vector<1x32x512xf32> to vector<32x512xf32>
    %158 = vector.shape_cast %155 : vector<32x512xf32> to vector<1x32x512xf32>
    tpu.vector_store %arg15[%c0_68, %c0_69, %c0_70], %158 {strides = array<i32>} : memref<1x32x512xf32, #tpu.memory_space<vmem>>, vector<1x32x512xf32>,
    %c0_71 = arith.constant 0 : index
    %c0_72 = arith.constant 0 : index
    %159 = vector.load %arg9[%c0_71, %c0_72] : memref<32x288xf32, #tpu.memory_space<vmem>>, vector<32x288xf32>
    %c0_73 = arith.constant 0 : index
    %c0_74 = arith.constant 0 : index
    %160 = vector.load %arg10[%c0_73, %c0_74] : memref<32x1xf32, #tpu.memory_space<vmem>>, vector<32x1xf32>
    %cst_75 = arith.constant 0.000000e+00 : f32
    %161 = vector.broadcast %cst_75 : f32 to vector<32x512xf32>
    %c17_i32_76 = arith.constant 17 : i32
    %162 = tpu.dynamic_rotate %155 by %c17_i32_76 dim 1 : vector<32x512xf32>, i32 -> vector<32x512xf32>
    %163 = vector.broadcast %0 : vector<1x512xf32> to vector<32x512xf32>
    %164 = arith.mulf %162, %163 : vector<32x512xf32>
    %165 = vector.extract_strided_slice %159 {offsets = [0, 0], sizes = [32, 32], strides = [1, 1]} : vector<32x288xf32> to vector<32x32xf32>
    %cst_77 = arith.constant dense<0.000000e+00> : vector<32x512xf32>
    %166 = tpu.matmul %165, %164, %cst_77 {dimension_numbers = #tpu.dot_dimension_numbers<[1], [0], [0], [1], [0, 0, 1, 1], [], []>} : vector<32x32xf32>, vector<32x512xf32>, vector<32x512xf32> -> vector<32x512xf32>
    %167 = arith.addf %161, %166 : vector<32x512xf32>
    %c16_i32_78 = arith.constant 16 : i32
    %168 = tpu.dynamic_rotate %155 by %c16_i32_78 dim 1 : vector<32x512xf32>, i32 -> vector<32x512xf32>
    %169 = vector.broadcast %1 : vector<1x512xf32> to vector<32x512xf32>
    %170 = arith.mulf %168, %169 : vector<32x512xf32>
    %171 = vector.extract_strided_slice %159 {offsets = [0, 32], sizes = [32, 32], strides = [1, 1]} : vector<32x288xf32> to vector<32x32xf32>
    %cst_79 = arith.constant dense<0.000000e+00> : vector<32x512xf32>
    %172 = tpu.matmul %171, %170, %cst_79 {dimension_numbers = #tpu.dot_dimension_numbers<[1], [0], [0], [1], [0, 0, 1, 1], [], []>} : vector<32x32xf32>, vector<32x512xf32>, vector<32x512xf32> -> vector<32x512xf32>
    %173 = arith.addf %167, %172 : vector<32x512xf32>
    %c15_i32_80 = arith.constant 15 : i32
    %174 = tpu.dynamic_rotate %155 by %c15_i32_80 dim 1 : vector<32x512xf32>, i32 -> vector<32x512xf32>
    %175 = vector.broadcast %2 : vector<1x512xf32> to vector<32x512xf32>
    %176 = arith.mulf %174, %175 : vector<32x512xf32>
    %177 = vector.extract_strided_slice %159 {offsets = [0, 64], sizes = [32, 32], strides = [1, 1]} : vector<32x288xf32> to vector<32x32xf32>
    %cst_81 = arith.constant dense<0.000000e+00> : vector<32x512xf32>
    %178 = tpu.matmul %177, %176, %cst_81 {dimension_numbers = #tpu.dot_dimension_numbers<[1], [0], [0], [1], [0, 0, 1, 1], [], []>} : vector<32x32xf32>, vector<32x512xf32>, vector<32x512xf32> -> vector<32x512xf32>
    %179 = arith.addf %173, %178 : vector<32x512xf32>
    %c1_i32_82 = arith.constant 1 : i32
    %180 = tpu.dynamic_rotate %155 by %c1_i32_82 dim 1 : vector<32x512xf32>, i32 -> vector<32x512xf32>
    %181 = vector.broadcast %3 : vector<1x512xf32> to vector<32x512xf32>
    %182 = arith.mulf %180, %181 : vector<32x512xf32>
    %183 = vector.extract_strided_slice %159 {offsets = [0, 96], sizes = [32, 32], strides = [1, 1]} : vector<32x288xf32> to vector<32x32xf32>
    %cst_83 = arith.constant dense<0.000000e+00> : vector<32x512xf32>
    %184 = tpu.matmul %183, %182, %cst_83 {dimension_numbers = #tpu.dot_dimension_numbers<[1], [0], [0], [1], [0, 0, 1, 1], [], []>} : vector<32x32xf32>, vector<32x512xf32>, vector<32x512xf32> -> vector<32x512xf32>
    %185 = arith.addf %179, %184 : vector<32x512xf32>
    %186 = vector.extract_strided_slice %159 {offsets = [0, 128], sizes = [32, 32], strides = [1, 1]} : vector<32x288xf32> to vector<32x32xf32>
    %cst_84 = arith.constant dense<0.000000e+00> : vector<32x512xf32>
    %187 = tpu.matmul %186, %155, %cst_84 {dimension_numbers = #tpu.dot_dimension_numbers<[1], [0], [0], [1], [0, 0, 1, 1], [], []>} : vector<32x32xf32>, vector<32x512xf32>, vector<32x512xf32> -> vector<32x512xf32>
    %188 = arith.addf %185, %187 : vector<32x512xf32>
    %c511_i32_85 = arith.constant 511 : i32
    %189 = tpu.dynamic_rotate %155 by %c511_i32_85 dim 1 : vector<32x512xf32>, i32 -> vector<32x512xf32>
    %190 = vector.broadcast %4 : vector<1x512xf32> to vector<32x512xf32>
    %191 = arith.mulf %189, %190 : vector<32x512xf32>
    %192 = vector.extract_strided_slice %159 {offsets = [0, 160], sizes = [32, 32], strides = [1, 1]} : vector<32x288xf32> to vector<32x32xf32>
    %cst_86 = arith.constant dense<0.000000e+00> : vector<32x512xf32>
    %193 = tpu.matmul %192, %191, %cst_86 {dimension_numbers = #tpu.dot_dimension_numbers<[1], [0], [0], [1], [0, 0, 1, 1], [], []>} : vector<32x32xf32>, vector<32x512xf32>, vector<32x512xf32> -> vector<32x512xf32>
    %194 = arith.addf %188, %193 : vector<32x512xf32>
    %c497_i32_87 = arith.constant 497 : i32
    %195 = tpu.dynamic_rotate %155 by %c497_i32_87 dim 1 : vector<32x512xf32>, i32 -> vector<32x512xf32>
    %196 = vector.broadcast %5 : vector<1x512xf32> to vector<32x512xf32>
    %197 = arith.mulf %195, %196 : vector<32x512xf32>
    %198 = vector.extract_strided_slice %159 {offsets = [0, 192], sizes = [32, 32], strides = [1, 1]} : vector<32x288xf32> to vector<32x32xf32>
    %cst_88 = arith.constant dense<0.000000e+00> : vector<32x512xf32>
    %199 = tpu.matmul %198, %197, %cst_88 {dimension_numbers = #tpu.dot_dimension_numbers<[1], [0], [0], [1], [0, 0, 1, 1], [], []>} : vector<32x32xf32>, vector<32x512xf32>, vector<32x512xf32> -> vector<32x512xf32>
    %200 = arith.addf %194, %199 : vector<32x512xf32>
    %c496_i32_89 = arith.constant 496 : i32
    %201 = tpu.dynamic_rotate %155 by %c496_i32_89 dim 1 : vector<32x512xf32>, i32 -> vector<32x512xf32>
    %202 = vector.broadcast %6 : vector<1x512xf32> to vector<32x512xf32>
    %203 = arith.mulf %201, %202 : vector<32x512xf32>
    %204 = vector.extract_strided_slice %159 {offsets = [0, 224], sizes = [32, 32], strides = [1, 1]} : vector<32x288xf32> to vector<32x32xf32>
    %cst_90 = arith.constant dense<0.000000e+00> : vector<32x512xf32>
    %205 = tpu.matmul %204, %203, %cst_90 {dimension_numbers = #tpu.dot_dimension_numbers<[1], [0], [0], [1], [0, 0, 1, 1], [], []>} : vector<32x32xf32>, vector<32x512xf32>, vector<32x512xf32> -> vector<32x512xf32>
    %206 = arith.addf %200, %205 : vector<32x512xf32>
    %c495_i32_91 = arith.constant 495 : i32
    %207 = tpu.dynamic_rotate %155 by %c495_i32_91 dim 1 : vector<32x512xf32>, i32 -> vector<32x512xf32>
    %208 = vector.broadcast %7 : vector<1x512xf32> to vector<32x512xf32>
    %209 = arith.mulf %207, %208 : vector<32x512xf32>
    %210 = vector.extract_strided_slice %159 {offsets = [0, 256], sizes = [32, 32], strides = [1, 1]} : vector<32x288xf32> to vector<32x32xf32>
    %cst_92 = arith.constant dense<0.000000e+00> : vector<32x512xf32>
    %211 = tpu.matmul %210, %209, %cst_92 {dimension_numbers = #tpu.dot_dimension_numbers<[1], [0], [0], [1], [0, 0, 1, 1], [], []>} : vector<32x32xf32>, vector<32x512xf32>, vector<32x512xf32> -> vector<32x512xf32>
    %212 = arith.addf %206, %211 : vector<32x512xf32>
    %213 = vector.broadcast %160 : vector<32x1xf32> to vector<32x512xf32>
    %214 = arith.addf %212, %213 : vector<32x512xf32>
    %cst_93 = arith.constant 0.000000e+00 : f32
    %215 = vector.broadcast %cst_93 : f32 to vector<32x512xf32>
    %216 = arith.maximumf %214, %215 : vector<32x512xf32>
    %c0_94 = arith.constant 0 : index
    %c0_95 = arith.constant 0 : index
    %c0_96 = arith.constant 0 : index
    %217 = vector.load %arg16[%c0_94, %c0_95, %c0_96] : memref<1x32x512xf32, #tpu.memory_space<vmem>>, vector<1x32x512xf32>
    %218 = vector.shape_cast %217 : vector<1x32x512xf32> to vector<32x512xf32>
    %219 = vector.shape_cast %216 : vector<32x512xf32> to vector<1x32x512xf32>
    tpu.vector_store %arg16[%c0_94, %c0_95, %c0_96], %219 {strides = array<i32>} : memref<1x32x512xf32, #tpu.memory_space<vmem>>, vector<1x32x512xf32>,
    %c0_97 = arith.constant 0 : index
    %c0_98 = arith.constant 0 : index
    %220 = vector.load %arg11[%c0_97, %c0_98] : memref<1x288xf32, #tpu.memory_space<vmem>>, vector<1x288xf32>
    %c0_99 = arith.constant 0 : index
    %c0_100 = arith.constant 0 : index
    %221 = vector.load %arg12[%c0_99, %c0_100] : memref<1x1xf32, #tpu.memory_space<vmem>>, vector<1x1xf32>
    %cst_101 = arith.constant 0.000000e+00 : f32
    %222 = vector.broadcast %cst_101 : f32 to vector<1x512xf32>
    %c17_i32_102 = arith.constant 17 : i32
    %223 = tpu.dynamic_rotate %216 by %c17_i32_102 dim 1 : vector<32x512xf32>, i32 -> vector<32x512xf32>
    %224 = vector.broadcast %0 : vector<1x512xf32> to vector<32x512xf32>
    %225 = arith.mulf %223, %224 : vector<32x512xf32>
    %226 = vector.extract_strided_slice %220 {offsets = [0, 0], sizes = [1, 32], strides = [1, 1]} : vector<1x288xf32> to vector<1x32xf32>
    %cst_103 = arith.constant dense<0.000000e+00> : vector<1x512xf32>
    %227 = tpu.matmul %226, %225, %cst_103 {dimension_numbers = #tpu.dot_dimension_numbers<[1], [0], [0], [1], [0, 0, 1, 1], [], []>} : vector<1x32xf32>, vector<32x512xf32>, vector<1x512xf32> -> vector<1x512xf32>
    %228 = arith.addf %222, %227 : vector<1x512xf32>
    %c16_i32_104 = arith.constant 16 : i32
    %229 = tpu.dynamic_rotate %216 by %c16_i32_104 dim 1 : vector<32x512xf32>, i32 -> vector<32x512xf32>
    %230 = vector.broadcast %1 : vector<1x512xf32> to vector<32x512xf32>
    %231 = arith.mulf %229, %230 : vector<32x512xf32>
    %232 = vector.extract_strided_slice %220 {offsets = [0, 32], sizes = [1, 32], strides = [1, 1]} : vector<1x288xf32> to vector<1x32xf32>
    %cst_105 = arith.constant dense<0.000000e+00> : vector<1x512xf32>
    %233 = tpu.matmul %232, %231, %cst_105 {dimension_numbers = #tpu.dot_dimension_numbers<[1], [0], [0], [1], [0, 0, 1, 1], [], []>} : vector<1x32xf32>, vector<32x512xf32>, vector<1x512xf32> -> vector<1x512xf32>
    %234 = arith.addf %228, %233 : vector<1x512xf32>
    %c15_i32_106 = arith.constant 15 : i32
    %235 = tpu.dynamic_rotate %216 by %c15_i32_106 dim 1 : vector<32x512xf32>, i32 -> vector<32x512xf32>
    %236 = vector.broadcast %2 : vector<1x512xf32> to vector<32x512xf32>
    %237 = arith.mulf %235, %236 : vector<32x512xf32>
    %238 = vector.extract_strided_slice %220 {offsets = [0, 64], sizes = [1, 32], strides = [1, 1]} : vector<1x288xf32> to vector<1x32xf32>
    %cst_107 = arith.constant dense<0.000000e+00> : vector<1x512xf32>
    %239 = tpu.matmul %238, %237, %cst_107 {dimension_numbers = #tpu.dot_dimension_numbers<[1], [0], [0], [1], [0, 0, 1, 1], [], []>} : vector<1x32xf32>, vector<32x512xf32>, vector<1x512xf32> -> vector<1x512xf32>
    %240 = arith.addf %234, %239 : vector<1x512xf32>
    %c1_i32_108 = arith.constant 1 : i32
    %241 = tpu.dynamic_rotate %216 by %c1_i32_108 dim 1 : vector<32x512xf32>, i32 -> vector<32x512xf32>
    %242 = vector.broadcast %3 : vector<1x512xf32> to vector<32x512xf32>
    %243 = arith.mulf %241, %242 : vector<32x512xf32>
    %244 = vector.extract_strided_slice %220 {offsets = [0, 96], sizes = [1, 32], strides = [1, 1]} : vector<1x288xf32> to vector<1x32xf32>
    %cst_109 = arith.constant dense<0.000000e+00> : vector<1x512xf32>
    %245 = tpu.matmul %244, %243, %cst_109 {dimension_numbers = #tpu.dot_dimension_numbers<[1], [0], [0], [1], [0, 0, 1, 1], [], []>} : vector<1x32xf32>, vector<32x512xf32>, vector<1x512xf32> -> vector<1x512xf32>
    %246 = arith.addf %240, %245 : vector<1x512xf32>
    %247 = vector.extract_strided_slice %220 {offsets = [0, 128], sizes = [1, 32], strides = [1, 1]} : vector<1x288xf32> to vector<1x32xf32>
    %cst_110 = arith.constant dense<0.000000e+00> : vector<1x512xf32>
    %248 = tpu.matmul %247, %216, %cst_110 {dimension_numbers = #tpu.dot_dimension_numbers<[1], [0], [0], [1], [0, 0, 1, 1], [], []>} : vector<1x32xf32>, vector<32x512xf32>, vector<1x512xf32> -> vector<1x512xf32>
    %249 = arith.addf %246, %248 : vector<1x512xf32>
    %c511_i32_111 = arith.constant 511 : i32
    %250 = tpu.dynamic_rotate %216 by %c511_i32_111 dim 1 : vector<32x512xf32>, i32 -> vector<32x512xf32>
    %251 = vector.broadcast %4 : vector<1x512xf32> to vector<32x512xf32>
    %252 = arith.mulf %250, %251 : vector<32x512xf32>
    %253 = vector.extract_strided_slice %220 {offsets = [0, 160], sizes = [1, 32], strides = [1, 1]} : vector<1x288xf32> to vector<1x32xf32>
    %cst_112 = arith.constant dense<0.000000e+00> : vector<1x512xf32>
    %254 = tpu.matmul %253, %252, %cst_112 {dimension_numbers = #tpu.dot_dimension_numbers<[1], [0], [0], [1], [0, 0, 1, 1], [], []>} : vector<1x32xf32>, vector<32x512xf32>, vector<1x512xf32> -> vector<1x512xf32>
    %255 = arith.addf %249, %254 : vector<1x512xf32>
    %c497_i32_113 = arith.constant 497 : i32
    %256 = tpu.dynamic_rotate %216 by %c497_i32_113 dim 1 : vector<32x512xf32>, i32 -> vector<32x512xf32>
    %257 = vector.broadcast %5 : vector<1x512xf32> to vector<32x512xf32>
    %258 = arith.mulf %256, %257 : vector<32x512xf32>
    %259 = vector.extract_strided_slice %220 {offsets = [0, 192], sizes = [1, 32], strides = [1, 1]} : vector<1x288xf32> to vector<1x32xf32>
    %cst_114 = arith.constant dense<0.000000e+00> : vector<1x512xf32>
    %260 = tpu.matmul %259, %258, %cst_114 {dimension_numbers = #tpu.dot_dimension_numbers<[1], [0], [0], [1], [0, 0, 1, 1], [], []>} : vector<1x32xf32>, vector<32x512xf32>, vector<1x512xf32> -> vector<1x512xf32>
    %261 = arith.addf %255, %260 : vector<1x512xf32>
    %c496_i32_115 = arith.constant 496 : i32
    %262 = tpu.dynamic_rotate %216 by %c496_i32_115 dim 1 : vector<32x512xf32>, i32 -> vector<32x512xf32>
    %263 = vector.broadcast %6 : vector<1x512xf32> to vector<32x512xf32>
    %264 = arith.mulf %262, %263 : vector<32x512xf32>
    %265 = vector.extract_strided_slice %220 {offsets = [0, 224], sizes = [1, 32], strides = [1, 1]} : vector<1x288xf32> to vector<1x32xf32>
    %cst_116 = arith.constant dense<0.000000e+00> : vector<1x512xf32>
    %266 = tpu.matmul %265, %264, %cst_116 {dimension_numbers = #tpu.dot_dimension_numbers<[1], [0], [0], [1], [0, 0, 1, 1], [], []>} : vector<1x32xf32>, vector<32x512xf32>, vector<1x512xf32> -> vector<1x512xf32>
    %267 = arith.addf %261, %266 : vector<1x512xf32>
    %c495_i32_117 = arith.constant 495 : i32
    %268 = tpu.dynamic_rotate %216 by %c495_i32_117 dim 1 : vector<32x512xf32>, i32 -> vector<32x512xf32>
    %269 = vector.broadcast %7 : vector<1x512xf32> to vector<32x512xf32>
    %270 = arith.mulf %268, %269 : vector<32x512xf32>
    %271 = vector.extract_strided_slice %220 {offsets = [0, 256], sizes = [1, 32], strides = [1, 1]} : vector<1x288xf32> to vector<1x32xf32>
    %cst_118 = arith.constant dense<0.000000e+00> : vector<1x512xf32>
    %272 = tpu.matmul %271, %270, %cst_118 {dimension_numbers = #tpu.dot_dimension_numbers<[1], [0], [0], [1], [0, 0, 1, 1], [], []>} : vector<1x32xf32>, vector<32x512xf32>, vector<1x512xf32> -> vector<1x512xf32>
    %273 = arith.addf %267, %272 : vector<1x512xf32>
    %274 = vector.broadcast %221 : vector<1x1xf32> to vector<1x512xf32>
    %275 = arith.addf %273, %274 : vector<1x512xf32>
    %c0_119 = arith.constant 0 : index
    %c0_120 = arith.constant 0 : index
    %c0_121 = arith.constant 0 : index
    %276 = vector.load %arg17[%c0_119, %c0_120, %c0_121] : memref<1x1x512xf32, #tpu.memory_space<vmem>>, vector<1x1x512xf32>
    %277 = vector.shape_cast %276 : vector<1x1x512xf32> to vector<1x512xf32>
    %278 = vector.shape_cast %275 : vector<1x512xf32> to vector<1x1x512xf32>
    tpu.vector_store %arg17[%c0_119, %c0_120, %c0_121], %278 {strides = array<i32>} : memref<1x1x512xf32, #tpu.memory_space<vmem>>, vector<1x1x512xf32>,
    return
  }
  func.func @transform_0(%arg0: i32) -> (i32, i32, i32) {
    %c0_i32 = arith.constant 0 : i32
    %c0_i32_0 = arith.constant 0 : i32
    %c0_i32_1 = arith.constant 0 : i32
    return %arg0, %c0_i32, %c0_i32_0 : i32, i32, i32
  }
  func.func @transform_1(%arg0: i32) -> (i32, i32) {
    %c0_i32 = arith.constant 0 : i32
    %c0_i32_0 = arith.constant 0 : i32
    %c0_i32_1 = arith.constant 0 : i32
    return %c0_i32, %c0_i32_0 : i32, i32
  }
  func.func @transform_2(%arg0: i32) -> (i32, i32) {
    %c0_i32 = arith.constant 0 : i32
    %c0_i32_0 = arith.constant 0 : i32
    %c0_i32_1 = arith.constant 0 : i32
    return %c0_i32, %c0_i32_0 : i32, i32
  }
  func.func @transform_3(%arg0: i32) -> (i32, i32) {
    %c0_i32 = arith.constant 0 : i32
    %c0_i32_0 = arith.constant 0 : i32
    %c0_i32_1 = arith.constant 0 : i32
    return %c0_i32, %c0_i32_0 : i32, i32
  }
  func.func @transform_4(%arg0: i32) -> (i32, i32) {
    %c0_i32 = arith.constant 0 : i32
    %c0_i32_0 = arith.constant 0 : i32
    %c0_i32_1 = arith.constant 0 : i32
    return %c0_i32, %c0_i32_0 : i32, i32
  }
  func.func @transform_5(%arg0: i32) -> (i32, i32) {
    %c0_i32 = arith.constant 0 : i32
    %c0_i32_0 = arith.constant 0 : i32
    %c0_i32_1 = arith.constant 0 : i32
    return %c0_i32, %c0_i32_0 : i32, i32
  }
  func.func @transform_6(%arg0: i32) -> (i32, i32) {
    %c0_i32 = arith.constant 0 : i32
    %c0_i32_0 = arith.constant 0 : i32
    %c0_i32_1 = arith.constant 0 : i32
    return %c0_i32, %c0_i32_0 : i32, i32
  }
  func.func @transform_7(%arg0: i32) -> (i32, i32) {
    %c0_i32 = arith.constant 0 : i32
    %c0_i32_0 = arith.constant 0 : i32
    %c0_i32_1 = arith.constant 0 : i32
    return %c0_i32, %c0_i32_0 : i32, i32
  }
  func.func @transform_8(%arg0: i32) -> (i32, i32) {
    %c0_i32 = arith.constant 0 : i32
    %c0_i32_0 = arith.constant 0 : i32
    %c0_i32_1 = arith.constant 0 : i32
    return %c0_i32, %c0_i32_0 : i32, i32
  }
  func.func @transform_9(%arg0: i32) -> (i32, i32) {
    %c0_i32 = arith.constant 0 : i32
    %c0_i32_0 = arith.constant 0 : i32
    %c0_i32_1 = arith.constant 0 : i32
    return %c0_i32, %c0_i32_0 : i32, i32
  }
  func.func @transform_10(%arg0: i32) -> (i32, i32) {
    %c0_i32 = arith.constant 0 : i32
    %c0_i32_0 = arith.constant 0 : i32
    %c0_i32_1 = arith.constant 0 : i32
    return %c0_i32, %c0_i32_0 : i32, i32
  }
  func.func @transform_11(%arg0: i32) -> (i32, i32) {
    %c0_i32 = arith.constant 0 : i32
    %c0_i32_0 = arith.constant 0 : i32
    %c0_i32_1 = arith.constant 0 : i32
    return %c0_i32, %c0_i32_0 : i32, i32
  }
  func.func @transform_12(%arg0: i32) -> (i32, i32, i32) {
    %c0_i32 = arith.constant 0 : i32
    %c0_i32_0 = arith.constant 0 : i32
    %c0_i32_1 = arith.constant 0 : i32
    return %arg0, %c0_i32, %c0_i32_0 : i32, i32, i32
  }
  func.func @transform_13(%arg0: i32) -> (i32, i32, i32) {
    %c0_i32 = arith.constant 0 : i32
    %c0_i32_0 = arith.constant 0 : i32
    %c0_i32_1 = arith.constant 0 : i32
    return %arg0, %c0_i32, %c0_i32_0 : i32, i32, i32
  }
  func.func @transform_14(%arg0: i32) -> (i32, i32, i32) {
    %c0_i32 = arith.constant 0 : i32
    %c0_i32_0 = arith.constant 0 : i32
    %c0_i32_1 = arith.constant 0 : i32
    return %arg0, %c0_i32, %c0_i32_0 : i32, i32, i32
  }
  func.func @transform_15(%arg0: i32) -> (i32, i32, i32) {
    %c0_i32 = arith.constant 0 : i32
    %c0_i32_0 = arith.constant 0 : i32
    %c0_i32_1 = arith.constant 0 : i32
    return %arg0, %c0_i32, %c0_i32_0 : i32, i32, i32
  }
  func.func @transform_16(%arg0: i32) -> (i32, i32, i32) {
    %c0_i32 = arith.constant 0 : i32
    %c0_i32_0 = arith.constant 0 : i32
    %c0_i32_1 = arith.constant 0 : i32
    return %arg0, %c0_i32, %c0_i32_0 : i32, i32, i32
  }
}

</mosaic_0001>

<llo_original>
// kernel: tpu_custom_call.1
$region0: #{tpu_custom_call.1}
  #allocation0 [shape = 'u32[]', space=smem, size = 0x4, offset = 0x4, fixed_abs, tag = 'smem constant byte address 0x4 - core index']
  #allocation1 [shape = 'u32[144,128]{1,0:T(1,128)}', space=vmem, size = 0x12000, scoped, tag = 'internal scratch']
  #allocation2 [shape = 'f32[1,1]{1,0:T(1,128)S(1)}', space=vmem, size = 0x200, scoped, tag = 'scoped memory for tpu_custom_call.1']
  %s0 = inlined_call_operand.hbm [shape: f32[3,1,512], index: 0, kind: input, shape index: {}]
  %s1 = inlined_call_operand.hbm [shape: f32[9,512], index: 1, kind: input, shape index: {}]
  %s2 = inlined_call_operand.vmem [shape: f32[32,9], index: 2, kind: input, shape index: {}]
  %s3 = inlined_call_operand.vmem [shape: f32[32,1], index: 3, kind: input, shape index: {}]
  %s4 = inlined_call_operand.vmem [shape: f32[32,288], index: 4, kind: input, shape index: {}]
  %s5 = inlined_call_operand.vmem [shape: f32[32,1], index: 5, kind: input, shape index: {}]
  %s6 = inlined_call_operand.vmem [shape: f32[32,288], index: 6, kind: input, shape index: {}]
  %s7 = inlined_call_operand.vmem [shape: f32[32,1], index: 7, kind: input, shape index: {}]
  %s8 = inlined_call_operand.hbm [shape: f32[32,288], index: 8, kind: input, shape index: {}]
  %s9 = inlined_call_operand.vmem [shape: f32[32,1], index: 9, kind: input, shape index: {}]
  %s10 = inlined_call_operand.vmem [shape: f32[1,288], index: 10, kind: input, shape index: {}]
  %s11 = inlined_call_operand.<no memory space> [shape: f32[1,1], index: 11, kind: input, shape index: {}]
  %s12 = inlined_call_operand.hbm [shape: f32[3,32,512], index: 12, kind: output, shape index: {0}]
  %s13 = inlined_call_operand.hbm [shape: f32[3,32,512], index: 13, kind: output, shape index: {1}]
  %s14 = inlined_call_operand.hbm [shape: f32[3,32,512], index: 14, kind: output, shape index: {2}]
  %s15 = inlined_call_operand.hbm [shape: f32[3,32,512], index: 15, kind: output, shape index: {3}]
  %s16 = inlined_call_operand.hbm [shape: f32[3,1,512], index: 16, kind: output, shape index: {4}]
  %17 = xla_tuple %s12, %s13, %s14, %s15, %s16
  %s18 = sld [smem:[#allocation0]]
  $region125: #{tpu_custom_call.1} parent=0
    _
  %s20 = ssub.s32 1, %s18
  %s21 = scalar_select 0, %s20, %s18
  %v22 = vstv %s11
  %23 = vst [vmem:[#allocation2] sm:$0x1] %v22
  $region1: #{tpu_custom_call.1} parent=0
    #allocation3 [shape = 'u8[4096]{0}', space=vmem, size = 0x1000, scoped, tag = 'input window, operand 0']
    #allocation4 [shape = 's32[2]{0}', space=sflag, size = 0x8, scoped, tag = 'scoped memory for tpu_custom_call.1']
    #allocation5 [shape = 's32[2]{0}', space=sflag, size = 0x8, scoped, tag = 'scoped memory for tpu_custom_call.1']
    #allocation6 [shape = 'u8[32768]{0}', space=vmem, size = 0x8000, scoped, tag = 'input window, operand 1, single buffered']
    #allocation7 [shape = 's32[1]{0}', space=sflag, size = 0x4, scoped, tag = 'scoped memory for tpu_custom_call.1']
    #allocation8 [shape = 'u8[49152]{0}', space=vmem, size = 0xc000, scoped, tag = 'input window, operand 8, single buffered']
    #allocation9 [shape = 'u8[131072]{0}', space=vmem, size = 0x20000, scoped, tag = 'output window, operand 0']
    #allocation10 [shape = 'u8[131072]{0}', space=vmem, size = 0x20000, scoped, tag = 'output window, operand 1']
    #allocation11 [shape = 's32[2]{0}', space=sflag, size = 0x8, scoped, tag = 'scoped memory for tpu_custom_call.1']
    #allocation12 [shape = 'u8[131072]{0}', space=vmem, size = 0x20000, scoped, tag = 'output window, operand 2']
    #allocation13 [shape = 'u8[131072]{0}', space=vmem, size = 0x20000, scoped, tag = 'output window, operand 3']
    #allocation14 [shape = 's32[2]{0}', space=sflag, size = 0x8, scoped, tag = 'scoped memory for tpu_custom_call.1']
    #allocation15 [shape = 'u8[4096]{0}', space=vmem, size = 0x1000, scoped, tag = 'output window, operand 4']
    %24 = vsyncpa [#allocation4], 0
    %s25 = scalar_lea.sflag [#allocation4], 1
    %26 = vsyncpa %s25, 0
    %27 = vsyncpa [#allocation7], 0
    %28 = vsyncpa [#allocation5], 0
    %s29 = scalar_lea.sflag [#allocation5], 1
    %30 = vsyncpa %s29, 0
    %31 = vsyncpa [#allocation11], 0
    %s32 = scalar_lea.sflag [#allocation11], 1
    %33 = vsyncpa %s32, 0
    %34 = vsyncpa [#allocation14], 0
    %s35 = scalar_lea.sflag [#allocation14], 1
    %36 = vsyncpa %s35, 0
    loop: start=0, step=1, limit=5
    $region2: #{tpu_custom_call.1} parent=1 // loop_pre_header
      _
    $region3: #{tpu_custom_call.1} parent=1 // loop_header
      %s38 = sphi 0, %s42
      %p39 = scmp.ge.s32.totalorder %s38, 5
      %s48 = sphi 0, %s50
      %s51 = sphi 0, %s48
      %s52 = sphi 0, %s51
      %s68 = sphi 0, %s52
      %s72 = sphi 0, %s72
      %s74 = sphi 0, %s72
      %s75 = sphi 0, %s74
      %s89 = sphi 0, %s75
      %s93 = sphi 0, %s93
      %s95 = sphi 0, %s93
      %s96 = sphi 0, %s95
      %s110 = sphi 0, %s96
      %s114 = sphi 0, %s114
      %s116 = sphi 0, %s114
      %s117 = sphi 0, %s116
      %s131 = sphi 0, %s117
      %s135 = sphi 0, %s135
      %s137 = sphi 0, %s135
      %s138 = sphi 0, %s137
      %s152 = sphi 0, %s138
      %s156 = sphi 0, %s156
      %s158 = sphi 0, %s156
      %s159 = sphi 0, %s158
      %s173 = sphi 0, %s159
      %s177 = sphi 0, %s177
      %s179 = sphi 0, %s177
      %s180 = sphi 0, %s179
      %s194 = sphi 0, %s180
      %s198 = sphi 0, %s198
      %s200 = sphi 0, %s198
      %s201 = sphi 0, %s200
      %s215 = sphi 0, %s201
      %s219 = sphi 0, %s219
      %s221 = sphi 0, %s219
      %s222 = sphi 0, %s221
      %s236 = sphi 0, %s222
      %s240 = sphi 0, %s240
      %s242 = sphi 0, %s240
      %s243 = sphi 0, %s242
      %s257 = sphi 0, %s243
      %s261 = sphi 0, %s261
      %s263 = sphi 0, %s261
      %s264 = sphi 0, %s263
      %s278 = sphi 0, %s264
      %s282 = sphi 0, %s282
      %s284 = sphi 0, %s282
      %s285 = sphi 0, %s284
      %s299 = sphi 0, %s285
      %s305 = sphi 0, %s307
      %s308 = sphi 0, %s305
      %s309 = sphi 0, %s308
      %s325 = sphi 0, %s309
      %s331 = sphi 0, %s333
      %s334 = sphi 0, %s331
      %s335 = sphi 0, %s334
      %s351 = sphi 0, %s335
      %s357 = sphi 0, %s359
      %s360 = sphi 0, %s357
      %s361 = sphi 0, %s360
      %s377 = sphi 0, %s361
      %s383 = sphi 0, %s385
      %s386 = sphi 0, %s383
      %s387 = sphi 0, %s386
      %s403 = sphi 0, %s387
      %s409 = sphi 0, %s411
      %s412 = sphi 0, %s409
      %s413 = sphi 0, %s412
      %s429 = sphi 0, %s413
    $region4: #{tpu_custom_call.1} parent=1 // loop_header_branch
      %41 = sbr.rel (%p39) target = $region8
    $region5: #{tpu_custom_call.1} parent=1 // loop_body
      %s43 = ssub.s32 %s38, 1
      %s44 = ssub.s32 %s38, 2
      %s45 = sadd.s32 %s38, 1
      %s46 = ssub.s32 %s38, %s45
      %p47 = scmp.eq.s32.totalorder %s46, 0
      %s49 = sadd.s32 %s48, 1
      %s50 = scalar_select %p47, %s48, %s49
      %p53 = pneg %p47
      %p54 = scmp.eq.s32.totalorder %s38, 2
      %p55 = por %p53, %p54
      %p56 = scmp.ne.s32.totalorder %s48, %s51
      %p57 = scmp.eq.s32.totalorder %s38, 0
      %p58 = por %p56, %p57
      %p59 = scmp.ne.s32.totalorder %s48, %s51
      %p60 = scmp.eq.s32.totalorder %s43, 2
      %p61 = por %p59, %p60
      %p62 = scmp.ne.s32.totalorder %s51, %s52
      %p63 = scmp.eq.s32.totalorder %s43, 0
      %p64 = por %p62, %p63
      %p65 = scmp.ne.s32.totalorder %s51, %s52
      %p66 = scmp.eq.s32.totalorder %s44, 2
      %p67 = por %p65, %p66
      %p69 = scmp.ne.s32.totalorder %s52, %s68
      %p70 = scmp.eq.s32.totalorder %s44, 0
      %p71 = por %p69, %p70
      %s73 = sadd.s32 %s72, 1
      %p76 = scmp.eq.s32.totalorder %s38, 2
      %p77 = scmp.ne.s32.totalorder %s72, %s74
      %p78 = scmp.eq.s32.totalorder %s38, 0
      %p79 = por %p77, %p78
      %p80 = scmp.ne.s32.totalorder %s72, %s74
      %p81 = scmp.eq.s32.totalorder %s43, 2
      %p82 = por %p80, %p81
      %p83 = scmp.ne.s32.totalorder %s74, %s75
      %p84 = scmp.eq.s32.totalorder %s43, 0
      %p85 = por %p83, %p84
      %p86 = scmp.ne.s32.totalorder %s74, %s75
      %p87 = scmp.eq.s32.totalorder %s44, 2
      %p88 = por %p86, %p87
      %p90 = scmp.ne.s32.totalorder %s75, %s89
      %p91 = scmp.eq.s32.totalorder %s44, 0
      %p92 = por %p90, %p91
      %s94 = sadd.s32 %s93, 1
      %p97 = scmp.eq.s32.totalorder %s38, 2
      %p98 = scmp.ne.s32.totalorder %s93, %s95
      %p99 = scmp.eq.s32.totalorder %s38, 0
      %p100 = por %p98, %p99
      %p101 = scmp.ne.s32.totalorder %s93, %s95
      %p102 = scmp.eq.s32.totalorder %s43, 2
      %p103 = por %p101, %p102
      %p104 = scmp.ne.s32.totalorder %s95, %s96
      %p105 = scmp.eq.s32.totalorder %s43, 0
      %p106 = por %p104, %p105
      %p107 = scmp.ne.s32.totalorder %s95, %s96
      %p108 = scmp.eq.s32.totalorder %s44, 2
      %p109 = por %p107, %p108
      %p111 = scmp.ne.s32.totalorder %s96, %s110
      %p112 = scmp.eq.s32.totalorder %s44, 0
      %p113 = por %p111, %p112
      %s115 = sadd.s32 %s114, 1
      %p118 = scmp.eq.s32.totalorder %s38, 2
      %p119 = scmp.ne.s32.totalorder %s114, %s116
      %p120 = scmp.eq.s32.totalorder %s38, 0
      %p121 = por %p119, %p120
      %p122 = scmp.ne.s32.totalorder %s114, %s116
      %p123 = scmp.eq.s32.totalorder %s43, 2
      %p124 = por %p122, %p123
      %p125 = scmp.ne.s32.totalorder %s116, %s117
      %p126 = scmp.eq.s32.totalorder %s43, 0
      %p127 = por %p125, %p126
      %p128 = scmp.ne.s32.totalorder %s116, %s117
      %p129 = scmp.eq.s32.totalorder %s44, 2
      %p130 = por %p128, %p129
      %p132 = scmp.ne.s32.totalorder %s117, %s131
      %p133 = scmp.eq.s32.totalorder %s44, 0
      %p134 = por %p132, %p133
      %s136 = sadd.s32 %s135, 1
      %p139 = scmp.eq.s32.totalorder %s38, 2
      %p140 = scmp.ne.s32.totalorder %s135, %s137
      %p141 = scmp.eq.s32.totalorder %s38, 0
      %p142 = por %p140, %p141
      %p143 = scmp.ne.s32.totalorder %s135, %s137
      %p144 = scmp.eq.s32.totalorder %s43, 2
      %p145 = por %p143, %p144
      %p146 = scmp.ne.s32.totalorder %s137, %s138
      %p147 = scmp.eq.s32.totalorder %s43, 0
      %p148 = por %p146, %p147
      %p149 = scmp.ne.s32.totalorder %s137, %s138
      %p150 = scmp.eq.s32.totalorder %s44, 2
      %p151 = por %p149, %p150
      %p153 = scmp.ne.s32.totalorder %s138, %s152
      %p154 = scmp.eq.s32.totalorder %s44, 0
      %p155 = por %p153, %p154
      %s157 = sadd.s32 %s156, 1
      %p160 = scmp.eq.s32.totalorder %s38, 2
      %p161 = scmp.ne.s32.totalorder %s156, %s158
      %p162 = scmp.eq.s32.totalorder %s38, 0
      %p163 = por %p161, %p162
      %p164 = scmp.ne.s32.totalorder %s156, %s158
      %p165 = scmp.eq.s32.totalorder %s43, 2
      %p166 = por %p164, %p165
      %p167 = scmp.ne.s32.totalorder %s158, %s159
      %p168 = scmp.eq.s32.totalorder %s43, 0
      %p169 = por %p167, %p168
      %p170 = scmp.ne.s32.totalorder %s158, %s159
      %p171 = scmp.eq.s32.totalorder %s44, 2
      %p172 = por %p170, %p171
      %p174 = scmp.ne.s32.totalorder %s159, %s173
      %p175 = scmp.eq.s32.totalorder %s44, 0
      %p176 = por %p174, %p175
      %s178 = sadd.s32 %s177, 1
      %p181 = scmp.eq.s32.totalorder %s38, 2
      %p182 = scmp.ne.s32.totalorder %s177, %s179
      %p183 = scmp.eq.s32.totalorder %s38, 0
      %p184 = por %p182, %p183
      %p185 = scmp.ne.s32.totalorder %s177, %s179
      %p186 = scmp.eq.s32.totalorder %s43, 2
      %p187 = por %p185, %p186
      %p188 = scmp.ne.s32.totalorder %s179, %s180
      %p189 = scmp.eq.s32.totalorder %s43, 0
      %p190 = por %p188, %p189
      %p191 = scmp.ne.s32.totalorder %s179, %s180
      %p192 = scmp.eq.s32.totalorder %s44, 2
      %p193 = por %p191, %p192
      %p195 = scmp.ne.s32.totalorder %s180, %s194
      %p196 = scmp.eq.s32.totalorder %s44, 0
      %p197 = por %p195, %p196
      %s199 = sadd.s32 %s198, 1
      %p202 = scmp.eq.s32.totalorder %s38, 2
      %p203 = scmp.ne.s32.totalorder %s198, %s200
      %p204 = scmp.eq.s32.totalorder %s38, 0
      %p205 = por %p203, %p204
      %p206 = scmp.ne.s32.totalorder %s198, %s200
      %p207 = scmp.eq.s32.totalorder %s43, 2
      %p208 = por %p206, %p207
      %p209 = scmp.ne.s32.totalorder %s200, %s201
      %p210 = scmp.eq.s32.totalorder %s43, 0
      %p211 = por %p209, %p210
      %p212 = scmp.ne.s32.totalorder %s200, %s201
      %p213 = scmp.eq.s32.totalorder %s44, 2
      %p214 = por %p212, %p213
      %p216 = scmp.ne.s32.totalorder %s201, %s215
      %p217 = scmp.eq.s32.totalorder %s44, 0
      %p218 = por %p216, %p217
      %s220 = sadd.s32 %s219, 1
      %p223 = scmp.eq.s32.totalorder %s38, 2
      %p224 = scmp.ne.s32.totalorder %s219, %s221
      %p225 = scmp.eq.s32.totalorder %s38, 0
      %p226 = por %p224, %p225
      %p227 = scmp.ne.s32.totalorder %s219, %s221
      %p228 = scmp.eq.s32.totalorder %s43, 2
      %p229 = por %p227, %p228
      %p230 = scmp.ne.s32.totalorder %s221, %s222
      %p231 = scmp.eq.s32.totalorder %s43, 0
      %p232 = por %p230, %p231
      %p233 = scmp.ne.s32.totalorder %s221, %s222
      %p234 = scmp.eq.s32.totalorder %s44, 2
      %p235 = por %p233, %p234
      %p237 = scmp.ne.s32.totalorder %s222, %s236
      %p238 = scmp.eq.s32.totalorder %s44, 0
      %p239 = por %p237, %p238
      %s241 = sadd.s32 %s240, 1
      %p244 = scmp.eq.s32.totalorder %s38, 2
      %p245 = scmp.ne.s32.totalorder %s240, %s242
      %p246 = scmp.eq.s32.totalorder %s38, 0
      %p247 = por %p245, %p246
      %p248 = scmp.ne.s32.totalorder %s240, %s242
      %p249 = scmp.eq.s32.totalorder %s43, 2
      %p250 = por %p248, %p249
      %p251 = scmp.ne.s32.totalorder %s242, %s243
      %p252 = scmp.eq.s32.totalorder %s43, 0
      %p253 = por %p251, %p252
      %p254 = scmp.ne.s32.totalorder %s242, %s243
      %p255 = scmp.eq.s32.totalorder %s44, 2
      %p256 = por %p254, %p255
      %p258 = scmp.ne.s32.totalorder %s243, %s257
      %p259 = scmp.eq.s32.totalorder %s44, 0
      %p260 = por %p258, %p259
      %s262 = sadd.s32 %s261, 1
      %p265 = scmp.eq.s32.totalorder %s38, 2
      %p266 = scmp.ne.s32.totalorder %s261, %s263
      %p267 = scmp.eq.s32.totalorder %s38, 0
      %p268 = por %p266, %p267
      %p269 = scmp.ne.s32.totalorder %s261, %s263
      %p270 = scmp.eq.s32.totalorder %s43, 2
      %p271 = por %p269, %p270
      %p272 = scmp.ne.s32.totalorder %s263, %s264
      %p273 = scmp.eq.s32.totalorder %s43, 0
      %p274 = por %p272, %p273
      %p275 = scmp.ne.s32.totalorder %s263, %s264
      %p276 = scmp.eq.s32.totalorder %s44, 2
      %p277 = por %p275, %p276
      %p279 = scmp.ne.s32.totalorder %s264, %s278
      %p280 = scmp.eq.s32.totalorder %s44, 0
      %p281 = por %p279, %p280
      %s283 = sadd.s32 %s282, 1
      %p286 = scmp.eq.s32.totalorder %s38, 2
      %p287 = scmp.ne.s32.totalorder %s282, %s284
      %p288 = scmp.eq.s32.totalorder %s38, 0
      %p289 = por %p287, %p288
      %p290 = scmp.ne.s32.totalorder %s282, %s284
      %p291 = scmp.eq.s32.totalorder %s43, 2
      %p292 = por %p290, %p291
      %p293 = scmp.ne.s32.totalorder %s284, %s285
      %p294 = scmp.eq.s32.totalorder %s43, 0
      %p295 = por %p293, %p294
      %p296 = scmp.ne.s32.totalorder %s284, %s285
      %p297 = scmp.eq.s32.totalorder %s44, 2
      %p298 = por %p296, %p297
      %p300 = scmp.ne.s32.totalorder %s285, %s299
      %p301 = scmp.eq.s32.totalorder %s44, 0
      %p302 = por %p300, %p301
      %s303 = ssub.s32 %s38, %s45
      %p304 = scmp.eq.s32.totalorder %s303, 0
      %s306 = sadd.s32 %s305, 1
      %s307 = scalar_select %p304, %s305, %s306
      %p310 = pneg %p304
      %p311 = scmp.eq.s32.totalorder %s38, 2
      %p312 = por %p310, %p311
      %p313 = scmp.ne.s32.totalorder %s305, %s308
      %p314 = scmp.eq.s32.totalorder %s38, 0
      %p315 = por %p313, %p314
      %p316 = scmp.ne.s32.totalorder %s305, %s308
      %p317 = scmp.eq.s32.totalorder %s43, 2
      %p318 = por %p316, %p317
      %p319 = scmp.ne.s32.totalorder %s308, %s309
      %p320 = scmp.eq.s32.totalorder %s43, 0
      %p321 = por %p319, %p320
      %p322 = scmp.ne.s32.totalorder %s308, %s309
      %p323 = scmp.eq.s32.totalorder %s44, 2
      %p324 = por %p322, %p323
      %p326 = scmp.ne.s32.totalorder %s309, %s325
      %p327 = scmp.eq.s32.totalorder %s44, 0
      %p328 = por %p326, %p327
      %s329 = ssub.s32 %s38, %s45
      %p330 = scmp.eq.s32.totalorder %s329, 0
      %s332 = sadd.s32 %s331, 1
      %s333 = scalar_select %p330, %s331, %s332
      %p336 = pneg %p330
      %p337 = scmp.eq.s32.totalorder %s38, 2
      %p338 = por %p336, %p337
      %p339 = scmp.ne.s32.totalorder %s331, %s334
      %p340 = scmp.eq.s32.totalorder %s38, 0
      %p341 = por %p339, %p340
      %p342 = scmp.ne.s32.totalorder %s331, %s334
      %p343 = scmp.eq.s32.totalorder %s43, 2
      %p344 = por %p342, %p343
      %p345 = scmp.ne.s32.totalorder %s334, %s335
      %p346 = scmp.eq.s32.totalorder %s43, 0
      %p347 = por %p345, %p346
      %p348 = scmp.ne.s32.totalorder %s334, %s335
      %p349 = scmp.eq.s32.totalorder %s44, 2
      %p350 = por %p348, %p349
      %p352 = scmp.ne.s32.totalorder %s335, %s351
      %p353 = scmp.eq.s32.totalorder %s44, 0
      %p354 = por %p352, %p353
      %s355 = ssub.s32 %s38, %s45
      %p356 = scmp.eq.s32.totalorder %s355, 0
      %s358 = sadd.s32 %s357, 1
      %s359 = scalar_select %p356, %s357, %s358
      %p362 = pneg %p356
      %p363 = scmp.eq.s32.totalorder %s38, 2
      %p364 = por %p362, %p363
      %p365 = scmp.ne.s32.totalorder %s357, %s360
      %p366 = scmp.eq.s32.totalorder %s38, 0
      %p367 = por %p365, %p366
      %p368 = scmp.ne.s32.totalorder %s357, %s360
      %p369 = scmp.eq.s32.totalorder %s43, 2
      %p370 = por %p368, %p369
      %p371 = scmp.ne.s32.totalorder %s360, %s361
      %p372 = scmp.eq.s32.totalorder %s43, 0
      %p373 = por %p371, %p372
      %p374 = scmp.ne.s32.totalorder %s360, %s361
      %p375 = scmp.eq.s32.totalorder %s44, 2
      %p376 = por %p374, %p375
      %p378 = scmp.ne.s32.totalorder %s361, %s377
      %p379 = scmp.eq.s32.totalorder %s44, 0
      %p380 = por %p378, %p379
      %s381 = ssub.s32 %s38, %s45
      %p382 = scmp.eq.s32.totalorder %s381, 0
      %s384 = sadd.s32 %s383, 1
      %s385 = scalar_select %p382, %s383, %s384
      %p388 = pneg %p382
      %p389 = scmp.eq.s32.totalorder %s38, 2
      %p390 = por %p388, %p389
      %p391 = scmp.ne.s32.totalorder %s383, %s386
      %p392 = scmp.eq.s32.totalorder %s38, 0
      %p393 = por %p391, %p392
      %p394 = scmp.ne.s32.totalorder %s383, %s386
      %p395 = scmp.eq.s32.totalorder %s43, 2
      %p396 = por %p394, %p395
      %p397 = scmp.ne.s32.totalorder %s386, %s387
      %p398 = scmp.eq.s32.totalorder %s43, 0
      %p399 = por %p397, %p398
      %p400 = scmp.ne.s32.totalorder %s386, %s387
      %p401 = scmp.eq.s32.totalorder %s44, 2
      %p402 = por %p400, %p401
      %p404 = scmp.ne.s32.totalorder %s387, %s403
      %p405 = scmp.eq.s32.totalorder %s44, 0
      %p406 = por %p404, %p405
      %s407 = ssub.s32 %s38, %s45
      %p408 = scmp.eq.s32.totalorder %s407, 0
      %s410 = sadd.s32 %s409, 1
      %s411 = scalar_select %p408, %s409, %s410
      %p414 = pneg %p408
      %p415 = scmp.eq.s32.totalorder %s38, 2
      %p416 = por %p414, %p415
      %p417 = scmp.ne.s32.totalorder %s409, %s412
      %p418 = scmp.eq.s32.totalorder %s38, 0
      %p419 = por %p417, %p418
      %p420 = scmp.ne.s32.totalorder %s409, %s412
      %p421 = scmp.eq.s32.totalorder %s43, 2
      %p422 = por %p420, %p421
      %p423 = scmp.ne.s32.totalorder %s412, %s413
      %p424 = scmp.eq.s32.totalorder %s43, 0
      %p425 = por %p423, %p424
      %p426 = scmp.ne.s32.totalorder %s412, %s413
      %p427 = scmp.eq.s32.totalorder %s44, 2
      %p428 = por %p426, %p427
      %p430 = scmp.ne.s32.totalorder %s413, %s429
      %p431 = scmp.eq.s32.totalorder %s44, 0
      %p432 = por %p430, %p431
      %p433 = scmp.le.s32.totalorder 1, %s38
      %p434 = scmp.lt.s32.totalorder %s38, 4
      %p435 = pnand %p433, %p434
      %p436 = pneg %p435
      // Predicated region
      $region9: #{tpu_custom_call.1} parent=5 // pred_check
        _
      $region10: #{tpu_custom_call.1} parent=5 // pred_check_branch
        %438 = sbr.rel (%p435) target = $region12
      $region11: #{tpu_custom_call.1} parent=5 // pred_region
        %s439 = ssub.s32 %s38, 1
        // Predicated region
        $region13: #{tpu_custom_call.1} parent=11 // pred_check
          %p440 = pneg %p85
        $region14: #{tpu_custom_call.1} parent=11 // pred_check_branch
          %442 = sbr.rel (%p440) target = $region16
        $region15: #{tpu_custom_call.1} parent=11 // pred_region
          %s444 = ssub.s32 1024, 1024
          %445 = vsyncadd [#allocation7], %s444
          %s446 = sshll.u32 [#allocation6], 4
          %s447 = int_to_ptr.vmem [resolvable:$true] %s446
          %452 = dma.hbm_to_vmem [thread:$0]  %s1, 1024, %s447, [#allocation7], 512, 512, 32
        $region16: #{tpu_custom_call.1} parent=11 // pred_fallthru
          _
        // Predicated region
        $region17: #{tpu_custom_call.1} parent=11 // pred_check
          %p453 = pneg %p106
        $region18: #{tpu_custom_call.1} parent=11 // pred_check_branch
          %455 = sbr.rel (%p453) target = $region20
        $region19: #{tpu_custom_call.1} parent=11 // pred_region
          _
        $region20: #{tpu_custom_call.1} parent=11 // pred_fallthru
          _
        // Predicated region
        $region21: #{tpu_custom_call.1} parent=11 // pred_check
          %p456 = pneg %p127
        $region22: #{tpu_custom_call.1} parent=11 // pred_check_branch
          %458 = sbr.rel (%p456) target = $region24
        $region23: #{tpu_custom_call.1} parent=11 // pred_region
          _
        $region24: #{tpu_custom_call.1} parent=11 // pred_fallthru
          _
        // Predicated region
        $region25: #{tpu_custom_call.1} parent=11 // pred_check
          %p459 = pneg %p148
        $region26: #{tpu_custom_call.1} parent=11 // pred_check_branch
          %461 = sbr.rel (%p459) target = $region28
        $region27: #{tpu_custom_call.1} parent=11 // pred_region
          _
        $region28: #{tpu_custom_call.1} parent=11 // pred_fallthru
          _
        // Predicated region
        $region29: #{tpu_custom_call.1} parent=11 // pred_check
          %p462 = pneg %p169
        $region30: #{tpu_custom_call.1} parent=11 // pred_check_branch
          %464 = sbr.rel (%p462) target = $region32
        $region31: #{tpu_custom_call.1} parent=11 // pred_region
          _
        $region32: #{tpu_custom_call.1} parent=11 // pred_fallthru
          _
        // Predicated region
        $region33: #{tpu_custom_call.1} parent=11 // pred_check
          %p465 = pneg %p190
        $region34: #{tpu_custom_call.1} parent=11 // pred_check_branch
          %467 = sbr.rel (%p465) target = $region36
        $region35: #{tpu_custom_call.1} parent=11 // pred_region
          _
        $region36: #{tpu_custom_call.1} parent=11 // pred_fallthru
          _
        // Predicated region
        $region37: #{tpu_custom_call.1} parent=11 // pred_check
          %p468 = pneg %p211
        $region38: #{tpu_custom_call.1} parent=11 // pred_check_branch
          %470 = sbr.rel (%p468) target = $region40
        $region39: #{tpu_custom_call.1} parent=11 // pred_region
          _
        $region40: #{tpu_custom_call.1} parent=11 // pred_fallthru
          _
        // Predicated region
        $region41: #{tpu_custom_call.1} parent=11 // pred_check
          %p471 = pneg %p232
        $region42: #{tpu_custom_call.1} parent=11 // pred_check_branch
          %473 = sbr.rel (%p471) target = $region44
        $region43: #{tpu_custom_call.1} parent=11 // pred_region
          %s475 = ssub.s32 1536, 1536
          %476 = vsyncadd [#allocation7], %s475
          %s477 = sshll.u32 [#allocation8], 4
          %s478 = int_to_ptr.vmem [resolvable:$true] %s477
          %483 = dma.hbm_to_vmem [thread:$0]  %s8, 1536, %s478, [#allocation7], 384, 384, 24
        $region44: #{tpu_custom_call.1} parent=11 // pred_fallthru
          _
        // Predicated region
        $region45: #{tpu_custom_call.1} parent=11 // pred_check
          %p484 = pneg %p253
        $region46: #{tpu_custom_call.1} parent=11 // pred_check_branch
          %486 = sbr.rel (%p484) target = $region48
        $region47: #{tpu_custom_call.1} parent=11 // pred_region
          _
        $region48: #{tpu_custom_call.1} parent=11 // pred_fallthru
          _
        // Predicated region
        $region49: #{tpu_custom_call.1} parent=11 // pred_check
          %p487 = pneg %p274
        $region50: #{tpu_custom_call.1} parent=11 // pred_check_branch
          %489 = sbr.rel (%p487) target = $region52
        $region51: #{tpu_custom_call.1} parent=11 // pred_region
          _
        $region52: #{tpu_custom_call.1} parent=11 // pred_fallthru
          _
        // Predicated region
        $region53: #{tpu_custom_call.1} parent=11 // pred_check
          %p490 = pneg %p295
        $region54: #{tpu_custom_call.1} parent=11 // pred_check_branch
          %492 = sbr.rel (%p490) target = $region56
        $region55: #{tpu_custom_call.1} parent=11 // pred_region
          _
        $region56: #{tpu_custom_call.1} parent=11 // pred_fallthru
          _
      $region12: #{tpu_custom_call.1} parent=5 // pred_fallthru
        _
      %p493 = scmp.lt.s32.totalorder %s38, 3
      // Predicated region
      $region57: #{tpu_custom_call.1} parent=5 // pred_check
        %p494 = pneg %p493
      $region58: #{tpu_custom_call.1} parent=5 // pred_check_branch
        %496 = sbr.rel (%p494) target = $region60
      $region59: #{tpu_custom_call.1} parent=5 // pred_region
        // Predicated region
        $region61: #{tpu_custom_call.1} parent=59 // pred_check
          %p497 = pneg %p58
        $region62: #{tpu_custom_call.1} parent=59 // pred_check_branch
          %499 = sbr.rel (%p497) target = $region64
        $region63: #{tpu_custom_call.1} parent=59 // pred_region
          %s500 = sand.u32 %s48, 1
          %s501 = scalar_lea.sflag [#allocation4], %s500
          %s502 = sand.u32 %s48, 1
          %s503 = smul.addr %s502, 4
          %s504 = scalar_lea.vmem [#allocation3], %s503
          %s506 = ssub.s32 64, 64
          %507 = vsyncadd %s501, %s506
          %s508 = smul.addr %s38, 4
          %s509 = smul.addr %s508, 16
          %s510 = scalar_lea.hbm %s0, %s509
          %s512 = sshll.u32 %s504, 4
          %s513 = int_to_ptr.vmem [resolvable:$true] %s512
          %515 = dma.hbm_to_vmem [thread:$0]  %s510, 64, %s513, %s501
        $region64: #{tpu_custom_call.1} parent=59 // pred_fallthru
          _
      $region60: #{tpu_custom_call.1} parent=5 // pred_fallthru
        _
      %p516 = scmp.le.s32.totalorder 1, %s38
      %p517 = scmp.lt.s32.totalorder %s38, 4
      %p518 = pnand %p516, %p517
      %p519 = pneg %p518
      // Predicated region
      $region65: #{tpu_custom_call.1} parent=5 // pred_check
        _
      $region66: #{tpu_custom_call.1} parent=5 // pred_check_branch
        %521 = sbr.rel (%p518) target = $region68
      $region67: #{tpu_custom_call.1} parent=5 // pred_region
        %s522 = ssub.s32 %s38, 1
        %s523 = sand.u32 %s51, 1
        %s524 = scalar_lea.sflag [#allocation4], %s523
        %s525 = sand.u32 %s51, 1
        %s526 = smul.addr %s525, 4
        %s527 = scalar_lea.vmem [#allocation3], %s526
        // Predicated region
        $region69: #{tpu_custom_call.1} parent=67 // pred_check
          %p528 = pneg %p64
        $region70: #{tpu_custom_call.1} parent=67 // pred_check_branch
          %530 = sbr.rel (%p528) target = $region72
        $region71: #{tpu_custom_call.1} parent=67 // pred_region
          %531 = dma.done %s524, 64
        $region72: #{tpu_custom_call.1} parent=67 // pred_fallthru
          _
        // Predicated region
        $region73: #{tpu_custom_call.1} parent=67 // pred_check
          %p532 = pneg %p85
        $region74: #{tpu_custom_call.1} parent=67 // pred_check_branch
          %534 = sbr.rel (%p532) target = $region76
        $region75: #{tpu_custom_call.1} parent=67 // pred_region
          %535 = dma.done [#allocation7], 1024
        $region76: #{tpu_custom_call.1} parent=67 // pred_fallthru
          _
        // Predicated region
        $region77: #{tpu_custom_call.1} parent=67 // pred_check
          %p536 = pneg %p232
        $region78: #{tpu_custom_call.1} parent=67 // pred_check_branch
          %538 = sbr.rel (%p536) target = $region80
        $region79: #{tpu_custom_call.1} parent=67 // pred_region
          %539 = dma.done [#allocation7], 1536
        $region80: #{tpu_custom_call.1} parent=67 // pred_fallthru
          _
        %s540 = sand.u32 %s51, 1
        %s541 = scalar_lea.sflag [#allocation4], %s540
        %s542 = sand.u32 %s51, 1
        %s543 = smul.addr %s542, 4
        %s544 = scalar_lea.vmem [#allocation3], %s543
        %p545 = pneg %p64
        %p546 = pneg %p61
        %p547 = pneg %p85
        %p548 = pneg %p82
        %p549 = pneg %p106
        %p550 = pneg %p103
        %p551 = pneg %p127
        %p552 = pneg %p124
        %p553 = pneg %p148
        %p554 = pneg %p145
        %p555 = pneg %p169
        %p556 = pneg %p166
        %p557 = pneg %p190
        %p558 = pneg %p187
        %p559 = pneg %p211
        %p560 = pneg %p208
        %p561 = pneg %p232
        %p562 = pneg %p229
        %p563 = pneg %p253
        %p564 = pneg %p250
        %p565 = pneg %p274
        %p566 = pneg %p271
        %p567 = pneg %p295
        %p568 = pneg %p292
        %p569 = pneg %p321
        %p570 = pneg %p318
        %s571 = sand.u32 %s308, 1
        %s572 = scalar_lea.sflag [#allocation5], %s571
        %s573 = sand.u32 %s308, 1
        %s574 = smul.addr %s573, 128
        %s575 = scalar_lea.vmem [#allocation9], %s574
        %p576 = pneg %p347
        %p577 = pneg %p344
        %s578 = sand.u32 %s43, 1
        %s579 = scalar_lea.sflag [#allocation11], %s578
        %s580 = sand.u32 %s334, 1
        %s581 = smul.addr %s580, 128
        %s582 = scalar_lea.vmem [#allocation10], %s581
        %p583 = pneg %p373
        %p584 = pneg %p370
        %s585 = sand.u32 %s43, 1
        %s586 = scalar_lea.sflag [#allocation11], %s585
        %s587 = sand.u32 %s360, 1
        %s588 = smul.addr %s587, 128
        %s589 = scalar_lea.vmem [#allocation12], %s588
        %p590 = pneg %p399
        %p591 = pneg %p396
        %s592 = sand.u32 %s43, 1
        %s593 = scalar_lea.sflag [#allocation14], %s592
        %s594 = sand.u32 %s386, 1
        %s595 = smul.addr %s594, 128
        %s596 = scalar_lea.vmem [#allocation13], %s595
        %p597 = pneg %p425
        %p598 = pneg %p422
        %s599 = sand.u32 %s43, 1
        %s600 = scalar_lea.sflag [#allocation14], %s599
        %s601 = sand.u32 %s412, 1
        %s602 = smul.addr %s601, 4
        %s603 = scalar_lea.vmem [#allocation15], %s602
        %v604 = vld [vmem:[#allocation6] ss:$8 sm:$0xf]
        %s605 = scalar_lea.vmem [#allocation6], 1
        %v606 = vld [vmem:[%s605] ss:$8 sm:$0xf]
        %s607 = scalar_lea.vmem [#allocation6], 2
        %v608 = vld [vmem:[%s607] ss:$8 sm:$0xf]
        %s609 = scalar_lea.vmem [#allocation6], 3
        %v610 = vld [vmem:[%s609] ss:$8 sm:$0xf]
        %s611 = scalar_lea.vmem [#allocation6], 5
        %v612 = vld [vmem:[%s611] ss:$8 sm:$0xf]
        %s613 = scalar_lea.vmem [#allocation6], 6
        %v614 = vld [vmem:[%s613] ss:$8 sm:$0xf]
        %s615 = scalar_lea.vmem [#allocation6], 7
        %v616 = vld [vmem:[%s615] ss:$8 sm:$0xf]
        %s617 = scalar_lea.vmem [#allocation6], 32
        %v618 = vld [vmem:[%s617] ss:$8 sm:$0xf]
        %v619 = vld [vmem:[%s527] sm:$0xf]
        %v620 = vld [vmem:[%s2] sm:$0xff]
        %v621 = vld [vmem:[%s2 + $0x8] sm:$0xff]
        %v622 = vld [vmem:[%s2 + $0x10] sm:$0xff]
        %v623 = vld [vmem:[%s2 + $0x18] sm:$0xff]
        %v624 = vld [vmem:[%s3] sm:$0xff]
        %v625 = vld [vmem:[%s3 + $0x8] sm:$0xff]
        %v626 = vld [vmem:[%s3 + $0x10] sm:$0xff]
        %v627 = vld [vmem:[%s3 + $0x18] sm:$0xff]
        %v629 = vlaneseq
        %v630 = vshrl.u32 %v629, 7
        %v631 = vsub.s32 0, %v630
        %v632 = vrot.slane %v619, %v631
        %v633 = vlaneseq
        %v634 = vshrl.u32 %v633, 7
        %v635 = vsub.s32 1, %v634
        %v636 = vrot.slane %v619, %v635
        %v637 = vlaneseq
        %v638 = vshrl.u32 %v637, 7
        %v639 = vsub.s32 2, %v638
        %v640 = vrot.slane %v619, %v639
        %v641 = vlaneseq
        %v642 = vshrl.u32 %v641, 7
        %v643 = vsub.s32 3, %v642
        %v644 = vrot.slane %v619, %v643
        %649 = vrot.lane.b32.xlu0 %v632, 17
        %v650 = vpop.permute.xlu0 %649
        %651 = vrot.lane.b32.xlu0 %v636, 17
        %v652 = vpop.permute.xlu0 %651
        %653 = vrot.lane.b32.xlu0 %v640, 17
        %v654 = vpop.permute.xlu0 %653
        %655 = vrot.lane.b32.xlu0 %v644, 17
        %v656 = vpop.permute.xlu0 %655
        %v657 = vlaneseq
        %v658 = vand.u32 %v657, 127
        %vm659 = vcmp.lt.s32.totalorder %v658, 17
        %v660 = vsel %vm659, %v654, %v656
        %v661 = vsel %vm659, %v652, %v654
        %v662 = vsel %vm659, %v650, %v652
        %v663 = vsel %vm659, %v656, %v650
        %v665 = vlaneseq
        %v666 = vshrl.u32 %v665, 7
        %v667 = vsub.s32 0, %v666
        %v668 = vrot.slane %v604, %v667
        %v669 = vlaneseq
        %v670 = vshrl.u32 %v669, 7
        %v671 = vsub.s32 1, %v670
        %v672 = vrot.slane %v604, %v671
        %v673 = vlaneseq
        %v674 = vshrl.u32 %v673, 7
        %v675 = vsub.s32 2, %v674
        %v676 = vrot.slane %v604, %v675
        %v677 = vlaneseq
        %v678 = vshrl.u32 %v677, 7
        %v679 = vsub.s32 3, %v678
        %v680 = vrot.slane %v604, %v679
        %v685 = vmul.f32 %v663, %v668
        %v686 = vmul.f32 %v662, %v672
        %v687 = vmul.f32 %v661, %v676
        %v688 = vmul.f32 %v660, %v680
        %689 = vrot.lane.b32.xlu0 %v632, 16
        %v690 = vpop.permute.xlu0 %689
        %691 = vrot.lane.b32.xlu0 %v636, 16
        %v692 = vpop.permute.xlu0 %691
        %693 = vrot.lane.b32.xlu0 %v640, 16
        %v694 = vpop.permute.xlu0 %693
        %695 = vrot.lane.b32.xlu0 %v644, 16
        %v696 = vpop.permute.xlu0 %695
        %vm697 = vcmp.lt.s32.totalorder %v658, 16
        %v698 = vsel %vm697, %v694, %v696
        %v699 = vsel %vm697, %v692, %v694
        %v700 = vsel %vm697, %v690, %v692
        %v701 = vsel %vm697, %v696, %v690
        %v703 = vlaneseq
        %v704 = vshrl.u32 %v703, 7
        %v705 = vsub.s32 0, %v704
        %v706 = vrot.slane %v606, %v705
        %v707 = vlaneseq
        %v708 = vshrl.u32 %v707, 7
        %v709 = vsub.s32 1, %v708
        %v710 = vrot.slane %v606, %v709
        %v711 = vlaneseq
        %v712 = vshrl.u32 %v711, 7
        %v713 = vsub.s32 2, %v712
        %v714 = vrot.slane %v606, %v713
        %v715 = vlaneseq
        %v716 = vshrl.u32 %v715, 7
        %v717 = vsub.s32 3, %v716
        %v718 = vrot.slane %v606, %v717
        %v723 = vmul.f32 %v701, %v706
        %v724 = vmul.f32 %v700, %v710
        %v725 = vmul.f32 %v699, %v714
        %v726 = vmul.f32 %v698, %v718
        %727 = vrot.lane.b32.xlu0 %v632, 15
        %v728 = vpop.permute.xlu0 %727
        %729 = vrot.lane.b32.xlu0 %v636, 15
        %v730 = vpop.permute.xlu0 %729
        %731 = vrot.lane.b32.xlu0 %v640, 15
        %v732 = vpop.permute.xlu0 %731
        %733 = vrot.lane.b32.xlu0 %v644, 15
        %v734 = vpop.permute.xlu0 %733
        %vm735 = vcmp.lt.s32.totalorder %v658, 15
        %v736 = vsel %vm735, %v732, %v734
        %v737 = vsel %vm735, %v730, %v732
        %v738 = vsel %vm735, %v728, %v730
        %v739 = vsel %vm735, %v734, %v728
        %v741 = vlaneseq
        %v742 = vshrl.u32 %v741, 7
        %v743 = vsub.s32 0, %v742
        %v744 = vrot.slane %v608, %v743
        %v745 = vlaneseq
        %v746 = vshrl.u32 %v745, 7
        %v747 = vsub.s32 1, %v746
        %v748 = vrot.slane %v608, %v747
        %v749 = vlaneseq
        %v750 = vshrl.u32 %v749, 7
        %v751 = vsub.s32 2, %v750
        %v752 = vrot.slane %v608, %v751
        %v753 = vlaneseq
        %v754 = vshrl.u32 %v753, 7
        %v755 = vsub.s32 3, %v754
        %v756 = vrot.slane %v608, %v755
        %v761 = vmul.f32 %v739, %v744
        %v762 = vmul.f32 %v738, %v748
        %v763 = vmul.f32 %v737, %v752
        %v764 = vmul.f32 %v736, %v756
        %765 = vrot.lane.b32.xlu0 %v632, 1
        %v766 = vpop.permute.xlu0 %765
        %767 = vrot.lane.b32.xlu0 %v636, 1
        %v768 = vpop.permute.xlu0 %767
        %769 = vrot.lane.b32.xlu0 %v640, 1
        %v770 = vpop.permute.xlu0 %769
        %771 = vrot.lane.b32.xlu0 %v644, 1
        %v772 = vpop.permute.xlu0 %771
        %vm773 = vcmp.lt.s32.totalorder %v658, 1
        %v774 = vsel %vm773, %v770, %v772
        %v775 = vsel %vm773, %v768, %v770
        %v776 = vsel %vm773, %v766, %v768
        %v777 = vsel %vm773, %v772, %v766
        %v779 = vlaneseq
        %v780 = vshrl.u32 %v779, 7
        %v781 = vsub.s32 0, %v780
        %v782 = vrot.slane %v610, %v781
        %v783 = vlaneseq
        %v784 = vshrl.u32 %v783, 7
        %v785 = vsub.s32 1, %v784
        %v786 = vrot.slane %v610, %v785
        %v787 = vlaneseq
        %v788 = vshrl.u32 %v787, 7
        %v789 = vsub.s32 2, %v788
        %v790 = vrot.slane %v610, %v789
        %v791 = vlaneseq
        %v792 = vshrl.u32 %v791, 7
        %v793 = vsub.s32 3, %v792
        %v794 = vrot.slane %v610, %v793
        %v799 = vmul.f32 %v777, %v782
        %v800 = vmul.f32 %v776, %v786
        %v801 = vmul.f32 %v775, %v790
        %v802 = vmul.f32 %v774, %v794
        %803 = vrot.lane.b32.xlu0 %v632, 127
        %v804 = vpop.permute.xlu0 %803
        %805 = vrot.lane.b32.xlu0 %v636, 127
        %v806 = vpop.permute.xlu0 %805
        %807 = vrot.lane.b32.xlu0 %v640, 127
        %v808 = vpop.permute.xlu0 %807
        %809 = vrot.lane.b32.xlu0 %v644, 127
        %v810 = vpop.permute.xlu0 %809
        %vm811 = vcmp.lt.s32.totalorder %v658, 127
        %v812 = vsel %vm811, %v808, %v810
        %v813 = vsel %vm811, %v806, %v808
        %v814 = vsel %vm811, %v804, %v806
        %v815 = vsel %vm811, %v810, %v804
        %v817 = vlaneseq
        %v818 = vshrl.u32 %v817, 7
        %v819 = vsub.s32 0, %v818
        %v820 = vrot.slane %v612, %v819
        %v821 = vlaneseq
        %v822 = vshrl.u32 %v821, 7
        %v823 = vsub.s32 1, %v822
        %v824 = vrot.slane %v612, %v823
        %v825 = vlaneseq
        %v826 = vshrl.u32 %v825, 7
        %v827 = vsub.s32 2, %v826
        %v828 = vrot.slane %v612, %v827
        %v829 = vlaneseq
        %v830 = vshrl.u32 %v829, 7
        %v831 = vsub.s32 3, %v830
        %v832 = vrot.slane %v612, %v831
        %v837 = vmul.f32 %v814, %v820
        %v838 = vmul.f32 %v813, %v824
        %v839 = vmul.f32 %v812, %v828
        %v840 = vmul.f32 %v815, %v832
        %841 = vrot.lane.b32.xlu0 %v632, 113
        %v842 = vpop.permute.xlu0 %841
        %843 = vrot.lane.b32.xlu0 %v636, 113
        %v844 = vpop.permute.xlu0 %843
        %845 = vrot.lane.b32.xlu0 %v640, 113
        %v846 = vpop.permute.xlu0 %845
        %847 = vrot.lane.b32.xlu0 %v644, 113
        %v848 = vpop.permute.xlu0 %847
        %vm849 = vcmp.lt.s32.totalorder %v658, 113
        %v850 = vsel %vm849, %v846, %v848
        %v851 = vsel %vm849, %v844, %v846
        %v852 = vsel %vm849, %v842, %v844
        %v853 = vsel %vm849, %v848, %v842
        %v855 = vlaneseq
        %v856 = vshrl.u32 %v855, 7
        %v857 = vsub.s32 0, %v856
        %v858 = vrot.slane %v614, %v857
        %v859 = vlaneseq
        %v860 = vshrl.u32 %v859, 7
        %v861 = vsub.s32 1, %v860
        %v862 = vrot.slane %v614, %v861
        %v863 = vlaneseq
        %v864 = vshrl.u32 %v863, 7
        %v865 = vsub.s32 2, %v864
        %v866 = vrot.slane %v614, %v865
        %v867 = vlaneseq
        %v868 = vshrl.u32 %v867, 7
        %v869 = vsub.s32 3, %v868
        %v870 = vrot.slane %v614, %v869
        %v875 = vmul.f32 %v852, %v858
        %v876 = vmul.f32 %v851, %v862
        %v877 = vmul.f32 %v850, %v866
        %v878 = vmul.f32 %v853, %v870
        %879 = vrot.lane.b32.xlu0 %v632, 112
        %v880 = vpop.permute.xlu0 %879
        %881 = vrot.lane.b32.xlu0 %v636, 112
        %v882 = vpop.permute.xlu0 %881
        %883 = vrot.lane.b32.xlu0 %v640, 112
        %v884 = vpop.permute.xlu0 %883
        %885 = vrot.lane.b32.xlu0 %v644, 112
        %v886 = vpop.permute.xlu0 %885
        %vm887 = vcmp.lt.s32.totalorder %v658, 112
        %v888 = vsel %vm887, %v884, %v886
        %v889 = vsel %vm887, %v882, %v884
        %v890 = vsel %vm887, %v880, %v882
        %v891 = vsel %vm887, %v886, %v880
        %v893 = vlaneseq
        %v894 = vshrl.u32 %v893, 7
        %v895 = vsub.s32 0, %v894
        %v896 = vrot.slane %v616, %v895
        %v897 = vlaneseq
        %v898 = vshrl.u32 %v897, 7
        %v899 = vsub.s32 1, %v898
        %v900 = vrot.slane %v616, %v899
        %v901 = vlaneseq
        %v902 = vshrl.u32 %v901, 7
        %v903 = vsub.s32 2, %v902
        %v904 = vrot.slane %v616, %v903
        %v905 = vlaneseq
        %v906 = vshrl.u32 %v905, 7
        %v907 = vsub.s32 3, %v906
        %v908 = vrot.slane %v616, %v907
        %v913 = vmul.f32 %v890, %v896
        %v914 = vmul.f32 %v889, %v900
        %v915 = vmul.f32 %v888, %v904
        %v916 = vmul.f32 %v891, %v908
        %917 = vrot.lane.b32.xlu0 %v632, 111
        %v918 = vpop.permute.xlu0 %917
        %919 = vrot.lane.b32.xlu0 %v636, 111
        %v920 = vpop.permute.xlu0 %919
        %921 = vrot.lane.b32.xlu0 %v640, 111
        %v922 = vpop.permute.xlu0 %921
        %923 = vrot.lane.b32.xlu0 %v644, 111
        %v924 = vpop.permute.xlu0 %923
        %vm925 = vcmp.lt.s32.totalorder %v658, 111
        %v926 = vsel %vm925, %v922, %v924
        %v927 = vsel %vm925, %v920, %v922
        %v928 = vsel %vm925, %v918, %v920
        %v929 = vsel %vm925, %v924, %v918
        %v931 = vlaneseq
        %v932 = vshrl.u32 %v931, 7
        %v933 = vsub.s32 0, %v932
        %v934 = vrot.slane %v618, %v933
        %v935 = vlaneseq
        %v936 = vshrl.u32 %v935, 7
        %v937 = vsub.s32 1, %v936
        %v938 = vrot.slane %v618, %v937
        %v939 = vlaneseq
        %v940 = vshrl.u32 %v939, 7
        %v941 = vsub.s32 2, %v940
        %v942 = vrot.slane %v618, %v941
        %v943 = vlaneseq
        %v944 = vshrl.u32 %v943, 7
        %v945 = vsub.s32 3, %v944
        %v946 = vrot.slane %v618, %v945
        %v951 = vmul.f32 %v928, %v934
        %v952 = vmul.f32 %v927, %v938
        %v953 = vmul.f32 %v926, %v942
        %v954 = vmul.f32 %v929, %v946
        %v959 = vrot.slane %v723, 7
        %v960 = vrot.slane %v724, 7
        %v961 = vrot.slane %v725, 7
        %v962 = vrot.slane %v726, 7
        %v971 = vrot.slane %v761, 6
        %v972 = vrot.slane %v762, 6
        %v973 = vrot.slane %v763, 6
        %v974 = vrot.slane %v764, 6
        %v983 = vrot.slane %v799, 5
        %v984 = vrot.slane %v800, 5
        %v985 = vrot.slane %v801, 5
        %v986 = vrot.slane %v802, 5
        %v995 = vrot.slane %v837, 3
        %v996 = vrot.slane %v838, 3
        %v997 = vrot.slane %v839, 3
        %v998 = vrot.slane %v840, 3
        %v1007 = vrot.slane %v875, 2
        %v1008 = vrot.slane %v876, 2
        %v1009 = vrot.slane %v877, 2
        %v1010 = vrot.slane %v878, 2
        %v1019 = vrot.slane %v913, 1
        %v1020 = vrot.slane %v914, 1
        %v1021 = vrot.slane %v915, 1
        %v1022 = vrot.slane %v916, 1
        %vm1027 = vcmask 1040384
        %v1028 = vsel %vm1027, %v685, %v959
        %v1029 = vsel %vm1027, %v686, %v960
        %v1030 = vsel %vm1027, %v687, %v961
        %v1031 = vsel %vm1027, %v688, %v962
        %vm1032 = vcmask 1041408
        %v1033 = vsel %vm1032, %v1028, %v971
        %v1034 = vsel %vm1032, %v1029, %v972
        %v1035 = vsel %vm1032, %v1030, %v973
        %v1036 = vsel %vm1032, %v1031, %v974
        %vm1037 = vcmask 1042432
        %v1038 = vsel %vm1037, %v1033, %v983
        %v1039 = vsel %vm1037, %v1034, %v984
        %v1040 = vsel %vm1037, %v1035, %v985
        %v1041 = vsel %vm1037, %v1036, %v986
        %vm1042 = vcmask 1043456
        %v1043 = vsel %vm1042, %v1038, %v632
        %v1044 = vsel %vm1042, %v1039, %v636
        %v1045 = vsel %vm1042, %v1040, %v640
        %v1046 = vsel %vm1042, %v1041, %v644
        %vm1047 = vcmask 1044480
        %v1048 = vsel %vm1047, %v1043, %v995
        %v1049 = vsel %vm1047, %v1044, %v996
        %v1050 = vsel %vm1047, %v1045, %v997
        %v1051 = vsel %vm1047, %v1046, %v998
        %vm1052 = vcmask 1045504
        %v1053 = vsel %vm1052, %v1048, %v1007
        %v1054 = vsel %vm1052, %v1049, %v1008
        %v1055 = vsel %vm1052, %v1050, %v1009
        %v1056 = vsel %vm1052, %v1051, %v1010
        %vm1057 = vcmask 1046528
        %v1058 = vsel %vm1057, %v1053, %v1019
        %v1059 = vsel %vm1057, %v1054, %v1020
        %v1060 = vsel %vm1057, %v1055, %v1021
        %v1061 = vsel %vm1057, %v1056, %v1022
        %1063 = vset.pattern.permute.xlu0 0
        %1064 = vperm.xlu0 %1063, %v624
        %v1065 = vpop.permute.xlu0 %1064
        %1068 = vset.pattern.permute.xlu0 0
        %1069 = vperm.xlu0 %1068, %v625
        %v1070 = vpop.permute.xlu0 %1069
        %1073 = vset.pattern.permute.xlu0 0
        %1074 = vperm.xlu0 %1073, %v626
        %v1075 = vpop.permute.xlu0 %1074
        %1078 = vset.pattern.permute.xlu0 0
        %1079 = vperm.xlu0 %1078, %v627
        %v1080 = vpop.permute.xlu0 %1079
        %vm1082 = vcmask 72704
        %v1084 = vsel %vm1082, %v620, 0
        %v1087 = vsel %vm1082, %v621, 0
        %v1090 = vsel %vm1082, %v622, 0
        %v1093 = vsel %vm1082, %v623, 0
        %v1096 = vsel %vm1027, %v951, 0
        %v1099 = vsel %vm1027, %v952, 0
        %v1102 = vsel %vm1027, %v953, 0
        %v1105 = vsel %vm1027, %v954, 0
        %1107 = vmatprep.subr.mxu0 0.0
        %1108 = vmatpush1.msra.mxu0 0.0
        %1109 = vmatprep.subr.mxu0 0.0
        %1110 = vmatpush1.msra.mxu0 0.0
        %1111 = vmatprep.subr.mxu0 0.0
        %1112 = vmatpush1.msra.mxu0 0.0
        %1113 = vmatprep.subr.mxu0 0.0
        %1114 = vmatpush1.msra.mxu0 0.0
        %1115 = vmatprep.subr.mxu0 0.0
        %1116 = vmatpush1.msra.mxu0 0.0
        %1117 = vmatprep.subr.mxu0 0.0
        %1118 = vmatpush1.msra.mxu0 0.0
        %1119 = vmatprep.subr.mxu0 0.0
        %1120 = vmatpush1.msra.mxu0 0.0
        %1121 = vmatprep.subr.mxu0 0.0
        %1122 = vmatpush1.msra.mxu0 0.0
        %1123 = vmatprep.subr.mxu0 0.0
        %1124 = vmatpush1.msra.mxu0 0.0
        %1125 = vmatprep.subr.mxu0 0.0
        %1126 = vmatpush1.msra.mxu0 0.0
        %1127 = vmatprep.subr.mxu0 0.0
        %1128 = vmatpush1.msra.mxu0 0.0
        %1129 = vmatprep.subr.mxu0 0.0
        %1130 = vmatpush1.msra.mxu0 0.0
        %1131 = vmatprep.subr.mxu0 0.0
        %1132 = vmatpush1.msra.mxu0 0.0
        %1133 = vmatprep.subr.mxu0 0.0
        %1134 = vmatpush1.msra.mxu0 0.0
        %1135 = vmatprep.subr.mxu0 %v1099
        %1136 = vmatpush1.msra.mxu0 %v1096
        %1137 = vmatprep.subr.mxu0 %v1059
        %1138 = vmatpush1.msra.mxu0 %v1058
        %1139 = vmatprep.subr.mxu0 0.0
        %1140 = vmatpush2.msra.mxu0 0.0
        %1141 = vmatprep.subr.mxu0 0.0
        %1142 = vmatpush2.msra.mxu0 0.0
        %1143 = vmatprep.subr.mxu0 0.0
        %1144 = vmatpush2.msra.mxu0 0.0
        %1145 = vmatprep.subr.mxu0 0.0
        %1146 = vmatpush2.msra.mxu0 0.0
        %1147 = vmatprep.subr.mxu0 0.0
        %1148 = vmatpush2.msra.mxu0 0.0
        %1149 = vmatprep.subr.mxu0 0.0
        %1150 = vmatpush2.msra.mxu0 0.0
        %1151 = vmatprep.subr.mxu0 0.0
        %1152 = vmatpush2.msra.mxu0 0.0
        %1153 = vmatprep.subr.mxu0 0.0
        %1154 = vmatpush2.msra.mxu0 0.0
        %1155 = vmatprep.subr.mxu0 0.0
        %1156 = vmatpush2.msra.mxu0 0.0
        %1157 = vmatprep.subr.mxu0 0.0
        %1158 = vmatpush2.msra.mxu0 0.0
        %1159 = vmatprep.subr.mxu0 0.0
        %1160 = vmatpush2.msra.mxu0 0.0
        %1161 = vmatprep.subr.mxu0 0.0
        %1162 = vmatpush2.msra.mxu0 0.0
        %1163 = vmatprep.subr.mxu0 0.0
        %1164 = vmatpush2.msra.mxu0 0.0
        %1165 = vmatprep.subr.mxu0 0.0
        %1166 = vmatpush2.msra.mxu0 0.0
        %1167 = vmatprep.subr.mxu0 0.0
        %1168 = vmatpush2.msra.mxu0 0.0
        %1169 = vmatprep.subr.mxu0 0.0
        %1170 = vmatpush2.msra.mxu0 0.0
        %1171 = vmatprep.mubr.f32.mxu0 0.0
        %1172 = vmatmul.mubr.f32.gmra.mxu0 %v1084
        %v1173 = vpop.f32.mrf.mxu0
        %v1174 = vadd.f32 %v1065, %v1173
        %v1175 = vpop.f32.mrf.mxu0
        %v1176 = vadd.f32 %v1065, %v1175
        %1177 = vmatprep.mubr.f32.mxu0 0.0
        %1178 = vmatmul.mubr.f32.gmra.mxu0 %v1087
        %v1179 = vpop.f32.mrf.mxu0
        %v1180 = vadd.f32 %v1070, %v1179
        %v1181 = vpop.f32.mrf.mxu0
        %v1182 = vadd.f32 %v1070, %v1181
        %1183 = vmatprep.mubr.f32.mxu0 0.0
        %1184 = vmatmul.mubr.f32.gmra.mxu0 %v1090
        %v1185 = vpop.f32.mrf.mxu0
        %v1186 = vadd.f32 %v1075, %v1185
        %v1187 = vpop.f32.mrf.mxu0
        %v1188 = vadd.f32 %v1075, %v1187
        %1189 = vmatprep.mubr.f32.mxu0 0.0
        %1190 = vmatmul.mubr.f32.gmra.mxu0 %v1093
        %v1191 = vpop.f32.mrf.mxu0
        %v1192 = vadd.f32 %v1080, %v1191
        %v1193 = vpop.f32.mrf.mxu0
        %v1194 = vadd.f32 %v1080, %v1193
        %1195 = vdwg.mxu0
        %1196 = vmatprep.subr.mxu0 0.0
        %1197 = vmatpush1.msra.mxu0 0.0
        %1198 = vmatprep.subr.mxu0 0.0
        %1199 = vmatpush1.msra.mxu0 0.0
        %1200 = vmatprep.subr.mxu0 0.0
        %1201 = vmatpush1.msra.mxu0 0.0
        %1202 = vmatprep.subr.mxu0 0.0
        %1203 = vmatpush1.msra.mxu0 0.0
        %1204 = vmatprep.subr.mxu0 0.0
        %1205 = vmatpush1.msra.mxu0 0.0
        %1206 = vmatprep.subr.mxu0 0.0
        %1207 = vmatpush1.msra.mxu0 0.0
        %1208 = vmatprep.subr.mxu0 0.0
        %1209 = vmatpush1.msra.mxu0 0.0
        %1210 = vmatprep.subr.mxu0 0.0
        %1211 = vmatpush1.msra.mxu0 0.0
        %1212 = vmatprep.subr.mxu0 0.0
        %1213 = vmatpush1.msra.mxu0 0.0
        %1214 = vmatprep.subr.mxu0 0.0
        %1215 = vmatpush1.msra.mxu0 0.0
        %1216 = vmatprep.subr.mxu0 0.0
        %1217 = vmatpush1.msra.mxu0 0.0
        %1218 = vmatprep.subr.mxu0 0.0
        %1219 = vmatpush1.msra.mxu0 0.0
        %1220 = vmatprep.subr.mxu0 0.0
        %1221 = vmatpush1.msra.mxu0 0.0
        %1222 = vmatprep.subr.mxu0 0.0
        %1223 = vmatpush1.msra.mxu0 0.0
        %1224 = vmatprep.subr.mxu0 %v1105
        %1225 = vmatpush1.msra.mxu0 %v1102
        %1226 = vmatprep.subr.mxu0 %v1061
        %1227 = vmatpush1.msra.mxu0 %v1060
        %1228 = vmatprep.subr.mxu0 0.0
        %1229 = vmatpush2.msra.mxu0 0.0
        %1230 = vmatprep.subr.mxu0 0.0
        %1231 = vmatpush2.msra.mxu0 0.0
        %1232 = vmatprep.subr.mxu0 0.0
        %1233 = vmatpush2.msra.mxu0 0.0
        %1234 = vmatprep.subr.mxu0 0.0
        %1235 = vmatpush2.msra.mxu0 0.0
        %1236 = vmatprep.subr.mxu0 0.0
        %1237 = vmatpush2.msra.mxu0 0.0
        %1238 = vmatprep.subr.mxu0 0.0
        %1239 = vmatpush2.msra.mxu0 0.0
        %1240 = vmatprep.subr.mxu0 0.0
        %1241 = vmatpush2.msra.mxu0 0.0
        %1242 = vmatprep.subr.mxu0 0.0
        %1243 = vmatpush2.msra.mxu0 0.0
        %1244 = vmatprep.subr.mxu0 0.0
        %1245 = vmatpush2.msra.mxu0 0.0
        %1246 = vmatprep.subr.mxu0 0.0
        %1247 = vmatpush2.msra.mxu0 0.0
        %1248 = vmatprep.subr.mxu0 0.0
        %1249 = vmatpush2.msra.mxu0 0.0
        %1250 = vmatprep.subr.mxu0 0.0
        %1251 = vmatpush2.msra.mxu0 0.0
        %1252 = vmatprep.subr.mxu0 0.0
        %1253 = vmatpush2.msra.mxu0 0.0
        %1254 = vmatprep.subr.mxu0 0.0
        %1255 = vmatpush2.msra.mxu0 0.0
        %1256 = vmatprep.subr.mxu0 0.0
        %1257 = vmatpush2.msra.mxu0 0.0
        %1258 = vmatprep.subr.mxu0 0.0
        %1259 = vmatpush2.msra.mxu0 0.0
        %1260 = vmatprep.mubr.f32.mxu0 0.0
        %1261 = vmatmul.mubr.f32.gmra.mxu0 %v1084
        %v1262 = vpop.f32.mrf.mxu0
        %v1263 = vadd.f32 %v1065, %v1262
        %v1264 = vpop.f32.mrf.mxu0
        %v1265 = vadd.f32 %v1065, %v1264
        %1266 = vmatprep.mubr.f32.mxu0 0.0
        %1267 = vmatmul.mubr.f32.gmra.mxu0 %v1087
        %v1268 = vpop.f32.mrf.mxu0
        %v1269 = vadd.f32 %v1070, %v1268
        %v1270 = vpop.f32.mrf.mxu0
        %v1271 = vadd.f32 %v1070, %v1270
        %1272 = vmatprep.mubr.f32.mxu0 0.0
        %1273 = vmatmul.mubr.f32.gmra.mxu0 %v1090
        %v1274 = vpop.f32.mrf.mxu0
        %v1275 = vadd.f32 %v1075, %v1274
        %v1276 = vpop.f32.mrf.mxu0
        %v1277 = vadd.f32 %v1075, %v1276
        %1278 = vmatprep.mubr.f32.mxu0 0.0
        %1279 = vmatmul.mubr.f32.gmra.mxu0 %v1093
        %v1280 = vpop.f32.mrf.mxu0
        %v1281 = vadd.f32 %v1080, %v1280
        %v1282 = vpop.f32.mrf.mxu0
        %v1283 = vadd.f32 %v1080, %v1282
        %1284 = vdwg.mxu0
        %v1285 = vmax.f32 %v1174, 0.0
        %v1286 = vmax.f32 %v1176, 0.0
        %v1287 = vmax.f32 %v1263, 0.0
        %v1288 = vmax.f32 %v1265, 0.0
        %v1289 = vmax.f32 %v1180, 0.0
        %v1290 = vmax.f32 %v1182, 0.0
        %v1291 = vmax.f32 %v1269, 0.0
        %v1292 = vmax.f32 %v1271, 0.0
        %v1293 = vmax.f32 %v1186, 0.0
        %v1294 = vmax.f32 %v1188, 0.0
        %v1295 = vmax.f32 %v1275, 0.0
        %v1296 = vmax.f32 %v1277, 0.0
        %v1297 = vmax.f32 %v1192, 0.0
        %v1298 = vmax.f32 %v1194, 0.0
        %v1299 = vmax.f32 %v1281, 0.0
        %v1300 = vmax.f32 %v1283, 0.0
        %1301 = vst [vmem:[%s575] sm:$0xff] %v1285
        %1302 = vst [vmem:[%s575 + $0x8] sm:$0xff] %v1286
        %1303 = vst [vmem:[%s575 + $0x10] sm:$0xff] %v1287
        %1304 = vst [vmem:[%s575 + $0x18] sm:$0xff] %v1288
        %1305 = vst [vmem:[%s575 + $0x20] sm:$0xff] %v1289
        %1306 = vst [vmem:[%s575 + $0x28] sm:$0xff] %v1290
        %1307 = vst [vmem:[%s575 + $0x30] sm:$0xff] %v1291
        %1308 = vst [vmem:[%s575 + $0x38] sm:$0xff] %v1292
        %1309 = vst [vmem:[%s575 + $0x40] sm:$0xff] %v1293
        %1310 = vst [vmem:[%s575 + $0x48] sm:$0xff] %v1294
        %1311 = vst [vmem:[%s575 + $0x50] sm:$0xff] %v1295
        %1312 = vst [vmem:[%s575 + $0x58] sm:$0xff] %v1296
        %1313 = vst [vmem:[%s575 + $0x60] sm:$0xff] %v1297
        %1314 = vst [vmem:[%s575 + $0x68] sm:$0xff] %v1298
        %1315 = vst [vmem:[%s575 + $0x70] sm:$0xff] %v1299
        %1316 = vst [vmem:[%s575 + $0x78] sm:$0xff] %v1300
        %v1317 = vld [vmem:[%s4] sm:$0xff]
        %v1318 = vld [vmem:[%s4 + $0x8] sm:$0xff]
        %v1319 = vld [vmem:[%s4 + $0x10] sm:$0xff]
        %v1320 = vld [vmem:[%s4 + $0x18] sm:$0xff]
        %v1321 = vld [vmem:[%s4 + $0x20] sm:$0xff]
        %v1322 = vld [vmem:[%s4 + $0x28] sm:$0xff]
        %v1323 = vld [vmem:[%s4 + $0x30] sm:$0xff]
        %v1324 = vld [vmem:[%s4 + $0x38] sm:$0xff]
        %v1325 = vld [vmem:[%s4 + $0x40] sm:$0xff]
        %v1326 = vld [vmem:[%s4 + $0x48] sm:$0xff]
        %v1327 = vld [vmem:[%s4 + $0x50] sm:$0xff]
        %v1328 = vld [vmem:[%s4 + $0x58] sm:$0xff]
        %v1329 = vld [vmem:[%s5] sm:$0xff]
        %v1330 = vld [vmem:[%s5 + $0x8] sm:$0xff]
        %v1331 = vld [vmem:[%s5 + $0x10] sm:$0xff]
        %v1332 = vld [vmem:[%s5 + $0x18] sm:$0xff]
        %1333 = vrot.lane.b32.xlu0 %v1285, 17
        %v1334 = vpop.permute.xlu0 %1333
        %1335 = vrot.lane.b32.xlu0 %v1289, 17
        %v1336 = vpop.permute.xlu0 %1335
        %1337 = vrot.lane.b32.xlu0 %v1293, 17
        %v1338 = vpop.permute.xlu0 %1337
        %1339 = vrot.lane.b32.xlu0 %v1297, 17
        %v1340 = vpop.permute.xlu0 %1339
        %1341 = vrot.lane.b32.xlu0 %v1286, 17
        %v1342 = vpop.permute.xlu0 %1341
        %1343 = vrot.lane.b32.xlu0 %v1290, 17
        %v1344 = vpop.permute.xlu0 %1343
        %1345 = vrot.lane.b32.xlu0 %v1294, 17
        %v1346 = vpop.permute.xlu0 %1345
        %1347 = vrot.lane.b32.xlu0 %v1298, 17
        %v1348 = vpop.permute.xlu0 %1347
        %1349 = vrot.lane.b32.xlu0 %v1287, 17
        %v1350 = vpop.permute.xlu0 %1349
        %1351 = vrot.lane.b32.xlu0 %v1291, 17
        %v1352 = vpop.permute.xlu0 %1351
        %1353 = vrot.lane.b32.xlu0 %v1295, 17
        %v1354 = vpop.permute.xlu0 %1353
        %1355 = vrot.lane.b32.xlu0 %v1299, 17
        %v1356 = vpop.permute.xlu0 %1355
        %1357 = vrot.lane.b32.xlu0 %v1288, 17
        %v1358 = vpop.permute.xlu0 %1357
        %1359 = vrot.lane.b32.xlu0 %v1292, 17
        %v1360 = vpop.permute.xlu0 %1359
        %1361 = vrot.lane.b32.xlu0 %v1296, 17
        %v1362 = vpop.permute.xlu0 %1361
        %1363 = vrot.lane.b32.xlu0 %v1300, 17
        %v1364 = vpop.permute.xlu0 %1363
        %v1365 = vsel %vm659, %v1350, %v1358
        %v1366 = vsel %vm659, %v1352, %v1360
        %v1367 = vsel %vm659, %v1354, %v1362
        %v1368 = vsel %vm659, %v1356, %v1364
        %v1369 = vsel %vm659, %v1342, %v1350
        %v1370 = vsel %vm659, %v1344, %v1352
        %v1371 = vsel %vm659, %v1346, %v1354
        %v1372 = vsel %vm659, %v1348, %v1356
        %v1373 = vsel %vm659, %v1334, %v1342
        %v1374 = vsel %vm659, %v1336, %v1344
        %v1375 = vsel %vm659, %v1338, %v1346
        %v1376 = vsel %vm659, %v1340, %v1348
        %v1377 = vsel %vm659, %v1358, %v1334
        %v1378 = vsel %vm659, %v1360, %v1336
        %v1379 = vsel %vm659, %v1362, %v1338
        %v1380 = vsel %vm659, %v1364, %v1340
        %v1381 = vmul.f32 %v1377, %v668
        %v1382 = vmul.f32 %v1373, %v672
        %v1383 = vmul.f32 %v1369, %v676
        %v1384 = vmul.f32 %v1365, %v680
        %v1385 = vmul.f32 %v1378, %v668
        %v1386 = vmul.f32 %v1374, %v672
        %v1387 = vmul.f32 %v1370, %v676
        %v1388 = vmul.f32 %v1366, %v680
        %v1389 = vmul.f32 %v1379, %v668
        %v1390 = vmul.f32 %v1375, %v672
        %v1391 = vmul.f32 %v1371, %v676
        %v1392 = vmul.f32 %v1367, %v680
        %v1393 = vmul.f32 %v1380, %v668
        %v1394 = vmul.f32 %v1376, %v672
        %v1395 = vmul.f32 %v1372, %v676
        %v1396 = vmul.f32 %v1368, %v680
        %1397 = vrot.lane.b32.xlu0 %v1285, 16
        %v1398 = vpop.permute.xlu0 %1397
        %1399 = vrot.lane.b32.xlu0 %v1289, 16
        %v1400 = vpop.permute.xlu0 %1399
        %1401 = vrot.lane.b32.xlu0 %v1293, 16
        %v1402 = vpop.permute.xlu0 %1401
        %1403 = vrot.lane.b32.xlu0 %v1297, 16
        %v1404 = vpop.permute.xlu0 %1403
        %1405 = vrot.lane.b32.xlu0 %v1286, 16
        %v1406 = vpop.permute.xlu0 %1405
        %1407 = vrot.lane.b32.xlu0 %v1290, 16
        %v1408 = vpop.permute.xlu0 %1407
        %1409 = vrot.lane.b32.xlu0 %v1294, 16
        %v1410 = vpop.permute.xlu0 %1409
        %1411 = vrot.lane.b32.xlu0 %v1298, 16
        %v1412 = vpop.permute.xlu0 %1411
        %1413 = vrot.lane.b32.xlu0 %v1287, 16
        %v1414 = vpop.permute.xlu0 %1413
        %1415 = vrot.lane.b32.xlu0 %v1291, 16
        %v1416 = vpop.permute.xlu0 %1415
        %1417 = vrot.lane.b32.xlu0 %v1295, 16
        %v1418 = vpop.permute.xlu0 %1417
        %1419 = vrot.lane.b32.xlu0 %v1299, 16
        %v1420 = vpop.permute.xlu0 %1419
        %1421 = vrot.lane.b32.xlu0 %v1288, 16
        %v1422 = vpop.permute.xlu0 %1421
        %1423 = vrot.lane.b32.xlu0 %v1292, 16
        %v1424 = vpop.permute.xlu0 %1423
        %1425 = vrot.lane.b32.xlu0 %v1296, 16
        %v1426 = vpop.permute.xlu0 %1425
        %1427 = vrot.lane.b32.xlu0 %v1300, 16
        %v1428 = vpop.permute.xlu0 %1427
        %v1429 = vsel %vm697, %v1414, %v1422
        %v1430 = vsel %vm697, %v1416, %v1424
        %v1431 = vsel %vm697, %v1418, %v1426
        %v1432 = vsel %vm697, %v1420, %v1428
        %v1433 = vsel %vm697, %v1406, %v1414
        %v1434 = vsel %vm697, %v1408, %v1416
        %v1435 = vsel %vm697, %v1410, %v1418
        %v1436 = vsel %vm697, %v1412, %v1420
        %v1437 = vsel %vm697, %v1398, %v1406
        %v1438 = vsel %vm697, %v1400, %v1408
        %v1439 = vsel %vm697, %v1402, %v1410
        %v1440 = vsel %vm697, %v1404, %v1412
        %v1441 = vsel %vm697, %v1422, %v1398
        %v1442 = vsel %vm697, %v1424, %v1400
        %v1443 = vsel %vm697, %v1426, %v1402
        %v1444 = vsel %vm697, %v1428, %v1404
        %v1445 = vmul.f32 %v1441, %v706
        %v1446 = vmul.f32 %v1437, %v710
        %v1447 = vmul.f32 %v1433, %v714
        %v1448 = vmul.f32 %v1429, %v718
        %v1449 = vmul.f32 %v1442, %v706
        %v1450 = vmul.f32 %v1438, %v710
        %v1451 = vmul.f32 %v1434, %v714
        %v1452 = vmul.f32 %v1430, %v718
        %v1453 = vmul.f32 %v1443, %v706
        %v1454 = vmul.f32 %v1439, %v710
        %v1455 = vmul.f32 %v1435, %v714
        %v1456 = vmul.f32 %v1431, %v718
        %v1457 = vmul.f32 %v1444, %v706
        %v1458 = vmul.f32 %v1440, %v710
        %v1459 = vmul.f32 %v1436, %v714
        %v1460 = vmul.f32 %v1432, %v718
        %1465 = vrot.lane.b32.xlu0 %v1317, 96
        %v1466 = vpop.permute.xlu0 %1465
        %1467 = vrot.lane.b32.xlu0 %v1320, 96
        %v1468 = vpop.permute.xlu0 %1467
        %1469 = vrot.lane.b32.xlu0 %v1323, 96
        %v1470 = vpop.permute.xlu0 %1469
        %1471 = vrot.lane.b32.xlu0 %v1326, 96
        %v1472 = vpop.permute.xlu0 %1471
        %vm1473 = vcmask 261120
        %v1474 = vsel %vm1473, %v1466, 0
        %v1476 = vsel %vm1473, %v1468, 0
        %v1478 = vsel %vm1473, %v1470, 0
        %v1480 = vsel %vm1473, %v1472, 0
        %1482 = vmatprep.subr.mxu0 0.0
        %1483 = vmatpush1.msra.mxu0 0.0
        %1484 = vmatprep.subr.mxu0 0.0
        %1485 = vmatpush1.msra.mxu0 0.0
        %1486 = vmatprep.subr.mxu0 0.0
        %1487 = vmatpush1.msra.mxu0 0.0
        %1488 = vmatprep.subr.mxu0 0.0
        %1489 = vmatpush1.msra.mxu0 0.0
        %1490 = vmatprep.subr.mxu0 0.0
        %1491 = vmatpush1.msra.mxu0 0.0
        %1492 = vmatprep.subr.mxu0 0.0
        %1493 = vmatpush1.msra.mxu0 0.0
        %1494 = vmatprep.subr.mxu0 0.0
        %1495 = vmatpush1.msra.mxu0 0.0
        %1496 = vmatprep.subr.mxu0 0.0
        %1497 = vmatpush1.msra.mxu0 0.0
        %1498 = vmatprep.subr.mxu0 0.0
        %1499 = vmatpush1.msra.mxu0 0.0
        %1500 = vmatprep.subr.mxu0 0.0
        %1501 = vmatpush1.msra.mxu0 0.0
        %1502 = vmatprep.subr.mxu0 0.0
        %1503 = vmatpush1.msra.mxu0 0.0
        %1504 = vmatprep.subr.mxu0 0.0
        %1505 = vmatpush1.msra.mxu0 0.0
        %1506 = vmatprep.subr.mxu0 %v1458
        %1507 = vmatpush1.msra.mxu0 %v1457
        %1508 = vmatprep.subr.mxu0 %v1454
        %1509 = vmatpush1.msra.mxu0 %v1453
        %1510 = vmatprep.subr.mxu0 %v1450
        %1511 = vmatpush1.msra.mxu0 %v1449
        %1512 = vmatprep.subr.mxu0 %v1446
        %1513 = vmatpush1.msra.mxu0 %v1445
        %1514 = vmatprep.subr.mxu0 0.0
        %1515 = vmatpush2.msra.mxu0 0.0
        %1516 = vmatprep.subr.mxu0 0.0
        %1517 = vmatpush2.msra.mxu0 0.0
        %1518 = vmatprep.subr.mxu0 0.0
        %1519 = vmatpush2.msra.mxu0 0.0
        %1520 = vmatprep.subr.mxu0 0.0
        %1521 = vmatpush2.msra.mxu0 0.0
        %1522 = vmatprep.subr.mxu0 0.0
        %1523 = vmatpush2.msra.mxu0 0.0
        %1524 = vmatprep.subr.mxu0 0.0
        %1525 = vmatpush2.msra.mxu0 0.0
        %1526 = vmatprep.subr.mxu0 0.0
        %1527 = vmatpush2.msra.mxu0 0.0
        %1528 = vmatprep.subr.mxu0 0.0
        %1529 = vmatpush2.msra.mxu0 0.0
        %1530 = vmatprep.subr.mxu0 0.0
        %1531 = vmatpush2.msra.mxu0 0.0
        %1532 = vmatprep.subr.mxu0 0.0
        %1533 = vmatpush2.msra.mxu0 0.0
        %1534 = vmatprep.subr.mxu0 0.0
        %1535 = vmatpush2.msra.mxu0 0.0
        %1536 = vmatprep.subr.mxu0 0.0
        %1537 = vmatpush2.msra.mxu0 0.0
        %1538 = vmatprep.subr.mxu0 0.0
        %1539 = vmatpush2.msra.mxu0 0.0
        %1540 = vmatprep.subr.mxu0 0.0
        %1541 = vmatpush2.msra.mxu0 0.0
        %1542 = vmatprep.subr.mxu0 0.0
        %1543 = vmatpush2.msra.mxu0 0.0
        %1544 = vmatprep.subr.mxu0 0.0
        %1545 = vmatpush2.msra.mxu0 0.0
        %1546 = vmatprep.mubr.f32.mxu0 0.0
        %1547 = vmatmul.mubr.f32.gmra.mxu0 %v1474
        %v1548 = vpop.f32.mrf.mxu0
        %v1549 = vadd.f32 0.0, %v1548
        %v1550 = vpop.f32.mrf.mxu0
        %v1551 = vadd.f32 0.0, %v1550
        %1552 = vmatprep.mubr.f32.mxu0 0.0
        %1553 = vmatmul.mubr.f32.gmra.mxu0 %v1476
        %v1554 = vpop.f32.mrf.mxu0
        %v1555 = vadd.f32 0.0, %v1554
        %v1556 = vpop.f32.mrf.mxu0
        %v1557 = vadd.f32 0.0, %v1556
        %1558 = vmatprep.mubr.f32.mxu0 0.0
        %1559 = vmatmul.mubr.f32.gmra.mxu0 %v1478
        %v1560 = vpop.f32.mrf.mxu0
        %v1561 = vadd.f32 0.0, %v1560
        %v1562 = vpop.f32.mrf.mxu0
        %v1563 = vadd.f32 0.0, %v1562
        %1564 = vmatprep.mubr.f32.mxu0 0.0
        %1565 = vmatmul.mubr.f32.gmra.mxu0 %v1480
        %v1566 = vpop.f32.mrf.mxu0
        %v1567 = vadd.f32 0.0, %v1566
        %v1568 = vpop.f32.mrf.mxu0
        %v1569 = vadd.f32 0.0, %v1568
        %1570 = vdwg.mxu0
        %1571 = vmatprep.subr.mxu0 0.0
        %1572 = vmatpush1.msra.mxu0 0.0
        %1573 = vmatprep.subr.mxu0 0.0
        %1574 = vmatpush1.msra.mxu0 0.0
        %1575 = vmatprep.subr.mxu0 0.0
        %1576 = vmatpush1.msra.mxu0 0.0
        %1577 = vmatprep.subr.mxu0 0.0
        %1578 = vmatpush1.msra.mxu0 0.0
        %1579 = vmatprep.subr.mxu0 0.0
        %1580 = vmatpush1.msra.mxu0 0.0
        %1581 = vmatprep.subr.mxu0 0.0
        %1582 = vmatpush1.msra.mxu0 0.0
        %1583 = vmatprep.subr.mxu0 0.0
        %1584 = vmatpush1.msra.mxu0 0.0
        %1585 = vmatprep.subr.mxu0 0.0
        %1586 = vmatpush1.msra.mxu0 0.0
        %1587 = vmatprep.subr.mxu0 0.0
        %1588 = vmatpush1.msra.mxu0 0.0
        %1589 = vmatprep.subr.mxu0 0.0
        %1590 = vmatpush1.msra.mxu0 0.0
        %1591 = vmatprep.subr.mxu0 0.0
        %1592 = vmatpush1.msra.mxu0 0.0
        %1593 = vmatprep.subr.mxu0 0.0
        %1594 = vmatpush1.msra.mxu0 0.0
        %1595 = vmatprep.subr.mxu0 %v1460
        %1596 = vmatpush1.msra.mxu0 %v1459
        %1597 = vmatprep.subr.mxu0 %v1456
        %1598 = vmatpush1.msra.mxu0 %v1455
        %1599 = vmatprep.subr.mxu0 %v1452
        %1600 = vmatpush1.msra.mxu0 %v1451
        %1601 = vmatprep.subr.mxu0 %v1448
        %1602 = vmatpush1.msra.mxu0 %v1447
        %1603 = vmatprep.subr.mxu0 0.0
        %1604 = vmatpush2.msra.mxu0 0.0
        %1605 = vmatprep.subr.mxu0 0.0
        %1606 = vmatpush2.msra.mxu0 0.0
        %1607 = vmatprep.subr.mxu0 0.0
        %1608 = vmatpush2.msra.mxu0 0.0
        %1609 = vmatprep.subr.mxu0 0.0
        %1610 = vmatpush2.msra.mxu0 0.0
        %1611 = vmatprep.subr.mxu0 0.0
        %1612 = vmatpush2.msra.mxu0 0.0
        %1613 = vmatprep.subr.mxu0 0.0
        %1614 = vmatpush2.msra.mxu0 0.0
        %1615 = vmatprep.subr.mxu0 0.0
        %1616 = vmatpush2.msra.mxu0 0.0
        %1617 = vmatprep.subr.mxu0 0.0
        %1618 = vmatpush2.msra.mxu0 0.0
        %1619 = vmatprep.subr.mxu0 0.0
        %1620 = vmatpush2.msra.mxu0 0.0
        %1621 = vmatprep.subr.mxu0 0.0
        %1622 = vmatpush2.msra.mxu0 0.0
        %1623 = vmatprep.subr.mxu0 0.0
        %1624 = vmatpush2.msra.mxu0 0.0
        %1625 = vmatprep.subr.mxu0 0.0
        %1626 = vmatpush2.msra.mxu0 0.0
        %1627 = vmatprep.subr.mxu0 0.0
        %1628 = vmatpush2.msra.mxu0 0.0
        %1629 = vmatprep.subr.mxu0 0.0
        %1630 = vmatpush2.msra.mxu0 0.0
        %1631 = vmatprep.subr.mxu0 0.0
        %1632 = vmatpush2.msra.mxu0 0.0
        %1633 = vmatprep.subr.mxu0 0.0
        %1634 = vmatpush2.msra.mxu0 0.0
        %1635 = vmatprep.mubr.f32.mxu0 0.0
        %1636 = vmatmul.mubr.f32.gmra.mxu0 %v1474
        %v1637 = vpop.f32.mrf.mxu0
        %v1638 = vadd.f32 0.0, %v1637
        %v1639 = vpop.f32.mrf.mxu0
        %v1640 = vadd.f32 0.0, %v1639
        %1641 = vmatprep.mubr.f32.mxu0 0.0
        %1642 = vmatmul.mubr.f32.gmra.mxu0 %v1476
        %v1643 = vpop.f32.mrf.mxu0
        %v1644 = vadd.f32 0.0, %v1643
        %v1645 = vpop.f32.mrf.mxu0
        %v1646 = vadd.f32 0.0, %v1645
        %1647 = vmatprep.mubr.f32.mxu0 0.0
        %1648 = vmatmul.mubr.f32.gmra.mxu0 %v1478
        %v1649 = vpop.f32.mrf.mxu0
        %v1650 = vadd.f32 0.0, %v1649
        %v1651 = vpop.f32.mrf.mxu0
        %v1652 = vadd.f32 0.0, %v1651
        %1653 = vmatprep.mubr.f32.mxu0 0.0
        %1654 = vmatmul.mubr.f32.gmra.mxu0 %v1480
        %v1655 = vpop.f32.mrf.mxu0
        %v1656 = vadd.f32 0.0, %v1655
        %v1657 = vpop.f32.mrf.mxu0
        %v1658 = vadd.f32 0.0, %v1657
        %1659 = vdwg.mxu0
        %v1660 = vsel %vm1473, %v1317, 0
        %v1662 = vsel %vm1473, %v1320, 0
        %v1664 = vsel %vm1473, %v1323, 0
        %v1666 = vsel %vm1473, %v1326, 0
        %1668 = vmatprep.subr.mxu0 0.0
        %1669 = vmatpush1.msra.mxu0 0.0
        %1670 = vmatprep.subr.mxu0 0.0
        %1671 = vmatpush1.msra.mxu0 0.0
        %1672 = vmatprep.subr.mxu0 0.0
        %1673 = vmatpush1.msra.mxu0 0.0
        %1674 = vmatprep.subr.mxu0 0.0
        %1675 = vmatpush1.msra.mxu0 0.0
        %1676 = vmatprep.subr.mxu0 0.0
        %1677 = vmatpush1.msra.mxu0 0.0
        %1678 = vmatprep.subr.mxu0 0.0
        %1679 = vmatpush1.msra.mxu0 0.0
        %1680 = vmatprep.subr.mxu0 0.0
        %1681 = vmatpush1.msra.mxu0 0.0
        %1682 = vmatprep.subr.mxu0 0.0
        %1683 = vmatpush1.msra.mxu0 0.0
        %1684 = vmatprep.subr.mxu0 0.0
        %1685 = vmatpush1.msra.mxu0 0.0
        %1686 = vmatprep.subr.mxu0 0.0
        %1687 = vmatpush1.msra.mxu0 0.0
        %1688 = vmatprep.subr.mxu0 0.0
        %1689 = vmatpush1.msra.mxu0 0.0
        %1690 = vmatprep.subr.mxu0 0.0
        %1691 = vmatpush1.msra.mxu0 0.0
        %1692 = vmatprep.subr.mxu0 %v1394
        %1693 = vmatpush1.msra.mxu0 %v1393
        %1694 = vmatprep.subr.mxu0 %v1390
        %1695 = vmatpush1.msra.mxu0 %v1389
        %1696 = vmatprep.subr.mxu0 %v1386
        %1697 = vmatpush1.msra.mxu0 %v1385
        %1698 = vmatprep.subr.mxu0 %v1382
        %1699 = vmatpush1.msra.mxu0 %v1381
        %1700 = vmatprep.subr.mxu0 0.0
        %1701 = vmatpush2.msra.mxu0 0.0
        %1702 = vmatprep.subr.mxu0 0.0
        %1703 = vmatpush2.msra.mxu0 0.0
        %1704 = vmatprep.subr.mxu0 0.0
        %1705 = vmatpush2.msra.mxu0 0.0
        %1706 = vmatprep.subr.mxu0 0.0
        %1707 = vmatpush2.msra.mxu0 0.0
        %1708 = vmatprep.subr.mxu0 0.0
        %1709 = vmatpush2.msra.mxu0 0.0
        %1710 = vmatprep.subr.mxu0 0.0
        %1711 = vmatpush2.msra.mxu0 0.0
        %1712 = vmatprep.subr.mxu0 0.0
        %1713 = vmatpush2.msra.mxu0 0.0
        %1714 = vmatprep.subr.mxu0 0.0
        %1715 = vmatpush2.msra.mxu0 0.0
        %1716 = vmatprep.subr.mxu0 0.0
        %1717 = vmatpush2.msra.mxu0 0.0
        %1718 = vmatprep.subr.mxu0 0.0
        %1719 = vmatpush2.msra.mxu0 0.0
        %1720 = vmatprep.subr.mxu0 0.0
        %1721 = vmatpush2.msra.mxu0 0.0
        %1722 = vmatprep.subr.mxu0 0.0
        %1723 = vmatpush2.msra.mxu0 0.0
        %1724 = vmatprep.subr.mxu0 0.0
        %1725 = vmatpush2.msra.mxu0 0.0
        %1726 = vmatprep.subr.mxu0 0.0
        %1727 = vmatpush2.msra.mxu0 0.0
        %1728 = vmatprep.subr.mxu0 0.0
        %1729 = vmatpush2.msra.mxu0 0.0
        %1730 = vmatprep.subr.mxu0 0.0
        %1731 = vmatpush2.msra.mxu0 0.0
        %1732 = vmatprep.mubr.f32.mxu0 0.0
        %1733 = vmatmul.mubr.f32.gmra.mxu0 %v1660
        %v1734 = vpop.f32.mrf.mxu0
        %v1735 = vadd.f32 %v1549, %v1734
        %v1736 = vpop.f32.mrf.mxu0
        %v1737 = vadd.f32 %v1551, %v1736
        %1738 = vmatprep.mubr.f32.mxu0 0.0
        %1739 = vmatmul.mubr.f32.gmra.mxu0 %v1662
        %v1740 = vpop.f32.mrf.mxu0
        %v1741 = vadd.f32 %v1555, %v1740
        %v1742 = vpop.f32.mrf.mxu0
        %v1743 = vadd.f32 %v1557, %v1742
        %1744 = vmatprep.mubr.f32.mxu0 0.0
        %1745 = vmatmul.mubr.f32.gmra.mxu0 %v1664
        %v1746 = vpop.f32.mrf.mxu0
        %v1747 = vadd.f32 %v1561, %v1746
        %v1748 = vpop.f32.mrf.mxu0
        %v1749 = vadd.f32 %v1563, %v1748
        %1750 = vmatprep.mubr.f32.mxu0 0.0
        %1751 = vmatmul.mubr.f32.gmra.mxu0 %v1666
        %v1752 = vpop.f32.mrf.mxu0
        %v1753 = vadd.f32 %v1567, %v1752
        %v1754 = vpop.f32.mrf.mxu0
        %v1755 = vadd.f32 %v1569, %v1754
        %1756 = vdwg.mxu0
        %1757 = vmatprep.subr.mxu0 0.0
        %1758 = vmatpush1.msra.mxu0 0.0
        %1759 = vmatprep.subr.mxu0 0.0
        %1760 = vmatpush1.msra.mxu0 0.0
        %1761 = vmatprep.subr.mxu0 0.0
        %1762 = vmatpush1.msra.mxu0 0.0
        %1763 = vmatprep.subr.mxu0 0.0
        %1764 = vmatpush1.msra.mxu0 0.0
        %1765 = vmatprep.subr.mxu0 0.0
        %1766 = vmatpush1.msra.mxu0 0.0
        %1767 = vmatprep.subr.mxu0 0.0
        %1768 = vmatpush1.msra.mxu0 0.0
        %1769 = vmatprep.subr.mxu0 0.0
        %1770 = vmatpush1.msra.mxu0 0.0
        %1771 = vmatprep.subr.mxu0 0.0
        %1772 = vmatpush1.msra.mxu0 0.0
        %1773 = vmatprep.subr.mxu0 0.0
        %1774 = vmatpush1.msra.mxu0 0.0
        %1775 = vmatprep.subr.mxu0 0.0
        %1776 = vmatpush1.msra.mxu0 0.0
        %1777 = vmatprep.subr.mxu0 0.0
        %1778 = vmatpush1.msra.mxu0 0.0
        %1779 = vmatprep.subr.mxu0 0.0
        %1780 = vmatpush1.msra.mxu0 0.0
        %1781 = vmatprep.subr.mxu0 %v1396
        %1782 = vmatpush1.msra.mxu0 %v1395
        %1783 = vmatprep.subr.mxu0 %v1392
        %1784 = vmatpush1.msra.mxu0 %v1391
        %1785 = vmatprep.subr.mxu0 %v1388
        %1786 = vmatpush1.msra.mxu0 %v1387
        %1787 = vmatprep.subr.mxu0 %v1384
        %1788 = vmatpush1.msra.mxu0 %v1383
        %1789 = vmatprep.subr.mxu0 0.0
        %1790 = vmatpush2.msra.mxu0 0.0
        %1791 = vmatprep.subr.mxu0 0.0
        %1792 = vmatpush2.msra.mxu0 0.0
        %1793 = vmatprep.subr.mxu0 0.0
        %1794 = vmatpush2.msra.mxu0 0.0
        %1795 = vmatprep.subr.mxu0 0.0
        %1796 = vmatpush2.msra.mxu0 0.0
        %1797 = vmatprep.subr.mxu0 0.0
        %1798 = vmatpush2.msra.mxu0 0.0
        %1799 = vmatprep.subr.mxu0 0.0
        %1800 = vmatpush2.msra.mxu0 0.0
        %1801 = vmatprep.subr.mxu0 0.0
        %1802 = vmatpush2.msra.mxu0 0.0
        %1803 = vmatprep.subr.mxu0 0.0
        %1804 = vmatpush2.msra.mxu0 0.0
        %1805 = vmatprep.subr.mxu0 0.0
        %1806 = vmatpush2.msra.mxu0 0.0
        %1807 = vmatprep.subr.mxu0 0.0
        %1808 = vmatpush2.msra.mxu0 0.0
        %1809 = vmatprep.subr.mxu0 0.0
        %1810 = vmatpush2.msra.mxu0 0.0
        %1811 = vmatprep.subr.mxu0 0.0
        %1812 = vmatpush2.msra.mxu0 0.0
        %1813 = vmatprep.subr.mxu0 0.0
        %1814 = vmatpush2.msra.mxu0 0.0
        %1815 = vmatprep.subr.mxu0 0.0
        %1816 = vmatpush2.msra.mxu0 0.0
        %1817 = vmatprep.subr.mxu0 0.0
        %1818 = vmatpush2.msra.mxu0 0.0
        %1819 = vmatprep.subr.mxu0 0.0
        %1820 = vmatpush2.msra.mxu0 0.0
        %1821 = vmatprep.mubr.f32.mxu0 0.0
        %1822 = vmatmul.mubr.f32.gmra.mxu0 %v1660
        %v1823 = vpop.f32.mrf.mxu0
        %v1824 = vadd.f32 %v1638, %v1823
        %v1825 = vpop.f32.mrf.mxu0
        %v1826 = vadd.f32 %v1640, %v1825
        %1827 = vmatprep.mubr.f32.mxu0 0.0
        %1828 = vmatmul.mubr.f32.gmra.mxu0 %v1662
        %v1829 = vpop.f32.mrf.mxu0
        %v1830 = vadd.f32 %v1644, %v1829
        %v1831 = vpop.f32.mrf.mxu0
        %v1832 = vadd.f32 %v1646, %v1831
        %1833 = vmatprep.mubr.f32.mxu0 0.0
        %1834 = vmatmul.mubr.f32.gmra.mxu0 %v1664
        %v1835 = vpop.f32.mrf.mxu0
        %v1836 = vadd.f32 %v1650, %v1835
        %v1837 = vpop.f32.mrf.mxu0
        %v1838 = vadd.f32 %v1652, %v1837
        %1839 = vmatprep.mubr.f32.mxu0 0.0
        %1840 = vmatmul.mubr.f32.gmra.mxu0 %v1666
        %v1841 = vpop.f32.mrf.mxu0
        %v1842 = vadd.f32 %v1656, %v1841
        %v1843 = vpop.f32.mrf.mxu0
        %v1844 = vadd.f32 %v1658, %v1843
        %1845 = vdwg.mxu0
        %1846 = vrot.lane.b32.xlu0 %v1285, 15
        %v1847 = vpop.permute.xlu0 %1846
        %1848 = vrot.lane.b32.xlu0 %v1289, 15
        %v1849 = vpop.permute.xlu0 %1848
        %1850 = vrot.lane.b32.xlu0 %v1293, 15
        %v1851 = vpop.permute.xlu0 %1850
        %1852 = vrot.lane.b32.xlu0 %v1297, 15
        %v1853 = vpop.permute.xlu0 %1852
        %1854 = vrot.lane.b32.xlu0 %v1286, 15
        %v1855 = vpop.permute.xlu0 %1854
        %1856 = vrot.lane.b32.xlu0 %v1290, 15
        %v1857 = vpop.permute.xlu0 %1856
        %1858 = vrot.lane.b32.xlu0 %v1294, 15
        %v1859 = vpop.permute.xlu0 %1858
        %1860 = vrot.lane.b32.xlu0 %v1298, 15
        %v1861 = vpop.permute.xlu0 %1860
        %1862 = vrot.lane.b32.xlu0 %v1287, 15
        %v1863 = vpop.permute.xlu0 %1862
        %1864 = vrot.lane.b32.xlu0 %v1291, 15
        %v1865 = vpop.permute.xlu0 %1864
        %1866 = vrot.lane.b32.xlu0 %v1295, 15
        %v1867 = vpop.permute.xlu0 %1866
        %1868 = vrot.lane.b32.xlu0 %v1299, 15
        %v1869 = vpop.permute.xlu0 %1868
        %1870 = vrot.lane.b32.xlu0 %v1288, 15
        %v1871 = vpop.permute.xlu0 %1870
        %1872 = vrot.lane.b32.xlu0 %v1292, 15
        %v1873 = vpop.permute.xlu0 %1872
        %1874 = vrot.lane.b32.xlu0 %v1296, 15
        %v1875 = vpop.permute.xlu0 %1874
        %1876 = vrot.lane.b32.xlu0 %v1300, 15
        %v1877 = vpop.permute.xlu0 %1876
        %v1878 = vsel %vm735, %v1863, %v1871
        %v1879 = vsel %vm735, %v1865, %v1873
        %v1880 = vsel %vm735, %v1867, %v1875
        %v1881 = vsel %vm735, %v1869, %v1877
        %v1882 = vsel %vm735, %v1855, %v1863
        %v1883 = vsel %vm735, %v1857, %v1865
        %v1884 = vsel %vm735, %v1859, %v1867
        %v1885 = vsel %vm735, %v1861, %v1869
        %v1886 = vsel %vm735, %v1847, %v1855
        %v1887 = vsel %vm735, %v1849, %v1857
        %v1888 = vsel %vm735, %v1851, %v1859
        %v1889 = vsel %vm735, %v1853, %v1861
        %v1890 = vsel %vm735, %v1871, %v1847
        %v1891 = vsel %vm735, %v1873, %v1849
        %v1892 = vsel %vm735, %v1875, %v1851
        %v1893 = vsel %vm735, %v1877, %v1853
        %v1894 = vmul.f32 %v1890, %v744
        %v1895 = vmul.f32 %v1886, %v748
        %v1896 = vmul.f32 %v1882, %v752
        %v1897 = vmul.f32 %v1878, %v756
        %v1898 = vmul.f32 %v1891, %v744
        %v1899 = vmul.f32 %v1887, %v748
        %v1900 = vmul.f32 %v1883, %v752
        %v1901 = vmul.f32 %v1879, %v756
        %v1902 = vmul.f32 %v1892, %v744
        %v1903 = vmul.f32 %v1888, %v748
        %v1904 = vmul.f32 %v1884, %v752
        %v1905 = vmul.f32 %v1880, %v756
        %v1906 = vmul.f32 %v1893, %v744
        %v1907 = vmul.f32 %v1889, %v748
        %v1908 = vmul.f32 %v1885, %v752
        %v1909 = vmul.f32 %v1881, %v756
        %1910 = vrot.lane.b32.xlu0 %v1317, 64
        %v1911 = vpop.permute.xlu0 %1910
        %1912 = vrot.lane.b32.xlu0 %v1320, 64
        %v1913 = vpop.permute.xlu0 %1912
        %1914 = vrot.lane.b32.xlu0 %v1323, 64
        %v1915 = vpop.permute.xlu0 %1914
        %1916 = vrot.lane.b32.xlu0 %v1326, 64
        %v1917 = vpop.permute.xlu0 %1916
        %v1918 = vsel %vm1473, %v1911, 0
        %v1920 = vsel %vm1473, %v1913, 0
        %v1922 = vsel %vm1473, %v1915, 0
        %v1924 = vsel %vm1473, %v1917, 0
        %1926 = vmatprep.subr.mxu0 0.0
        %1927 = vmatpush1.msra.mxu0 0.0
        %1928 = vmatprep.subr.mxu0 0.0
        %1929 = vmatpush1.msra.mxu0 0.0
        %1930 = vmatprep.subr.mxu0 0.0
        %1931 = vmatpush1.msra.mxu0 0.0
        %1932 = vmatprep.subr.mxu0 0.0
        %1933 = vmatpush1.msra.mxu0 0.0
        %1934 = vmatprep.subr.mxu0 0.0
        %1935 = vmatpush1.msra.mxu0 0.0
        %1936 = vmatprep.subr.mxu0 0.0
        %1937 = vmatpush1.msra.mxu0 0.0
        %1938 = vmatprep.subr.mxu0 0.0
        %1939 = vmatpush1.msra.mxu0 0.0
        %1940 = vmatprep.subr.mxu0 0.0
        %1941 = vmatpush1.msra.mxu0 0.0
        %1942 = vmatprep.subr.mxu0 0.0
        %1943 = vmatpush1.msra.mxu0 0.0
        %1944 = vmatprep.subr.mxu0 0.0
        %1945 = vmatpush1.msra.mxu0 0.0
        %1946 = vmatprep.subr.mxu0 0.0
        %1947 = vmatpush1.msra.mxu0 0.0
        %1948 = vmatprep.subr.mxu0 0.0
        %1949 = vmatpush1.msra.mxu0 0.0
        %1950 = vmatprep.subr.mxu0 %v1907
        %1951 = vmatpush1.msra.mxu0 %v1906
        %1952 = vmatprep.subr.mxu0 %v1903
        %1953 = vmatpush1.msra.mxu0 %v1902
        %1954 = vmatprep.subr.mxu0 %v1899
        %1955 = vmatpush1.msra.mxu0 %v1898
        %1956 = vmatprep.subr.mxu0 %v1895
        %1957 = vmatpush1.msra.mxu0 %v1894
        %1958 = vmatprep.subr.mxu0 0.0
        %1959 = vmatpush2.msra.mxu0 0.0
        %1960 = vmatprep.subr.mxu0 0.0
        %1961 = vmatpush2.msra.mxu0 0.0
        %1962 = vmatprep.subr.mxu0 0.0
        %1963 = vmatpush2.msra.mxu0 0.0
        %1964 = vmatprep.subr.mxu0 0.0
        %1965 = vmatpush2.msra.mxu0 0.0
        %1966 = vmatprep.subr.mxu0 0.0
        %1967 = vmatpush2.msra.mxu0 0.0
        %1968 = vmatprep.subr.mxu0 0.0
        %1969 = vmatpush2.msra.mxu0 0.0
        %1970 = vmatprep.subr.mxu0 0.0
        %1971 = vmatpush2.msra.mxu0 0.0
        %1972 = vmatprep.subr.mxu0 0.0
        %1973 = vmatpush2.msra.mxu0 0.0
        %1974 = vmatprep.subr.mxu0 0.0
        %1975 = vmatpush2.msra.mxu0 0.0
        %1976 = vmatprep.subr.mxu0 0.0
        %1977 = vmatpush2.msra.mxu0 0.0
        %1978 = vmatprep.subr.mxu0 0.0
        %1979 = vmatpush2.msra.mxu0 0.0
        %1980 = vmatprep.subr.mxu0 0.0
        %1981 = vmatpush2.msra.mxu0 0.0
        %1982 = vmatprep.subr.mxu0 0.0
        %1983 = vmatpush2.msra.mxu0 0.0
        %1984 = vmatprep.subr.mxu0 0.0
        %1985 = vmatpush2.msra.mxu0 0.0
        %1986 = vmatprep.subr.mxu0 0.0
        %1987 = vmatpush2.msra.mxu0 0.0
        %1988 = vmatprep.subr.mxu0 0.0
        %1989 = vmatpush2.msra.mxu0 0.0
        %1990 = vmatprep.mubr.f32.mxu0 0.0
        %1991 = vmatmul.mubr.f32.gmra.mxu0 %v1918
        %v1992 = vpop.f32.mrf.mxu0
        %v1993 = vadd.f32 0.0, %v1992
        %v1994 = vpop.f32.mrf.mxu0
        %v1995 = vadd.f32 0.0, %v1994
        %1996 = vmatprep.mubr.f32.mxu0 0.0
        %1997 = vmatmul.mubr.f32.gmra.mxu0 %v1920
        %v1998 = vpop.f32.mrf.mxu0
        %v1999 = vadd.f32 0.0, %v1998
        %v2000 = vpop.f32.mrf.mxu0
        %v2001 = vadd.f32 0.0, %v2000
        %2002 = vmatprep.mubr.f32.mxu0 0.0
        %2003 = vmatmul.mubr.f32.gmra.mxu0 %v1922
        %v2004 = vpop.f32.mrf.mxu0
        %v2005 = vadd.f32 0.0, %v2004
        %v2006 = vpop.f32.mrf.mxu0
        %v2007 = vadd.f32 0.0, %v2006
        %2008 = vmatprep.mubr.f32.mxu0 0.0
        %2009 = vmatmul.mubr.f32.gmra.mxu0 %v1924
        %v2010 = vpop.f32.mrf.mxu0
        %v2011 = vadd.f32 0.0, %v2010
        %v2012 = vpop.f32.mrf.mxu0
        %v2013 = vadd.f32 0.0, %v2012
        %2014 = vdwg.mxu0
        %2015 = vmatprep.subr.mxu0 0.0
        %2016 = vmatpush1.msra.mxu0 0.0
        %2017 = vmatprep.subr.mxu0 0.0
        %2018 = vmatpush1.msra.mxu0 0.0
        %2019 = vmatprep.subr.mxu0 0.0
        %2020 = vmatpush1.msra.mxu0 0.0
        %2021 = vmatprep.subr.mxu0 0.0
        %2022 = vmatpush1.msra.mxu0 0.0
        %2023 = vmatprep.subr.mxu0 0.0
        %2024 = vmatpush1.msra.mxu0 0.0
        %2025 = vmatprep.subr.mxu0 0.0
        %2026 = vmatpush1.msra.mxu0 0.0
        %2027 = vmatprep.subr.mxu0 0.0
        %2028 = vmatpush1.msra.mxu0 0.0
        %2029 = vmatprep.subr.mxu0 0.0
        %2030 = vmatpush1.msra.mxu0 0.0
        %2031 = vmatprep.subr.mxu0 0.0
        %2032 = vmatpush1.msra.mxu0 0.0
        %2033 = vmatprep.subr.mxu0 0.0
        %2034 = vmatpush1.msra.mxu0 0.0
        %2035 = vmatprep.subr.mxu0 0.0
        %2036 = vmatpush1.msra.mxu0 0.0
        %2037 = vmatprep.subr.mxu0 0.0
        %2038 = vmatpush1.msra.mxu0 0.0
        %2039 = vmatprep.subr.mxu0 %v1909
        %2040 = vmatpush1.msra.mxu0 %v1908
        %2041 = vmatprep.subr.mxu0 %v1905
        %2042 = vmatpush1.msra.mxu0 %v1904
        %2043 = vmatprep.subr.mxu0 %v1901
        %2044 = vmatpush1.msra.mxu0 %v1900
        %2045 = vmatprep.subr.mxu0 %v1897
        %2046 = vmatpush1.msra.mxu0 %v1896
        %2047 = vmatprep.subr.mxu0 0.0
        %2048 = vmatpush2.msra.mxu0 0.0
        %2049 = vmatprep.subr.mxu0 0.0
        %2050 = vmatpush2.msra.mxu0 0.0
        %2051 = vmatprep.subr.mxu0 0.0
        %2052 = vmatpush2.msra.mxu0 0.0
        %2053 = vmatprep.subr.mxu0 0.0
        %2054 = vmatpush2.msra.mxu0 0.0
        %2055 = vmatprep.subr.mxu0 0.0
        %2056 = vmatpush2.msra.mxu0 0.0
        %2057 = vmatprep.subr.mxu0 0.0
        %2058 = vmatpush2.msra.mxu0 0.0
        %2059 = vmatprep.subr.mxu0 0.0
        %2060 = vmatpush2.msra.mxu0 0.0
        %2061 = vmatprep.subr.mxu0 0.0
        %2062 = vmatpush2.msra.mxu0 0.0
        %2063 = vmatprep.subr.mxu0 0.0
        %2064 = vmatpush2.msra.mxu0 0.0
        %2065 = vmatprep.subr.mxu0 0.0
        %2066 = vmatpush2.msra.mxu0 0.0
        %2067 = vmatprep.subr.mxu0 0.0
        %2068 = vmatpush2.msra.mxu0 0.0
        %2069 = vmatprep.subr.mxu0 0.0
        %2070 = vmatpush2.msra.mxu0 0.0
        %2071 = vmatprep.subr.mxu0 0.0
        %2072 = vmatpush2.msra.mxu0 0.0
        %2073 = vmatprep.subr.mxu0 0.0
        %2074 = vmatpush2.msra.mxu0 0.0
        %2075 = vmatprep.subr.mxu0 0.0
        %2076 = vmatpush2.msra.mxu0 0.0
        %2077 = vmatprep.subr.mxu0 0.0
        %2078 = vmatpush2.msra.mxu0 0.0
        %2079 = vmatprep.mubr.f32.mxu0 0.0
        %2080 = vmatmul.mubr.f32.gmra.mxu0 %v1918
        %v2081 = vpop.f32.mrf.mxu0
        %v2082 = vadd.f32 0.0, %v2081
        %v2083 = vpop.f32.mrf.mxu0
        %v2084 = vadd.f32 0.0, %v2083
        %2085 = vmatprep.mubr.f32.mxu0 0.0
        %2086 = vmatmul.mubr.f32.gmra.mxu0 %v1920
        %v2087 = vpop.f32.mrf.mxu0
        %v2088 = vadd.f32 0.0, %v2087
        %v2089 = vpop.f32.mrf.mxu0
        %v2090 = vadd.f32 0.0, %v2089
        %2091 = vmatprep.mubr.f32.mxu0 0.0
        %2092 = vmatmul.mubr.f32.gmra.mxu0 %v1922
        %v2093 = vpop.f32.mrf.mxu0
        %v2094 = vadd.f32 0.0, %v2093
        %v2095 = vpop.f32.mrf.mxu0
        %v2096 = vadd.f32 0.0, %v2095
        %2097 = vmatprep.mubr.f32.mxu0 0.0
        %2098 = vmatmul.mubr.f32.gmra.mxu0 %v1924
        %v2099 = vpop.f32.mrf.mxu0
        %v2100 = vadd.f32 0.0, %v2099
        %v2101 = vpop.f32.mrf.mxu0
        %v2102 = vadd.f32 0.0, %v2101
        %2103 = vdwg.mxu0
        %v2104 = vadd.f32 %v1735, %v1993
        %v2105 = vadd.f32 %v1737, %v1995
        %v2106 = vadd.f32 %v1824, %v2082
        %v2107 = vadd.f32 %v1826, %v2084
        %v2108 = vadd.f32 %v1741, %v1999
        %v2109 = vadd.f32 %v1743, %v2001
        %v2110 = vadd.f32 %v1830, %v2088
        %v2111 = vadd.f32 %v1832, %v2090
        %v2112 = vadd.f32 %v1747, %v2005
        %v2113 = vadd.f32 %v1749, %v2007
        %v2114 = vadd.f32 %v1836, %v2094
        %v2115 = vadd.f32 %v1838, %v2096
        %v2116 = vadd.f32 %v1753, %v2011
        %v2117 = vadd.f32 %v1755, %v2013
        %v2118 = vadd.f32 %v1842, %v2100
        %v2119 = vadd.f32 %v1844, %v2102
        %2120 = vrot.lane.b32.xlu0 %v1285, 1
        %v2121 = vpop.permute.xlu0 %2120
        %2122 = vrot.lane.b32.xlu0 %v1289, 1
        %v2123 = vpop.permute.xlu0 %2122
        %2124 = vrot.lane.b32.xlu0 %v1293, 1
        %v2125 = vpop.permute.xlu0 %2124
        %2126 = vrot.lane.b32.xlu0 %v1297, 1
        %v2127 = vpop.permute.xlu0 %2126
        %2128 = vrot.lane.b32.xlu0 %v1286, 1
        %v2129 = vpop.permute.xlu0 %2128
        %2130 = vrot.lane.b32.xlu0 %v1290, 1
        %v2131 = vpop.permute.xlu0 %2130
        %2132 = vrot.lane.b32.xlu0 %v1294, 1
        %v2133 = vpop.permute.xlu0 %2132
        %2134 = vrot.lane.b32.xlu0 %v1298, 1
        %v2135 = vpop.permute.xlu0 %2134
        %2136 = vrot.lane.b32.xlu0 %v1287, 1
        %v2137 = vpop.permute.xlu0 %2136
        %2138 = vrot.lane.b32.xlu0 %v1291, 1
        %v2139 = vpop.permute.xlu0 %2138
        %2140 = vrot.lane.b32.xlu0 %v1295, 1
        %v2141 = vpop.permute.xlu0 %2140
        %2142 = vrot.lane.b32.xlu0 %v1299, 1
        %v2143 = vpop.permute.xlu0 %2142
        %2144 = vrot.lane.b32.xlu0 %v1288, 1
        %v2145 = vpop.permute.xlu0 %2144
        %2146 = vrot.lane.b32.xlu0 %v1292, 1
        %v2147 = vpop.permute.xlu0 %2146
        %2148 = vrot.lane.b32.xlu0 %v1296, 1
        %v2149 = vpop.permute.xlu0 %2148
        %2150 = vrot.lane.b32.xlu0 %v1300, 1
        %v2151 = vpop.permute.xlu0 %2150
        %v2152 = vsel %vm773, %v2137, %v2145
        %v2153 = vsel %vm773, %v2139, %v2147
        %v2154 = vsel %vm773, %v2141, %v2149
        %v2155 = vsel %vm773, %v2143, %v2151
        %v2156 = vsel %vm773, %v2129, %v2137
        %v2157 = vsel %vm773, %v2131, %v2139
        %v2158 = vsel %vm773, %v2133, %v2141
        %v2159 = vsel %vm773, %v2135, %v2143
        %v2160 = vsel %vm773, %v2121, %v2129
        %v2161 = vsel %vm773, %v2123, %v2131
        %v2162 = vsel %vm773, %v2125, %v2133
        %v2163 = vsel %vm773, %v2127, %v2135
        %v2164 = vsel %vm773, %v2145, %v2121
        %v2165 = vsel %vm773, %v2147, %v2123
        %v2166 = vsel %vm773, %v2149, %v2125
        %v2167 = vsel %vm773, %v2151, %v2127
        %v2168 = vmul.f32 %v2164, %v782
        %v2169 = vmul.f32 %v2160, %v786
        %v2170 = vmul.f32 %v2156, %v790
        %v2171 = vmul.f32 %v2152, %v794
        %v2172 = vmul.f32 %v2165, %v782
        %v2173 = vmul.f32 %v2161, %v786
        %v2174 = vmul.f32 %v2157, %v790
        %v2175 = vmul.f32 %v2153, %v794
        %v2176 = vmul.f32 %v2166, %v782
        %v2177 = vmul.f32 %v2162, %v786
        %v2178 = vmul.f32 %v2158, %v790
        %v2179 = vmul.f32 %v2154, %v794
        %v2180 = vmul.f32 %v2167, %v782
        %v2181 = vmul.f32 %v2163, %v786
        %v2182 = vmul.f32 %v2159, %v790
        %v2183 = vmul.f32 %v2155, %v794
        %2184 = vrot.lane.b32.xlu0 %v1317, 32
        %v2185 = vpop.permute.xlu0 %2184
        %2186 = vrot.lane.b32.xlu0 %v1320, 32
        %v2187 = vpop.permute.xlu0 %2186
        %2188 = vrot.lane.b32.xlu0 %v1323, 32
        %v2189 = vpop.permute.xlu0 %2188
        %2190 = vrot.lane.b32.xlu0 %v1326, 32
        %v2191 = vpop.permute.xlu0 %2190
        %v2192 = vsel %vm1473, %v2185, 0
        %v2194 = vsel %vm1473, %v2187, 0
        %v2196 = vsel %vm1473, %v2189, 0
        %v2198 = vsel %vm1473, %v2191, 0
        %2200 = vmatprep.subr.mxu0 0.0
        %2201 = vmatpush1.msra.mxu0 0.0
        %2202 = vmatprep.subr.mxu0 0.0
        %2203 = vmatpush1.msra.mxu0 0.0
        %2204 = vmatprep.subr.mxu0 0.0
        %2205 = vmatpush1.msra.mxu0 0.0
        %2206 = vmatprep.subr.mxu0 0.0
        %2207 = vmatpush1.msra.mxu0 0.0
        %2208 = vmatprep.subr.mxu0 0.0
        %2209 = vmatpush1.msra.mxu0 0.0
        %2210 = vmatprep.subr.mxu0 0.0
        %2211 = vmatpush1.msra.mxu0 0.0
        %2212 = vmatprep.subr.mxu0 0.0
        %2213 = vmatpush1.msra.mxu0 0.0
        %2214 = vmatprep.subr.mxu0 0.0
        %2215 = vmatpush1.msra.mxu0 0.0
        %2216 = vmatprep.subr.mxu0 0.0
        %2217 = vmatpush1.msra.mxu0 0.0
        %2218 = vmatprep.subr.mxu0 0.0
        %2219 = vmatpush1.msra.mxu0 0.0
        %2220 = vmatprep.subr.mxu0 0.0
        %2221 = vmatpush1.msra.mxu0 0.0
        %2222 = vmatprep.subr.mxu0 0.0
        %2223 = vmatpush1.msra.mxu0 0.0
        %2224 = vmatprep.subr.mxu0 %v2181
        %2225 = vmatpush1.msra.mxu0 %v2180
        %2226 = vmatprep.subr.mxu0 %v2177
        %2227 = vmatpush1.msra.mxu0 %v2176
        %2228 = vmatprep.subr.mxu0 %v2173
        %2229 = vmatpush1.msra.mxu0 %v2172
        %2230 = vmatprep.subr.mxu0 %v2169
        %2231 = vmatpush1.msra.mxu0 %v2168
        %2232 = vmatprep.subr.mxu0 0.0
        %2233 = vmatpush2.msra.mxu0 0.0
        %2234 = vmatprep.subr.mxu0 0.0
        %2235 = vmatpush2.msra.mxu0 0.0
        %2236 = vmatprep.subr.mxu0 0.0
        %2237 = vmatpush2.msra.mxu0 0.0
        %2238 = vmatprep.subr.mxu0 0.0
        %2239 = vmatpush2.msra.mxu0 0.0
        %2240 = vmatprep.subr.mxu0 0.0
        %2241 = vmatpush2.msra.mxu0 0.0
        %2242 = vmatprep.subr.mxu0 0.0
        %2243 = vmatpush2.msra.mxu0 0.0
        %2244 = vmatprep.subr.mxu0 0.0
        %2245 = vmatpush2.msra.mxu0 0.0
        %2246 = vmatprep.subr.mxu0 0.0
        %2247 = vmatpush2.msra.mxu0 0.0
        %2248 = vmatprep.subr.mxu0 0.0
        %2249 = vmatpush2.msra.mxu0 0.0
        %2250 = vmatprep.subr.mxu0 0.0
        %2251 = vmatpush2.msra.mxu0 0.0
        %2252 = vmatprep.subr.mxu0 0.0
        %2253 = vmatpush2.msra.mxu0 0.0
        %2254 = vmatprep.subr.mxu0 0.0
        %2255 = vmatpush2.msra.mxu0 0.0
        %2256 = vmatprep.subr.mxu0 0.0
        %2257 = vmatpush2.msra.mxu0 0.0
        %2258 = vmatprep.subr.mxu0 0.0
        %2259 = vmatpush2.msra.mxu0 0.0
        %2260 = vmatprep.subr.mxu0 0.0
        %2261 = vmatpush2.msra.mxu0 0.0
        %2262 = vmatprep.subr.mxu0 0.0
        %2263 = vmatpush2.msra.mxu0 0.0
        %2264 = vmatprep.mubr.f32.mxu0 0.0
        %2265 = vmatmul.mubr.f32.gmra.mxu0 %v2192
        %v2266 = vpop.f32.mrf.mxu0
        %v2267 = vadd.f32 0.0, %v2266
        %v2268 = vpop.f32.mrf.mxu0
        %v2269 = vadd.f32 0.0, %v2268
        %2270 = vmatprep.mubr.f32.mxu0 0.0
        %2271 = vmatmul.mubr.f32.gmra.mxu0 %v2194
        %v2272 = vpop.f32.mrf.mxu0
        %v2273 = vadd.f32 0.0, %v2272
        %v2274 = vpop.f32.mrf.mxu0
        %v2275 = vadd.f32 0.0, %v2274
        %2276 = vmatprep.mubr.f32.mxu0 0.0
        %2277 = vmatmul.mubr.f32.gmra.mxu0 %v2196
        %v2278 = vpop.f32.mrf.mxu0
        %v2279 = vadd.f32 0.0, %v2278
        %v2280 = vpop.f32.mrf.mxu0
        %v2281 = vadd.f32 0.0, %v2280
        %2282 = vmatprep.mubr.f32.mxu0 0.0
        %2283 = vmatmul.mubr.f32.gmra.mxu0 %v2198
        %v2284 = vpop.f32.mrf.mxu0
        %v2285 = vadd.f32 0.0, %v2284
        %v2286 = vpop.f32.mrf.mxu0
        %v2287 = vadd.f32 0.0, %v2286
        %2288 = vdwg.mxu0
        %2289 = vmatprep.subr.mxu0 0.0
        %2290 = vmatpush1.msra.mxu0 0.0
        %2291 = vmatprep.subr.mxu0 0.0
        %2292 = vmatpush1.msra.mxu0 0.0
        %2293 = vmatprep.subr.mxu0 0.0
        %2294 = vmatpush1.msra.mxu0 0.0
        %2295 = vmatprep.subr.mxu0 0.0
        %2296 = vmatpush1.msra.mxu0 0.0
        %2297 = vmatprep.subr.mxu0 0.0
        %2298 = vmatpush1.msra.mxu0 0.0
        %2299 = vmatprep.subr.mxu0 0.0
        %2300 = vmatpush1.msra.mxu0 0.0
        %2301 = vmatprep.subr.mxu0 0.0
        %2302 = vmatpush1.msra.mxu0 0.0
        %2303 = vmatprep.subr.mxu0 0.0
        %2304 = vmatpush1.msra.mxu0 0.0
        %2305 = vmatprep.subr.mxu0 0.0
        %2306 = vmatpush1.msra.mxu0 0.0
        %2307 = vmatprep.subr.mxu0 0.0
        %2308 = vmatpush1.msra.mxu0 0.0
        %2309 = vmatprep.subr.mxu0 0.0
        %2310 = vmatpush1.msra.mxu0 0.0
        %2311 = vmatprep.subr.mxu0 0.0
        %2312 = vmatpush1.msra.mxu0 0.0
        %2313 = vmatprep.subr.mxu0 %v2183
        %2314 = vmatpush1.msra.mxu0 %v2182
        %2315 = vmatprep.subr.mxu0 %v2179
        %2316 = vmatpush1.msra.mxu0 %v2178
        %2317 = vmatprep.subr.mxu0 %v2175
        %2318 = vmatpush1.msra.mxu0 %v2174
        %2319 = vmatprep.subr.mxu0 %v2171
        %2320 = vmatpush1.msra.mxu0 %v2170
        %2321 = vmatprep.subr.mxu0 0.0
        %2322 = vmatpush2.msra.mxu0 0.0
        %2323 = vmatprep.subr.mxu0 0.0
        %2324 = vmatpush2.msra.mxu0 0.0
        %2325 = vmatprep.subr.mxu0 0.0
        %2326 = vmatpush2.msra.mxu0 0.0
        %2327 = vmatprep.subr.mxu0 0.0
        %2328 = vmatpush2.msra.mxu0 0.0
        %2329 = vmatprep.subr.mxu0 0.0
        %2330 = vmatpush2.msra.mxu0 0.0
        %2331 = vmatprep.subr.mxu0 0.0
        %2332 = vmatpush2.msra.mxu0 0.0
        %2333 = vmatprep.subr.mxu0 0.0
        %2334 = vmatpush2.msra.mxu0 0.0
        %2335 = vmatprep.subr.mxu0 0.0
        %2336 = vmatpush2.msra.mxu0 0.0
        %2337 = vmatprep.subr.mxu0 0.0
        %2338 = vmatpush2.msra.mxu0 0.0
        %2339 = vmatprep.subr.mxu0 0.0
        %2340 = vmatpush2.msra.mxu0 0.0
        %2341 = vmatprep.subr.mxu0 0.0
        %2342 = vmatpush2.msra.mxu0 0.0
        %2343 = vmatprep.subr.mxu0 0.0
        %2344 = vmatpush2.msra.mxu0 0.0
        %2345 = vmatprep.subr.mxu0 0.0
        %2346 = vmatpush2.msra.mxu0 0.0
        %2347 = vmatprep.subr.mxu0 0.0
        %2348 = vmatpush2.msra.mxu0 0.0
        %2349 = vmatprep.subr.mxu0 0.0
        %2350 = vmatpush2.msra.mxu0 0.0
        %2351 = vmatprep.subr.mxu0 0.0
        %2352 = vmatpush2.msra.mxu0 0.0
        %2353 = vmatprep.mubr.f32.mxu0 0.0
        %2354 = vmatmul.mubr.f32.gmra.mxu0 %v2192
        %v2355 = vpop.f32.mrf.mxu0
        %v2356 = vadd.f32 0.0, %v2355
        %v2357 = vpop.f32.mrf.mxu0
        %v2358 = vadd.f32 0.0, %v2357
        %2359 = vmatprep.mubr.f32.mxu0 0.0
        %2360 = vmatmul.mubr.f32.gmra.mxu0 %v2194
        %v2361 = vpop.f32.mrf.mxu0
        %v2362 = vadd.f32 0.0, %v2361
        %v2363 = vpop.f32.mrf.mxu0
        %v2364 = vadd.f32 0.0, %v2363
        %2365 = vmatprep.mubr.f32.mxu0 0.0
        %2366 = vmatmul.mubr.f32.gmra.mxu0 %v2196
        %v2367 = vpop.f32.mrf.mxu0
        %v2368 = vadd.f32 0.0, %v2367
        %v2369 = vpop.f32.mrf.mxu0
        %v2370 = vadd.f32 0.0, %v2369
        %2371 = vmatprep.mubr.f32.mxu0 0.0
        %2372 = vmatmul.mubr.f32.gmra.mxu0 %v2198
        %v2373 = vpop.f32.mrf.mxu0
        %v2374 = vadd.f32 0.0, %v2373
        %v2375 = vpop.f32.mrf.mxu0
        %v2376 = vadd.f32 0.0, %v2375
        %2377 = vdwg.mxu0
        %v2378 = vadd.f32 %v2104, %v2267
        %v2379 = vadd.f32 %v2105, %v2269
        %v2380 = vadd.f32 %v2106, %v2356
        %v2381 = vadd.f32 %v2107, %v2358
        %v2382 = vadd.f32 %v2108, %v2273
        %v2383 = vadd.f32 %v2109, %v2275
        %v2384 = vadd.f32 %v2110, %v2362
        %v2385 = vadd.f32 %v2111, %v2364
        %v2386 = vadd.f32 %v2112, %v2279
        %v2387 = vadd.f32 %v2113, %v2281
        %v2388 = vadd.f32 %v2114, %v2368
        %v2389 = vadd.f32 %v2115, %v2370
        %v2390 = vadd.f32 %v2116, %v2285
        %v2391 = vadd.f32 %v2117, %v2287
        %v2392 = vadd.f32 %v2118, %v2374
        %v2393 = vadd.f32 %v2119, %v2376
        %v2395 = vsel %vm1473, %v1318, 0
        %v2398 = vsel %vm1473, %v1321, 0
        %v2401 = vsel %vm1473, %v1324, 0
        %v2404 = vsel %vm1473, %v1327, 0
        %2406 = vmatprep.subr.mxu0 0.0
        %2407 = vmatpush1.msra.mxu0 0.0
        %2408 = vmatprep.subr.mxu0 0.0
        %2409 = vmatpush1.msra.mxu0 0.0
        %2410 = vmatprep.subr.mxu0 0.0
        %2411 = vmatpush1.msra.mxu0 0.0
        %2412 = vmatprep.subr.mxu0 0.0
        %2413 = vmatpush1.msra.mxu0 0.0
        %2414 = vmatprep.subr.mxu0 0.0
        %2415 = vmatpush1.msra.mxu0 0.0
        %2416 = vmatprep.subr.mxu0 0.0
        %2417 = vmatpush1.msra.mxu0 0.0
        %2418 = vmatprep.subr.mxu0 0.0
        %2419 = vmatpush1.msra.mxu0 0.0
        %2420 = vmatprep.subr.mxu0 0.0
        %2421 = vmatpush1.msra.mxu0 0.0
        %2422 = vmatprep.subr.mxu0 0.0
        %2423 = vmatpush1.msra.mxu0 0.0
        %2424 = vmatprep.subr.mxu0 0.0
        %2425 = vmatpush1.msra.mxu0 0.0
        %2426 = vmatprep.subr.mxu0 0.0
        %2427 = vmatpush1.msra.mxu0 0.0
        %2428 = vmatprep.subr.mxu0 0.0
        %2429 = vmatpush1.msra.mxu0 0.0
        %2430 = vmatprep.subr.mxu0 %v1298
        %2431 = vmatpush1.msra.mxu0 %v1297
        %2432 = vmatprep.subr.mxu0 %v1294
        %2433 = vmatpush1.msra.mxu0 %v1293
        %2434 = vmatprep.subr.mxu0 %v1290
        %2435 = vmatpush1.msra.mxu0 %v1289
        %2436 = vmatprep.subr.mxu0 %v1286
        %2437 = vmatpush1.msra.mxu0 %v1285
        %2438 = vmatprep.subr.mxu0 0.0
        %2439 = vmatpush2.msra.mxu0 0.0
        %2440 = vmatprep.subr.mxu0 0.0
        %2441 = vmatpush2.msra.mxu0 0.0
        %2442 = vmatprep.subr.mxu0 0.0
        %2443 = vmatpush2.msra.mxu0 0.0
        %2444 = vmatprep.subr.mxu0 0.0
        %2445 = vmatpush2.msra.mxu0 0.0
        %2446 = vmatprep.subr.mxu0 0.0
        %2447 = vmatpush2.msra.mxu0 0.0
        %2448 = vmatprep.subr.mxu0 0.0
        %2449 = vmatpush2.msra.mxu0 0.0
        %2450 = vmatprep.subr.mxu0 0.0
        %2451 = vmatpush2.msra.mxu0 0.0
        %2452 = vmatprep.subr.mxu0 0.0
        %2453 = vmatpush2.msra.mxu0 0.0
        %2454 = vmatprep.subr.mxu0 0.0
        %2455 = vmatpush2.msra.mxu0 0.0
        %2456 = vmatprep.subr.mxu0 0.0
        %2457 = vmatpush2.msra.mxu0 0.0
        %2458 = vmatprep.subr.mxu0 0.0
        %2459 = vmatpush2.msra.mxu0 0.0
        %2460 = vmatprep.subr.mxu0 0.0
        %2461 = vmatpush2.msra.mxu0 0.0
        %2462 = vmatprep.subr.mxu0 0.0
        %2463 = vmatpush2.msra.mxu0 0.0
        %2464 = vmatprep.subr.mxu0 0.0
        %2465 = vmatpush2.msra.mxu0 0.0
        %2466 = vmatprep.subr.mxu0 0.0
        %2467 = vmatpush2.msra.mxu0 0.0
        %2468 = vmatprep.subr.mxu0 0.0
        %2469 = vmatpush2.msra.mxu0 0.0
        %2470 = vmatprep.mubr.f32.mxu0 0.0
        %2471 = vmatmul.mubr.f32.gmra.mxu0 %v2395
        %v2472 = vpop.f32.mrf.mxu0
        %v2473 = vadd.f32 0.0, %v2472
        %v2474 = vpop.f32.mrf.mxu0
        %v2475 = vadd.f32 0.0, %v2474
        %2476 = vmatprep.mubr.f32.mxu0 0.0
        %2477 = vmatmul.mubr.f32.gmra.mxu0 %v2398
        %v2478 = vpop.f32.mrf.mxu0
        %v2479 = vadd.f32 0.0, %v2478
        %v2480 = vpop.f32.mrf.mxu0
        %v2481 = vadd.f32 0.0, %v2480
        %2482 = vmatprep.mubr.f32.mxu0 0.0
        %2483 = vmatmul.mubr.f32.gmra.mxu0 %v2401
        %v2484 = vpop.f32.mrf.mxu0
        %v2485 = vadd.f32 0.0, %v2484
        %v2486 = vpop.f32.mrf.mxu0
        %v2487 = vadd.f32 0.0, %v2486
        %2488 = vmatprep.mubr.f32.mxu0 0.0
        %2489 = vmatmul.mubr.f32.gmra.mxu0 %v2404
        %v2490 = vpop.f32.mrf.mxu0
        %v2491 = vadd.f32 0.0, %v2490
        %v2492 = vpop.f32.mrf.mxu0
        %v2493 = vadd.f32 0.0, %v2492
        %2494 = vdwg.mxu0
        %2495 = vmatprep.subr.mxu0 0.0
        %2496 = vmatpush1.msra.mxu0 0.0
        %2497 = vmatprep.subr.mxu0 0.0
        %2498 = vmatpush1.msra.mxu0 0.0
        %2499 = vmatprep.subr.mxu0 0.0
        %2500 = vmatpush1.msra.mxu0 0.0
        %2501 = vmatprep.subr.mxu0 0.0
        %2502 = vmatpush1.msra.mxu0 0.0
        %2503 = vmatprep.subr.mxu0 0.0
        %2504 = vmatpush1.msra.mxu0 0.0
        %2505 = vmatprep.subr.mxu0 0.0
        %2506 = vmatpush1.msra.mxu0 0.0
        %2507 = vmatprep.subr.mxu0 0.0
        %2508 = vmatpush1.msra.mxu0 0.0
        %2509 = vmatprep.subr.mxu0 0.0
        %2510 = vmatpush1.msra.mxu0 0.0
        %2511 = vmatprep.subr.mxu0 0.0
        %2512 = vmatpush1.msra.mxu0 0.0
        %2513 = vmatprep.subr.mxu0 0.0
        %2514 = vmatpush1.msra.mxu0 0.0
        %2515 = vmatprep.subr.mxu0 0.0
        %2516 = vmatpush1.msra.mxu0 0.0
        %2517 = vmatprep.subr.mxu0 0.0
        %2518 = vmatpush1.msra.mxu0 0.0
        %2519 = vmatprep.subr.mxu0 %v1300
        %2520 = vmatpush1.msra.mxu0 %v1299
        %2521 = vmatprep.subr.mxu0 %v1296
        %2522 = vmatpush1.msra.mxu0 %v1295
        %2523 = vmatprep.subr.mxu0 %v1292
        %2524 = vmatpush1.msra.mxu0 %v1291
        %2525 = vmatprep.subr.mxu0 %v1288
        %2526 = vmatpush1.msra.mxu0 %v1287
        %2527 = vmatprep.subr.mxu0 0.0
        %2528 = vmatpush2.msra.mxu0 0.0
        %2529 = vmatprep.subr.mxu0 0.0
        %2530 = vmatpush2.msra.mxu0 0.0
        %2531 = vmatprep.subr.mxu0 0.0
        %2532 = vmatpush2.msra.mxu0 0.0
        %2533 = vmatprep.subr.mxu0 0.0
        %2534 = vmatpush2.msra.mxu0 0.0
        %2535 = vmatprep.subr.mxu0 0.0
        %2536 = vmatpush2.msra.mxu0 0.0
        %2537 = vmatprep.subr.mxu0 0.0
        %2538 = vmatpush2.msra.mxu0 0.0
        %2539 = vmatprep.subr.mxu0 0.0
        %2540 = vmatpush2.msra.mxu0 0.0
        %2541 = vmatprep.subr.mxu0 0.0
        %2542 = vmatpush2.msra.mxu0 0.0
        %2543 = vmatprep.subr.mxu0 0.0
        %2544 = vmatpush2.msra.mxu0 0.0
        %2545 = vmatprep.subr.mxu0 0.0
        %2546 = vmatpush2.msra.mxu0 0.0
        %2547 = vmatprep.subr.mxu0 0.0
        %2548 = vmatpush2.msra.mxu0 0.0
        %2549 = vmatprep.subr.mxu0 0.0
        %2550 = vmatpush2.msra.mxu0 0.0
        %2551 = vmatprep.subr.mxu0 0.0
        %2552 = vmatpush2.msra.mxu0 0.0
        %2553 = vmatprep.subr.mxu0 0.0
        %2554 = vmatpush2.msra.mxu0 0.0
        %2555 = vmatprep.subr.mxu0 0.0
        %2556 = vmatpush2.msra.mxu0 0.0
        %2557 = vmatprep.subr.mxu0 0.0
        %2558 = vmatpush2.msra.mxu0 0.0
        %2559 = vmatprep.mubr.f32.mxu0 0.0
        %2560 = vmatmul.mubr.f32.gmra.mxu0 %v2395
        %v2561 = vpop.f32.mrf.mxu0
        %v2562 = vadd.f32 0.0, %v2561
        %v2563 = vpop.f32.mrf.mxu0
        %v2564 = vadd.f32 0.0, %v2563
        %2565 = vmatprep.mubr.f32.mxu0 0.0
        %2566 = vmatmul.mubr.f32.gmra.mxu0 %v2398
        %v2567 = vpop.f32.mrf.mxu0
        %v2568 = vadd.f32 0.0, %v2567
        %v2569 = vpop.f32.mrf.mxu0
        %v2570 = vadd.f32 0.0, %v2569
        %2571 = vmatprep.mubr.f32.mxu0 0.0
        %2572 = vmatmul.mubr.f32.gmra.mxu0 %v2401
        %v2573 = vpop.f32.mrf.mxu0
        %v2574 = vadd.f32 0.0, %v2573
        %v2575 = vpop.f32.mrf.mxu0
        %v2576 = vadd.f32 0.0, %v2575
        %2577 = vmatprep.mubr.f32.mxu0 0.0
        %2578 = vmatmul.mubr.f32.gmra.mxu0 %v2404
        %v2579 = vpop.f32.mrf.mxu0
        %v2580 = vadd.f32 0.0, %v2579
        %v2581 = vpop.f32.mrf.mxu0
        %v2582 = vadd.f32 0.0, %v2581
        %2583 = vdwg.mxu0
        %v2584 = vadd.f32 %v2378, %v2473
        %v2585 = vadd.f32 %v2379, %v2475
        %v2586 = vadd.f32 %v2380, %v2562
        %v2587 = vadd.f32 %v2381, %v2564
        %v2588 = vadd.f32 %v2382, %v2479
        %v2589 = vadd.f32 %v2383, %v2481
        %v2590 = vadd.f32 %v2384, %v2568
        %v2591 = vadd.f32 %v2385, %v2570
        %v2592 = vadd.f32 %v2386, %v2485
        %v2593 = vadd.f32 %v2387, %v2487
        %v2594 = vadd.f32 %v2388, %v2574
        %v2595 = vadd.f32 %v2389, %v2576
        %v2596 = vadd.f32 %v2390, %v2491
        %v2597 = vadd.f32 %v2391, %v2493
        %v2598 = vadd.f32 %v2392, %v2580
        %v2599 = vadd.f32 %v2393, %v2582
        %2600 = vrot.lane.b32.xlu0 %v1285, 127
        %v2601 = vpop.permute.xlu0 %2600
        %2602 = vrot.lane.b32.xlu0 %v1289, 127
        %v2603 = vpop.permute.xlu0 %2602
        %2604 = vrot.lane.b32.xlu0 %v1293, 127
        %v2605 = vpop.permute.xlu0 %2604
        %2606 = vrot.lane.b32.xlu0 %v1297, 127
        %v2607 = vpop.permute.xlu0 %2606
        %2608 = vrot.lane.b32.xlu0 %v1286, 127
        %v2609 = vpop.permute.xlu0 %2608
        %2610 = vrot.lane.b32.xlu0 %v1290, 127
        %v2611 = vpop.permute.xlu0 %2610
        %2612 = vrot.lane.b32.xlu0 %v1294, 127
        %v2613 = vpop.permute.xlu0 %2612
        %2614 = vrot.lane.b32.xlu0 %v1298, 127
        %v2615 = vpop.permute.xlu0 %2614
        %2616 = vrot.lane.b32.xlu0 %v1287, 127
        %v2617 = vpop.permute.xlu0 %2616
        %2618 = vrot.lane.b32.xlu0 %v1291, 127
        %v2619 = vpop.permute.xlu0 %2618
        %2620 = vrot.lane.b32.xlu0 %v1295, 127
        %v2621 = vpop.permute.xlu0 %2620
        %2622 = vrot.lane.b32.xlu0 %v1299, 127
        %v2623 = vpop.permute.xlu0 %2622
        %2624 = vrot.lane.b32.xlu0 %v1288, 127
        %v2625 = vpop.permute.xlu0 %2624
        %2626 = vrot.lane.b32.xlu0 %v1292, 127
        %v2627 = vpop.permute.xlu0 %2626
        %2628 = vrot.lane.b32.xlu0 %v1296, 127
        %v2629 = vpop.permute.xlu0 %2628
        %2630 = vrot.lane.b32.xlu0 %v1300, 127
        %v2631 = vpop.permute.xlu0 %2630
        %v2632 = vsel %vm811, %v2617, %v2625
        %v2633 = vsel %vm811, %v2619, %v2627
        %v2634 = vsel %vm811, %v2621, %v2629
        %v2635 = vsel %vm811, %v2623, %v2631
        %v2636 = vsel %vm811, %v2609, %v2617
        %v2637 = vsel %vm811, %v2611, %v2619
        %v2638 = vsel %vm811, %v2613, %v2621
        %v2639 = vsel %vm811, %v2615, %v2623
        %v2640 = vsel %vm811, %v2601, %v2609
        %v2641 = vsel %vm811, %v2603, %v2611
        %v2642 = vsel %vm811, %v2605, %v2613
        %v2643 = vsel %vm811, %v2607, %v2615
        %v2644 = vsel %vm811, %v2625, %v2601
        %v2645 = vsel %vm811, %v2627, %v2603
        %v2646 = vsel %vm811, %v2629, %v2605
        %v2647 = vsel %vm811, %v2631, %v2607
        %v2648 = vmul.f32 %v2640, %v820
        %v2649 = vmul.f32 %v2636, %v824
        %v2650 = vmul.f32 %v2632, %v828
        %v2651 = vmul.f32 %v2644, %v832
        %v2652 = vmul.f32 %v2641, %v820
        %v2653 = vmul.f32 %v2637, %v824
        %v2654 = vmul.f32 %v2633, %v828
        %v2655 = vmul.f32 %v2645, %v832
        %v2656 = vmul.f32 %v2642, %v820
        %v2657 = vmul.f32 %v2638, %v824
        %v2658 = vmul.f32 %v2634, %v828
        %v2659 = vmul.f32 %v2646, %v832
        %v2660 = vmul.f32 %v2643, %v820
        %v2661 = vmul.f32 %v2639, %v824
        %v2662 = vmul.f32 %v2635, %v828
        %v2663 = vmul.f32 %v2647, %v832
        %2664 = vrot.lane.b32.xlu0 %v1318, 96
        %v2665 = vpop.permute.xlu0 %2664
        %2666 = vrot.lane.b32.xlu0 %v1321, 96
        %v2667 = vpop.permute.xlu0 %2666
        %2668 = vrot.lane.b32.xlu0 %v1324, 96
        %v2669 = vpop.permute.xlu0 %2668
        %2670 = vrot.lane.b32.xlu0 %v1327, 96
        %v2671 = vpop.permute.xlu0 %2670
        %v2672 = vsel %vm1473, %v2665, 0
        %v2674 = vsel %vm1473, %v2667, 0
        %v2676 = vsel %vm1473, %v2669, 0
        %v2678 = vsel %vm1473, %v2671, 0
        %2680 = vmatprep.subr.mxu0 0.0
        %2681 = vmatpush1.msra.mxu0 0.0
        %2682 = vmatprep.subr.mxu0 0.0
        %2683 = vmatpush1.msra.mxu0 0.0
        %2684 = vmatprep.subr.mxu0 0.0
        %2685 = vmatpush1.msra.mxu0 0.0
        %2686 = vmatprep.subr.mxu0 0.0
        %2687 = vmatpush1.msra.mxu0 0.0
        %2688 = vmatprep.subr.mxu0 0.0
        %2689 = vmatpush1.msra.mxu0 0.0
        %2690 = vmatprep.subr.mxu0 0.0
        %2691 = vmatpush1.msra.mxu0 0.0
        %2692 = vmatprep.subr.mxu0 0.0
        %2693 = vmatpush1.msra.mxu0 0.0
        %2694 = vmatprep.subr.mxu0 0.0
        %2695 = vmatpush1.msra.mxu0 0.0
        %2696 = vmatprep.subr.mxu0 0.0
        %2697 = vmatpush1.msra.mxu0 0.0
        %2698 = vmatprep.subr.mxu0 0.0
        %2699 = vmatpush1.msra.mxu0 0.0
        %2700 = vmatprep.subr.mxu0 0.0
        %2701 = vmatpush1.msra.mxu0 0.0
        %2702 = vmatprep.subr.mxu0 0.0
        %2703 = vmatpush1.msra.mxu0 0.0
        %2704 = vmatprep.subr.mxu0 %v2661
        %2705 = vmatpush1.msra.mxu0 %v2660
        %2706 = vmatprep.subr.mxu0 %v2657
        %2707 = vmatpush1.msra.mxu0 %v2656
        %2708 = vmatprep.subr.mxu0 %v2653
        %2709 = vmatpush1.msra.mxu0 %v2652
        %2710 = vmatprep.subr.mxu0 %v2649
        %2711 = vmatpush1.msra.mxu0 %v2648
        %2712 = vmatprep.subr.mxu0 0.0
        %2713 = vmatpush2.msra.mxu0 0.0
        %2714 = vmatprep.subr.mxu0 0.0
        %2715 = vmatpush2.msra.mxu0 0.0
        %2716 = vmatprep.subr.mxu0 0.0
        %2717 = vmatpush2.msra.mxu0 0.0
        %2718 = vmatprep.subr.mxu0 0.0
        %2719 = vmatpush2.msra.mxu0 0.0
        %2720 = vmatprep.subr.mxu0 0.0
        %2721 = vmatpush2.msra.mxu0 0.0
        %2722 = vmatprep.subr.mxu0 0.0
        %2723 = vmatpush2.msra.mxu0 0.0
        %2724 = vmatprep.subr.mxu0 0.0
        %2725 = vmatpush2.msra.mxu0 0.0
        %2726 = vmatprep.subr.mxu0 0.0
        %2727 = vmatpush2.msra.mxu0 0.0
        %2728 = vmatprep.subr.mxu0 0.0
        %2729 = vmatpush2.msra.mxu0 0.0
        %2730 = vmatprep.subr.mxu0 0.0
        %2731 = vmatpush2.msra.mxu0 0.0
        %2732 = vmatprep.subr.mxu0 0.0
        %2733 = vmatpush2.msra.mxu0 0.0
        %2734 = vmatprep.subr.mxu0 0.0
        %2735 = vmatpush2.msra.mxu0 0.0
        %2736 = vmatprep.subr.mxu0 0.0
        %2737 = vmatpush2.msra.mxu0 0.0
        %2738 = vmatprep.subr.mxu0 0.0
        %2739 = vmatpush2.msra.mxu0 0.0
        %2740 = vmatprep.subr.mxu0 0.0
        %2741 = vmatpush2.msra.mxu0 0.0
        %2742 = vmatprep.subr.mxu0 0.0
        %2743 = vmatpush2.msra.mxu0 0.0
        %2744 = vmatprep.mubr.f32.mxu0 0.0
        %2745 = vmatmul.mubr.f32.gmra.mxu0 %v2672
        %v2746 = vpop.f32.mrf.mxu0
        %v2747 = vadd.f32 0.0, %v2746
        %v2748 = vpop.f32.mrf.mxu0
        %v2749 = vadd.f32 0.0, %v2748
        %2750 = vmatprep.mubr.f32.mxu0 0.0
        %2751 = vmatmul.mubr.f32.gmra.mxu0 %v2674
        %v2752 = vpop.f32.mrf.mxu0
        %v2753 = vadd.f32 0.0, %v2752
        %v2754 = vpop.f32.mrf.mxu0
        %v2755 = vadd.f32 0.0, %v2754
        %2756 = vmatprep.mubr.f32.mxu0 0.0
        %2757 = vmatmul.mubr.f32.gmra.mxu0 %v2676
        %v2758 = vpop.f32.mrf.mxu0
        %v2759 = vadd.f32 0.0, %v2758
        %v2760 = vpop.f32.mrf.mxu0
        %v2761 = vadd.f32 0.0, %v2760
        %2762 = vmatprep.mubr.f32.mxu0 0.0
        %2763 = vmatmul.mubr.f32.gmra.mxu0 %v2678
        %v2764 = vpop.f32.mrf.mxu0
        %v2765 = vadd.f32 0.0, %v2764
        %v2766 = vpop.f32.mrf.mxu0
        %v2767 = vadd.f32 0.0, %v2766
        %2768 = vdwg.mxu0
        %2769 = vmatprep.subr.mxu0 0.0
        %2770 = vmatpush1.msra.mxu0 0.0
        %2771 = vmatprep.subr.mxu0 0.0
        %2772 = vmatpush1.msra.mxu0 0.0
        %2773 = vmatprep.subr.mxu0 0.0
        %2774 = vmatpush1.msra.mxu0 0.0
        %2775 = vmatprep.subr.mxu0 0.0
        %2776 = vmatpush1.msra.mxu0 0.0
        %2777 = vmatprep.subr.mxu0 0.0
        %2778 = vmatpush1.msra.mxu0 0.0
        %2779 = vmatprep.subr.mxu0 0.0
        %2780 = vmatpush1.msra.mxu0 0.0
        %2781 = vmatprep.subr.mxu0 0.0
        %2782 = vmatpush1.msra.mxu0 0.0
        %2783 = vmatprep.subr.mxu0 0.0
        %2784 = vmatpush1.msra.mxu0 0.0
        %2785 = vmatprep.subr.mxu0 0.0
        %2786 = vmatpush1.msra.mxu0 0.0
        %2787 = vmatprep.subr.mxu0 0.0
        %2788 = vmatpush1.msra.mxu0 0.0
        %2789 = vmatprep.subr.mxu0 0.0
        %2790 = vmatpush1.msra.mxu0 0.0
        %2791 = vmatprep.subr.mxu0 0.0
        %2792 = vmatpush1.msra.mxu0 0.0
        %2793 = vmatprep.subr.mxu0 %v2663
        %2794 = vmatpush1.msra.mxu0 %v2662
        %2795 = vmatprep.subr.mxu0 %v2659
        %2796 = vmatpush1.msra.mxu0 %v2658
        %2797 = vmatprep.subr.mxu0 %v2655
        %2798 = vmatpush1.msra.mxu0 %v2654
        %2799 = vmatprep.subr.mxu0 %v2651
        %2800 = vmatpush1.msra.mxu0 %v2650
        %2801 = vmatprep.subr.mxu0 0.0
        %2802 = vmatpush2.msra.mxu0 0.0
        %2803 = vmatprep.subr.mxu0 0.0
        %2804 = vmatpush2.msra.mxu0 0.0
        %2805 = vmatprep.subr.mxu0 0.0
        %2806 = vmatpush2.msra.mxu0 0.0
        %2807 = vmatprep.subr.mxu0 0.0
        %2808 = vmatpush2.msra.mxu0 0.0
        %2809 = vmatprep.subr.mxu0 0.0
        %2810 = vmatpush2.msra.mxu0 0.0
        %2811 = vmatprep.subr.mxu0 0.0
        %2812 = vmatpush2.msra.mxu0 0.0
        %2813 = vmatprep.subr.mxu0 0.0
        %2814 = vmatpush2.msra.mxu0 0.0
        %2815 = vmatprep.subr.mxu0 0.0
        %2816 = vmatpush2.msra.mxu0 0.0
        %2817 = vmatprep.subr.mxu0 0.0
        %2818 = vmatpush2.msra.mxu0 0.0
        %2819 = vmatprep.subr.mxu0 0.0
        %2820 = vmatpush2.msra.mxu0 0.0
        %2821 = vmatprep.subr.mxu0 0.0
        %2822 = vmatpush2.msra.mxu0 0.0
        %2823 = vmatprep.subr.mxu0 0.0
        %2824 = vmatpush2.msra.mxu0 0.0
        %2825 = vmatprep.subr.mxu0 0.0
        %2826 = vmatpush2.msra.mxu0 0.0
        %2827 = vmatprep.subr.mxu0 0.0
        %2828 = vmatpush2.msra.mxu0 0.0
        %2829 = vmatprep.subr.mxu0 0.0
        %2830 = vmatpush2.msra.mxu0 0.0
        %2831 = vmatprep.subr.mxu0 0.0
        %2832 = vmatpush2.msra.mxu0 0.0
        %2833 = vmatprep.mubr.f32.mxu0 0.0
        %2834 = vmatmul.mubr.f32.gmra.mxu0 %v2672
        %v2835 = vpop.f32.mrf.mxu0
        %v2836 = vadd.f32 0.0, %v2835
        %v2837 = vpop.f32.mrf.mxu0
        %v2838 = vadd.f32 0.0, %v2837
        %2839 = vmatprep.mubr.f32.mxu0 0.0
        %2840 = vmatmul.mubr.f32.gmra.mxu0 %v2674
        %v2841 = vpop.f32.mrf.mxu0
        %v2842 = vadd.f32 0.0, %v2841
        %v2843 = vpop.f32.mrf.mxu0
        %v2844 = vadd.f32 0.0, %v2843
        %2845 = vmatprep.mubr.f32.mxu0 0.0
        %2846 = vmatmul.mubr.f32.gmra.mxu0 %v2676
        %v2847 = vpop.f32.mrf.mxu0
        %v2848 = vadd.f32 0.0, %v2847
        %v2849 = vpop.f32.mrf.mxu0
        %v2850 = vadd.f32 0.0, %v2849
        %2851 = vmatprep.mubr.f32.mxu0 0.0
        %2852 = vmatmul.mubr.f32.gmra.mxu0 %v2678
        %v2853 = vpop.f32.mrf.mxu0
        %v2854 = vadd.f32 0.0, %v2853
        %v2855 = vpop.f32.mrf.mxu0
        %v2856 = vadd.f32 0.0, %v2855
        %2857 = vdwg.mxu0
        %v2858 = vadd.f32 %v2584, %v2747
        %v2859 = vadd.f32 %v2585, %v2749
        %v2860 = vadd.f32 %v2586, %v2836
        %v2861 = vadd.f32 %v2587, %v2838
        %v2862 = vadd.f32 %v2588, %v2753
        %v2863 = vadd.f32 %v2589, %v2755
        %v2864 = vadd.f32 %v2590, %v2842
        %v2865 = vadd.f32 %v2591, %v2844
        %v2866 = vadd.f32 %v2592, %v2759
        %v2867 = vadd.f32 %v2593, %v2761
        %v2868 = vadd.f32 %v2594, %v2848
        %v2869 = vadd.f32 %v2595, %v2850
        %v2870 = vadd.f32 %v2596, %v2765
        %v2871 = vadd.f32 %v2597, %v2767
        %v2872 = vadd.f32 %v2598, %v2854
        %v2873 = vadd.f32 %v2599, %v2856
        %2874 = vrot.lane.b32.xlu0 %v1285, 113
        %v2875 = vpop.permute.xlu0 %2874
        %2876 = vrot.lane.b32.xlu0 %v1289, 113
        %v2877 = vpop.permute.xlu0 %2876
        %2878 = vrot.lane.b32.xlu0 %v1293, 113
        %v2879 = vpop.permute.xlu0 %2878
        %2880 = vrot.lane.b32.xlu0 %v1297, 113
        %v2881 = vpop.permute.xlu0 %2880
        %2882 = vrot.lane.b32.xlu0 %v1286, 113
        %v2883 = vpop.permute.xlu0 %2882
        %2884 = vrot.lane.b32.xlu0 %v1290, 113
        %v2885 = vpop.permute.xlu0 %2884
        %2886 = vrot.lane.b32.xlu0 %v1294, 113
        %v2887 = vpop.permute.xlu0 %2886
        %2888 = vrot.lane.b32.xlu0 %v1298, 113
        %v2889 = vpop.permute.xlu0 %2888
        %2890 = vrot.lane.b32.xlu0 %v1287, 113
        %v2891 = vpop.permute.xlu0 %2890
        %2892 = vrot.lane.b32.xlu0 %v1291, 113
        %v2893 = vpop.permute.xlu0 %2892
        %2894 = vrot.lane.b32.xlu0 %v1295, 113
        %v2895 = vpop.permute.xlu0 %2894
        %2896 = vrot.lane.b32.xlu0 %v1299, 113
        %v2897 = vpop.permute.xlu0 %2896
        %2898 = vrot.lane.b32.xlu0 %v1288, 113
        %v2899 = vpop.permute.xlu0 %2898
        %2900 = vrot.lane.b32.xlu0 %v1292, 113
        %v2901 = vpop.permute.xlu0 %2900
        %2902 = vrot.lane.b32.xlu0 %v1296, 113
        %v2903 = vpop.permute.xlu0 %2902
        %2904 = vrot.lane.b32.xlu0 %v1300, 113
        %v2905 = vpop.permute.xlu0 %2904
        %v2906 = vsel %vm849, %v2891, %v2899
        %v2907 = vsel %vm849, %v2893, %v2901
        %v2908 = vsel %vm849, %v2895, %v2903
        %v2909 = vsel %vm849, %v2897, %v2905
        %v2910 = vsel %vm849, %v2883, %v2891
        %v2911 = vsel %vm849, %v2885, %v2893
        %v2912 = vsel %vm849, %v2887, %v2895
        %v2913 = vsel %vm849, %v2889, %v2897
        %v2914 = vsel %vm849, %v2875, %v2883
        %v2915 = vsel %vm849, %v2877, %v2885
        %v2916 = vsel %vm849, %v2879, %v2887
        %v2917 = vsel %vm849, %v2881, %v2889
        %v2918 = vsel %vm849, %v2899, %v2875
        %v2919 = vsel %vm849, %v2901, %v2877
        %v2920 = vsel %vm849, %v2903, %v2879
        %v2921 = vsel %vm849, %v2905, %v2881
        %v2922 = vmul.f32 %v2914, %v858
        %v2923 = vmul.f32 %v2910, %v862
        %v2924 = vmul.f32 %v2906, %v866
        %v2925 = vmul.f32 %v2918, %v870
        %v2926 = vmul.f32 %v2915, %v858
        %v2927 = vmul.f32 %v2911, %v862
        %v2928 = vmul.f32 %v2907, %v866
        %v2929 = vmul.f32 %v2919, %v870
        %v2930 = vmul.f32 %v2916, %v858
        %v2931 = vmul.f32 %v2912, %v862
        %v2932 = vmul.f32 %v2908, %v866
        %v2933 = vmul.f32 %v2920, %v870
        %v2934 = vmul.f32 %v2917, %v858
        %v2935 = vmul.f32 %v2913, %v862
        %v2936 = vmul.f32 %v2909, %v866
        %v2937 = vmul.f32 %v2921, %v870
        %2938 = vrot.lane.b32.xlu0 %v1318, 64
        %v2939 = vpop.permute.xlu0 %2938
        %2940 = vrot.lane.b32.xlu0 %v1321, 64
        %v2941 = vpop.permute.xlu0 %2940
        %2942 = vrot.lane.b32.xlu0 %v1324, 64
        %v2943 = vpop.permute.xlu0 %2942
        %2944 = vrot.lane.b32.xlu0 %v1327, 64
        %v2945 = vpop.permute.xlu0 %2944
        %v2946 = vsel %vm1473, %v2939, 0
        %v2948 = vsel %vm1473, %v2941, 0
        %v2950 = vsel %vm1473, %v2943, 0
        %v2952 = vsel %vm1473, %v2945, 0
        %2954 = vmatprep.subr.mxu0 0.0
        %2955 = vmatpush1.msra.mxu0 0.0
        %2956 = vmatprep.subr.mxu0 0.0
        %2957 = vmatpush1.msra.mxu0 0.0
        %2958 = vmatprep.subr.mxu0 0.0
        %2959 = vmatpush1.msra.mxu0 0.0
        %2960 = vmatprep.subr.mxu0 0.0
        %2961 = vmatpush1.msra.mxu0 0.0
        %2962 = vmatprep.subr.mxu0 0.0
        %2963 = vmatpush1.msra.mxu0 0.0
        %2964 = vmatprep.subr.mxu0 0.0
        %2965 = vmatpush1.msra.mxu0 0.0
        %2966 = vmatprep.subr.mxu0 0.0
        %2967 = vmatpush1.msra.mxu0 0.0
        %2968 = vmatprep.subr.mxu0 0.0
        %2969 = vmatpush1.msra.mxu0 0.0
        %2970 = vmatprep.subr.mxu0 0.0
        %2971 = vmatpush1.msra.mxu0 0.0
        %2972 = vmatprep.subr.mxu0 0.0
        %2973 = vmatpush1.msra.mxu0 0.0
        %2974 = vmatprep.subr.mxu0 0.0
        %2975 = vmatpush1.msra.mxu0 0.0
        %2976 = vmatprep.subr.mxu0 0.0
        %2977 = vmatpush1.msra.mxu0 0.0
        %2978 = vmatprep.subr.mxu0 %v2935
        %2979 = vmatpush1.msra.mxu0 %v2934
        %2980 = vmatprep.subr.mxu0 %v2931
        %2981 = vmatpush1.msra.mxu0 %v2930
        %2982 = vmatprep.subr.mxu0 %v2927
        %2983 = vmatpush1.msra.mxu0 %v2926
        %2984 = vmatprep.subr.mxu0 %v2923
        %2985 = vmatpush1.msra.mxu0 %v2922
        %2986 = vmatprep.subr.mxu0 0.0
        %2987 = vmatpush2.msra.mxu0 0.0
        %2988 = vmatprep.subr.mxu0 0.0
        %2989 = vmatpush2.msra.mxu0 0.0
        %2990 = vmatprep.subr.mxu0 0.0
        %2991 = vmatpush2.msra.mxu0 0.0
        %2992 = vmatprep.subr.mxu0 0.0
        %2993 = vmatpush2.msra.mxu0 0.0
        %2994 = vmatprep.subr.mxu0 0.0
        %2995 = vmatpush2.msra.mxu0 0.0
        %2996 = vmatprep.subr.mxu0 0.0
        %2997 = vmatpush2.msra.mxu0 0.0
        %2998 = vmatprep.subr.mxu0 0.0
        %2999 = vmatpush2.msra.mxu0 0.0
        %3000 = vmatprep.subr.mxu0 0.0
        %3001 = vmatpush2.msra.mxu0 0.0
        %3002 = vmatprep.subr.mxu0 0.0
        %3003 = vmatpush2.msra.mxu0 0.0
        %3004 = vmatprep.subr.mxu0 0.0
        %3005 = vmatpush2.msra.mxu0 0.0
        %3006 = vmatprep.subr.mxu0 0.0
        %3007 = vmatpush2.msra.mxu0 0.0
        %3008 = vmatprep.subr.mxu0 0.0
        %3009 = vmatpush2.msra.mxu0 0.0
        %3010 = vmatprep.subr.mxu0 0.0
        %3011 = vmatpush2.msra.mxu0 0.0
        %3012 = vmatprep.subr.mxu0 0.0
        %3013 = vmatpush2.msra.mxu0 0.0
        %3014 = vmatprep.subr.mxu0 0.0
        %3015 = vmatpush2.msra.mxu0 0.0
        %3016 = vmatprep.subr.mxu0 0.0
        %3017 = vmatpush2.msra.mxu0 0.0
        %3018 = vmatprep.mubr.f32.mxu0 0.0
        %3019 = vmatmul.mubr.f32.gmra.mxu0 %v2946
        %v3020 = vpop.f32.mrf.mxu0
        %v3021 = vadd.f32 0.0, %v3020
        %v3022 = vpop.f32.mrf.mxu0
        %v3023 = vadd.f32 0.0, %v3022
        %3024 = vmatprep.mubr.f32.mxu0 0.0
        %3025 = vmatmul.mubr.f32.gmra.mxu0 %v2948
        %v3026 = vpop.f32.mrf.mxu0
        %v3027 = vadd.f32 0.0, %v3026
        %v3028 = vpop.f32.mrf.mxu0
        %v3029 = vadd.f32 0.0, %v3028
        %3030 = vmatprep.mubr.f32.mxu0 0.0
        %3031 = vmatmul.mubr.f32.gmra.mxu0 %v2950
        %v3032 = vpop.f32.mrf.mxu0
        %v3033 = vadd.f32 0.0, %v3032
        %v3034 = vpop.f32.mrf.mxu0
        %v3035 = vadd.f32 0.0, %v3034
        %3036 = vmatprep.mubr.f32.mxu0 0.0
        %3037 = vmatmul.mubr.f32.gmra.mxu0 %v2952
        %v3038 = vpop.f32.mrf.mxu0
        %v3039 = vadd.f32 0.0, %v3038
        %v3040 = vpop.f32.mrf.mxu0
        %v3041 = vadd.f32 0.0, %v3040
        %3042 = vdwg.mxu0
        %3043 = vmatprep.subr.mxu0 0.0
        %3044 = vmatpush1.msra.mxu0 0.0
        %3045 = vmatprep.subr.mxu0 0.0
        %3046 = vmatpush1.msra.mxu0 0.0
        %3047 = vmatprep.subr.mxu0 0.0
        %3048 = vmatpush1.msra.mxu0 0.0
        %3049 = vmatprep.subr.mxu0 0.0
        %3050 = vmatpush1.msra.mxu0 0.0
        %3051 = vmatprep.subr.mxu0 0.0
        %3052 = vmatpush1.msra.mxu0 0.0
        %3053 = vmatprep.subr.mxu0 0.0
        %3054 = vmatpush1.msra.mxu0 0.0
        %3055 = vmatprep.subr.mxu0 0.0
        %3056 = vmatpush1.msra.mxu0 0.0
        %3057 = vmatprep.subr.mxu0 0.0
        %3058 = vmatpush1.msra.mxu0 0.0
        %3059 = vmatprep.subr.mxu0 0.0
        %3060 = vmatpush1.msra.mxu0 0.0
        %3061 = vmatprep.subr.mxu0 0.0
        %3062 = vmatpush1.msra.mxu0 0.0
        %3063 = vmatprep.subr.mxu0 0.0
        %3064 = vmatpush1.msra.mxu0 0.0
        %3065 = vmatprep.subr.mxu0 0.0
        %3066 = vmatpush1.msra.mxu0 0.0
        %3067 = vmatprep.subr.mxu0 %v2937
        %3068 = vmatpush1.msra.mxu0 %v2936
        %3069 = vmatprep.subr.mxu0 %v2933
        %3070 = vmatpush1.msra.mxu0 %v2932
        %3071 = vmatprep.subr.mxu0 %v2929
        %3072 = vmatpush1.msra.mxu0 %v2928
        %3073 = vmatprep.subr.mxu0 %v2925
        %3074 = vmatpush1.msra.mxu0 %v2924
        %3075 = vmatprep.subr.mxu0 0.0
        %3076 = vmatpush2.msra.mxu0 0.0
        %3077 = vmatprep.subr.mxu0 0.0
        %3078 = vmatpush2.msra.mxu0 0.0
        %3079 = vmatprep.subr.mxu0 0.0
        %3080 = vmatpush2.msra.mxu0 0.0
        %3081 = vmatprep.subr.mxu0 0.0
        %3082 = vmatpush2.msra.mxu0 0.0
        %3083 = vmatprep.subr.mxu0 0.0
        %3084 = vmatpush2.msra.mxu0 0.0
        %3085 = vmatprep.subr.mxu0 0.0
        %3086 = vmatpush2.msra.mxu0 0.0
        %3087 = vmatprep.subr.mxu0 0.0
        %3088 = vmatpush2.msra.mxu0 0.0
        %3089 = vmatprep.subr.mxu0 0.0
        %3090 = vmatpush2.msra.mxu0 0.0
        %3091 = vmatprep.subr.mxu0 0.0
        %3092 = vmatpush2.msra.mxu0 0.0
        %3093 = vmatprep.subr.mxu0 0.0
        %3094 = vmatpush2.msra.mxu0 0.0
        %3095 = vmatprep.subr.mxu0 0.0
        %3096 = vmatpush2.msra.mxu0 0.0
        %3097 = vmatprep.subr.mxu0 0.0
        %3098 = vmatpush2.msra.mxu0 0.0
        %3099 = vmatprep.subr.mxu0 0.0
        %3100 = vmatpush2.msra.mxu0 0.0
        %3101 = vmatprep.subr.mxu0 0.0
        %3102 = vmatpush2.msra.mxu0 0.0
        %3103 = vmatprep.subr.mxu0 0.0
        %3104 = vmatpush2.msra.mxu0 0.0
        %3105 = vmatprep.subr.mxu0 0.0
        %3106 = vmatpush2.msra.mxu0 0.0
        %3107 = vmatprep.mubr.f32.mxu0 0.0
        %3108 = vmatmul.mubr.f32.gmra.mxu0 %v2946
        %v3109 = vpop.f32.mrf.mxu0
        %v3110 = vadd.f32 0.0, %v3109
        %v3111 = vpop.f32.mrf.mxu0
        %v3112 = vadd.f32 0.0, %v3111
        %3113 = vmatprep.mubr.f32.mxu0 0.0
        %3114 = vmatmul.mubr.f32.gmra.mxu0 %v2948
        %v3115 = vpop.f32.mrf.mxu0
        %v3116 = vadd.f32 0.0, %v3115
        %v3117 = vpop.f32.mrf.mxu0
        %v3118 = vadd.f32 0.0, %v3117
        %3119 = vmatprep.mubr.f32.mxu0 0.0
        %3120 = vmatmul.mubr.f32.gmra.mxu0 %v2950
        %v3121 = vpop.f32.mrf.mxu0
        %v3122 = vadd.f32 0.0, %v3121
        %v3123 = vpop.f32.mrf.mxu0
        %v3124 = vadd.f32 0.0, %v3123
        %3125 = vmatprep.mubr.f32.mxu0 0.0
        %3126 = vmatmul.mubr.f32.gmra.mxu0 %v2952
        %v3127 = vpop.f32.mrf.mxu0
        %v3128 = vadd.f32 0.0, %v3127
        %v3129 = vpop.f32.mrf.mxu0
        %v3130 = vadd.f32 0.0, %v3129
        %3131 = vdwg.mxu0
        %v3132 = vadd.f32 %v2858, %v3021
        %v3133 = vadd.f32 %v2859, %v3023
        %v3134 = vadd.f32 %v2860, %v3110
        %v3135 = vadd.f32 %v2861, %v3112
        %v3136 = vadd.f32 %v2862, %v3027
        %v3137 = vadd.f32 %v2863, %v3029
        %v3138 = vadd.f32 %v2864, %v3116
        %v3139 = vadd.f32 %v2865, %v3118
        %v3140 = vadd.f32 %v2866, %v3033
        %v3141 = vadd.f32 %v2867, %v3035
        %v3142 = vadd.f32 %v2868, %v3122
        %v3143 = vadd.f32 %v2869, %v3124
        %v3144 = vadd.f32 %v2870, %v3039
        %v3145 = vadd.f32 %v2871, %v3041
        %v3146 = vadd.f32 %v2872, %v3128
        %v3147 = vadd.f32 %v2873, %v3130
        %3148 = vrot.lane.b32.xlu0 %v1285, 112
        %v3149 = vpop.permute.xlu0 %3148
        %3150 = vrot.lane.b32.xlu0 %v1289, 112
        %v3151 = vpop.permute.xlu0 %3150
        %3152 = vrot.lane.b32.xlu0 %v1293, 112
        %v3153 = vpop.permute.xlu0 %3152
        %3154 = vrot.lane.b32.xlu0 %v1297, 112
        %v3155 = vpop.permute.xlu0 %3154
        %3156 = vrot.lane.b32.xlu0 %v1286, 112
        %v3157 = vpop.permute.xlu0 %3156
        %3158 = vrot.lane.b32.xlu0 %v1290, 112
        %v3159 = vpop.permute.xlu0 %3158
        %3160 = vrot.lane.b32.xlu0 %v1294, 112
        %v3161 = vpop.permute.xlu0 %3160
        %3162 = vrot.lane.b32.xlu0 %v1298, 112
        %v3163 = vpop.permute.xlu0 %3162
        %3164 = vrot.lane.b32.xlu0 %v1287, 112
        %v3165 = vpop.permute.xlu0 %3164
        %3166 = vrot.lane.b32.xlu0 %v1291, 112
        %v3167 = vpop.permute.xlu0 %3166
        %3168 = vrot.lane.b32.xlu0 %v1295, 112
        %v3169 = vpop.permute.xlu0 %3168
        %3170 = vrot.lane.b32.xlu0 %v1299, 112
        %v3171 = vpop.permute.xlu0 %3170
        %3172 = vrot.lane.b32.xlu0 %v1288, 112
        %v3173 = vpop.permute.xlu0 %3172
        %3174 = vrot.lane.b32.xlu0 %v1292, 112
        %v3175 = vpop.permute.xlu0 %3174
        %3176 = vrot.lane.b32.xlu0 %v1296, 112
        %v3177 = vpop.permute.xlu0 %3176
        %3178 = vrot.lane.b32.xlu0 %v1300, 112
        %v3179 = vpop.permute.xlu0 %3178
        %v3180 = vsel %vm887, %v3165, %v3173
        %v3181 = vsel %vm887, %v3167, %v3175
        %v3182 = vsel %vm887, %v3169, %v3177
        %v3183 = vsel %vm887, %v3171, %v3179
        %v3184 = vsel %vm887, %v3157, %v3165
        %v3185 = vsel %vm887, %v3159, %v3167
        %v3186 = vsel %vm887, %v3161, %v3169
        %v3187 = vsel %vm887, %v3163, %v3171
        %v3188 = vsel %vm887, %v3149, %v3157
        %v3189 = vsel %vm887, %v3151, %v3159
        %v3190 = vsel %vm887, %v3153, %v3161
        %v3191 = vsel %vm887, %v3155, %v3163
        %v3192 = vsel %vm887, %v3173, %v3149
        %v3193 = vsel %vm887, %v3175, %v3151
        %v3194 = vsel %vm887, %v3177, %v3153
        %v3195 = vsel %vm887, %v3179, %v3155
        %v3196 = vmul.f32 %v3188, %v896
        %v3197 = vmul.f32 %v3184, %v900
        %v3198 = vmul.f32 %v3180, %v904
        %v3199 = vmul.f32 %v3192, %v908
        %v3200 = vmul.f32 %v3189, %v896
        %v3201 = vmul.f32 %v3185, %v900
        %v3202 = vmul.f32 %v3181, %v904
        %v3203 = vmul.f32 %v3193, %v908
        %v3204 = vmul.f32 %v3190, %v896
        %v3205 = vmul.f32 %v3186, %v900
        %v3206 = vmul.f32 %v3182, %v904
        %v3207 = vmul.f32 %v3194, %v908
        %v3208 = vmul.f32 %v3191, %v896
        %v3209 = vmul.f32 %v3187, %v900
        %v3210 = vmul.f32 %v3183, %v904
        %v3211 = vmul.f32 %v3195, %v908
        %3212 = vrot.lane.b32.xlu0 %v1318, 32
        %v3213 = vpop.permute.xlu0 %3212
        %3214 = vrot.lane.b32.xlu0 %v1321, 32
        %v3215 = vpop.permute.xlu0 %3214
        %3216 = vrot.lane.b32.xlu0 %v1324, 32
        %v3217 = vpop.permute.xlu0 %3216
        %3218 = vrot.lane.b32.xlu0 %v1327, 32
        %v3219 = vpop.permute.xlu0 %3218
        %v3220 = vsel %vm1473, %v3213, 0
        %v3222 = vsel %vm1473, %v3215, 0
        %v3224 = vsel %vm1473, %v3217, 0
        %v3226 = vsel %vm1473, %v3219, 0
        %3228 = vmatprep.subr.mxu0 0.0
        %3229 = vmatpush1.msra.mxu0 0.0
        %3230 = vmatprep.subr.mxu0 0.0
        %3231 = vmatpush1.msra.mxu0 0.0
        %3232 = vmatprep.subr.mxu0 0.0
        %3233 = vmatpush1.msra.mxu0 0.0
        %3234 = vmatprep.subr.mxu0 0.0
        %3235 = vmatpush1.msra.mxu0 0.0
        %3236 = vmatprep.subr.mxu0 0.0
        %3237 = vmatpush1.msra.mxu0 0.0
        %3238 = vmatprep.subr.mxu0 0.0
        %3239 = vmatpush1.msra.mxu0 0.0
        %3240 = vmatprep.subr.mxu0 0.0
        %3241 = vmatpush1.msra.mxu0 0.0
        %3242 = vmatprep.subr.mxu0 0.0
        %3243 = vmatpush1.msra.mxu0 0.0
        %3244 = vmatprep.subr.mxu0 0.0
        %3245 = vmatpush1.msra.mxu0 0.0
        %3246 = vmatprep.subr.mxu0 0.0
        %3247 = vmatpush1.msra.mxu0 0.0
        %3248 = vmatprep.subr.mxu0 0.0
        %3249 = vmatpush1.msra.mxu0 0.0
        %3250 = vmatprep.subr.mxu0 0.0
        %3251 = vmatpush1.msra.mxu0 0.0
        %3252 = vmatprep.subr.mxu0 %v3209
        %3253 = vmatpush1.msra.mxu0 %v3208
        %3254 = vmatprep.subr.mxu0 %v3205
        %3255 = vmatpush1.msra.mxu0 %v3204
        %3256 = vmatprep.subr.mxu0 %v3201
        %3257 = vmatpush1.msra.mxu0 %v3200
        %3258 = vmatprep.subr.mxu0 %v3197
        %3259 = vmatpush1.msra.mxu0 %v3196
        %3260 = vmatprep.subr.mxu0 0.0
        %3261 = vmatpush2.msra.mxu0 0.0
        %3262 = vmatprep.subr.mxu0 0.0
        %3263 = vmatpush2.msra.mxu0 0.0
        %3264 = vmatprep.subr.mxu0 0.0
        %3265 = vmatpush2.msra.mxu0 0.0
        %3266 = vmatprep.subr.mxu0 0.0
        %3267 = vmatpush2.msra.mxu0 0.0
        %3268 = vmatprep.subr.mxu0 0.0
        %3269 = vmatpush2.msra.mxu0 0.0
        %3270 = vmatprep.subr.mxu0 0.0
        %3271 = vmatpush2.msra.mxu0 0.0
        %3272 = vmatprep.subr.mxu0 0.0
        %3273 = vmatpush2.msra.mxu0 0.0
        %3274 = vmatprep.subr.mxu0 0.0
        %3275 = vmatpush2.msra.mxu0 0.0
        %3276 = vmatprep.subr.mxu0 0.0
        %3277 = vmatpush2.msra.mxu0 0.0
        %3278 = vmatprep.subr.mxu0 0.0
        %3279 = vmatpush2.msra.mxu0 0.0
        %3280 = vmatprep.subr.mxu0 0.0
        %3281 = vmatpush2.msra.mxu0 0.0
        %3282 = vmatprep.subr.mxu0 0.0
        %3283 = vmatpush2.msra.mxu0 0.0
        %3284 = vmatprep.subr.mxu0 0.0
        %3285 = vmatpush2.msra.mxu0 0.0
        %3286 = vmatprep.subr.mxu0 0.0
        %3287 = vmatpush2.msra.mxu0 0.0
        %3288 = vmatprep.subr.mxu0 0.0
        %3289 = vmatpush2.msra.mxu0 0.0
        %3290 = vmatprep.subr.mxu0 0.0
        %3291 = vmatpush2.msra.mxu0 0.0
        %3292 = vmatprep.mubr.f32.mxu0 0.0
        %3293 = vmatmul.mubr.f32.gmra.mxu0 %v3220
        %v3294 = vpop.f32.mrf.mxu0
        %v3295 = vadd.f32 0.0, %v3294
        %v3296 = vpop.f32.mrf.mxu0
        %v3297 = vadd.f32 0.0, %v3296
        %3298 = vmatprep.mubr.f32.mxu0 0.0
        %3299 = vmatmul.mubr.f32.gmra.mxu0 %v3222
        %v3300 = vpop.f32.mrf.mxu0
        %v3301 = vadd.f32 0.0, %v3300
        %v3302 = vpop.f32.mrf.mxu0
        %v3303 = vadd.f32 0.0, %v3302
        %3304 = vmatprep.mubr.f32.mxu0 0.0
        %3305 = vmatmul.mubr.f32.gmra.mxu0 %v3224
        %v3306 = vpop.f32.mrf.mxu0
        %v3307 = vadd.f32 0.0, %v3306
        %v3308 = vpop.f32.mrf.mxu0
        %v3309 = vadd.f32 0.0, %v3308
        %3310 = vmatprep.mubr.f32.mxu0 0.0
        %3311 = vmatmul.mubr.f32.gmra.mxu0 %v3226
        %v3312 = vpop.f32.mrf.mxu0
        %v3313 = vadd.f32 0.0, %v3312
        %v3314 = vpop.f32.mrf.mxu0
        %v3315 = vadd.f32 0.0, %v3314
        %3316 = vdwg.mxu0
        %3317 = vmatprep.subr.mxu0 0.0
        %3318 = vmatpush1.msra.mxu0 0.0
        %3319 = vmatprep.subr.mxu0 0.0
        %3320 = vmatpush1.msra.mxu0 0.0
        %3321 = vmatprep.subr.mxu0 0.0
        %3322 = vmatpush1.msra.mxu0 0.0
        %3323 = vmatprep.subr.mxu0 0.0
        %3324 = vmatpush1.msra.mxu0 0.0
        %3325 = vmatprep.subr.mxu0 0.0
        %3326 = vmatpush1.msra.mxu0 0.0
        %3327 = vmatprep.subr.mxu0 0.0
        %3328 = vmatpush1.msra.mxu0 0.0
        %3329 = vmatprep.subr.mxu0 0.0
        %3330 = vmatpush1.msra.mxu0 0.0
        %3331 = vmatprep.subr.mxu0 0.0
        %3332 = vmatpush1.msra.mxu0 0.0
        %3333 = vmatprep.subr.mxu0 0.0
        %3334 = vmatpush1.msra.mxu0 0.0
        %3335 = vmatprep.subr.mxu0 0.0
        %3336 = vmatpush1.msra.mxu0 0.0
        %3337 = vmatprep.subr.mxu0 0.0
        %3338 = vmatpush1.msra.mxu0 0.0
        %3339 = vmatprep.subr.mxu0 0.0
        %3340 = vmatpush1.msra.mxu0 0.0
        %3341 = vmatprep.subr.mxu0 %v3211
        %3342 = vmatpush1.msra.mxu0 %v3210
        %3343 = vmatprep.subr.mxu0 %v3207
        %3344 = vmatpush1.msra.mxu0 %v3206
        %3345 = vmatprep.subr.mxu0 %v3203
        %3346 = vmatpush1.msra.mxu0 %v3202
        %3347 = vmatprep.subr.mxu0 %v3199
        %3348 = vmatpush1.msra.mxu0 %v3198
        %3349 = vmatprep.subr.mxu0 0.0
        %3350 = vmatpush2.msra.mxu0 0.0
        %3351 = vmatprep.subr.mxu0 0.0
        %3352 = vmatpush2.msra.mxu0 0.0
        %3353 = vmatprep.subr.mxu0 0.0
        %3354 = vmatpush2.msra.mxu0 0.0
        %3355 = vmatprep.subr.mxu0 0.0
        %3356 = vmatpush2.msra.mxu0 0.0
        %3357 = vmatprep.subr.mxu0 0.0
        %3358 = vmatpush2.msra.mxu0 0.0
        %3359 = vmatprep.subr.mxu0 0.0
        %3360 = vmatpush2.msra.mxu0 0.0
        %3361 = vmatprep.subr.mxu0 0.0
        %3362 = vmatpush2.msra.mxu0 0.0
        %3363 = vmatprep.subr.mxu0 0.0
        %3364 = vmatpush2.msra.mxu0 0.0
        %3365 = vmatprep.subr.mxu0 0.0
        %3366 = vmatpush2.msra.mxu0 0.0
        %3367 = vmatprep.subr.mxu0 0.0
        %3368 = vmatpush2.msra.mxu0 0.0
        %3369 = vmatprep.subr.mxu0 0.0
        %3370 = vmatpush2.msra.mxu0 0.0
        %3371 = vmatprep.subr.mxu0 0.0
        %3372 = vmatpush2.msra.mxu0 0.0
        %3373 = vmatprep.subr.mxu0 0.0
        %3374 = vmatpush2.msra.mxu0 0.0
        %3375 = vmatprep.subr.mxu0 0.0
        %3376 = vmatpush2.msra.mxu0 0.0
        %3377 = vmatprep.subr.mxu0 0.0
        %3378 = vmatpush2.msra.mxu0 0.0
        %3379 = vmatprep.subr.mxu0 0.0
        %3380 = vmatpush2.msra.mxu0 0.0
        %3381 = vmatprep.mubr.f32.mxu0 0.0
        %3382 = vmatmul.mubr.f32.gmra.mxu0 %v3220
        %v3383 = vpop.f32.mrf.mxu0
        %v3384 = vadd.f32 0.0, %v3383
        %v3385 = vpop.f32.mrf.mxu0
        %v3386 = vadd.f32 0.0, %v3385
        %3387 = vmatprep.mubr.f32.mxu0 0.0
        %3388 = vmatmul.mubr.f32.gmra.mxu0 %v3222
        %v3389 = vpop.f32.mrf.mxu0
        %v3390 = vadd.f32 0.0, %v3389
        %v3391 = vpop.f32.mrf.mxu0
        %v3392 = vadd.f32 0.0, %v3391
        %3393 = vmatprep.mubr.f32.mxu0 0.0
        %3394 = vmatmul.mubr.f32.gmra.mxu0 %v3224
        %v3395 = vpop.f32.mrf.mxu0
        %v3396 = vadd.f32 0.0, %v3395
        %v3397 = vpop.f32.mrf.mxu0
        %v3398 = vadd.f32 0.0, %v3397
        %3399 = vmatprep.mubr.f32.mxu0 0.0
        %3400 = vmatmul.mubr.f32.gmra.mxu0 %v3226
        %v3401 = vpop.f32.mrf.mxu0
        %v3402 = vadd.f32 0.0, %v3401
        %v3403 = vpop.f32.mrf.mxu0
        %v3404 = vadd.f32 0.0, %v3403
        %3405 = vdwg.mxu0
        %v3406 = vadd.f32 %v3132, %v3295
        %v3407 = vadd.f32 %v3133, %v3297
        %v3408 = vadd.f32 %v3134, %v3384
        %v3409 = vadd.f32 %v3135, %v3386
        %v3410 = vadd.f32 %v3136, %v3301
        %v3411 = vadd.f32 %v3137, %v3303
        %v3412 = vadd.f32 %v3138, %v3390
        %v3413 = vadd.f32 %v3139, %v3392
        %v3414 = vadd.f32 %v3140, %v3307
        %v3415 = vadd.f32 %v3141, %v3309
        %v3416 = vadd.f32 %v3142, %v3396
        %v3417 = vadd.f32 %v3143, %v3398
        %v3418 = vadd.f32 %v3144, %v3313
        %v3419 = vadd.f32 %v3145, %v3315
        %v3420 = vadd.f32 %v3146, %v3402
        %v3421 = vadd.f32 %v3147, %v3404
        %3422 = vrot.lane.b32.xlu0 %v1285, 111
        %v3423 = vpop.permute.xlu0 %3422
        %3424 = vrot.lane.b32.xlu0 %v1289, 111
        %v3425 = vpop.permute.xlu0 %3424
        %3426 = vrot.lane.b32.xlu0 %v1293, 111
        %v3427 = vpop.permute.xlu0 %3426
        %3428 = vrot.lane.b32.xlu0 %v1297, 111
        %v3429 = vpop.permute.xlu0 %3428
        %3430 = vrot.lane.b32.xlu0 %v1286, 111
        %v3431 = vpop.permute.xlu0 %3430
        %3432 = vrot.lane.b32.xlu0 %v1290, 111
        %v3433 = vpop.permute.xlu0 %3432
        %3434 = vrot.lane.b32.xlu0 %v1294, 111
        %v3435 = vpop.permute.xlu0 %3434
        %3436 = vrot.lane.b32.xlu0 %v1298, 111
        %v3437 = vpop.permute.xlu0 %3436
        %3438 = vrot.lane.b32.xlu0 %v1287, 111
        %v3439 = vpop.permute.xlu0 %3438
        %3440 = vrot.lane.b32.xlu0 %v1291, 111
        %v3441 = vpop.permute.xlu0 %3440
        %3442 = vrot.lane.b32.xlu0 %v1295, 111
        %v3443 = vpop.permute.xlu0 %3442
        %3444 = vrot.lane.b32.xlu0 %v1299, 111
        %v3445 = vpop.permute.xlu0 %3444
        %3446 = vrot.lane.b32.xlu0 %v1288, 111
        %v3447 = vpop.permute.xlu0 %3446
        %3448 = vrot.lane.b32.xlu0 %v1292, 111
        %v3449 = vpop.permute.xlu0 %3448
        %3450 = vrot.lane.b32.xlu0 %v1296, 111
        %v3451 = vpop.permute.xlu0 %3450
        %3452 = vrot.lane.b32.xlu0 %v1300, 111
        %v3453 = vpop.permute.xlu0 %3452
        %v3454 = vsel %vm925, %v3439, %v3447
        %v3455 = vsel %vm925, %v3441, %v3449
        %v3456 = vsel %vm925, %v3443, %v3451
        %v3457 = vsel %vm925, %v3445, %v3453
        %v3458 = vsel %vm925, %v3431, %v3439
        %v3459 = vsel %vm925, %v3433, %v3441
        %v3460 = vsel %vm925, %v3435, %v3443
        %v3461 = vsel %vm925, %v3437, %v3445
        %v3462 = vsel %vm925, %v3423, %v3431
        %v3463 = vsel %vm925, %v3425, %v3433
        %v3464 = vsel %vm925, %v3427, %v3435
        %v3465 = vsel %vm925, %v3429, %v3437
        %v3466 = vsel %vm925, %v3447, %v3423
        %v3467 = vsel %vm925, %v3449, %v3425
        %v3468 = vsel %vm925, %v3451, %v3427
        %v3469 = vsel %vm925, %v3453, %v3429
        %v3470 = vmul.f32 %v3462, %v934
        %v3471 = vmul.f32 %v3458, %v938
        %v3472 = vmul.f32 %v3454, %v942
        %v3473 = vmul.f32 %v3466, %v946
        %v3474 = vmul.f32 %v3463, %v934
        %v3475 = vmul.f32 %v3459, %v938
        %v3476 = vmul.f32 %v3455, %v942
        %v3477 = vmul.f32 %v3467, %v946
        %v3478 = vmul.f32 %v3464, %v934
        %v3479 = vmul.f32 %v3460, %v938
        %v3480 = vmul.f32 %v3456, %v942
        %v3481 = vmul.f32 %v3468, %v946
        %v3482 = vmul.f32 %v3465, %v934
        %v3483 = vmul.f32 %v3461, %v938
        %v3484 = vmul.f32 %v3457, %v942
        %v3485 = vmul.f32 %v3469, %v946
        %v3487 = vsel %vm1473, %v1319, 0
        %v3490 = vsel %vm1473, %v1322, 0
        %v3493 = vsel %vm1473, %v1325, 0
        %v3496 = vsel %vm1473, %v1328, 0
        %3498 = vmatprep.subr.mxu0 0.0
        %3499 = vmatpush1.msra.mxu0 0.0
        %3500 = vmatprep.subr.mxu0 0.0
        %3501 = vmatpush1.msra.mxu0 0.0
        %3502 = vmatprep.subr.mxu0 0.0
        %3503 = vmatpush1.msra.mxu0 0.0
        %3504 = vmatprep.subr.mxu0 0.0
        %3505 = vmatpush1.msra.mxu0 0.0
        %3506 = vmatprep.subr.mxu0 0.0
        %3507 = vmatpush1.msra.mxu0 0.0
        %3508 = vmatprep.subr.mxu0 0.0
        %3509 = vmatpush1.msra.mxu0 0.0
        %3510 = vmatprep.subr.mxu0 0.0
        %3511 = vmatpush1.msra.mxu0 0.0
        %3512 = vmatprep.subr.mxu0 0.0
        %3513 = vmatpush1.msra.mxu0 0.0
        %3514 = vmatprep.subr.mxu0 0.0
        %3515 = vmatpush1.msra.mxu0 0.0
        %3516 = vmatprep.subr.mxu0 0.0
        %3517 = vmatpush1.msra.mxu0 0.0
        %3518 = vmatprep.subr.mxu0 0.0
        %3519 = vmatpush1.msra.mxu0 0.0
        %3520 = vmatprep.subr.mxu0 0.0
        %3521 = vmatpush1.msra.mxu0 0.0
        %3522 = vmatprep.subr.mxu0 %v3483
        %3523 = vmatpush1.msra.mxu0 %v3482
        %3524 = vmatprep.subr.mxu0 %v3479
        %3525 = vmatpush1.msra.mxu0 %v3478
        %3526 = vmatprep.subr.mxu0 %v3475
        %3527 = vmatpush1.msra.mxu0 %v3474
        %3528 = vmatprep.subr.mxu0 %v3471
        %3529 = vmatpush1.msra.mxu0 %v3470
        %3530 = vmatprep.subr.mxu0 0.0
        %3531 = vmatpush2.msra.mxu0 0.0
        %3532 = vmatprep.subr.mxu0 0.0
        %3533 = vmatpush2.msra.mxu0 0.0
        %3534 = vmatprep.subr.mxu0 0.0
        %3535 = vmatpush2.msra.mxu0 0.0
        %3536 = vmatprep.subr.mxu0 0.0
        %3537 = vmatpush2.msra.mxu0 0.0
        %3538 = vmatprep.subr.mxu0 0.0
        %3539 = vmatpush2.msra.mxu0 0.0
        %3540 = vmatprep.subr.mxu0 0.0
        %3541 = vmatpush2.msra.mxu0 0.0
        %3542 = vmatprep.subr.mxu0 0.0
        %3543 = vmatpush2.msra.mxu0 0.0
        %3544 = vmatprep.subr.mxu0 0.0
        %3545 = vmatpush2.msra.mxu0 0.0
        %3546 = vmatprep.subr.mxu0 0.0
        %3547 = vmatpush2.msra.mxu0 0.0
        %3548 = vmatprep.subr.mxu0 0.0
        %3549 = vmatpush2.msra.mxu0 0.0
        %3550 = vmatprep.subr.mxu0 0.0
        %3551 = vmatpush2.msra.mxu0 0.0
        %3552 = vmatprep.subr.mxu0 0.0
        %3553 = vmatpush2.msra.mxu0 0.0
        %3554 = vmatprep.subr.mxu0 0.0
        %3555 = vmatpush2.msra.mxu0 0.0
        %3556 = vmatprep.subr.mxu0 0.0
        %3557 = vmatpush2.msra.mxu0 0.0
        %3558 = vmatprep.subr.mxu0 0.0
        %3559 = vmatpush2.msra.mxu0 0.0
        %3560 = vmatprep.subr.mxu0 0.0
        %3561 = vmatpush2.msra.mxu0 0.0
        %3562 = vmatprep.mubr.f32.mxu0 0.0
        %3563 = vmatmul.mubr.f32.gmra.mxu0 %v3487
        %v3564 = vpop.f32.mrf.mxu0
        %v3565 = vadd.f32 0.0, %v3564
        %v3566 = vpop.f32.mrf.mxu0
        %v3567 = vadd.f32 0.0, %v3566
        %3568 = vmatprep.mubr.f32.mxu0 0.0
        %3569 = vmatmul.mubr.f32.gmra.mxu0 %v3490
        %v3570 = vpop.f32.mrf.mxu0
        %v3571 = vadd.f32 0.0, %v3570
        %v3572 = vpop.f32.mrf.mxu0
        %v3573 = vadd.f32 0.0, %v3572
        %3574 = vmatprep.mubr.f32.mxu0 0.0
        %3575 = vmatmul.mubr.f32.gmra.mxu0 %v3493
        %v3576 = vpop.f32.mrf.mxu0
        %v3577 = vadd.f32 0.0, %v3576
        %v3578 = vpop.f32.mrf.mxu0
        %v3579 = vadd.f32 0.0, %v3578
        %3580 = vmatprep.mubr.f32.mxu0 0.0
        %3581 = vmatmul.mubr.f32.gmra.mxu0 %v3496
        %v3582 = vpop.f32.mrf.mxu0
        %v3583 = vadd.f32 0.0, %v3582
        %v3584 = vpop.f32.mrf.mxu0
        %v3585 = vadd.f32 0.0, %v3584
        %3586 = vdwg.mxu0
        %3587 = vmatprep.subr.mxu0 0.0
        %3588 = vmatpush1.msra.mxu0 0.0
        %3589 = vmatprep.subr.mxu0 0.0
        %3590 = vmatpush1.msra.mxu0 0.0
        %3591 = vmatprep.subr.mxu0 0.0
        %3592 = vmatpush1.msra.mxu0 0.0
        %3593 = vmatprep.subr.mxu0 0.0
        %3594 = vmatpush1.msra.mxu0 0.0
        %3595 = vmatprep.subr.mxu0 0.0
        %3596 = vmatpush1.msra.mxu0 0.0
        %3597 = vmatprep.subr.mxu0 0.0
        %3598 = vmatpush1.msra.mxu0 0.0
        %3599 = vmatprep.subr.mxu0 0.0
        %3600 = vmatpush1.msra.mxu0 0.0
        %3601 = vmatprep.subr.mxu0 0.0
        %3602 = vmatpush1.msra.mxu0 0.0
        %3603 = vmatprep.subr.mxu0 0.0
        %3604 = vmatpush1.msra.mxu0 0.0
        %3605 = vmatprep.subr.mxu0 0.0
        %3606 = vmatpush1.msra.mxu0 0.0
        %3607 = vmatprep.subr.mxu0 0.0
        %3608 = vmatpush1.msra.mxu0 0.0
        %3609 = vmatprep.subr.mxu0 0.0
        %3610 = vmatpush1.msra.mxu0 0.0
        %3611 = vmatprep.subr.mxu0 %v3485
        %3612 = vmatpush1.msra.mxu0 %v3484
        %3613 = vmatprep.subr.mxu0 %v3481
        %3614 = vmatpush1.msra.mxu0 %v3480
        %3615 = vmatprep.subr.mxu0 %v3477
        %3616 = vmatpush1.msra.mxu0 %v3476
        %3617 = vmatprep.subr.mxu0 %v3473
        %3618 = vmatpush1.msra.mxu0 %v3472
        %3619 = vmatprep.subr.mxu0 0.0
        %3620 = vmatpush2.msra.mxu0 0.0
        %3621 = vmatprep.subr.mxu0 0.0
        %3622 = vmatpush2.msra.mxu0 0.0
        %3623 = vmatprep.subr.mxu0 0.0
        %3624 = vmatpush2.msra.mxu0 0.0
        %3625 = vmatprep.subr.mxu0 0.0
        %3626 = vmatpush2.msra.mxu0 0.0
        %3627 = vmatprep.subr.mxu0 0.0
        %3628 = vmatpush2.msra.mxu0 0.0
        %3629 = vmatprep.subr.mxu0 0.0
        %3630 = vmatpush2.msra.mxu0 0.0
        %3631 = vmatprep.subr.mxu0 0.0
        %3632 = vmatpush2.msra.mxu0 0.0
        %3633 = vmatprep.subr.mxu0 0.0
        %3634 = vmatpush2.msra.mxu0 0.0
        %3635 = vmatprep.subr.mxu0 0.0
        %3636 = vmatpush2.msra.mxu0 0.0
        %3637 = vmatprep.subr.mxu0 0.0
        %3638 = vmatpush2.msra.mxu0 0.0
        %3639 = vmatprep.subr.mxu0 0.0
        %3640 = vmatpush2.msra.mxu0 0.0
        %3641 = vmatprep.subr.mxu0 0.0
        %3642 = vmatpush2.msra.mxu0 0.0
        %3643 = vmatprep.subr.mxu0 0.0
        %3644 = vmatpush2.msra.mxu0 0.0
        %3645 = vmatprep.subr.mxu0 0.0
        %3646 = vmatpush2.msra.mxu0 0.0
        %3647 = vmatprep.subr.mxu0 0.0
        %3648 = vmatpush2.msra.mxu0 0.0
        %3649 = vmatprep.subr.mxu0 0.0
        %3650 = vmatpush2.msra.mxu0 0.0
        %3651 = vmatprep.mubr.f32.mxu0 0.0
        %3652 = vmatmul.mubr.f32.gmra.mxu0 %v3487
        %v3653 = vpop.f32.mrf.mxu0
        %v3654 = vadd.f32 0.0, %v3653
        %v3655 = vpop.f32.mrf.mxu0
        %v3656 = vadd.f32 0.0, %v3655
        %3657 = vmatprep.mubr.f32.mxu0 0.0
        %3658 = vmatmul.mubr.f32.gmra.mxu0 %v3490
        %v3659 = vpop.f32.mrf.mxu0
        %v3660 = vadd.f32 0.0, %v3659
        %v3661 = vpop.f32.mrf.mxu0
        %v3662 = vadd.f32 0.0, %v3661
        %3663 = vmatprep.mubr.f32.mxu0 0.0
        %3664 = vmatmul.mubr.f32.gmra.mxu0 %v3493
        %v3665 = vpop.f32.mrf.mxu0
        %v3666 = vadd.f32 0.0, %v3665
        %v3667 = vpop.f32.mrf.mxu0
        %v3668 = vadd.f32 0.0, %v3667
        %3669 = vmatprep.mubr.f32.mxu0 0.0
        %3670 = vmatmul.mubr.f32.gmra.mxu0 %v3496
        %v3671 = vpop.f32.mrf.mxu0
        %v3672 = vadd.f32 0.0, %v3671
        %v3673 = vpop.f32.mrf.mxu0
        %v3674 = vadd.f32 0.0, %v3673
        %3675 = vdwg.mxu0
        %v3676 = vadd.f32 %v3406, %v3565
        %v3677 = vadd.f32 %v3407, %v3567
        %v3678 = vadd.f32 %v3408, %v3654
        %v3679 = vadd.f32 %v3409, %v3656
        %v3680 = vadd.f32 %v3410, %v3571
        %v3681 = vadd.f32 %v3411, %v3573
        %v3682 = vadd.f32 %v3412, %v3660
        %v3683 = vadd.f32 %v3413, %v3662
        %v3684 = vadd.f32 %v3414, %v3577
        %v3685 = vadd.f32 %v3415, %v3579
        %v3686 = vadd.f32 %v3416, %v3666
        %v3687 = vadd.f32 %v3417, %v3668
        %v3688 = vadd.f32 %v3418, %v3583
        %v3689 = vadd.f32 %v3419, %v3585
        %v3690 = vadd.f32 %v3420, %v3672
        %v3691 = vadd.f32 %v3421, %v3674
        %3693 = vset.pattern.permute.xlu0 0
        %3694 = vperm.xlu0 %3693, %v1329
        %v3695 = vpop.permute.xlu0 %3694
        %3698 = vset.pattern.permute.xlu0 0
        %3699 = vperm.xlu0 %3698, %v1330
        %v3700 = vpop.permute.xlu0 %3699
        %3703 = vset.pattern.permute.xlu0 0
        %3704 = vperm.xlu0 %3703, %v1331
        %v3705 = vpop.permute.xlu0 %3704
        %3708 = vset.pattern.permute.xlu0 0
        %3709 = vperm.xlu0 %3708, %v1332
        %v3710 = vpop.permute.xlu0 %3709
        %v3712 = vadd.f32 %v3676, %v3695
        %v3713 = vadd.f32 %v3677, %v3695
        %v3714 = vadd.f32 %v3678, %v3695
        %v3715 = vadd.f32 %v3679, %v3695
        %v3716 = vadd.f32 %v3680, %v3700
        %v3717 = vadd.f32 %v3681, %v3700
        %v3718 = vadd.f32 %v3682, %v3700
        %v3719 = vadd.f32 %v3683, %v3700
        %v3720 = vadd.f32 %v3684, %v3705
        %v3721 = vadd.f32 %v3685, %v3705
        %v3722 = vadd.f32 %v3686, %v3705
        %v3723 = vadd.f32 %v3687, %v3705
        %v3724 = vadd.f32 %v3688, %v3710
        %v3725 = vadd.f32 %v3689, %v3710
        %v3726 = vadd.f32 %v3690, %v3710
        %v3727 = vadd.f32 %v3691, %v3710
        %v3728 = vmax.f32 %v3712, 0.0
        %v3729 = vmax.f32 %v3713, 0.0
        %v3730 = vmax.f32 %v3714, 0.0
        %v3731 = vmax.f32 %v3715, 0.0
        %v3732 = vmax.f32 %v3716, 0.0
        %v3733 = vmax.f32 %v3717, 0.0
        %v3734 = vmax.f32 %v3718, 0.0
        %v3735 = vmax.f32 %v3719, 0.0
        %v3736 = vmax.f32 %v3720, 0.0
        %v3737 = vmax.f32 %v3721, 0.0
        %v3738 = vmax.f32 %v3722, 0.0
        %v3739 = vmax.f32 %v3723, 0.0
        %v3740 = vmax.f32 %v3724, 0.0
        %v3741 = vmax.f32 %v3725, 0.0
        %v3742 = vmax.f32 %v3726, 0.0
        %v3743 = vmax.f32 %v3727, 0.0
        %3744 = vst [vmem:[%s582] sm:$0xff] %v3728
        %3745 = vst [vmem:[%s582 + $0x8] sm:$0xff] %v3729
        %3746 = vst [vmem:[%s582 + $0x10] sm:$0xff] %v3730
        %3747 = vst [vmem:[%s582 + $0x18] sm:$0xff] %v3731
        %3748 = vst [vmem:[%s582 + $0x20] sm:$0xff] %v3732
        %3749 = vst [vmem:[%s582 + $0x28] sm:$0xff] %v3733
        %3750 = vst [vmem:[%s582 + $0x30] sm:$0xff] %v3734
        %3751 = vst [vmem:[%s582 + $0x38] sm:$0xff] %v3735
        %3752 = vst [vmem:[%s582 + $0x40] sm:$0xff] %v3736
        %3753 = vst [vmem:[%s582 + $0x48] sm:$0xff] %v3737
        %3754 = vst [vmem:[%s582 + $0x50] sm:$0xff] %v3738
        %3755 = vst [vmem:[%s582 + $0x58] sm:$0xff] %v3739
        %3756 = vst [vmem:[%s582 + $0x60] sm:$0xff] %v3740
        %3757 = vst [vmem:[%s582 + $0x68] sm:$0xff] %v3741
        %3758 = vst [vmem:[%s582 + $0x70] sm:$0xff] %v3742
        %3759 = vst [vmem:[%s582 + $0x78] sm:$0xff] %v3743
        %v3760 = vld [vmem:[%s6] sm:$0xff]
        %v3761 = vld [vmem:[%s6 + $0x8] sm:$0xff]
        %v3762 = vld [vmem:[%s6 + $0x10] sm:$0xff]
        %v3763 = vld [vmem:[%s6 + $0x18] sm:$0xff]
        %v3764 = vld [vmem:[%s6 + $0x20] sm:$0xff]
        %v3765 = vld [vmem:[%s6 + $0x28] sm:$0xff]
        %v3766 = vld [vmem:[%s6 + $0x30] sm:$0xff]
        %v3767 = vld [vmem:[%s6 + $0x38] sm:$0xff]
        %v3768 = vld [vmem:[%s6 + $0x40] sm:$0xff]
        %v3769 = vld [vmem:[%s6 + $0x48] sm:$0xff]
        %v3770 = vld [vmem:[%s6 + $0x50] sm:$0xff]
        %v3771 = vld [vmem:[%s6 + $0x58] sm:$0xff]
        %v3772 = vld [vmem:[%s7] sm:$0xff]
        %v3773 = vld [vmem:[%s7 + $0x8] sm:$0xff]
        %v3774 = vld [vmem:[%s7 + $0x10] sm:$0xff]
        %v3775 = vld [vmem:[%s7 + $0x18] sm:$0xff]
        %3776 = vrot.lane.b32.xlu0 %v3728, 17
        %v3777 = vpop.permute.xlu0 %3776
        %3778 = vrot.lane.b32.xlu0 %v3732, 17
        %v3779 = vpop.permute.xlu0 %3778
        %3780 = vrot.lane.b32.xlu0 %v3736, 17
        %v3781 = vpop.permute.xlu0 %3780
        %3782 = vrot.lane.b32.xlu0 %v3740, 17
        %v3783 = vpop.permute.xlu0 %3782
        %3784 = vrot.lane.b32.xlu0 %v3729, 17
        %v3785 = vpop.permute.xlu0 %3784
        %3786 = vrot.lane.b32.xlu0 %v3733, 17
        %v3787 = vpop.permute.xlu0 %3786
        %3788 = vrot.lane.b32.xlu0 %v3737, 17
        %v3789 = vpop.permute.xlu0 %3788
        %3790 = vrot.lane.b32.xlu0 %v3741, 17
        %v3791 = vpop.permute.xlu0 %3790
        %3792 = vrot.lane.b32.xlu0 %v3730, 17
        %v3793 = vpop.permute.xlu0 %3792
        %3794 = vrot.lane.b32.xlu0 %v3734, 17
        %v3795 = vpop.permute.xlu0 %3794
        %3796 = vrot.lane.b32.xlu0 %v3738, 17
        %v3797 = vpop.permute.xlu0 %3796
        %3798 = vrot.lane.b32.xlu0 %v3742, 17
        %v3799 = vpop.permute.xlu0 %3798
        %3800 = vrot.lane.b32.xlu0 %v3731, 17
        %v3801 = vpop.permute.xlu0 %3800
        %3802 = vrot.lane.b32.xlu0 %v3735, 17
        %v3803 = vpop.permute.xlu0 %3802
        %3804 = vrot.lane.b32.xlu0 %v3739, 17
        %v3805 = vpop.permute.xlu0 %3804
        %3806 = vrot.lane.b32.xlu0 %v3743, 17
        %v3807 = vpop.permute.xlu0 %3806
        %v3808 = vsel %vm659, %v3793, %v3801
        %v3809 = vsel %vm659, %v3795, %v3803
        %v3810 = vsel %vm659, %v3797, %v3805
        %v3811 = vsel %vm659, %v3799, %v3807
        %v3812 = vsel %vm659, %v3785, %v3793
        %v3813 = vsel %vm659, %v3787, %v3795
        %v3814 = vsel %vm659, %v3789, %v3797
        %v3815 = vsel %vm659, %v3791, %v3799
        %v3816 = vsel %vm659, %v3777, %v3785
        %v3817 = vsel %vm659, %v3779, %v3787
        %v3818 = vsel %vm659, %v3781, %v3789
        %v3819 = vsel %vm659, %v3783, %v3791
        %v3820 = vsel %vm659, %v3801, %v3777
        %v3821 = vsel %vm659, %v3803, %v3779
        %v3822 = vsel %vm659, %v3805, %v3781
        %v3823 = vsel %vm659, %v3807, %v3783
        %v3824 = vmul.f32 %v3820, %v668
        %v3825 = vmul.f32 %v3816, %v672
        %v3826 = vmul.f32 %v3812, %v676
        %v3827 = vmul.f32 %v3808, %v680
        %v3828 = vmul.f32 %v3821, %v668
        %v3829 = vmul.f32 %v3817, %v672
        %v3830 = vmul.f32 %v3813, %v676
        %v3831 = vmul.f32 %v3809, %v680
        %v3832 = vmul.f32 %v3822, %v668
        %v3833 = vmul.f32 %v3818, %v672
        %v3834 = vmul.f32 %v3814, %v676
        %v3835 = vmul.f32 %v3810, %v680
        %v3836 = vmul.f32 %v3823, %v668
        %v3837 = vmul.f32 %v3819, %v672
        %v3838 = vmul.f32 %v3815, %v676
        %v3839 = vmul.f32 %v3811, %v680
        %3840 = vrot.lane.b32.xlu0 %v3728, 16
        %v3841 = vpop.permute.xlu0 %3840
        %3842 = vrot.lane.b32.xlu0 %v3732, 16
        %v3843 = vpop.permute.xlu0 %3842
        %3844 = vrot.lane.b32.xlu0 %v3736, 16
        %v3845 = vpop.permute.xlu0 %3844
        %3846 = vrot.lane.b32.xlu0 %v3740, 16
        %v3847 = vpop.permute.xlu0 %3846
        %3848 = vrot.lane.b32.xlu0 %v3729, 16
        %v3849 = vpop.permute.xlu0 %3848
        %3850 = vrot.lane.b32.xlu0 %v3733, 16
        %v3851 = vpop.permute.xlu0 %3850
        %3852 = vrot.lane.b32.xlu0 %v3737, 16
        %v3853 = vpop.permute.xlu0 %3852
        %3854 = vrot.lane.b32.xlu0 %v3741, 16
        %v3855 = vpop.permute.xlu0 %3854
        %3856 = vrot.lane.b32.xlu0 %v3730, 16
        %v3857 = vpop.permute.xlu0 %3856
        %3858 = vrot.lane.b32.xlu0 %v3734, 16
        %v3859 = vpop.permute.xlu0 %3858
        %3860 = vrot.lane.b32.xlu0 %v3738, 16
        %v3861 = vpop.permute.xlu0 %3860
        %3862 = vrot.lane.b32.xlu0 %v3742, 16
        %v3863 = vpop.permute.xlu0 %3862
        %3864 = vrot.lane.b32.xlu0 %v3731, 16
        %v3865 = vpop.permute.xlu0 %3864
        %3866 = vrot.lane.b32.xlu0 %v3735, 16
        %v3867 = vpop.permute.xlu0 %3866
        %3868 = vrot.lane.b32.xlu0 %v3739, 16
        %v3869 = vpop.permute.xlu0 %3868
        %3870 = vrot.lane.b32.xlu0 %v3743, 16
        %v3871 = vpop.permute.xlu0 %3870
        %v3872 = vsel %vm697, %v3857, %v3865
        %v3873 = vsel %vm697, %v3859, %v3867
        %v3874 = vsel %vm697, %v3861, %v3869
        %v3875 = vsel %vm697, %v3863, %v3871
        %v3876 = vsel %vm697, %v3849, %v3857
        %v3877 = vsel %vm697, %v3851, %v3859
        %v3878 = vsel %vm697, %v3853, %v3861
        %v3879 = vsel %vm697, %v3855, %v3863
        %v3880 = vsel %vm697, %v3841, %v3849
        %v3881 = vsel %vm697, %v3843, %v3851
        %v3882 = vsel %vm697, %v3845, %v3853
        %v3883 = vsel %vm697, %v3847, %v3855
        %v3884 = vsel %vm697, %v3865, %v3841
        %v3885 = vsel %vm697, %v3867, %v3843
        %v3886 = vsel %vm697, %v3869, %v3845
        %v3887 = vsel %vm697, %v3871, %v3847
        %v3888 = vmul.f32 %v3884, %v706
        %v3889 = vmul.f32 %v3880, %v710
        %v3890 = vmul.f32 %v3876, %v714
        %v3891 = vmul.f32 %v3872, %v718
        %v3892 = vmul.f32 %v3885, %v706
        %v3893 = vmul.f32 %v3881, %v710
        %v3894 = vmul.f32 %v3877, %v714
        %v3895 = vmul.f32 %v3873, %v718
        %v3896 = vmul.f32 %v3886, %v706
        %v3897 = vmul.f32 %v3882, %v710
        %v3898 = vmul.f32 %v3878, %v714
        %v3899 = vmul.f32 %v3874, %v718
        %v3900 = vmul.f32 %v3887, %v706
        %v3901 = vmul.f32 %v3883, %v710
        %v3902 = vmul.f32 %v3879, %v714
        %v3903 = vmul.f32 %v3875, %v718
        %3908 = vrot.lane.b32.xlu0 %v3760, 96
        %v3909 = vpop.permute.xlu0 %3908
        %3910 = vrot.lane.b32.xlu0 %v3763, 96
        %v3911 = vpop.permute.xlu0 %3910
        %3912 = vrot.lane.b32.xlu0 %v3766, 96
        %v3913 = vpop.permute.xlu0 %3912
        %3914 = vrot.lane.b32.xlu0 %v3769, 96
        %v3915 = vpop.permute.xlu0 %3914
        %v3916 = vsel %vm1473, %v3909, 0
        %v3918 = vsel %vm1473, %v3911, 0
        %v3920 = vsel %vm1473, %v3913, 0
        %v3922 = vsel %vm1473, %v3915, 0
        %3924 = vmatprep.subr.mxu0 0.0
        %3925 = vmatpush1.msra.mxu0 0.0
        %3926 = vmatprep.subr.mxu0 0.0
        %3927 = vmatpush1.msra.mxu0 0.0
        %3928 = vmatprep.subr.mxu0 0.0
        %3929 = vmatpush1.msra.mxu0 0.0
        %3930 = vmatprep.subr.mxu0 0.0
        %3931 = vmatpush1.msra.mxu0 0.0
        %3932 = vmatprep.subr.mxu0 0.0
        %3933 = vmatpush1.msra.mxu0 0.0
        %3934 = vmatprep.subr.mxu0 0.0
        %3935 = vmatpush1.msra.mxu0 0.0
        %3936 = vmatprep.subr.mxu0 0.0
        %3937 = vmatpush1.msra.mxu0 0.0
        %3938 = vmatprep.subr.mxu0 0.0
        %3939 = vmatpush1.msra.mxu0 0.0
        %3940 = vmatprep.subr.mxu0 0.0
        %3941 = vmatpush1.msra.mxu0 0.0
        %3942 = vmatprep.subr.mxu0 0.0
        %3943 = vmatpush1.msra.mxu0 0.0
        %3944 = vmatprep.subr.mxu0 0.0
        %3945 = vmatpush1.msra.mxu0 0.0
        %3946 = vmatprep.subr.mxu0 0.0
        %3947 = vmatpush1.msra.mxu0 0.0
        %3948 = vmatprep.subr.mxu0 %v3901
        %3949 = vmatpush1.msra.mxu0 %v3900
        %3950 = vmatprep.subr.mxu0 %v3897
        %3951 = vmatpush1.msra.mxu0 %v3896
        %3952 = vmatprep.subr.mxu0 %v3893
        %3953 = vmatpush1.msra.mxu0 %v3892
        %3954 = vmatprep.subr.mxu0 %v3889
        %3955 = vmatpush1.msra.mxu0 %v3888
        %3956 = vmatprep.subr.mxu0 0.0
        %3957 = vmatpush2.msra.mxu0 0.0
        %3958 = vmatprep.subr.mxu0 0.0
        %3959 = vmatpush2.msra.mxu0 0.0
        %3960 = vmatprep.subr.mxu0 0.0
        %3961 = vmatpush2.msra.mxu0 0.0
        %3962 = vmatprep.subr.mxu0 0.0
        %3963 = vmatpush2.msra.mxu0 0.0
        %3964 = vmatprep.subr.mxu0 0.0
        %3965 = vmatpush2.msra.mxu0 0.0
        %3966 = vmatprep.subr.mxu0 0.0
        %3967 = vmatpush2.msra.mxu0 0.0
        %3968 = vmatprep.subr.mxu0 0.0
        %3969 = vmatpush2.msra.mxu0 0.0
        %3970 = vmatprep.subr.mxu0 0.0
        %3971 = vmatpush2.msra.mxu0 0.0
        %3972 = vmatprep.subr.mxu0 0.0
        %3973 = vmatpush2.msra.mxu0 0.0
        %3974 = vmatprep.subr.mxu0 0.0
        %3975 = vmatpush2.msra.mxu0 0.0
        %3976 = vmatprep.subr.mxu0 0.0
        %3977 = vmatpush2.msra.mxu0 0.0
        %3978 = vmatprep.subr.mxu0 0.0
        %3979 = vmatpush2.msra.mxu0 0.0
        %3980 = vmatprep.subr.mxu0 0.0
        %3981 = vmatpush2.msra.mxu0 0.0
        %3982 = vmatprep.subr.mxu0 0.0
        %3983 = vmatpush2.msra.mxu0 0.0
        %3984 = vmatprep.subr.mxu0 0.0
        %3985 = vmatpush2.msra.mxu0 0.0
        %3986 = vmatprep.subr.mxu0 0.0
        %3987 = vmatpush2.msra.mxu0 0.0
        %3988 = vmatprep.mubr.f32.mxu0 0.0
        %3989 = vmatmul.mubr.f32.gmra.mxu0 %v3916
        %v3990 = vpop.f32.mrf.mxu0
        %v3991 = vadd.f32 0.0, %v3990
        %v3992 = vpop.f32.mrf.mxu0
        %v3993 = vadd.f32 0.0, %v3992
        %3994 = vmatprep.mubr.f32.mxu0 0.0
        %3995 = vmatmul.mubr.f32.gmra.mxu0 %v3918
        %v3996 = vpop.f32.mrf.mxu0
        %v3997 = vadd.f32 0.0, %v3996
        %v3998 = vpop.f32.mrf.mxu0
        %v3999 = vadd.f32 0.0, %v3998
        %4000 = vmatprep.mubr.f32.mxu0 0.0
        %4001 = vmatmul.mubr.f32.gmra.mxu0 %v3920
        %v4002 = vpop.f32.mrf.mxu0
        %v4003 = vadd.f32 0.0, %v4002
        %v4004 = vpop.f32.mrf.mxu0
        %v4005 = vadd.f32 0.0, %v4004
        %4006 = vmatprep.mubr.f32.mxu0 0.0
        %4007 = vmatmul.mubr.f32.gmra.mxu0 %v3922
        %v4008 = vpop.f32.mrf.mxu0
        %v4009 = vadd.f32 0.0, %v4008
        %v4010 = vpop.f32.mrf.mxu0
        %v4011 = vadd.f32 0.0, %v4010
        %4012 = vdwg.mxu0
        %4013 = vmatprep.subr.mxu0 0.0
        %4014 = vmatpush1.msra.mxu0 0.0
        %4015 = vmatprep.subr.mxu0 0.0
        %4016 = vmatpush1.msra.mxu0 0.0
        %4017 = vmatprep.subr.mxu0 0.0
        %4018 = vmatpush1.msra.mxu0 0.0
        %4019 = vmatprep.subr.mxu0 0.0
        %4020 = vmatpush1.msra.mxu0 0.0
        %4021 = vmatprep.subr.mxu0 0.0
        %4022 = vmatpush1.msra.mxu0 0.0
        %4023 = vmatprep.subr.mxu0 0.0
        %4024 = vmatpush1.msra.mxu0 0.0
        %4025 = vmatprep.subr.mxu0 0.0
        %4026 = vmatpush1.msra.mxu0 0.0
        %4027 = vmatprep.subr.mxu0 0.0
        %4028 = vmatpush1.msra.mxu0 0.0
        %4029 = vmatprep.subr.mxu0 0.0
        %4030 = vmatpush1.msra.mxu0 0.0
        %4031 = vmatprep.subr.mxu0 0.0
        %4032 = vmatpush1.msra.mxu0 0.0
        %4033 = vmatprep.subr.mxu0 0.0
        %4034 = vmatpush1.msra.mxu0 0.0
        %4035 = vmatprep.subr.mxu0 0.0
        %4036 = vmatpush1.msra.mxu0 0.0
        %4037 = vmatprep.subr.mxu0 %v3903
        %4038 = vmatpush1.msra.mxu0 %v3902
        %4039 = vmatprep.subr.mxu0 %v3899
        %4040 = vmatpush1.msra.mxu0 %v3898
        %4041 = vmatprep.subr.mxu0 %v3895
        %4042 = vmatpush1.msra.mxu0 %v3894
        %4043 = vmatprep.subr.mxu0 %v3891
        %4044 = vmatpush1.msra.mxu0 %v3890
        %4045 = vmatprep.subr.mxu0 0.0
        %4046 = vmatpush2.msra.mxu0 0.0
        %4047 = vmatprep.subr.mxu0 0.0
        %4048 = vmatpush2.msra.mxu0 0.0
        %4049 = vmatprep.subr.mxu0 0.0
        %4050 = vmatpush2.msra.mxu0 0.0
        %4051 = vmatprep.subr.mxu0 0.0
        %4052 = vmatpush2.msra.mxu0 0.0
        %4053 = vmatprep.subr.mxu0 0.0
        %4054 = vmatpush2.msra.mxu0 0.0
        %4055 = vmatprep.subr.mxu0 0.0
        %4056 = vmatpush2.msra.mxu0 0.0
        %4057 = vmatprep.subr.mxu0 0.0
        %4058 = vmatpush2.msra.mxu0 0.0
        %4059 = vmatprep.subr.mxu0 0.0
        %4060 = vmatpush2.msra.mxu0 0.0
        %4061 = vmatprep.subr.mxu0 0.0
        %4062 = vmatpush2.msra.mxu0 0.0
        %4063 = vmatprep.subr.mxu0 0.0
        %4064 = vmatpush2.msra.mxu0 0.0
        %4065 = vmatprep.subr.mxu0 0.0
        %4066 = vmatpush2.msra.mxu0 0.0
        %4067 = vmatprep.subr.mxu0 0.0
        %4068 = vmatpush2.msra.mxu0 0.0
        %4069 = vmatprep.subr.mxu0 0.0
        %4070 = vmatpush2.msra.mxu0 0.0
        %4071 = vmatprep.subr.mxu0 0.0
        %4072 = vmatpush2.msra.mxu0 0.0
        %4073 = vmatprep.subr.mxu0 0.0
        %4074 = vmatpush2.msra.mxu0 0.0
        %4075 = vmatprep.subr.mxu0 0.0
        %4076 = vmatpush2.msra.mxu0 0.0
        %4077 = vmatprep.mubr.f32.mxu0 0.0
        %4078 = vmatmul.mubr.f32.gmra.mxu0 %v3916
        %v4079 = vpop.f32.mrf.mxu0
        %v4080 = vadd.f32 0.0, %v4079
        %v4081 = vpop.f32.mrf.mxu0
        %v4082 = vadd.f32 0.0, %v4081
        %4083 = vmatprep.mubr.f32.mxu0 0.0
        %4084 = vmatmul.mubr.f32.gmra.mxu0 %v3918
        %v4085 = vpop.f32.mrf.mxu0
        %v4086 = vadd.f32 0.0, %v4085
        %v4087 = vpop.f32.mrf.mxu0
        %v4088 = vadd.f32 0.0, %v4087
        %4089 = vmatprep.mubr.f32.mxu0 0.0
        %4090 = vmatmul.mubr.f32.gmra.mxu0 %v3920
        %v4091 = vpop.f32.mrf.mxu0
        %v4092 = vadd.f32 0.0, %v4091
        %v4093 = vpop.f32.mrf.mxu0
        %v4094 = vadd.f32 0.0, %v4093
        %4095 = vmatprep.mubr.f32.mxu0 0.0
        %4096 = vmatmul.mubr.f32.gmra.mxu0 %v3922
        %v4097 = vpop.f32.mrf.mxu0
        %v4098 = vadd.f32 0.0, %v4097
        %v4099 = vpop.f32.mrf.mxu0
        %v4100 = vadd.f32 0.0, %v4099
        %4101 = vdwg.mxu0
        %v4102 = vsel %vm1473, %v3760, 0
        %v4104 = vsel %vm1473, %v3763, 0
        %v4106 = vsel %vm1473, %v3766, 0
        %v4108 = vsel %vm1473, %v3769, 0
        %4110 = vmatprep.subr.mxu0 0.0
        %4111 = vmatpush1.msra.mxu0 0.0
        %4112 = vmatprep.subr.mxu0 0.0
        %4113 = vmatpush1.msra.mxu0 0.0
        %4114 = vmatprep.subr.mxu0 0.0
        %4115 = vmatpush1.msra.mxu0 0.0
        %4116 = vmatprep.subr.mxu0 0.0
        %4117 = vmatpush1.msra.mxu0 0.0
        %4118 = vmatprep.subr.mxu0 0.0
        %4119 = vmatpush1.msra.mxu0 0.0
        %4120 = vmatprep.subr.mxu0 0.0
        %4121 = vmatpush1.msra.mxu0 0.0
        %4122 = vmatprep.subr.mxu0 0.0
        %4123 = vmatpush1.msra.mxu0 0.0
        %4124 = vmatprep.subr.mxu0 0.0
        %4125 = vmatpush1.msra.mxu0 0.0
        %4126 = vmatprep.subr.mxu0 0.0
        %4127 = vmatpush1.msra.mxu0 0.0
        %4128 = vmatprep.subr.mxu0 0.0
        %4129 = vmatpush1.msra.mxu0 0.0
        %4130 = vmatprep.subr.mxu0 0.0
        %4131 = vmatpush1.msra.mxu0 0.0
        %4132 = vmatprep.subr.mxu0 0.0
        %4133 = vmatpush1.msra.mxu0 0.0
        %4134 = vmatprep.subr.mxu0 %v3837
        %4135 = vmatpush1.msra.mxu0 %v3836
        %4136 = vmatprep.subr.mxu0 %v3833
        %4137 = vmatpush1.msra.mxu0 %v3832
        %4138 = vmatprep.subr.mxu0 %v3829
        %4139 = vmatpush1.msra.mxu0 %v3828
        %4140 = vmatprep.subr.mxu0 %v3825
        %4141 = vmatpush1.msra.mxu0 %v3824
        %4142 = vmatprep.subr.mxu0 0.0
        %4143 = vmatpush2.msra.mxu0 0.0
        %4144 = vmatprep.subr.mxu0 0.0
        %4145 = vmatpush2.msra.mxu0 0.0
        %4146 = vmatprep.subr.mxu0 0.0
        %4147 = vmatpush2.msra.mxu0 0.0
        %4148 = vmatprep.subr.mxu0 0.0
        %4149 = vmatpush2.msra.mxu0 0.0
        %4150 = vmatprep.subr.mxu0 0.0
        %4151 = vmatpush2.msra.mxu0 0.0
        %4152 = vmatprep.subr.mxu0 0.0
        %4153 = vmatpush2.msra.mxu0 0.0
        %4154 = vmatprep.subr.mxu0 0.0
        %4155 = vmatpush2.msra.mxu0 0.0
        %4156 = vmatprep.subr.mxu0 0.0
        %4157 = vmatpush2.msra.mxu0 0.0
        %4158 = vmatprep.subr.mxu0 0.0
        %4159 = vmatpush2.msra.mxu0 0.0
        %4160 = vmatprep.subr.mxu0 0.0
        %4161 = vmatpush2.msra.mxu0 0.0
        %4162 = vmatprep.subr.mxu0 0.0
        %4163 = vmatpush2.msra.mxu0 0.0
        %4164 = vmatprep.subr.mxu0 0.0
        %4165 = vmatpush2.msra.mxu0 0.0
        %4166 = vmatprep.subr.mxu0 0.0
        %4167 = vmatpush2.msra.mxu0 0.0
        %4168 = vmatprep.subr.mxu0 0.0
        %4169 = vmatpush2.msra.mxu0 0.0
        %4170 = vmatprep.subr.mxu0 0.0
        %4171 = vmatpush2.msra.mxu0 0.0
        %4172 = vmatprep.subr.mxu0 0.0
        %4173 = vmatpush2.msra.mxu0 0.0
        %4174 = vmatprep.mubr.f32.mxu0 0.0
        %4175 = vmatmul.mubr.f32.gmra.mxu0 %v4102
        %v4176 = vpop.f32.mrf.mxu0
        %v4177 = vadd.f32 %v3991, %v4176
        %v4178 = vpop.f32.mrf.mxu0
        %v4179 = vadd.f32 %v3993, %v4178
        %4180 = vmatprep.mubr.f32.mxu0 0.0
        %4181 = vmatmul.mubr.f32.gmra.mxu0 %v4104
        %v4182 = vpop.f32.mrf.mxu0
        %v4183 = vadd.f32 %v3997, %v4182
        %v4184 = vpop.f32.mrf.mxu0
        %v4185 = vadd.f32 %v3999, %v4184
        %4186 = vmatprep.mubr.f32.mxu0 0.0
        %4187 = vmatmul.mubr.f32.gmra.mxu0 %v4106
        %v4188 = vpop.f32.mrf.mxu0
        %v4189 = vadd.f32 %v4003, %v4188
        %v4190 = vpop.f32.mrf.mxu0
        %v4191 = vadd.f32 %v4005, %v4190
        %4192 = vmatprep.mubr.f32.mxu0 0.0
        %4193 = vmatmul.mubr.f32.gmra.mxu0 %v4108
        %v4194 = vpop.f32.mrf.mxu0
        %v4195 = vadd.f32 %v4009, %v4194
        %v4196 = vpop.f32.mrf.mxu0
        %v4197 = vadd.f32 %v4011, %v4196
        %4198 = vdwg.mxu0
        %4199 = vmatprep.subr.mxu0 0.0
        %4200 = vmatpush1.msra.mxu0 0.0
        %4201 = vmatprep.subr.mxu0 0.0
        %4202 = vmatpush1.msra.mxu0 0.0
        %4203 = vmatprep.subr.mxu0 0.0
        %4204 = vmatpush1.msra.mxu0 0.0
        %4205 = vmatprep.subr.mxu0 0.0
        %4206 = vmatpush1.msra.mxu0 0.0
        %4207 = vmatprep.subr.mxu0 0.0
        %4208 = vmatpush1.msra.mxu0 0.0
        %4209 = vmatprep.subr.mxu0 0.0
        %4210 = vmatpush1.msra.mxu0 0.0
        %4211 = vmatprep.subr.mxu0 0.0
        %4212 = vmatpush1.msra.mxu0 0.0
        %4213 = vmatprep.subr.mxu0 0.0
        %4214 = vmatpush1.msra.mxu0 0.0
        %4215 = vmatprep.subr.mxu0 0.0
        %4216 = vmatpush1.msra.mxu0 0.0
        %4217 = vmatprep.subr.mxu0 0.0
        %4218 = vmatpush1.msra.mxu0 0.0
        %4219 = vmatprep.subr.mxu0 0.0
        %4220 = vmatpush1.msra.mxu0 0.0
        %4221 = vmatprep.subr.mxu0 0.0
        %4222 = vmatpush1.msra.mxu0 0.0
        %4223 = vmatprep.subr.mxu0 %v3839
        %4224 = vmatpush1.msra.mxu0 %v3838
        %4225 = vmatprep.subr.mxu0 %v3835
        %4226 = vmatpush1.msra.mxu0 %v3834
        %4227 = vmatprep.subr.mxu0 %v3831
        %4228 = vmatpush1.msra.mxu0 %v3830
        %4229 = vmatprep.subr.mxu0 %v3827
        %4230 = vmatpush1.msra.mxu0 %v3826
        %4231 = vmatprep.subr.mxu0 0.0
        %4232 = vmatpush2.msra.mxu0 0.0
        %4233 = vmatprep.subr.mxu0 0.0
        %4234 = vmatpush2.msra.mxu0 0.0
        %4235 = vmatprep.subr.mxu0 0.0
        %4236 = vmatpush2.msra.mxu0 0.0
        %4237 = vmatprep.subr.mxu0 0.0
        %4238 = vmatpush2.msra.mxu0 0.0
        %4239 = vmatprep.subr.mxu0 0.0
        %4240 = vmatpush2.msra.mxu0 0.0
        %4241 = vmatprep.subr.mxu0 0.0
        %4242 = vmatpush2.msra.mxu0 0.0
        %4243 = vmatprep.subr.mxu0 0.0
        %4244 = vmatpush2.msra.mxu0 0.0
        %4245 = vmatprep.subr.mxu0 0.0
        %4246 = vmatpush2.msra.mxu0 0.0
        %4247 = vmatprep.subr.mxu0 0.0
        %4248 = vmatpush2.msra.mxu0 0.0
        %4249 = vmatprep.subr.mxu0 0.0
        %4250 = vmatpush2.msra.mxu0 0.0
        %4251 = vmatprep.subr.mxu0 0.0
        %4252 = vmatpush2.msra.mxu0 0.0
        %4253 = vmatprep.subr.mxu0 0.0
        %4254 = vmatpush2.msra.mxu0 0.0
        %4255 = vmatprep.subr.mxu0 0.0
        %4256 = vmatpush2.msra.mxu0 0.0
        %4257 = vmatprep.subr.mxu0 0.0
        %4258 = vmatpush2.msra.mxu0 0.0
        %4259 = vmatprep.subr.mxu0 0.0
        %4260 = vmatpush2.msra.mxu0 0.0
        %4261 = vmatprep.subr.mxu0 0.0
        %4262 = vmatpush2.msra.mxu0 0.0
        %4263 = vmatprep.mubr.f32.mxu0 0.0
        %4264 = vmatmul.mubr.f32.gmra.mxu0 %v4102
        %v4265 = vpop.f32.mrf.mxu0
        %v4266 = vadd.f32 %v4080, %v4265
        %v4267 = vpop.f32.mrf.mxu0
        %v4268 = vadd.f32 %v4082, %v4267
        %4269 = vmatprep.mubr.f32.mxu0 0.0
        %4270 = vmatmul.mubr.f32.gmra.mxu0 %v4104
        %v4271 = vpop.f32.mrf.mxu0
        %v4272 = vadd.f32 %v4086, %v4271
        %v4273 = vpop.f32.mrf.mxu0
        %v4274 = vadd.f32 %v4088, %v4273
        %4275 = vmatprep.mubr.f32.mxu0 0.0
        %4276 = vmatmul.mubr.f32.gmra.mxu0 %v4106
        %v4277 = vpop.f32.mrf.mxu0
        %v4278 = vadd.f32 %v4092, %v4277
        %v4279 = vpop.f32.mrf.mxu0
        %v4280 = vadd.f32 %v4094, %v4279
        %4281 = vmatprep.mubr.f32.mxu0 0.0
        %4282 = vmatmul.mubr.f32.gmra.mxu0 %v4108
        %v4283 = vpop.f32.mrf.mxu0
        %v4284 = vadd.f32 %v4098, %v4283
        %v4285 = vpop.f32.mrf.mxu0
        %v4286 = vadd.f32 %v4100, %v4285
        %4287 = vdwg.mxu0
        %4288 = vrot.lane.b32.xlu0 %v3728, 15
        %v4289 = vpop.permute.xlu0 %4288
        %4290 = vrot.lane.b32.xlu0 %v3732, 15
        %v4291 = vpop.permute.xlu0 %4290
        %4292 = vrot.lane.b32.xlu0 %v3736, 15
        %v4293 = vpop.permute.xlu0 %4292
        %4294 = vrot.lane.b32.xlu0 %v3740, 15
        %v4295 = vpop.permute.xlu0 %4294
        %4296 = vrot.lane.b32.xlu0 %v3729, 15
        %v4297 = vpop.permute.xlu0 %4296
        %4298 = vrot.lane.b32.xlu0 %v3733, 15
        %v4299 = vpop.permute.xlu0 %4298
        %4300 = vrot.lane.b32.xlu0 %v3737, 15
        %v4301 = vpop.permute.xlu0 %4300
        %4302 = vrot.lane.b32.xlu0 %v3741, 15
        %v4303 = vpop.permute.xlu0 %4302
        %4304 = vrot.lane.b32.xlu0 %v3730, 15
        %v4305 = vpop.permute.xlu0 %4304
        %4306 = vrot.lane.b32.xlu0 %v3734, 15
        %v4307 = vpop.permute.xlu0 %4306
        %4308 = vrot.lane.b32.xlu0 %v3738, 15
        %v4309 = vpop.permute.xlu0 %4308
        %4310 = vrot.lane.b32.xlu0 %v3742, 15
        %v4311 = vpop.permute.xlu0 %4310
        %4312 = vrot.lane.b32.xlu0 %v3731, 15
        %v4313 = vpop.permute.xlu0 %4312
        %4314 = vrot.lane.b32.xlu0 %v3735, 15
        %v4315 = vpop.permute.xlu0 %4314
        %4316 = vrot.lane.b32.xlu0 %v3739, 15
        %v4317 = vpop.permute.xlu0 %4316
        %4318 = vrot.lane.b32.xlu0 %v3743, 15
        %v4319 = vpop.permute.xlu0 %4318
        %v4320 = vsel %vm735, %v4305, %v4313
        %v4321 = vsel %vm735, %v4307, %v4315
        %v4322 = vsel %vm735, %v4309, %v4317
        %v4323 = vsel %vm735, %v4311, %v4319
        %v4324 = vsel %vm735, %v4297, %v4305
        %v4325 = vsel %vm735, %v4299, %v4307
        %v4326 = vsel %vm735, %v4301, %v4309
        %v4327 = vsel %vm735, %v4303, %v4311
        %v4328 = vsel %vm735, %v4289, %v4297
        %v4329 = vsel %vm735, %v4291, %v4299
        %v4330 = vsel %vm735, %v4293, %v4301
        %v4331 = vsel %vm735, %v4295, %v4303
        %v4332 = vsel %vm735, %v4313, %v4289
        %v4333 = vsel %vm735, %v4315, %v4291
        %v4334 = vsel %vm735, %v4317, %v4293
        %v4335 = vsel %vm735, %v4319, %v4295
        %v4336 = vmul.f32 %v4332, %v744
        %v4337 = vmul.f32 %v4328, %v748
        %v4338 = vmul.f32 %v4324, %v752
        %v4339 = vmul.f32 %v4320, %v756
        %v4340 = vmul.f32 %v4333, %v744
        %v4341 = vmul.f32 %v4329, %v748
        %v4342 = vmul.f32 %v4325, %v752
        %v4343 = vmul.f32 %v4321, %v756
        %v4344 = vmul.f32 %v4334, %v744
        %v4345 = vmul.f32 %v4330, %v748
        %v4346 = vmul.f32 %v4326, %v752
        %v4347 = vmul.f32 %v4322, %v756
        %v4348 = vmul.f32 %v4335, %v744
        %v4349 = vmul.f32 %v4331, %v748
        %v4350 = vmul.f32 %v4327, %v752
        %v4351 = vmul.f32 %v4323, %v756
        %4352 = vrot.lane.b32.xlu0 %v3760, 64
        %v4353 = vpop.permute.xlu0 %4352
        %4354 = vrot.lane.b32.xlu0 %v3763, 64
        %v4355 = vpop.permute.xlu0 %4354
        %4356 = vrot.lane.b32.xlu0 %v3766, 64
        %v4357 = vpop.permute.xlu0 %4356
        %4358 = vrot.lane.b32.xlu0 %v3769, 64
        %v4359 = vpop.permute.xlu0 %4358
        %v4360 = vsel %vm1473, %v4353, 0
        %v4362 = vsel %vm1473, %v4355, 0
        %v4364 = vsel %vm1473, %v4357, 0
        %v4366 = vsel %vm1473, %v4359, 0
        %4368 = vmatprep.subr.mxu0 0.0
        %4369 = vmatpush1.msra.mxu0 0.0
        %4370 = vmatprep.subr.mxu0 0.0
        %4371 = vmatpush1.msra.mxu0 0.0
        %4372 = vmatprep.subr.mxu0 0.0
        %4373 = vmatpush1.msra.mxu0 0.0
        %4374 = vmatprep.subr.mxu0 0.0
        %4375 = vmatpush1.msra.mxu0 0.0
        %4376 = vmatprep.subr.mxu0 0.0
        %4377 = vmatpush1.msra.mxu0 0.0
        %4378 = vmatprep.subr.mxu0 0.0
        %4379 = vmatpush1.msra.mxu0 0.0
        %4380 = vmatprep.subr.mxu0 0.0
        %4381 = vmatpush1.msra.mxu0 0.0
        %4382 = vmatprep.subr.mxu0 0.0
        %4383 = vmatpush1.msra.mxu0 0.0
        %4384 = vmatprep.subr.mxu0 0.0
        %4385 = vmatpush1.msra.mxu0 0.0
        %4386 = vmatprep.subr.mxu0 0.0
        %4387 = vmatpush1.msra.mxu0 0.0
        %4388 = vmatprep.subr.mxu0 0.0
        %4389 = vmatpush1.msra.mxu0 0.0
        %4390 = vmatprep.subr.mxu0 0.0
        %4391 = vmatpush1.msra.mxu0 0.0
        %4392 = vmatprep.subr.mxu0 %v4349
        %4393 = vmatpush1.msra.mxu0 %v4348
        %4394 = vmatprep.subr.mxu0 %v4345
        %4395 = vmatpush1.msra.mxu0 %v4344
        %4396 = vmatprep.subr.mxu0 %v4341
        %4397 = vmatpush1.msra.mxu0 %v4340
        %4398 = vmatprep.subr.mxu0 %v4337
        %4399 = vmatpush1.msra.mxu0 %v4336
        %4400 = vmatprep.subr.mxu0 0.0
        %4401 = vmatpush2.msra.mxu0 0.0
        %4402 = vmatprep.subr.mxu0 0.0
        %4403 = vmatpush2.msra.mxu0 0.0
        %4404 = vmatprep.subr.mxu0 0.0
        %4405 = vmatpush2.msra.mxu0 0.0
        %4406 = vmatprep.subr.mxu0 0.0
        %4407 = vmatpush2.msra.mxu0 0.0
        %4408 = vmatprep.subr.mxu0 0.0
        %4409 = vmatpush2.msra.mxu0 0.0
        %4410 = vmatprep.subr.mxu0 0.0
        %4411 = vmatpush2.msra.mxu0 0.0
        %4412 = vmatprep.subr.mxu0 0.0
        %4413 = vmatpush2.msra.mxu0 0.0
        %4414 = vmatprep.subr.mxu0 0.0
        %4415 = vmatpush2.msra.mxu0 0.0
        %4416 = vmatprep.subr.mxu0 0.0
        %4417 = vmatpush2.msra.mxu0 0.0
        %4418 = vmatprep.subr.mxu0 0.0
        %4419 = vmatpush2.msra.mxu0 0.0
        %4420 = vmatprep.subr.mxu0 0.0
        %4421 = vmatpush2.msra.mxu0 0.0
        %4422 = vmatprep.subr.mxu0 0.0
        %4423 = vmatpush2.msra.mxu0 0.0
        %4424 = vmatprep.subr.mxu0 0.0
        %4425 = vmatpush2.msra.mxu0 0.0
        %4426 = vmatprep.subr.mxu0 0.0
        %4427 = vmatpush2.msra.mxu0 0.0
        %4428 = vmatprep.subr.mxu0 0.0
        %4429 = vmatpush2.msra.mxu0 0.0
        %4430 = vmatprep.subr.mxu0 0.0
        %4431 = vmatpush2.msra.mxu0 0.0
        %4432 = vmatprep.mubr.f32.mxu0 0.0
        %4433 = vmatmul.mubr.f32.gmra.mxu0 %v4360
        %v4434 = vpop.f32.mrf.mxu0
        %v4435 = vadd.f32 0.0, %v4434
        %v4436 = vpop.f32.mrf.mxu0
        %v4437 = vadd.f32 0.0, %v4436
        %4438 = vmatprep.mubr.f32.mxu0 0.0
        %4439 = vmatmul.mubr.f32.gmra.mxu0 %v4362
        %v4440 = vpop.f32.mrf.mxu0
        %v4441 = vadd.f32 0.0, %v4440
        %v4442 = vpop.f32.mrf.mxu0
        %v4443 = vadd.f32 0.0, %v4442
        %4444 = vmatprep.mubr.f32.mxu0 0.0
        %4445 = vmatmul.mubr.f32.gmra.mxu0 %v4364
        %v4446 = vpop.f32.mrf.mxu0
        %v4447 = vadd.f32 0.0, %v4446
        %v4448 = vpop.f32.mrf.mxu0
        %v4449 = vadd.f32 0.0, %v4448
        %4450 = vmatprep.mubr.f32.mxu0 0.0
        %4451 = vmatmul.mubr.f32.gmra.mxu0 %v4366
        %v4452 = vpop.f32.mrf.mxu0
        %v4453 = vadd.f32 0.0, %v4452
        %v4454 = vpop.f32.mrf.mxu0
        %v4455 = vadd.f32 0.0, %v4454
        %4456 = vdwg.mxu0
        %4457 = vmatprep.subr.mxu0 0.0
        %4458 = vmatpush1.msra.mxu0 0.0
        %4459 = vmatprep.subr.mxu0 0.0
        %4460 = vmatpush1.msra.mxu0 0.0
        %4461 = vmatprep.subr.mxu0 0.0
        %4462 = vmatpush1.msra.mxu0 0.0
        %4463 = vmatprep.subr.mxu0 0.0
        %4464 = vmatpush1.msra.mxu0 0.0
        %4465 = vmatprep.subr.mxu0 0.0
        %4466 = vmatpush1.msra.mxu0 0.0
        %4467 = vmatprep.subr.mxu0 0.0
        %4468 = vmatpush1.msra.mxu0 0.0
        %4469 = vmatprep.subr.mxu0 0.0
        %4470 = vmatpush1.msra.mxu0 0.0
        %4471 = vmatprep.subr.mxu0 0.0
        %4472 = vmatpush1.msra.mxu0 0.0
        %4473 = vmatprep.subr.mxu0 0.0
        %4474 = vmatpush1.msra.mxu0 0.0
        %4475 = vmatprep.subr.mxu0 0.0
        %4476 = vmatpush1.msra.mxu0 0.0
        %4477 = vmatprep.subr.mxu0 0.0
        %4478 = vmatpush1.msra.mxu0 0.0
        %4479 = vmatprep.subr.mxu0 0.0
        %4480 = vmatpush1.msra.mxu0 0.0
        %4481 = vmatprep.subr.mxu0 %v4351
        %4482 = vmatpush1.msra.mxu0 %v4350
        %4483 = vmatprep.subr.mxu0 %v4347
        %4484 = vmatpush1.msra.mxu0 %v4346
        %4485 = vmatprep.subr.mxu0 %v4343
        %4486 = vmatpush1.msra.mxu0 %v4342
        %4487 = vmatprep.subr.mxu0 %v4339
        %4488 = vmatpush1.msra.mxu0 %v4338
        %4489 = vmatprep.subr.mxu0 0.0
        %4490 = vmatpush2.msra.mxu0 0.0
        %4491 = vmatprep.subr.mxu0 0.0
        %4492 = vmatpush2.msra.mxu0 0.0
        %4493 = vmatprep.subr.mxu0 0.0
        %4494 = vmatpush2.msra.mxu0 0.0
        %4495 = vmatprep.subr.mxu0 0.0
        %4496 = vmatpush2.msra.mxu0 0.0
        %4497 = vmatprep.subr.mxu0 0.0
        %4498 = vmatpush2.msra.mxu0 0.0
        %4499 = vmatprep.subr.mxu0 0.0
        %4500 = vmatpush2.msra.mxu0 0.0
        %4501 = vmatprep.subr.mxu0 0.0
        %4502 = vmatpush2.msra.mxu0 0.0
        %4503 = vmatprep.subr.mxu0 0.0
        %4504 = vmatpush2.msra.mxu0 0.0
        %4505 = vmatprep.subr.mxu0 0.0
        %4506 = vmatpush2.msra.mxu0 0.0
        %4507 = vmatprep.subr.mxu0 0.0
        %4508 = vmatpush2.msra.mxu0 0.0
        %4509 = vmatprep.subr.mxu0 0.0
        %4510 = vmatpush2.msra.mxu0 0.0
        %4511 = vmatprep.subr.mxu0 0.0
        %4512 = vmatpush2.msra.mxu0 0.0
        %4513 = vmatprep.subr.mxu0 0.0
        %4514 = vmatpush2.msra.mxu0 0.0
        %4515 = vmatprep.subr.mxu0 0.0
        %4516 = vmatpush2.msra.mxu0 0.0
        %4517 = vmatprep.subr.mxu0 0.0
        %4518 = vmatpush2.msra.mxu0 0.0
        %4519 = vmatprep.subr.mxu0 0.0
        %4520 = vmatpush2.msra.mxu0 0.0
        %4521 = vmatprep.mubr.f32.mxu0 0.0
        %4522 = vmatmul.mubr.f32.gmra.mxu0 %v4360
        %v4523 = vpop.f32.mrf.mxu0
        %v4524 = vadd.f32 0.0, %v4523
        %v4525 = vpop.f32.mrf.mxu0
        %v4526 = vadd.f32 0.0, %v4525
        %4527 = vmatprep.mubr.f32.mxu0 0.0
        %4528 = vmatmul.mubr.f32.gmra.mxu0 %v4362
        %v4529 = vpop.f32.mrf.mxu0
        %v4530 = vadd.f32 0.0, %v4529
        %v4531 = vpop.f32.mrf.mxu0
        %v4532 = vadd.f32 0.0, %v4531
        %4533 = vmatprep.mubr.f32.mxu0 0.0
        %4534 = vmatmul.mubr.f32.gmra.mxu0 %v4364
        %v4535 = vpop.f32.mrf.mxu0
        %v4536 = vadd.f32 0.0, %v4535
        %v4537 = vpop.f32.mrf.mxu0
        %v4538 = vadd.f32 0.0, %v4537
        %4539 = vmatprep.mubr.f32.mxu0 0.0
        %4540 = vmatmul.mubr.f32.gmra.mxu0 %v4366
        %v4541 = vpop.f32.mrf.mxu0
        %v4542 = vadd.f32 0.0, %v4541
        %v4543 = vpop.f32.mrf.mxu0
        %v4544 = vadd.f32 0.0, %v4543
        %4545 = vdwg.mxu0
        %v4546 = vadd.f32 %v4177, %v4435
        %v4547 = vadd.f32 %v4179, %v4437
        %v4548 = vadd.f32 %v4266, %v4524
        %v4549 = vadd.f32 %v4268, %v4526
        %v4550 = vadd.f32 %v4183, %v4441
        %v4551 = vadd.f32 %v4185, %v4443
        %v4552 = vadd.f32 %v4272, %v4530
        %v4553 = vadd.f32 %v4274, %v4532
        %v4554 = vadd.f32 %v4189, %v4447
        %v4555 = vadd.f32 %v4191, %v4449
        %v4556 = vadd.f32 %v4278, %v4536
        %v4557 = vadd.f32 %v4280, %v4538
        %v4558 = vadd.f32 %v4195, %v4453
        %v4559 = vadd.f32 %v4197, %v4455
        %v4560 = vadd.f32 %v4284, %v4542
        %v4561 = vadd.f32 %v4286, %v4544
        %4562 = vrot.lane.b32.xlu0 %v3728, 1
        %v4563 = vpop.permute.xlu0 %4562
        %4564 = vrot.lane.b32.xlu0 %v3732, 1
        %v4565 = vpop.permute.xlu0 %4564
        %4566 = vrot.lane.b32.xlu0 %v3736, 1
        %v4567 = vpop.permute.xlu0 %4566
        %4568 = vrot.lane.b32.xlu0 %v3740, 1
        %v4569 = vpop.permute.xlu0 %4568
        %4570 = vrot.lane.b32.xlu0 %v3729, 1
        %v4571 = vpop.permute.xlu0 %4570
        %4572 = vrot.lane.b32.xlu0 %v3733, 1
        %v4573 = vpop.permute.xlu0 %4572
        %4574 = vrot.lane.b32.xlu0 %v3737, 1
        %v4575 = vpop.permute.xlu0 %4574
        %4576 = vrot.lane.b32.xlu0 %v3741, 1
        %v4577 = vpop.permute.xlu0 %4576
        %4578 = vrot.lane.b32.xlu0 %v3730, 1
        %v4579 = vpop.permute.xlu0 %4578
        %4580 = vrot.lane.b32.xlu0 %v3734, 1
        %v4581 = vpop.permute.xlu0 %4580
        %4582 = vrot.lane.b32.xlu0 %v3738, 1
        %v4583 = vpop.permute.xlu0 %4582
        %4584 = vrot.lane.b32.xlu0 %v3742, 1
        %v4585 = vpop.permute.xlu0 %4584
        %4586 = vrot.lane.b32.xlu0 %v3731, 1
        %v4587 = vpop.permute.xlu0 %4586
        %4588 = vrot.lane.b32.xlu0 %v3735, 1
        %v4589 = vpop.permute.xlu0 %4588
        %4590 = vrot.lane.b32.xlu0 %v3739, 1
        %v4591 = vpop.permute.xlu0 %4590
        %4592 = vrot.lane.b32.xlu0 %v3743, 1
        %v4593 = vpop.permute.xlu0 %4592
        %v4594 = vsel %vm773, %v4579, %v4587
        %v4595 = vsel %vm773, %v4581, %v4589
        %v4596 = vsel %vm773, %v4583, %v4591
        %v4597 = vsel %vm773, %v4585, %v4593
        %v4598 = vsel %vm773, %v4571, %v4579
        %v4599 = vsel %vm773, %v4573, %v4581
        %v4600 = vsel %vm773, %v4575, %v4583
        %v4601 = vsel %vm773, %v4577, %v4585
        %v4602 = vsel %vm773, %v4563, %v4571
        %v4603 = vsel %vm773, %v4565, %v4573
        %v4604 = vsel %vm773, %v4567, %v4575
        %v4605 = vsel %vm773, %v4569, %v4577
        %v4606 = vsel %vm773, %v4587, %v4563
        %v4607 = vsel %vm773, %v4589, %v4565
        %v4608 = vsel %vm773, %v4591, %v4567
        %v4609 = vsel %vm773, %v4593, %v4569
        %v4610 = vmul.f32 %v4606, %v782
        %v4611 = vmul.f32 %v4602, %v786
        %v4612 = vmul.f32 %v4598, %v790
        %v4613 = vmul.f32 %v4594, %v794
        %v4614 = vmul.f32 %v4607, %v782
        %v4615 = vmul.f32 %v4603, %v786
        %v4616 = vmul.f32 %v4599, %v790
        %v4617 = vmul.f32 %v4595, %v794
        %v4618 = vmul.f32 %v4608, %v782
        %v4619 = vmul.f32 %v4604, %v786
        %v4620 = vmul.f32 %v4600, %v790
        %v4621 = vmul.f32 %v4596, %v794
        %v4622 = vmul.f32 %v4609, %v782
        %v4623 = vmul.f32 %v4605, %v786
        %v4624 = vmul.f32 %v4601, %v790
        %v4625 = vmul.f32 %v4597, %v794
        %4626 = vrot.lane.b32.xlu0 %v3760, 32
        %v4627 = vpop.permute.xlu0 %4626
        %4628 = vrot.lane.b32.xlu0 %v3763, 32
        %v4629 = vpop.permute.xlu0 %4628
        %4630 = vrot.lane.b32.xlu0 %v3766, 32
        %v4631 = vpop.permute.xlu0 %4630
        %4632 = vrot.lane.b32.xlu0 %v3769, 32
        %v4633 = vpop.permute.xlu0 %4632
        %v4634 = vsel %vm1473, %v4627, 0
        %v4636 = vsel %vm1473, %v4629, 0
        %v4638 = vsel %vm1473, %v4631, 0
        %v4640 = vsel %vm1473, %v4633, 0
        %4642 = vmatprep.subr.mxu0 0.0
        %4643 = vmatpush1.msra.mxu0 0.0
        %4644 = vmatprep.subr.mxu0 0.0
        %4645 = vmatpush1.msra.mxu0 0.0
        %4646 = vmatprep.subr.mxu0 0.0
        %4647 = vmatpush1.msra.mxu0 0.0
        %4648 = vmatprep.subr.mxu0 0.0
        %4649 = vmatpush1.msra.mxu0 0.0
        %4650 = vmatprep.subr.mxu0 0.0
        %4651 = vmatpush1.msra.mxu0 0.0
        %4652 = vmatprep.subr.mxu0 0.0
        %4653 = vmatpush1.msra.mxu0 0.0
        %4654 = vmatprep.subr.mxu0 0.0
        %4655 = vmatpush1.msra.mxu0 0.0
        %4656 = vmatprep.subr.mxu0 0.0
        %4657 = vmatpush1.msra.mxu0 0.0
        %4658 = vmatprep.subr.mxu0 0.0
        %4659 = vmatpush1.msra.mxu0 0.0
        %4660 = vmatprep.subr.mxu0 0.0
        %4661 = vmatpush1.msra.mxu0 0.0
        %4662 = vmatprep.subr.mxu0 0.0
        %4663 = vmatpush1.msra.mxu0 0.0
        %4664 = vmatprep.subr.mxu0 0.0
        %4665 = vmatpush1.msra.mxu0 0.0
        %4666 = vmatprep.subr.mxu0 %v4623
        %4667 = vmatpush1.msra.mxu0 %v4622
        %4668 = vmatprep.subr.mxu0 %v4619
        %4669 = vmatpush1.msra.mxu0 %v4618
        %4670 = vmatprep.subr.mxu0 %v4615
        %4671 = vmatpush1.msra.mxu0 %v4614
        %4672 = vmatprep.subr.mxu0 %v4611
        %4673 = vmatpush1.msra.mxu0 %v4610
        %4674 = vmatprep.subr.mxu0 0.0
        %4675 = vmatpush2.msra.mxu0 0.0
        %4676 = vmatprep.subr.mxu0 0.0
        %4677 = vmatpush2.msra.mxu0 0.0
        %4678 = vmatprep.subr.mxu0 0.0
        %4679 = vmatpush2.msra.mxu0 0.0
        %4680 = vmatprep.subr.mxu0 0.0
        %4681 = vmatpush2.msra.mxu0 0.0
        %4682 = vmatprep.subr.mxu0 0.0
        %4683 = vmatpush2.msra.mxu0 0.0
        %4684 = vmatprep.subr.mxu0 0.0
        %4685 = vmatpush2.msra.mxu0 0.0
        %4686 = vmatprep.subr.mxu0 0.0
        %4687 = vmatpush2.msra.mxu0 0.0
        %4688 = vmatprep.subr.mxu0 0.0
        %4689 = vmatpush2.msra.mxu0 0.0
        %4690 = vmatprep.subr.mxu0 0.0
        %4691 = vmatpush2.msra.mxu0 0.0
        %4692 = vmatprep.subr.mxu0 0.0
        %4693 = vmatpush2.msra.mxu0 0.0
        %4694 = vmatprep.subr.mxu0 0.0
        %4695 = vmatpush2.msra.mxu0 0.0
        %4696 = vmatprep.subr.mxu0 0.0
        %4697 = vmatpush2.msra.mxu0 0.0
        %4698 = vmatprep.subr.mxu0 0.0
        %4699 = vmatpush2.msra.mxu0 0.0
        %4700 = vmatprep.subr.mxu0 0.0
        %4701 = vmatpush2.msra.mxu0 0.0
        %4702 = vmatprep.subr.mxu0 0.0
        %4703 = vmatpush2.msra.mxu0 0.0
        %4704 = vmatprep.subr.mxu0 0.0
        %4705 = vmatpush2.msra.mxu0 0.0
        %4706 = vmatprep.mubr.f32.mxu0 0.0
        %4707 = vmatmul.mubr.f32.gmra.mxu0 %v4634
        %v4708 = vpop.f32.mrf.mxu0
        %v4709 = vadd.f32 0.0, %v4708
        %v4710 = vpop.f32.mrf.mxu0
        %v4711 = vadd.f32 0.0, %v4710
        %4712 = vmatprep.mubr.f32.mxu0 0.0
        %4713 = vmatmul.mubr.f32.gmra.mxu0 %v4636
        %v4714 = vpop.f32.mrf.mxu0
        %v4715 = vadd.f32 0.0, %v4714
        %v4716 = vpop.f32.mrf.mxu0
        %v4717 = vadd.f32 0.0, %v4716
        %4718 = vmatprep.mubr.f32.mxu0 0.0
        %4719 = vmatmul.mubr.f32.gmra.mxu0 %v4638
        %v4720 = vpop.f32.mrf.mxu0
        %v4721 = vadd.f32 0.0, %v4720
        %v4722 = vpop.f32.mrf.mxu0
        %v4723 = vadd.f32 0.0, %v4722
        %4724 = vmatprep.mubr.f32.mxu0 0.0
        %4725 = vmatmul.mubr.f32.gmra.mxu0 %v4640
        %v4726 = vpop.f32.mrf.mxu0
        %v4727 = vadd.f32 0.0, %v4726
        %v4728 = vpop.f32.mrf.mxu0
        %v4729 = vadd.f32 0.0, %v4728
        %4730 = vdwg.mxu0
        %4731 = vmatprep.subr.mxu0 0.0
        %4732 = vmatpush1.msra.mxu0 0.0
        %4733 = vmatprep.subr.mxu0 0.0
        %4734 = vmatpush1.msra.mxu0 0.0
        %4735 = vmatprep.subr.mxu0 0.0
        %4736 = vmatpush1.msra.mxu0 0.0
        %4737 = vmatprep.subr.mxu0 0.0
        %4738 = vmatpush1.msra.mxu0 0.0
        %4739 = vmatprep.subr.mxu0 0.0
        %4740 = vmatpush1.msra.mxu0 0.0
        %4741 = vmatprep.subr.mxu0 0.0
        %4742 = vmatpush1.msra.mxu0 0.0
        %4743 = vmatprep.subr.mxu0 0.0
        %4744 = vmatpush1.msra.mxu0 0.0
        %4745 = vmatprep.subr.mxu0 0.0
        %4746 = vmatpush1.msra.mxu0 0.0
        %4747 = vmatprep.subr.mxu0 0.0
        %4748 = vmatpush1.msra.mxu0 0.0
        %4749 = vmatprep.subr.mxu0 0.0
        %4750 = vmatpush1.msra.mxu0 0.0
        %4751 = vmatprep.subr.mxu0 0.0
        %4752 = vmatpush1.msra.mxu0 0.0
        %4753 = vmatprep.subr.mxu0 0.0
        %4754 = vmatpush1.msra.mxu0 0.0
        %4755 = vmatprep.subr.mxu0 %v4625
        %4756 = vmatpush1.msra.mxu0 %v4624
        %4757 = vmatprep.subr.mxu0 %v4621
        %4758 = vmatpush1.msra.mxu0 %v4620
        %4759 = vmatprep.subr.mxu0 %v4617
        %4760 = vmatpush1.msra.mxu0 %v4616
        %4761 = vmatprep.subr.mxu0 %v4613
        %4762 = vmatpush1.msra.mxu0 %v4612
        %4763 = vmatprep.subr.mxu0 0.0
        %4764 = vmatpush2.msra.mxu0 0.0
        %4765 = vmatprep.subr.mxu0 0.0
        %4766 = vmatpush2.msra.mxu0 0.0
        %4767 = vmatprep.subr.mxu0 0.0
        %4768 = vmatpush2.msra.mxu0 0.0
        %4769 = vmatprep.subr.mxu0 0.0
        %4770 = vmatpush2.msra.mxu0 0.0
        %4771 = vmatprep.subr.mxu0 0.0
        %4772 = vmatpush2.msra.mxu0 0.0
        %4773 = vmatprep.subr.mxu0 0.0
        %4774 = vmatpush2.msra.mxu0 0.0
        %4775 = vmatprep.subr.mxu0 0.0
        %4776 = vmatpush2.msra.mxu0 0.0
        %4777 = vmatprep.subr.mxu0 0.0
        %4778 = vmatpush2.msra.mxu0 0.0
        %4779 = vmatprep.subr.mxu0 0.0
        %4780 = vmatpush2.msra.mxu0 0.0
        %4781 = vmatprep.subr.mxu0 0.0
        %4782 = vmatpush2.msra.mxu0 0.0
        %4783 = vmatprep.subr.mxu0 0.0
        %4784 = vmatpush2.msra.mxu0 0.0
        %4785 = vmatprep.subr.mxu0 0.0
        %4786 = vmatpush2.msra.mxu0 0.0
        %4787 = vmatprep.subr.mxu0 0.0
        %4788 = vmatpush2.msra.mxu0 0.0
        %4789 = vmatprep.subr.mxu0 0.0
        %4790 = vmatpush2.msra.mxu0 0.0
        %4791 = vmatprep.subr.mxu0 0.0
        %4792 = vmatpush2.msra.mxu0 0.0
        %4793 = vmatprep.subr.mxu0 0.0
        %4794 = vmatpush2.msra.mxu0 0.0
        %4795 = vmatprep.mubr.f32.mxu0 0.0
        %4796 = vmatmul.mubr.f32.gmra.mxu0 %v4634
        %v4797 = vpop.f32.mrf.mxu0
        %v4798 = vadd.f32 0.0, %v4797
        %v4799 = vpop.f32.mrf.mxu0
        %v4800 = vadd.f32 0.0, %v4799
        %4801 = vmatprep.mubr.f32.mxu0 0.0
        %4802 = vmatmul.mubr.f32.gmra.mxu0 %v4636
        %v4803 = vpop.f32.mrf.mxu0
        %v4804 = vadd.f32 0.0, %v4803
        %v4805 = vpop.f32.mrf.mxu0
        %v4806 = vadd.f32 0.0, %v4805
        %4807 = vmatprep.mubr.f32.mxu0 0.0
        %4808 = vmatmul.mubr.f32.gmra.mxu0 %v4638
        %v4809 = vpop.f32.mrf.mxu0
        %v4810 = vadd.f32 0.0, %v4809
        %v4811 = vpop.f32.mrf.mxu0
        %v4812 = vadd.f32 0.0, %v4811
        %4813 = vmatprep.mubr.f32.mxu0 0.0
        %4814 = vmatmul.mubr.f32.gmra.mxu0 %v4640
        %v4815 = vpop.f32.mrf.mxu0
        %v4816 = vadd.f32 0.0, %v4815
        %v4817 = vpop.f32.mrf.mxu0
        %v4818 = vadd.f32 0.0, %v4817
        %4819 = vdwg.mxu0
        %v4820 = vadd.f32 %v4546, %v4709
        %v4821 = vadd.f32 %v4547, %v4711
        %v4822 = vadd.f32 %v4548, %v4798
        %v4823 = vadd.f32 %v4549, %v4800
        %v4824 = vadd.f32 %v4550, %v4715
        %v4825 = vadd.f32 %v4551, %v4717
        %v4826 = vadd.f32 %v4552, %v4804
        %v4827 = vadd.f32 %v4553, %v4806
        %v4828 = vadd.f32 %v4554, %v4721
        %v4829 = vadd.f32 %v4555, %v4723
        %v4830 = vadd.f32 %v4556, %v4810
        %v4831 = vadd.f32 %v4557, %v4812
        %v4832 = vadd.f32 %v4558, %v4727
        %v4833 = vadd.f32 %v4559, %v4729
        %v4834 = vadd.f32 %v4560, %v4816
        %v4835 = vadd.f32 %v4561, %v4818
        %v4837 = vsel %vm1473, %v3761, 0
        %v4840 = vsel %vm1473, %v3764, 0
        %v4843 = vsel %vm1473, %v3767, 0
        %v4846 = vsel %vm1473, %v3770, 0
        %4848 = vmatprep.subr.mxu0 0.0
        %4849 = vmatpush1.msra.mxu0 0.0
        %4850 = vmatprep.subr.mxu0 0.0
        %4851 = vmatpush1.msra.mxu0 0.0
        %4852 = vmatprep.subr.mxu0 0.0
        %4853 = vmatpush1.msra.mxu0 0.0
        %4854 = vmatprep.subr.mxu0 0.0
        %4855 = vmatpush1.msra.mxu0 0.0
        %4856 = vmatprep.subr.mxu0 0.0
        %4857 = vmatpush1.msra.mxu0 0.0
        %4858 = vmatprep.subr.mxu0 0.0
        %4859 = vmatpush1.msra.mxu0 0.0
        %4860 = vmatprep.subr.mxu0 0.0
        %4861 = vmatpush1.msra.mxu0 0.0
        %4862 = vmatprep.subr.mxu0 0.0
        %4863 = vmatpush1.msra.mxu0 0.0
        %4864 = vmatprep.subr.mxu0 0.0
        %4865 = vmatpush1.msra.mxu0 0.0
        %4866 = vmatprep.subr.mxu0 0.0
        %4867 = vmatpush1.msra.mxu0 0.0
        %4868 = vmatprep.subr.mxu0 0.0
        %4869 = vmatpush1.msra.mxu0 0.0
        %4870 = vmatprep.subr.mxu0 0.0
        %4871 = vmatpush1.msra.mxu0 0.0
        %4872 = vmatprep.subr.mxu0 %v3741
        %4873 = vmatpush1.msra.mxu0 %v3740
        %4874 = vmatprep.subr.mxu0 %v3737
        %4875 = vmatpush1.msra.mxu0 %v3736
        %4876 = vmatprep.subr.mxu0 %v3733
        %4877 = vmatpush1.msra.mxu0 %v3732
        %4878 = vmatprep.subr.mxu0 %v3729
        %4879 = vmatpush1.msra.mxu0 %v3728
        %4880 = vmatprep.subr.mxu0 0.0
        %4881 = vmatpush2.msra.mxu0 0.0
        %4882 = vmatprep.subr.mxu0 0.0
        %4883 = vmatpush2.msra.mxu0 0.0
        %4884 = vmatprep.subr.mxu0 0.0
        %4885 = vmatpush2.msra.mxu0 0.0
        %4886 = vmatprep.subr.mxu0 0.0
        %4887 = vmatpush2.msra.mxu0 0.0
        %4888 = vmatprep.subr.mxu0 0.0
        %4889 = vmatpush2.msra.mxu0 0.0
        %4890 = vmatprep.subr.mxu0 0.0
        %4891 = vmatpush2.msra.mxu0 0.0
        %4892 = vmatprep.subr.mxu0 0.0
        %4893 = vmatpush2.msra.mxu0 0.0
        %4894 = vmatprep.subr.mxu0 0.0
        %4895 = vmatpush2.msra.mxu0 0.0
        %4896 = vmatprep.subr.mxu0 0.0
        %4897 = vmatpush2.msra.mxu0 0.0
        %4898 = vmatprep.subr.mxu0 0.0
        %4899 = vmatpush2.msra.mxu0 0.0
        %4900 = vmatprep.subr.mxu0 0.0
        %4901 = vmatpush2.msra.mxu0 0.0
        %4902 = vmatprep.subr.mxu0 0.0
        %4903 = vmatpush2.msra.mxu0 0.0
        %4904 = vmatprep.subr.mxu0 0.0
        %4905 = vmatpush2.msra.mxu0 0.0
        %4906 = vmatprep.subr.mxu0 0.0
        %4907 = vmatpush2.msra.mxu0 0.0
        %4908 = vmatprep.subr.mxu0 0.0
        %4909 = vmatpush2.msra.mxu0 0.0
        %4910 = vmatprep.subr.mxu0 0.0
        %4911 = vmatpush2.msra.mxu0 0.0
        %4912 = vmatprep.mubr.f32.mxu0 0.0
        %4913 = vmatmul.mubr.f32.gmra.mxu0 %v4837
        %v4914 = vpop.f32.mrf.mxu0
        %v4915 = vadd.f32 0.0, %v4914
        %v4916 = vpop.f32.mrf.mxu0
        %v4917 = vadd.f32 0.0, %v4916
        %4918 = vmatprep.mubr.f32.mxu0 0.0
        %4919 = vmatmul.mubr.f32.gmra.mxu0 %v4840
        %v4920 = vpop.f32.mrf.mxu0
        %v4921 = vadd.f32 0.0, %v4920
        %v4922 = vpop.f32.mrf.mxu0
        %v4923 = vadd.f32 0.0, %v4922
        %4924 = vmatprep.mubr.f32.mxu0 0.0
        %4925 = vmatmul.mubr.f32.gmra.mxu0 %v4843
        %v4926 = vpop.f32.mrf.mxu0
        %v4927 = vadd.f32 0.0, %v4926
        %v4928 = vpop.f32.mrf.mxu0
        %v4929 = vadd.f32 0.0, %v4928
        %4930 = vmatprep.mubr.f32.mxu0 0.0
        %4931 = vmatmul.mubr.f32.gmra.mxu0 %v4846
        %v4932 = vpop.f32.mrf.mxu0
        %v4933 = vadd.f32 0.0, %v4932
        %v4934 = vpop.f32.mrf.mxu0
        %v4935 = vadd.f32 0.0, %v4934
        %4936 = vdwg.mxu0
        %4937 = vmatprep.subr.mxu0 0.0
        %4938 = vmatpush1.msra.mxu0 0.0
        %4939 = vmatprep.subr.mxu0 0.0
        %4940 = vmatpush1.msra.mxu0 0.0
        %4941 = vmatprep.subr.mxu0 0.0
        %4942 = vmatpush1.msra.mxu0 0.0
        %4943 = vmatprep.subr.mxu0 0.0
        %4944 = vmatpush1.msra.mxu0 0.0
        %4945 = vmatprep.subr.mxu0 0.0
        %4946 = vmatpush1.msra.mxu0 0.0
        %4947 = vmatprep.subr.mxu0 0.0
        %4948 = vmatpush1.msra.mxu0 0.0
        %4949 = vmatprep.subr.mxu0 0.0
        %4950 = vmatpush1.msra.mxu0 0.0
        %4951 = vmatprep.subr.mxu0 0.0
        %4952 = vmatpush1.msra.mxu0 0.0
        %4953 = vmatprep.subr.mxu0 0.0
        %4954 = vmatpush1.msra.mxu0 0.0
        %4955 = vmatprep.subr.mxu0 0.0
        %4956 = vmatpush1.msra.mxu0 0.0
        %4957 = vmatprep.subr.mxu0 0.0
        %4958 = vmatpush1.msra.mxu0 0.0
        %4959 = vmatprep.subr.mxu0 0.0
        %4960 = vmatpush1.msra.mxu0 0.0
        %4961 = vmatprep.subr.mxu0 %v3743
        %4962 = vmatpush1.msra.mxu0 %v3742
        %4963 = vmatprep.subr.mxu0 %v3739
        %4964 = vmatpush1.msra.mxu0 %v3738
        %4965 = vmatprep.subr.mxu0 %v3735
        %4966 = vmatpush1.msra.mxu0 %v3734
        %4967 = vmatprep.subr.mxu0 %v3731
        %4968 = vmatpush1.msra.mxu0 %v3730
        %4969 = vmatprep.subr.mxu0 0.0
        %4970 = vmatpush2.msra.mxu0 0.0
        %4971 = vmatprep.subr.mxu0 0.0
        %4972 = vmatpush2.msra.mxu0 0.0
        %4973 = vmatprep.subr.mxu0 0.0
        %4974 = vmatpush2.msra.mxu0 0.0
        %4975 = vmatprep.subr.mxu0 0.0
        %4976 = vmatpush2.msra.mxu0 0.0
        %4977 = vmatprep.subr.mxu0 0.0
        %4978 = vmatpush2.msra.mxu0 0.0
        %4979 = vmatprep.subr.mxu0 0.0
        %4980 = vmatpush2.msra.mxu0 0.0
        %4981 = vmatprep.subr.mxu0 0.0
        %4982 = vmatpush2.msra.mxu0 0.0
        %4983 = vmatprep.subr.mxu0 0.0
        %4984 = vmatpush2.msra.mxu0 0.0
        %4985 = vmatprep.subr.mxu0 0.0
        %4986 = vmatpush2.msra.mxu0 0.0
        %4987 = vmatprep.subr.mxu0 0.0
        %4988 = vmatpush2.msra.mxu0 0.0
        %4989 = vmatprep.subr.mxu0 0.0
        %4990 = vmatpush2.msra.mxu0 0.0
        %4991 = vmatprep.subr.mxu0 0.0
        %4992 = vmatpush2.msra.mxu0 0.0
        %4993 = vmatprep.subr.mxu0 0.0
        %4994 = vmatpush2.msra.mxu0 0.0
        %4995 = vmatprep.subr.mxu0 0.0
        %4996 = vmatpush2.msra.mxu0 0.0
        %4997 = vmatprep.subr.mxu0 0.0
        %4998 = vmatpush2.msra.mxu0 0.0
        %4999 = vmatprep.subr.mxu0 0.0
        %5000 = vmatpush2.msra.mxu0 0.0
        %5001 = vmatprep.mubr.f32.mxu0 0.0
        %5002 = vmatmul.mubr.f32.gmra.mxu0 %v4837
        %v5003 = vpop.f32.mrf.mxu0
        %v5004 = vadd.f32 0.0, %v5003
        %v5005 = vpop.f32.mrf.mxu0
        %v5006 = vadd.f32 0.0, %v5005
        %5007 = vmatprep.mubr.f32.mxu0 0.0
        %5008 = vmatmul.mubr.f32.gmra.mxu0 %v4840
        %v5009 = vpop.f32.mrf.mxu0
        %v5010 = vadd.f32 0.0, %v5009
        %v5011 = vpop.f32.mrf.mxu0
        %v5012 = vadd.f32 0.0, %v5011
        %5013 = vmatprep.mubr.f32.mxu0 0.0
        %5014 = vmatmul.mubr.f32.gmra.mxu0 %v4843
        %v5015 = vpop.f32.mrf.mxu0
        %v5016 = vadd.f32 0.0, %v5015
        %v5017 = vpop.f32.mrf.mxu0
        %v5018 = vadd.f32 0.0, %v5017
        %5019 = vmatprep.mubr.f32.mxu0 0.0
        %5020 = vmatmul.mubr.f32.gmra.mxu0 %v4846
        %v5021 = vpop.f32.mrf.mxu0
        %v5022 = vadd.f32 0.0, %v5021
        %v5023 = vpop.f32.mrf.mxu0
        %v5024 = vadd.f32 0.0, %v5023
        %5025 = vdwg.mxu0
        %v5026 = vadd.f32 %v4820, %v4915
        %v5027 = vadd.f32 %v4821, %v4917
        %v5028 = vadd.f32 %v4822, %v5004
        %v5029 = vadd.f32 %v4823, %v5006
        %v5030 = vadd.f32 %v4824, %v4921
        %v5031 = vadd.f32 %v4825, %v4923
        %v5032 = vadd.f32 %v4826, %v5010
        %v5033 = vadd.f32 %v4827, %v5012
        %v5034 = vadd.f32 %v4828, %v4927
        %v5035 = vadd.f32 %v4829, %v4929
        %v5036 = vadd.f32 %v4830, %v5016
        %v5037 = vadd.f32 %v4831, %v5018
        %v5038 = vadd.f32 %v4832, %v4933
        %v5039 = vadd.f32 %v4833, %v4935
        %v5040 = vadd.f32 %v4834, %v5022
        %v5041 = vadd.f32 %v4835, %v5024
        %5042 = vrot.lane.b32.xlu0 %v3728, 127
        %v5043 = vpop.permute.xlu0 %5042
        %5044 = vrot.lane.b32.xlu0 %v3732, 127
        %v5045 = vpop.permute.xlu0 %5044
        %5046 = vrot.lane.b32.xlu0 %v3736, 127
        %v5047 = vpop.permute.xlu0 %5046
        %5048 = vrot.lane.b32.xlu0 %v3740, 127
        %v5049 = vpop.permute.xlu0 %5048
        %5050 = vrot.lane.b32.xlu0 %v3729, 127
        %v5051 = vpop.permute.xlu0 %5050
        %5052 = vrot.lane.b32.xlu0 %v3733, 127
        %v5053 = vpop.permute.xlu0 %5052
        %5054 = vrot.lane.b32.xlu0 %v3737, 127
        %v5055 = vpop.permute.xlu0 %5054
        %5056 = vrot.lane.b32.xlu0 %v3741, 127
        %v5057 = vpop.permute.xlu0 %5056
        %5058 = vrot.lane.b32.xlu0 %v3730, 127
        %v5059 = vpop.permute.xlu0 %5058
        %5060 = vrot.lane.b32.xlu0 %v3734, 127
        %v5061 = vpop.permute.xlu0 %5060
        %5062 = vrot.lane.b32.xlu0 %v3738, 127
        %v5063 = vpop.permute.xlu0 %5062
        %5064 = vrot.lane.b32.xlu0 %v3742, 127
        %v5065 = vpop.permute.xlu0 %5064
        %5066 = vrot.lane.b32.xlu0 %v3731, 127
        %v5067 = vpop.permute.xlu0 %5066
        %5068 = vrot.lane.b32.xlu0 %v3735, 127
        %v5069 = vpop.permute.xlu0 %5068
        %5070 = vrot.lane.b32.xlu0 %v3739, 127
        %v5071 = vpop.permute.xlu0 %5070
        %5072 = vrot.lane.b32.xlu0 %v3743, 127
        %v5073 = vpop.permute.xlu0 %5072
        %v5074 = vsel %vm811, %v5059, %v5067
        %v5075 = vsel %vm811, %v5061, %v5069
        %v5076 = vsel %vm811, %v5063, %v5071
        %v5077 = vsel %vm811, %v5065, %v5073
        %v5078 = vsel %vm811, %v5051, %v5059
        %v5079 = vsel %vm811, %v5053, %v5061
        %v5080 = vsel %vm811, %v5055, %v5063
        %v5081 = vsel %vm811, %v5057, %v5065
        %v5082 = vsel %vm811, %v5043, %v5051
        %v5083 = vsel %vm811, %v5045, %v5053
        %v5084 = vsel %vm811, %v5047, %v5055
        %v5085 = vsel %vm811, %v5049, %v5057
        %v5086 = vsel %vm811, %v5067, %v5043
        %v5087 = vsel %vm811, %v5069, %v5045
        %v5088 = vsel %vm811, %v5071, %v5047
        %v5089 = vsel %vm811, %v5073, %v5049
        %v5090 = vmul.f32 %v5082, %v820
        %v5091 = vmul.f32 %v5078, %v824
        %v5092 = vmul.f32 %v5074, %v828
        %v5093 = vmul.f32 %v5086, %v832
        %v5094 = vmul.f32 %v5083, %v820
        %v5095 = vmul.f32 %v5079, %v824
        %v5096 = vmul.f32 %v5075, %v828
        %v5097 = vmul.f32 %v5087, %v832
        %v5098 = vmul.f32 %v5084, %v820
        %v5099 = vmul.f32 %v5080, %v824
        %v5100 = vmul.f32 %v5076, %v828
        %v5101 = vmul.f32 %v5088, %v832
        %v5102 = vmul.f32 %v5085, %v820
        %v5103 = vmul.f32 %v5081, %v824
        %v5104 = vmul.f32 %v5077, %v828
        %v5105 = vmul.f32 %v5089, %v832
        %5106 = vrot.lane.b32.xlu0 %v3761, 96
        %v5107 = vpop.permute.xlu0 %5106
        %5108 = vrot.lane.b32.xlu0 %v3764, 96
        %v5109 = vpop.permute.xlu0 %5108
        %5110 = vrot.lane.b32.xlu0 %v3767, 96
        %v5111 = vpop.permute.xlu0 %5110
        %5112 = vrot.lane.b32.xlu0 %v3770, 96
        %v5113 = vpop.permute.xlu0 %5112
        %v5114 = vsel %vm1473, %v5107, 0
        %v5116 = vsel %vm1473, %v5109, 0
        %v5118 = vsel %vm1473, %v5111, 0
        %v5120 = vsel %vm1473, %v5113, 0
        %5122 = vmatprep.subr.mxu0 0.0
        %5123 = vmatpush1.msra.mxu0 0.0
        %5124 = vmatprep.subr.mxu0 0.0
        %5125 = vmatpush1.msra.mxu0 0.0
        %5126 = vmatprep.subr.mxu0 0.0
        %5127 = vmatpush1.msra.mxu0 0.0
        %5128 = vmatprep.subr.mxu0 0.0
        %5129 = vmatpush1.msra.mxu0 0.0
        %5130 = vmatprep.subr.mxu0 0.0
        %5131 = vmatpush1.msra.mxu0 0.0
        %5132 = vmatprep.subr.mxu0 0.0
        %5133 = vmatpush1.msra.mxu0 0.0
        %5134 = vmatprep.subr.mxu0 0.0
        %5135 = vmatpush1.msra.mxu0 0.0
        %5136 = vmatprep.subr.mxu0 0.0
        %5137 = vmatpush1.msra.mxu0 0.0
        %5138 = vmatprep.subr.mxu0 0.0
        %5139 = vmatpush1.msra.mxu0 0.0
        %5140 = vmatprep.subr.mxu0 0.0
        %5141 = vmatpush1.msra.mxu0 0.0
        %5142 = vmatprep.subr.mxu0 0.0
        %5143 = vmatpush1.msra.mxu0 0.0
        %5144 = vmatprep.subr.mxu0 0.0
        %5145 = vmatpush1.msra.mxu0 0.0
        %5146 = vmatprep.subr.mxu0 %v5103
        %5147 = vmatpush1.msra.mxu0 %v5102
        %5148 = vmatprep.subr.mxu0 %v5099
        %5149 = vmatpush1.msra.mxu0 %v5098
        %5150 = vmatprep.subr.mxu0 %v5095
        %5151 = vmatpush1.msra.mxu0 %v5094
        %5152 = vmatprep.subr.mxu0 %v5091
        %5153 = vmatpush1.msra.mxu0 %v5090
        %5154 = vmatprep.subr.mxu0 0.0
        %5155 = vmatpush2.msra.mxu0 0.0
        %5156 = vmatprep.subr.mxu0 0.0
        %5157 = vmatpush2.msra.mxu0 0.0
        %5158 = vmatprep.subr.mxu0 0.0
        %5159 = vmatpush2.msra.mxu0 0.0
        %5160 = vmatprep.subr.mxu0 0.0
        %5161 = vmatpush2.msra.mxu0 0.0
        %5162 = vmatprep.subr.mxu0 0.0
        %5163 = vmatpush2.msra.mxu0 0.0
        %5164 = vmatprep.subr.mxu0 0.0
        %5165 = vmatpush2.msra.mxu0 0.0
        %5166 = vmatprep.subr.mxu0 0.0
        %5167 = vmatpush2.msra.mxu0 0.0
        %5168 = vmatprep.subr.mxu0 0.0
        %5169 = vmatpush2.msra.mxu0 0.0
        %5170 = vmatprep.subr.mxu0 0.0
        %5171 = vmatpush2.msra.mxu0 0.0
        %5172 = vmatprep.subr.mxu0 0.0
        %5173 = vmatpush2.msra.mxu0 0.0
        %5174 = vmatprep.subr.mxu0 0.0
        %5175 = vmatpush2.msra.mxu0 0.0
        %5176 = vmatprep.subr.mxu0 0.0
        %5177 = vmatpush2.msra.mxu0 0.0
        %5178 = vmatprep.subr.mxu0 0.0
        %5179 = vmatpush2.msra.mxu0 0.0
        %5180 = vmatprep.subr.mxu0 0.0
        %5181 = vmatpush2.msra.mxu0 0.0
        %5182 = vmatprep.subr.mxu0 0.0
        %5183 = vmatpush2.msra.mxu0 0.0
        %5184 = vmatprep.subr.mxu0 0.0
        %5185 = vmatpush2.msra.mxu0 0.0
        %5186 = vmatprep.mubr.f32.mxu0 0.0
        %5187 = vmatmul.mubr.f32.gmra.mxu0 %v5114
        %v5188 = vpop.f32.mrf.mxu0
        %v5189 = vadd.f32 0.0, %v5188
        %v5190 = vpop.f32.mrf.mxu0
        %v5191 = vadd.f32 0.0, %v5190
        %5192 = vmatprep.mubr.f32.mxu0 0.0
        %5193 = vmatmul.mubr.f32.gmra.mxu0 %v5116
        %v5194 = vpop.f32.mrf.mxu0
        %v5195 = vadd.f32 0.0, %v5194
        %v5196 = vpop.f32.mrf.mxu0
        %v5197 = vadd.f32 0.0, %v5196
        %5198 = vmatprep.mubr.f32.mxu0 0.0
        %5199 = vmatmul.mubr.f32.gmra.mxu0 %v5118
        %v5200 = vpop.f32.mrf.mxu0
        %v5201 = vadd.f32 0.0, %v5200
        %v5202 = vpop.f32.mrf.mxu0
        %v5203 = vadd.f32 0.0, %v5202
        %5204 = vmatprep.mubr.f32.mxu0 0.0
        %5205 = vmatmul.mubr.f32.gmra.mxu0 %v5120
        %v5206 = vpop.f32.mrf.mxu0
        %v5207 = vadd.f32 0.0, %v5206
        %v5208 = vpop.f32.mrf.mxu0
        %v5209 = vadd.f32 0.0, %v5208
        %5210 = vdwg.mxu0
        %5211 = vmatprep.subr.mxu0 0.0
        %5212 = vmatpush1.msra.mxu0 0.0
        %5213 = vmatprep.subr.mxu0 0.0
        %5214 = vmatpush1.msra.mxu0 0.0
        %5215 = vmatprep.subr.mxu0 0.0
        %5216 = vmatpush1.msra.mxu0 0.0
        %5217 = vmatprep.subr.mxu0 0.0
        %5218 = vmatpush1.msra.mxu0 0.0
        %5219 = vmatprep.subr.mxu0 0.0
        %5220 = vmatpush1.msra.mxu0 0.0
        %5221 = vmatprep.subr.mxu0 0.0
        %5222 = vmatpush1.msra.mxu0 0.0
        %5223 = vmatprep.subr.mxu0 0.0
        %5224 = vmatpush1.msra.mxu0 0.0
        %5225 = vmatprep.subr.mxu0 0.0
        %5226 = vmatpush1.msra.mxu0 0.0
        %5227 = vmatprep.subr.mxu0 0.0
        %5228 = vmatpush1.msra.mxu0 0.0
        %5229 = vmatprep.subr.mxu0 0.0
        %5230 = vmatpush1.msra.mxu0 0.0
        %5231 = vmatprep.subr.mxu0 0.0
        %5232 = vmatpush1.msra.mxu0 0.0
        %5233 = vmatprep.subr.mxu0 0.0
        %5234 = vmatpush1.msra.mxu0 0.0
        %5235 = vmatprep.subr.mxu0 %v5105
        %5236 = vmatpush1.msra.mxu0 %v5104
        %5237 = vmatprep.subr.mxu0 %v5101
        %5238 = vmatpush1.msra.mxu0 %v5100
        %5239 = vmatprep.subr.mxu0 %v5097
        %5240 = vmatpush1.msra.mxu0 %v5096
        %5241 = vmatprep.subr.mxu0 %v5093
        %5242 = vmatpush1.msra.mxu0 %v5092
        %5243 = vmatprep.subr.mxu0 0.0
        %5244 = vmatpush2.msra.mxu0 0.0
        %5245 = vmatprep.subr.mxu0 0.0
        %5246 = vmatpush2.msra.mxu0 0.0
        %5247 = vmatprep.subr.mxu0 0.0
        %5248 = vmatpush2.msra.mxu0 0.0
        %5249 = vmatprep.subr.mxu0 0.0
        %5250 = vmatpush2.msra.mxu0 0.0
        %5251 = vmatprep.subr.mxu0 0.0
        %5252 = vmatpush2.msra.mxu0 0.0
        %5253 = vmatprep.subr.mxu0 0.0
        %5254 = vmatpush2.msra.mxu0 0.0
        %5255 = vmatprep.subr.mxu0 0.0
        %5256 = vmatpush2.msra.mxu0 0.0
        %5257 = vmatprep.subr.mxu0 0.0
        %5258 = vmatpush2.msra.mxu0 0.0
        %5259 = vmatprep.subr.mxu0 0.0
        %5260 = vmatpush2.msra.mxu0 0.0
        %5261 = vmatprep.subr.mxu0 0.0
        %5262 = vmatpush2.msra.mxu0 0.0
        %5263 = vmatprep.subr.mxu0 0.0
        %5264 = vmatpush2.msra.mxu0 0.0
        %5265 = vmatprep.subr.mxu0 0.0
        %5266 = vmatpush2.msra.mxu0 0.0
        %5267 = vmatprep.subr.mxu0 0.0
        %5268 = vmatpush2.msra.mxu0 0.0
        %5269 = vmatprep.subr.mxu0 0.0
        %5270 = vmatpush2.msra.mxu0 0.0
        %5271 = vmatprep.subr.mxu0 0.0
        %5272 = vmatpush2.msra.mxu0 0.0
        %5273 = vmatprep.subr.mxu0 0.0
        %5274 = vmatpush2.msra.mxu0 0.0
        %5275 = vmatprep.mubr.f32.mxu0 0.0
        %5276 = vmatmul.mubr.f32.gmra.mxu0 %v5114
        %v5277 = vpop.f32.mrf.mxu0
        %v5278 = vadd.f32 0.0, %v5277
        %v5279 = vpop.f32.mrf.mxu0
        %v5280 = vadd.f32 0.0, %v5279
        %5281 = vmatprep.mubr.f32.mxu0 0.0
        %5282 = vmatmul.mubr.f32.gmra.mxu0 %v5116
        %v5283 = vpop.f32.mrf.mxu0
        %v5284 = vadd.f32 0.0, %v5283
        %v5285 = vpop.f32.mrf.mxu0
        %v5286 = vadd.f32 0.0, %v5285
        %5287 = vmatprep.mubr.f32.mxu0 0.0
        %5288 = vmatmul.mubr.f32.gmra.mxu0 %v5118
        %v5289 = vpop.f32.mrf.mxu0
        %v5290 = vadd.f32 0.0, %v5289
        %v5291 = vpop.f32.mrf.mxu0
        %v5292 = vadd.f32 0.0, %v5291
        %5293 = vmatprep.mubr.f32.mxu0 0.0
        %5294 = vmatmul.mubr.f32.gmra.mxu0 %v5120
        %v5295 = vpop.f32.mrf.mxu0
        %v5296 = vadd.f32 0.0, %v5295
        %v5297 = vpop.f32.mrf.mxu0
        %v5298 = vadd.f32 0.0, %v5297
        %5299 = vdwg.mxu0
        %v5300 = vadd.f32 %v5026, %v5189
        %v5301 = vadd.f32 %v5027, %v5191
        %v5302 = vadd.f32 %v5028, %v5278
        %v5303 = vadd.f32 %v5029, %v5280
        %v5304 = vadd.f32 %v5030, %v5195
        %v5305 = vadd.f32 %v5031, %v5197
        %v5306 = vadd.f32 %v5032, %v5284
        %v5307 = vadd.f32 %v5033, %v5286
        %v5308 = vadd.f32 %v5034, %v5201
        %v5309 = vadd.f32 %v5035, %v5203
        %v5310 = vadd.f32 %v5036, %v5290
        %v5311 = vadd.f32 %v5037, %v5292
        %v5312 = vadd.f32 %v5038, %v5207
        %v5313 = vadd.f32 %v5039, %v5209
        %v5314 = vadd.f32 %v5040, %v5296
        %v5315 = vadd.f32 %v5041, %v5298
        %5316 = vrot.lane.b32.xlu0 %v3728, 113
        %v5317 = vpop.permute.xlu0 %5316
        %5318 = vrot.lane.b32.xlu0 %v3732, 113
        %v5319 = vpop.permute.xlu0 %5318
        %5320 = vrot.lane.b32.xlu0 %v3736, 113
        %v5321 = vpop.permute.xlu0 %5320
        %5322 = vrot.lane.b32.xlu0 %v3740, 113
        %v5323 = vpop.permute.xlu0 %5322
        %5324 = vrot.lane.b32.xlu0 %v3729, 113
        %v5325 = vpop.permute.xlu0 %5324
        %5326 = vrot.lane.b32.xlu0 %v3733, 113
        %v5327 = vpop.permute.xlu0 %5326
        %5328 = vrot.lane.b32.xlu0 %v3737, 113
        %v5329 = vpop.permute.xlu0 %5328
        %5330 = vrot.lane.b32.xlu0 %v3741, 113
        %v5331 = vpop.permute.xlu0 %5330
        %5332 = vrot.lane.b32.xlu0 %v3730, 113
        %v5333 = vpop.permute.xlu0 %5332
        %5334 = vrot.lane.b32.xlu0 %v3734, 113
        %v5335 = vpop.permute.xlu0 %5334
        %5336 = vrot.lane.b32.xlu0 %v3738, 113
        %v5337 = vpop.permute.xlu0 %5336
        %5338 = vrot.lane.b32.xlu0 %v3742, 113
        %v5339 = vpop.permute.xlu0 %5338
        %5340 = vrot.lane.b32.xlu0 %v3731, 113
        %v5341 = vpop.permute.xlu0 %5340
        %5342 = vrot.lane.b32.xlu0 %v3735, 113
        %v5343 = vpop.permute.xlu0 %5342
        %5344 = vrot.lane.b32.xlu0 %v3739, 113
        %v5345 = vpop.permute.xlu0 %5344
        %5346 = vrot.lane.b32.xlu0 %v3743, 113
        %v5347 = vpop.permute.xlu0 %5346
        %v5348 = vsel %vm849, %v5333, %v5341
        %v5349 = vsel %vm849, %v5335, %v5343
        %v5350 = vsel %vm849, %v5337, %v5345
        %v5351 = vsel %vm849, %v5339, %v5347
        %v5352 = vsel %vm849, %v5325, %v5333
        %v5353 = vsel %vm849, %v5327, %v5335
        %v5354 = vsel %vm849, %v5329, %v5337
        %v5355 = vsel %vm849, %v5331, %v5339
        %v5356 = vsel %vm849, %v5317, %v5325
        %v5357 = vsel %vm849, %v5319, %v5327
        %v5358 = vsel %vm849, %v5321, %v5329
        %v5359 = vsel %vm849, %v5323, %v5331
        %v5360 = vsel %vm849, %v5341, %v5317
        %v5361 = vsel %vm849, %v5343, %v5319
        %v5362 = vsel %vm849, %v5345, %v5321
        %v5363 = vsel %vm849, %v5347, %v5323
        %v5364 = vmul.f32 %v5356, %v858
        %v5365 = vmul.f32 %v5352, %v862
        %v5366 = vmul.f32 %v5348, %v866
        %v5367 = vmul.f32 %v5360, %v870
        %v5368 = vmul.f32 %v5357, %v858
        %v5369 = vmul.f32 %v5353, %v862
        %v5370 = vmul.f32 %v5349, %v866
        %v5371 = vmul.f32 %v5361, %v870
        %v5372 = vmul.f32 %v5358, %v858
        %v5373 = vmul.f32 %v5354, %v862
        %v5374 = vmul.f32 %v5350, %v866
        %v5375 = vmul.f32 %v5362, %v870
        %v5376 = vmul.f32 %v5359, %v858
        %v5377 = vmul.f32 %v5355, %v862
        %v5378 = vmul.f32 %v5351, %v866
        %v5379 = vmul.f32 %v5363, %v870
        %5380 = vrot.lane.b32.xlu0 %v3761, 64
        %v5381 = vpop.permute.xlu0 %5380
        %5382 = vrot.lane.b32.xlu0 %v3764, 64
        %v5383 = vpop.permute.xlu0 %5382
        %5384 = vrot.lane.b32.xlu0 %v3767, 64
        %v5385 = vpop.permute.xlu0 %5384
        %5386 = vrot.lane.b32.xlu0 %v3770, 64
        %v5387 = vpop.permute.xlu0 %5386
        %v5388 = vsel %vm1473, %v5381, 0
        %v5390 = vsel %vm1473, %v5383, 0
        %v5392 = vsel %vm1473, %v5385, 0
        %v5394 = vsel %vm1473, %v5387, 0
        %5396 = vmatprep.subr.mxu0 0.0
        %5397 = vmatpush1.msra.mxu0 0.0
        %5398 = vmatprep.subr.mxu0 0.0
        %5399 = vmatpush1.msra.mxu0 0.0
        %5400 = vmatprep.subr.mxu0 0.0
        %5401 = vmatpush1.msra.mxu0 0.0
        %5402 = vmatprep.subr.mxu0 0.0
        %5403 = vmatpush1.msra.mxu0 0.0
        %5404 = vmatprep.subr.mxu0 0.0
        %5405 = vmatpush1.msra.mxu0 0.0
        %5406 = vmatprep.subr.mxu0 0.0
        %5407 = vmatpush1.msra.mxu0 0.0
        %5408 = vmatprep.subr.mxu0 0.0
        %5409 = vmatpush1.msra.mxu0 0.0
        %5410 = vmatprep.subr.mxu0 0.0
        %5411 = vmatpush1.msra.mxu0 0.0
        %5412 = vmatprep.subr.mxu0 0.0
        %5413 = vmatpush1.msra.mxu0 0.0
        %5414 = vmatprep.subr.mxu0 0.0
        %5415 = vmatpush1.msra.mxu0 0.0
        %5416 = vmatprep.subr.mxu0 0.0
        %5417 = vmatpush1.msra.mxu0 0.0
        %5418 = vmatprep.subr.mxu0 0.0
        %5419 = vmatpush1.msra.mxu0 0.0
        %5420 = vmatprep.subr.mxu0 %v5377
        %5421 = vmatpush1.msra.mxu0 %v5376
        %5422 = vmatprep.subr.mxu0 %v5373
        %5423 = vmatpush1.msra.mxu0 %v5372
        %5424 = vmatprep.subr.mxu0 %v5369
        %5425 = vmatpush1.msra.mxu0 %v5368
        %5426 = vmatprep.subr.mxu0 %v5365
        %5427 = vmatpush1.msra.mxu0 %v5364
        %5428 = vmatprep.subr.mxu0 0.0
        %5429 = vmatpush2.msra.mxu0 0.0
        %5430 = vmatprep.subr.mxu0 0.0
        %5431 = vmatpush2.msra.mxu0 0.0
        %5432 = vmatprep.subr.mxu0 0.0
        %5433 = vmatpush2.msra.mxu0 0.0
        %5434 = vmatprep.subr.mxu0 0.0
        %5435 = vmatpush2.msra.mxu0 0.0
        %5436 = vmatprep.subr.mxu0 0.0
        %5437 = vmatpush2.msra.mxu0 0.0
        %5438 = vmatprep.subr.mxu0 0.0
        %5439 = vmatpush2.msra.mxu0 0.0
        %5440 = vmatprep.subr.mxu0 0.0
        %5441 = vmatpush2.msra.mxu0 0.0
        %5442 = vmatprep.subr.mxu0 0.0
        %5443 = vmatpush2.msra.mxu0 0.0
        %5444 = vmatprep.subr.mxu0 0.0
        %5445 = vmatpush2.msra.mxu0 0.0
        %5446 = vmatprep.subr.mxu0 0.0
        %5447 = vmatpush2.msra.mxu0 0.0
        %5448 = vmatprep.subr.mxu0 0.0
        %5449 = vmatpush2.msra.mxu0 0.0
        %5450 = vmatprep.subr.mxu0 0.0
        %5451 = vmatpush2.msra.mxu0 0.0
        %5452 = vmatprep.subr.mxu0 0.0
        %5453 = vmatpush2.msra.mxu0 0.0
        %5454 = vmatprep.subr.mxu0 0.0
        %5455 = vmatpush2.msra.mxu0 0.0
        %5456 = vmatprep.subr.mxu0 0.0
        %5457 = vmatpush2.msra.mxu0 0.0
        %5458 = vmatprep.subr.mxu0 0.0
        %5459 = vmatpush2.msra.mxu0 0.0
        %5460 = vmatprep.mubr.f32.mxu0 0.0
        %5461 = vmatmul.mubr.f32.gmra.mxu0 %v5388
        %v5462 = vpop.f32.mrf.mxu0
        %v5463 = vadd.f32 0.0, %v5462
        %v5464 = vpop.f32.mrf.mxu0
        %v5465 = vadd.f32 0.0, %v5464
        %5466 = vmatprep.mubr.f32.mxu0 0.0
        %5467 = vmatmul.mubr.f32.gmra.mxu0 %v5390
        %v5468 = vpop.f32.mrf.mxu0
        %v5469 = vadd.f32 0.0, %v5468
        %v5470 = vpop.f32.mrf.mxu0
        %v5471 = vadd.f32 0.0, %v5470
        %5472 = vmatprep.mubr.f32.mxu0 0.0
        %5473 = vmatmul.mubr.f32.gmra.mxu0 %v5392
        %v5474 = vpop.f32.mrf.mxu0
        %v5475 = vadd.f32 0.0, %v5474
        %v5476 = vpop.f32.mrf.mxu0
        %v5477 = vadd.f32 0.0, %v5476
        %5478 = vmatprep.mubr.f32.mxu0 0.0
        %5479 = vmatmul.mubr.f32.gmra.mxu0 %v5394
        %v5480 = vpop.f32.mrf.mxu0
        %v5481 = vadd.f32 0.0, %v5480
        %v5482 = vpop.f32.mrf.mxu0
        %v5483 = vadd.f32 0.0, %v5482
        %5484 = vdwg.mxu0
        %5485 = vmatprep.subr.mxu0 0.0
        %5486 = vmatpush1.msra.mxu0 0.0
        %5487 = vmatprep.subr.mxu0 0.0
        %5488 = vmatpush1.msra.mxu0 0.0
        %5489 = vmatprep.subr.mxu0 0.0
        %5490 = vmatpush1.msra.mxu0 0.0
        %5491 = vmatprep.subr.mxu0 0.0
        %5492 = vmatpush1.msra.mxu0 0.0
        %5493 = vmatprep.subr.mxu0 0.0
        %5494 = vmatpush1.msra.mxu0 0.0
        %5495 = vmatprep.subr.mxu0 0.0
        %5496 = vmatpush1.msra.mxu0 0.0
        %5497 = vmatprep.subr.mxu0 0.0
        %5498 = vmatpush1.msra.mxu0 0.0
        %5499 = vmatprep.subr.mxu0 0.0
        %5500 = vmatpush1.msra.mxu0 0.0
        %5501 = vmatprep.subr.mxu0 0.0
        %5502 = vmatpush1.msra.mxu0 0.0
        %5503 = vmatprep.subr.mxu0 0.0
        %5504 = vmatpush1.msra.mxu0 0.0
        %5505 = vmatprep.subr.mxu0 0.0
        %5506 = vmatpush1.msra.mxu0 0.0
        %5507 = vmatprep.subr.mxu0 0.0
        %5508 = vmatpush1.msra.mxu0 0.0
        %5509 = vmatprep.subr.mxu0 %v5379
        %5510 = vmatpush1.msra.mxu0 %v5378
        %5511 = vmatprep.subr.mxu0 %v5375
        %5512 = vmatpush1.msra.mxu0 %v5374
        %5513 = vmatprep.subr.mxu0 %v5371
        %5514 = vmatpush1.msra.mxu0 %v5370
        %5515 = vmatprep.subr.mxu0 %v5367
        %5516 = vmatpush1.msra.mxu0 %v5366
        %5517 = vmatprep.subr.mxu0 0.0
        %5518 = vmatpush2.msra.mxu0 0.0
        %5519 = vmatprep.subr.mxu0 0.0
        %5520 = vmatpush2.msra.mxu0 0.0
        %5521 = vmatprep.subr.mxu0 0.0
        %5522 = vmatpush2.msra.mxu0 0.0
        %5523 = vmatprep.subr.mxu0 0.0
        %5524 = vmatpush2.msra.mxu0 0.0
        %5525 = vmatprep.subr.mxu0 0.0
        %5526 = vmatpush2.msra.mxu0 0.0
        %5527 = vmatprep.subr.mxu0 0.0
        %5528 = vmatpush2.msra.mxu0 0.0
        %5529 = vmatprep.subr.mxu0 0.0
        %5530 = vmatpush2.msra.mxu0 0.0
        %5531 = vmatprep.subr.mxu0 0.0
        %5532 = vmatpush2.msra.mxu0 0.0
        %5533 = vmatprep.subr.mxu0 0.0
        %5534 = vmatpush2.msra.mxu0 0.0
        %5535 = vmatprep.subr.mxu0 0.0
        %5536 = vmatpush2.msra.mxu0 0.0
        %5537 = vmatprep.subr.mxu0 0.0
        %5538 = vmatpush2.msra.mxu0 0.0
        %5539 = vmatprep.subr.mxu0 0.0
        %5540 = vmatpush2.msra.mxu0 0.0
        %5541 = vmatprep.subr.mxu0 0.0
        %5542 = vmatpush2.msra.mxu0 0.0
        %5543 = vmatprep.subr.mxu0 0.0
        %5544 = vmatpush2.msra.mxu0 0.0
        %5545 = vmatprep.subr.mxu0 0.0
        %5546 = vmatpush2.msra.mxu0 0.0
        %5547 = vmatprep.subr.mxu0 0.0
        %5548 = vmatpush2.msra.mxu0 0.0
        %5549 = vmatprep.mubr.f32.mxu0 0.0
        %5550 = vmatmul.mubr.f32.gmra.mxu0 %v5388
        %v5551 = vpop.f32.mrf.mxu0
        %v5552 = vadd.f32 0.0, %v5551
        %v5553 = vpop.f32.mrf.mxu0
        %v5554 = vadd.f32 0.0, %v5553
        %5555 = vmatprep.mubr.f32.mxu0 0.0
        %5556 = vmatmul.mubr.f32.gmra.mxu0 %v5390
        %v5557 = vpop.f32.mrf.mxu0
        %v5558 = vadd.f32 0.0, %v5557
        %v5559 = vpop.f32.mrf.mxu0
        %v5560 = vadd.f32 0.0, %v5559
        %5561 = vmatprep.mubr.f32.mxu0 0.0
        %5562 = vmatmul.mubr.f32.gmra.mxu0 %v5392
        %v5563 = vpop.f32.mrf.mxu0
        %v5564 = vadd.f32 0.0, %v5563
        %v5565 = vpop.f32.mrf.mxu0
        %v5566 = vadd.f32 0.0, %v5565
        %5567 = vmatprep.mubr.f32.mxu0 0.0
        %5568 = vmatmul.mubr.f32.gmra.mxu0 %v5394
        %v5569 = vpop.f32.mrf.mxu0
        %v5570 = vadd.f32 0.0, %v5569
        %v5571 = vpop.f32.mrf.mxu0
        %v5572 = vadd.f32 0.0, %v5571
        %5573 = vdwg.mxu0
        %v5574 = vadd.f32 %v5300, %v5463
        %v5575 = vadd.f32 %v5301, %v5465
        %v5576 = vadd.f32 %v5302, %v5552
        %v5577 = vadd.f32 %v5303, %v5554
        %v5578 = vadd.f32 %v5304, %v5469
        %v5579 = vadd.f32 %v5305, %v5471
        %v5580 = vadd.f32 %v5306, %v5558
        %v5581 = vadd.f32 %v5307, %v5560
        %v5582 = vadd.f32 %v5308, %v5475
        %v5583 = vadd.f32 %v5309, %v5477
        %v5584 = vadd.f32 %v5310, %v5564
        %v5585 = vadd.f32 %v5311, %v5566
        %v5586 = vadd.f32 %v5312, %v5481
        %v5587 = vadd.f32 %v5313, %v5483
        %v5588 = vadd.f32 %v5314, %v5570
        %v5589 = vadd.f32 %v5315, %v5572
        %5590 = vrot.lane.b32.xlu0 %v3728, 112
        %v5591 = vpop.permute.xlu0 %5590
        %5592 = vrot.lane.b32.xlu0 %v3732, 112
        %v5593 = vpop.permute.xlu0 %5592
        %5594 = vrot.lane.b32.xlu0 %v3736, 112
        %v5595 = vpop.permute.xlu0 %5594
        %5596 = vrot.lane.b32.xlu0 %v3740, 112
        %v5597 = vpop.permute.xlu0 %5596
        %5598 = vrot.lane.b32.xlu0 %v3729, 112
        %v5599 = vpop.permute.xlu0 %5598
        %5600 = vrot.lane.b32.xlu0 %v3733, 112
        %v5601 = vpop.permute.xlu0 %5600
        %5602 = vrot.lane.b32.xlu0 %v3737, 112
        %v5603 = vpop.permute.xlu0 %5602
        %5604 = vrot.lane.b32.xlu0 %v3741, 112
        %v5605 = vpop.permute.xlu0 %5604
        %5606 = vrot.lane.b32.xlu0 %v3730, 112
        %v5607 = vpop.permute.xlu0 %5606
        %5608 = vrot.lane.b32.xlu0 %v3734, 112
        %v5609 = vpop.permute.xlu0 %5608
        %5610 = vrot.lane.b32.xlu0 %v3738, 112
        %v5611 = vpop.permute.xlu0 %5610
        %5612 = vrot.lane.b32.xlu0 %v3742, 112
        %v5613 = vpop.permute.xlu0 %5612
        %5614 = vrot.lane.b32.xlu0 %v3731, 112
        %v5615 = vpop.permute.xlu0 %5614
        %5616 = vrot.lane.b32.xlu0 %v3735, 112
        %v5617 = vpop.permute.xlu0 %5616
        %5618 = vrot.lane.b32.xlu0 %v3739, 112
        %v5619 = vpop.permute.xlu0 %5618
        %5620 = vrot.lane.b32.xlu0 %v3743, 112
        %v5621 = vpop.permute.xlu0 %5620
        %v5622 = vsel %vm887, %v5607, %v5615
        %v5623 = vsel %vm887, %v5609, %v5617
        %v5624 = vsel %vm887, %v5611, %v5619
        %v5625 = vsel %vm887, %v5613, %v5621
        %v5626 = vsel %vm887, %v5599, %v5607
        %v5627 = vsel %vm887, %v5601, %v5609
        %v5628 = vsel %vm887, %v5603, %v5611
        %v5629 = vsel %vm887, %v5605, %v5613
        %v5630 = vsel %vm887, %v5591, %v5599
        %v5631 = vsel %vm887, %v5593, %v5601
        %v5632 = vsel %vm887, %v5595, %v5603
        %v5633 = vsel %vm887, %v5597, %v5605
        %v5634 = vsel %vm887, %v5615, %v5591
        %v5635 = vsel %vm887, %v5617, %v5593
        %v5636 = vsel %vm887, %v5619, %v5595
        %v5637 = vsel %vm887, %v5621, %v5597
        %v5638 = vmul.f32 %v5630, %v896
        %v5639 = vmul.f32 %v5626, %v900
        %v5640 = vmul.f32 %v5622, %v904
        %v5641 = vmul.f32 %v5634, %v908
        %v5642 = vmul.f32 %v5631, %v896
        %v5643 = vmul.f32 %v5627, %v900
        %v5644 = vmul.f32 %v5623, %v904
        %v5645 = vmul.f32 %v5635, %v908
        %v5646 = vmul.f32 %v5632, %v896
        %v5647 = vmul.f32 %v5628, %v900
        %v5648 = vmul.f32 %v5624, %v904
        %v5649 = vmul.f32 %v5636, %v908
        %v5650 = vmul.f32 %v5633, %v896
        %v5651 = vmul.f32 %v5629, %v900
        %v5652 = vmul.f32 %v5625, %v904
        %v5653 = vmul.f32 %v5637, %v908
        %5654 = vrot.lane.b32.xlu0 %v3761, 32
        %v5655 = vpop.permute.xlu0 %5654
        %5656 = vrot.lane.b32.xlu0 %v3764, 32
        %v5657 = vpop.permute.xlu0 %5656
        %5658 = vrot.lane.b32.xlu0 %v3767, 32
        %v5659 = vpop.permute.xlu0 %5658
        %5660 = vrot.lane.b32.xlu0 %v3770, 32
        %v5661 = vpop.permute.xlu0 %5660
        %v5662 = vsel %vm1473, %v5655, 0
        %v5664 = vsel %vm1473, %v5657, 0
        %v5666 = vsel %vm1473, %v5659, 0
        %v5668 = vsel %vm1473, %v5661, 0
        %5670 = vmatprep.subr.mxu0 0.0
        %5671 = vmatpush1.msra.mxu0 0.0
        %5672 = vmatprep.subr.mxu0 0.0
        %5673 = vmatpush1.msra.mxu0 0.0
        %5674 = vmatprep.subr.mxu0 0.0
        %5675 = vmatpush1.msra.mxu0 0.0
        %5676 = vmatprep.subr.mxu0 0.0
        %5677 = vmatpush1.msra.mxu0 0.0
        %5678 = vmatprep.subr.mxu0 0.0
        %5679 = vmatpush1.msra.mxu0 0.0
        %5680 = vmatprep.subr.mxu0 0.0
        %5681 = vmatpush1.msra.mxu0 0.0
        %5682 = vmatprep.subr.mxu0 0.0
        %5683 = vmatpush1.msra.mxu0 0.0
        %5684 = vmatprep.subr.mxu0 0.0
        %5685 = vmatpush1.msra.mxu0 0.0
        %5686 = vmatprep.subr.mxu0 0.0
        %5687 = vmatpush1.msra.mxu0 0.0
        %5688 = vmatprep.subr.mxu0 0.0
        %5689 = vmatpush1.msra.mxu0 0.0
        %5690 = vmatprep.subr.mxu0 0.0
        %5691 = vmatpush1.msra.mxu0 0.0
        %5692 = vmatprep.subr.mxu0 0.0
        %5693 = vmatpush1.msra.mxu0 0.0
        %5694 = vmatprep.subr.mxu0 %v5651
        %5695 = vmatpush1.msra.mxu0 %v5650
        %5696 = vmatprep.subr.mxu0 %v5647
        %5697 = vmatpush1.msra.mxu0 %v5646
        %5698 = vmatprep.subr.mxu0 %v5643
        %5699 = vmatpush1.msra.mxu0 %v5642
        %5700 = vmatprep.subr.mxu0 %v5639
        %5701 = vmatpush1.msra.mxu0 %v5638
        %5702 = vmatprep.subr.mxu0 0.0
        %5703 = vmatpush2.msra.mxu0 0.0
        %5704 = vmatprep.subr.mxu0 0.0
        %5705 = vmatpush2.msra.mxu0 0.0
        %5706 = vmatprep.subr.mxu0 0.0
        %5707 = vmatpush2.msra.mxu0 0.0
        %5708 = vmatprep.subr.mxu0 0.0
        %5709 = vmatpush2.msra.mxu0 0.0
        %5710 = vmatprep.subr.mxu0 0.0
        %5711 = vmatpush2.msra.mxu0 0.0
        %5712 = vmatprep.subr.mxu0 0.0
        %5713 = vmatpush2.msra.mxu0 0.0
        %5714 = vmatprep.subr.mxu0 0.0
        %5715 = vmatpush2.msra.mxu0 0.0
        %5716 = vmatprep.subr.mxu0 0.0
        %5717 = vmatpush2.msra.mxu0 0.0
        %5718 = vmatprep.subr.mxu0 0.0
        %5719 = vmatpush2.msra.mxu0 0.0
        %5720 = vmatprep.subr.mxu0 0.0
        %5721 = vmatpush2.msra.mxu0 0.0
        %5722 = vmatprep.subr.mxu0 0.0
        %5723 = vmatpush2.msra.mxu0 0.0
        %5724 = vmatprep.subr.mxu0 0.0
        %5725 = vmatpush2.msra.mxu0 0.0
        %5726 = vmatprep.subr.mxu0 0.0
        %5727 = vmatpush2.msra.mxu0 0.0
        %5728 = vmatprep.subr.mxu0 0.0
        %5729 = vmatpush2.msra.mxu0 0.0
        %5730 = vmatprep.subr.mxu0 0.0
        %5731 = vmatpush2.msra.mxu0 0.0
        %5732 = vmatprep.subr.mxu0 0.0
        %5733 = vmatpush2.msra.mxu0 0.0
        %5734 = vmatprep.mubr.f32.mxu0 0.0
        %5735 = vmatmul.mubr.f32.gmra.mxu0 %v5662
        %v5736 = vpop.f32.mrf.mxu0
        %v5737 = vadd.f32 0.0, %v5736
        %v5738 = vpop.f32.mrf.mxu0
        %v5739 = vadd.f32 0.0, %v5738
        %5740 = vmatprep.mubr.f32.mxu0 0.0
        %5741 = vmatmul.mubr.f32.gmra.mxu0 %v5664
        %v5742 = vpop.f32.mrf.mxu0
        %v5743 = vadd.f32 0.0, %v5742
        %v5744 = vpop.f32.mrf.mxu0
        %v5745 = vadd.f32 0.0, %v5744
        %5746 = vmatprep.mubr.f32.mxu0 0.0
        %5747 = vmatmul.mubr.f32.gmra.mxu0 %v5666
        %v5748 = vpop.f32.mrf.mxu0
        %v5749 = vadd.f32 0.0, %v5748
        %v5750 = vpop.f32.mrf.mxu0
        %v5751 = vadd.f32 0.0, %v5750
        %5752 = vmatprep.mubr.f32.mxu0 0.0
        %5753 = vmatmul.mubr.f32.gmra.mxu0 %v5668
        %v5754 = vpop.f32.mrf.mxu0
        %v5755 = vadd.f32 0.0, %v5754
        %v5756 = vpop.f32.mrf.mxu0
        %v5757 = vadd.f32 0.0, %v5756
        %5758 = vdwg.mxu0
        %5759 = vmatprep.subr.mxu0 0.0
        %5760 = vmatpush1.msra.mxu0 0.0
        %5761 = vmatprep.subr.mxu0 0.0
        %5762 = vmatpush1.msra.mxu0 0.0
        %5763 = vmatprep.subr.mxu0 0.0
        %5764 = vmatpush1.msra.mxu0 0.0
        %5765 = vmatprep.subr.mxu0 0.0
        %5766 = vmatpush1.msra.mxu0 0.0
        %5767 = vmatprep.subr.mxu0 0.0
        %5768 = vmatpush1.msra.mxu0 0.0
        %5769 = vmatprep.subr.mxu0 0.0
        %5770 = vmatpush1.msra.mxu0 0.0
        %5771 = vmatprep.subr.mxu0 0.0
        %5772 = vmatpush1.msra.mxu0 0.0
        %5773 = vmatprep.subr.mxu0 0.0
        %5774 = vmatpush1.msra.mxu0 0.0
        %5775 = vmatprep.subr.mxu0 0.0
        %5776 = vmatpush1.msra.mxu0 0.0
        %5777 = vmatprep.subr.mxu0 0.0
        %5778 = vmatpush1.msra.mxu0 0.0
        %5779 = vmatprep.subr.mxu0 0.0
        %5780 = vmatpush1.msra.mxu0 0.0
        %5781 = vmatprep.subr.mxu0 0.0
        %5782 = vmatpush1.msra.mxu0 0.0
        %5783 = vmatprep.subr.mxu0 %v5653
        %5784 = vmatpush1.msra.mxu0 %v5652
        %5785 = vmatprep.subr.mxu0 %v5649
        %5786 = vmatpush1.msra.mxu0 %v5648
        %5787 = vmatprep.subr.mxu0 %v5645
        %5788 = vmatpush1.msra.mxu0 %v5644
        %5789 = vmatprep.subr.mxu0 %v5641
        %5790 = vmatpush1.msra.mxu0 %v5640
        %5791 = vmatprep.subr.mxu0 0.0
        %5792 = vmatpush2.msra.mxu0 0.0
        %5793 = vmatprep.subr.mxu0 0.0
        %5794 = vmatpush2.msra.mxu0 0.0
        %5795 = vmatprep.subr.mxu0 0.0
        %5796 = vmatpush2.msra.mxu0 0.0
        %5797 = vmatprep.subr.mxu0 0.0
        %5798 = vmatpush2.msra.mxu0 0.0
        %5799 = vmatprep.subr.mxu0 0.0
        %5800 = vmatpush2.msra.mxu0 0.0
        %5801 = vmatprep.subr.mxu0 0.0
        %5802 = vmatpush2.msra.mxu0 0.0
        %5803 = vmatprep.subr.mxu0 0.0
        %5804 = vmatpush2.msra.mxu0 0.0
        %5805 = vmatprep.subr.mxu0 0.0
        %5806 = vmatpush2.msra.mxu0 0.0
        %5807 = vmatprep.subr.mxu0 0.0
        %5808 = vmatpush2.msra.mxu0 0.0
        %5809 = vmatprep.subr.mxu0 0.0
        %5810 = vmatpush2.msra.mxu0 0.0
        %5811 = vmatprep.subr.mxu0 0.0
        %5812 = vmatpush2.msra.mxu0 0.0
        %5813 = vmatprep.subr.mxu0 0.0
        %5814 = vmatpush2.msra.mxu0 0.0
        %5815 = vmatprep.subr.mxu0 0.0
        %5816 = vmatpush2.msra.mxu0 0.0
        %5817 = vmatprep.subr.mxu0 0.0
        %5818 = vmatpush2.msra.mxu0 0.0
        %5819 = vmatprep.subr.mxu0 0.0
        %5820 = vmatpush2.msra.mxu0 0.0
        %5821 = vmatprep.subr.mxu0 0.0
        %5822 = vmatpush2.msra.mxu0 0.0
        %5823 = vmatprep.mubr.f32.mxu0 0.0
        %5824 = vmatmul.mubr.f32.gmra.mxu0 %v5662
        %v5825 = vpop.f32.mrf.mxu0
        %v5826 = vadd.f32 0.0, %v5825
        %v5827 = vpop.f32.mrf.mxu0
        %v5828 = vadd.f32 0.0, %v5827
        %5829 = vmatprep.mubr.f32.mxu0 0.0
        %5830 = vmatmul.mubr.f32.gmra.mxu0 %v5664
        %v5831 = vpop.f32.mrf.mxu0
        %v5832 = vadd.f32 0.0, %v5831
        %v5833 = vpop.f32.mrf.mxu0
        %v5834 = vadd.f32 0.0, %v5833
        %5835 = vmatprep.mubr.f32.mxu0 0.0
        %5836 = vmatmul.mubr.f32.gmra.mxu0 %v5666
        %v5837 = vpop.f32.mrf.mxu0
        %v5838 = vadd.f32 0.0, %v5837
        %v5839 = vpop.f32.mrf.mxu0
        %v5840 = vadd.f32 0.0, %v5839
        %5841 = vmatprep.mubr.f32.mxu0 0.0
        %5842 = vmatmul.mubr.f32.gmra.mxu0 %v5668
        %v5843 = vpop.f32.mrf.mxu0
        %v5844 = vadd.f32 0.0, %v5843
        %v5845 = vpop.f32.mrf.mxu0
        %v5846 = vadd.f32 0.0, %v5845
        %5847 = vdwg.mxu0
        %v5848 = vadd.f32 %v5574, %v5737
        %v5849 = vadd.f32 %v5575, %v5739
        %v5850 = vadd.f32 %v5576, %v5826
        %v5851 = vadd.f32 %v5577, %v5828
        %v5852 = vadd.f32 %v5578, %v5743
        %v5853 = vadd.f32 %v5579, %v5745
        %v5854 = vadd.f32 %v5580, %v5832
        %v5855 = vadd.f32 %v5581, %v5834
        %v5856 = vadd.f32 %v5582, %v5749
        %v5857 = vadd.f32 %v5583, %v5751
        %v5858 = vadd.f32 %v5584, %v5838
        %v5859 = vadd.f32 %v5585, %v5840
        %v5860 = vadd.f32 %v5586, %v5755
        %v5861 = vadd.f32 %v5587, %v5757
        %v5862 = vadd.f32 %v5588, %v5844
        %v5863 = vadd.f32 %v5589, %v5846
        %5864 = vrot.lane.b32.xlu0 %v3728, 111
        %v5865 = vpop.permute.xlu0 %5864
        %5866 = vrot.lane.b32.xlu0 %v3732, 111
        %v5867 = vpop.permute.xlu0 %5866
        %5868 = vrot.lane.b32.xlu0 %v3736, 111
        %v5869 = vpop.permute.xlu0 %5868
        %5870 = vrot.lane.b32.xlu0 %v3740, 111
        %v5871 = vpop.permute.xlu0 %5870
        %5872 = vrot.lane.b32.xlu0 %v3729, 111
        %v5873 = vpop.permute.xlu0 %5872
        %5874 = vrot.lane.b32.xlu0 %v3733, 111
        %v5875 = vpop.permute.xlu0 %5874
        %5876 = vrot.lane.b32.xlu0 %v3737, 111
        %v5877 = vpop.permute.xlu0 %5876
        %5878 = vrot.lane.b32.xlu0 %v3741, 111
        %v5879 = vpop.permute.xlu0 %5878
        %5880 = vrot.lane.b32.xlu0 %v3730, 111
        %v5881 = vpop.permute.xlu0 %5880
        %5882 = vrot.lane.b32.xlu0 %v3734, 111
        %v5883 = vpop.permute.xlu0 %5882
        %5884 = vrot.lane.b32.xlu0 %v3738, 111
        %v5885 = vpop.permute.xlu0 %5884
        %5886 = vrot.lane.b32.xlu0 %v3742, 111
        %v5887 = vpop.permute.xlu0 %5886
        %5888 = vrot.lane.b32.xlu0 %v3731, 111
        %v5889 = vpop.permute.xlu0 %5888
        %5890 = vrot.lane.b32.xlu0 %v3735, 111
        %v5891 = vpop.permute.xlu0 %5890
        %5892 = vrot.lane.b32.xlu0 %v3739, 111
        %v5893 = vpop.permute.xlu0 %5892
        %5894 = vrot.lane.b32.xlu0 %v3743, 111
        %v5895 = vpop.permute.xlu0 %5894
        %v5896 = vsel %vm925, %v5881, %v5889
        %v5897 = vsel %vm925, %v5883, %v5891
        %v5898 = vsel %vm925, %v5885, %v5893
        %v5899 = vsel %vm925, %v5887, %v5895
        %v5900 = vsel %vm925, %v5873, %v5881
        %v5901 = vsel %vm925, %v5875, %v5883
        %v5902 = vsel %vm925, %v5877, %v5885
        %v5903 = vsel %vm925, %v5879, %v5887
        %v5904 = vsel %vm925, %v5865, %v5873
        %v5905 = vsel %vm925, %v5867, %v5875
        %v5906 = vsel %vm925, %v5869, %v5877
        %v5907 = vsel %vm925, %v5871, %v5879
        %v5908 = vsel %vm925, %v5889, %v5865
        %v5909 = vsel %vm925, %v5891, %v5867
        %v5910 = vsel %vm925, %v5893, %v5869
        %v5911 = vsel %vm925, %v5895, %v5871
        %v5912 = vmul.f32 %v5904, %v934
        %v5913 = vmul.f32 %v5900, %v938
        %v5914 = vmul.f32 %v5896, %v942
        %v5915 = vmul.f32 %v5908, %v946
        %v5916 = vmul.f32 %v5905, %v934
        %v5917 = vmul.f32 %v5901, %v938
        %v5918 = vmul.f32 %v5897, %v942
        %v5919 = vmul.f32 %v5909, %v946
        %v5920 = vmul.f32 %v5906, %v934
        %v5921 = vmul.f32 %v5902, %v938
        %v5922 = vmul.f32 %v5898, %v942
        %v5923 = vmul.f32 %v5910, %v946
        %v5924 = vmul.f32 %v5907, %v934
        %v5925 = vmul.f32 %v5903, %v938
        %v5926 = vmul.f32 %v5899, %v942
        %v5927 = vmul.f32 %v5911, %v946
        %v5929 = vsel %vm1473, %v3762, 0
        %v5932 = vsel %vm1473, %v3765, 0
        %v5935 = vsel %vm1473, %v3768, 0
        %v5938 = vsel %vm1473, %v3771, 0
        %5940 = vmatprep.subr.mxu0 0.0
        %5941 = vmatpush1.msra.mxu0 0.0
        %5942 = vmatprep.subr.mxu0 0.0
        %5943 = vmatpush1.msra.mxu0 0.0
        %5944 = vmatprep.subr.mxu0 0.0
        %5945 = vmatpush1.msra.mxu0 0.0
        %5946 = vmatprep.subr.mxu0 0.0
        %5947 = vmatpush1.msra.mxu0 0.0
        %5948 = vmatprep.subr.mxu0 0.0
        %5949 = vmatpush1.msra.mxu0 0.0
        %5950 = vmatprep.subr.mxu0 0.0
        %5951 = vmatpush1.msra.mxu0 0.0
        %5952 = vmatprep.subr.mxu0 0.0
        %5953 = vmatpush1.msra.mxu0 0.0
        %5954 = vmatprep.subr.mxu0 0.0
        %5955 = vmatpush1.msra.mxu0 0.0
        %5956 = vmatprep.subr.mxu0 0.0
        %5957 = vmatpush1.msra.mxu0 0.0
        %5958 = vmatprep.subr.mxu0 0.0
        %5959 = vmatpush1.msra.mxu0 0.0
        %5960 = vmatprep.subr.mxu0 0.0
        %5961 = vmatpush1.msra.mxu0 0.0
        %5962 = vmatprep.subr.mxu0 0.0
        %5963 = vmatpush1.msra.mxu0 0.0
        %5964 = vmatprep.subr.mxu0 %v5925
        %5965 = vmatpush1.msra.mxu0 %v5924
        %5966 = vmatprep.subr.mxu0 %v5921
        %5967 = vmatpush1.msra.mxu0 %v5920
        %5968 = vmatprep.subr.mxu0 %v5917
        %5969 = vmatpush1.msra.mxu0 %v5916
        %5970 = vmatprep.subr.mxu0 %v5913
        %5971 = vmatpush1.msra.mxu0 %v5912
        %5972 = vmatprep.subr.mxu0 0.0
        %5973 = vmatpush2.msra.mxu0 0.0
        %5974 = vmatprep.subr.mxu0 0.0
        %5975 = vmatpush2.msra.mxu0 0.0
        %5976 = vmatprep.subr.mxu0 0.0
        %5977 = vmatpush2.msra.mxu0 0.0
        %5978 = vmatprep.subr.mxu0 0.0
        %5979 = vmatpush2.msra.mxu0 0.0
        %5980 = vmatprep.subr.mxu0 0.0
        %5981 = vmatpush2.msra.mxu0 0.0
        %5982 = vmatprep.subr.mxu0 0.0
        %5983 = vmatpush2.msra.mxu0 0.0
        %5984 = vmatprep.subr.mxu0 0.0
        %5985 = vmatpush2.msra.mxu0 0.0
        %5986 = vmatprep.subr.mxu0 0.0
        %5987 = vmatpush2.msra.mxu0 0.0
        %5988 = vmatprep.subr.mxu0 0.0
        %5989 = vmatpush2.msra.mxu0 0.0
        %5990 = vmatprep.subr.mxu0 0.0
        %5991 = vmatpush2.msra.mxu0 0.0
        %5992 = vmatprep.subr.mxu0 0.0
        %5993 = vmatpush2.msra.mxu0 0.0
        %5994 = vmatprep.subr.mxu0 0.0
        %5995 = vmatpush2.msra.mxu0 0.0
        %5996 = vmatprep.subr.mxu0 0.0
        %5997 = vmatpush2.msra.mxu0 0.0
        %5998 = vmatprep.subr.mxu0 0.0
        %5999 = vmatpush2.msra.mxu0 0.0
        %6000 = vmatprep.subr.mxu0 0.0
        %6001 = vmatpush2.msra.mxu0 0.0
        %6002 = vmatprep.subr.mxu0 0.0
        %6003 = vmatpush2.msra.mxu0 0.0
        %6004 = vmatprep.mubr.f32.mxu0 0.0
        %6005 = vmatmul.mubr.f32.gmra.mxu0 %v5929
        %v6006 = vpop.f32.mrf.mxu0
        %v6007 = vadd.f32 0.0, %v6006
        %v6008 = vpop.f32.mrf.mxu0
        %v6009 = vadd.f32 0.0, %v6008
        %6010 = vmatprep.mubr.f32.mxu0 0.0
        %6011 = vmatmul.mubr.f32.gmra.mxu0 %v5932
        %v6012 = vpop.f32.mrf.mxu0
        %v6013 = vadd.f32 0.0, %v6012
        %v6014 = vpop.f32.mrf.mxu0
        %v6015 = vadd.f32 0.0, %v6014
        %6016 = vmatprep.mubr.f32.mxu0 0.0
        %6017 = vmatmul.mubr.f32.gmra.mxu0 %v5935
        %v6018 = vpop.f32.mrf.mxu0
        %v6019 = vadd.f32 0.0, %v6018
        %v6020 = vpop.f32.mrf.mxu0
        %v6021 = vadd.f32 0.0, %v6020
        %6022 = vmatprep.mubr.f32.mxu0 0.0
        %6023 = vmatmul.mubr.f32.gmra.mxu0 %v5938
        %v6024 = vpop.f32.mrf.mxu0
        %v6025 = vadd.f32 0.0, %v6024
        %v6026 = vpop.f32.mrf.mxu0
        %v6027 = vadd.f32 0.0, %v6026
        %6028 = vdwg.mxu0
        %6029 = vmatprep.subr.mxu0 0.0
        %6030 = vmatpush1.msra.mxu0 0.0
        %6031 = vmatprep.subr.mxu0 0.0
        %6032 = vmatpush1.msra.mxu0 0.0
        %6033 = vmatprep.subr.mxu0 0.0
        %6034 = vmatpush1.msra.mxu0 0.0
        %6035 = vmatprep.subr.mxu0 0.0
        %6036 = vmatpush1.msra.mxu0 0.0
        %6037 = vmatprep.subr.mxu0 0.0
        %6038 = vmatpush1.msra.mxu0 0.0
        %6039 = vmatprep.subr.mxu0 0.0
        %6040 = vmatpush1.msra.mxu0 0.0
        %6041 = vmatprep.subr.mxu0 0.0
        %6042 = vmatpush1.msra.mxu0 0.0
        %6043 = vmatprep.subr.mxu0 0.0
        %6044 = vmatpush1.msra.mxu0 0.0
        %6045 = vmatprep.subr.mxu0 0.0
        %6046 = vmatpush1.msra.mxu0 0.0
        %6047 = vmatprep.subr.mxu0 0.0
        %6048 = vmatpush1.msra.mxu0 0.0
        %6049 = vmatprep.subr.mxu0 0.0
        %6050 = vmatpush1.msra.mxu0 0.0
        %6051 = vmatprep.subr.mxu0 0.0
        %6052 = vmatpush1.msra.mxu0 0.0
        %6053 = vmatprep.subr.mxu0 %v5927
        %6054 = vmatpush1.msra.mxu0 %v5926
        %6055 = vmatprep.subr.mxu0 %v5923
        %6056 = vmatpush1.msra.mxu0 %v5922
        %6057 = vmatprep.subr.mxu0 %v5919
        %6058 = vmatpush1.msra.mxu0 %v5918
        %6059 = vmatprep.subr.mxu0 %v5915
        %6060 = vmatpush1.msra.mxu0 %v5914
        %6061 = vmatprep.subr.mxu0 0.0
        %6062 = vmatpush2.msra.mxu0 0.0
        %6063 = vmatprep.subr.mxu0 0.0
        %6064 = vmatpush2.msra.mxu0 0.0
        %6065 = vmatprep.subr.mxu0 0.0
        %6066 = vmatpush2.msra.mxu0 0.0
        %6067 = vmatprep.subr.mxu0 0.0
        %6068 = vmatpush2.msra.mxu0 0.0
        %6069 = vmatprep.subr.mxu0 0.0
        %6070 = vmatpush2.msra.mxu0 0.0
        %6071 = vmatprep.subr.mxu0 0.0
        %6072 = vmatpush2.msra.mxu0 0.0
        %6073 = vmatprep.subr.mxu0 0.0
        %6074 = vmatpush2.msra.mxu0 0.0
        %6075 = vmatprep.subr.mxu0 0.0
        %6076 = vmatpush2.msra.mxu0 0.0
        %6077 = vmatprep.subr.mxu0 0.0
        %6078 = vmatpush2.msra.mxu0 0.0
        %6079 = vmatprep.subr.mxu0 0.0
        %6080 = vmatpush2.msra.mxu0 0.0
        %6081 = vmatprep.subr.mxu0 0.0
        %6082 = vmatpush2.msra.mxu0 0.0
        %6083 = vmatprep.subr.mxu0 0.0
        %6084 = vmatpush2.msra.mxu0 0.0
        %6085 = vmatprep.subr.mxu0 0.0
        %6086 = vmatpush2.msra.mxu0 0.0
        %6087 = vmatprep.subr.mxu0 0.0
        %6088 = vmatpush2.msra.mxu0 0.0
        %6089 = vmatprep.subr.mxu0 0.0
        %6090 = vmatpush2.msra.mxu0 0.0
        %6091 = vmatprep.subr.mxu0 0.0
        %6092 = vmatpush2.msra.mxu0 0.0
        %6093 = vmatprep.mubr.f32.mxu0 0.0
        %6094 = vmatmul.mubr.f32.gmra.mxu0 %v5929
        %v6095 = vpop.f32.mrf.mxu0
        %v6096 = vadd.f32 0.0, %v6095
        %v6097 = vpop.f32.mrf.mxu0
        %v6098 = vadd.f32 0.0, %v6097
        %6099 = vmatprep.mubr.f32.mxu0 0.0
        %6100 = vmatmul.mubr.f32.gmra.mxu0 %v5932
        %v6101 = vpop.f32.mrf.mxu0
        %v6102 = vadd.f32 0.0, %v6101
        %v6103 = vpop.f32.mrf.mxu0
        %v6104 = vadd.f32 0.0, %v6103
        %6105 = vmatprep.mubr.f32.mxu0 0.0
        %6106 = vmatmul.mubr.f32.gmra.mxu0 %v5935
        %v6107 = vpop.f32.mrf.mxu0
        %v6108 = vadd.f32 0.0, %v6107
        %v6109 = vpop.f32.mrf.mxu0
        %v6110 = vadd.f32 0.0, %v6109
        %6111 = vmatprep.mubr.f32.mxu0 0.0
        %6112 = vmatmul.mubr.f32.gmra.mxu0 %v5938
        %v6113 = vpop.f32.mrf.mxu0
        %v6114 = vadd.f32 0.0, %v6113
        %v6115 = vpop.f32.mrf.mxu0
        %v6116 = vadd.f32 0.0, %v6115
        %6117 = vdwg.mxu0
        %v6118 = vadd.f32 %v5848, %v6007
        %v6119 = vadd.f32 %v5849, %v6009
        %v6120 = vadd.f32 %v5850, %v6096
        %v6121 = vadd.f32 %v5851, %v6098
        %v6122 = vadd.f32 %v5852, %v6013
        %v6123 = vadd.f32 %v5853, %v6015
        %v6124 = vadd.f32 %v5854, %v6102
        %v6125 = vadd.f32 %v5855, %v6104
        %v6126 = vadd.f32 %v5856, %v6019
        %v6127 = vadd.f32 %v5857, %v6021
        %v6128 = vadd.f32 %v5858, %v6108
        %v6129 = vadd.f32 %v5859, %v6110
        %v6130 = vadd.f32 %v5860, %v6025
        %v6131 = vadd.f32 %v5861, %v6027
        %v6132 = vadd.f32 %v5862, %v6114
        %v6133 = vadd.f32 %v5863, %v6116
        %6135 = vset.pattern.permute.xlu0 0
        %6136 = vperm.xlu0 %6135, %v3772
        %v6137 = vpop.permute.xlu0 %6136
        %6140 = vset.pattern.permute.xlu0 0
        %6141 = vperm.xlu0 %6140, %v3773
        %v6142 = vpop.permute.xlu0 %6141
        %6145 = vset.pattern.permute.xlu0 0
        %6146 = vperm.xlu0 %6145, %v3774
        %v6147 = vpop.permute.xlu0 %6146
        %6150 = vset.pattern.permute.xlu0 0
        %6151 = vperm.xlu0 %6150, %v3775
        %v6152 = vpop.permute.xlu0 %6151
        %v6154 = vadd.f32 %v6118, %v6137
        %v6155 = vadd.f32 %v6119, %v6137
        %v6156 = vadd.f32 %v6120, %v6137
        %v6157 = vadd.f32 %v6121, %v6137
        %v6158 = vadd.f32 %v6122, %v6142
        %v6159 = vadd.f32 %v6123, %v6142
        %v6160 = vadd.f32 %v6124, %v6142
        %v6161 = vadd.f32 %v6125, %v6142
        %v6162 = vadd.f32 %v6126, %v6147
        %v6163 = vadd.f32 %v6127, %v6147
        %v6164 = vadd.f32 %v6128, %v6147
        %v6165 = vadd.f32 %v6129, %v6147
        %v6166 = vadd.f32 %v6130, %v6152
        %v6167 = vadd.f32 %v6131, %v6152
        %v6168 = vadd.f32 %v6132, %v6152
        %v6169 = vadd.f32 %v6133, %v6152
        %v6170 = vmax.f32 %v6154, 0.0
        %v6171 = vmax.f32 %v6155, 0.0
        %v6172 = vmax.f32 %v6156, 0.0
        %v6173 = vmax.f32 %v6157, 0.0
        %v6174 = vmax.f32 %v6158, 0.0
        %v6175 = vmax.f32 %v6159, 0.0
        %v6176 = vmax.f32 %v6160, 0.0
        %v6177 = vmax.f32 %v6161, 0.0
        %v6178 = vmax.f32 %v6162, 0.0
        %v6179 = vmax.f32 %v6163, 0.0
        %v6180 = vmax.f32 %v6164, 0.0
        %v6181 = vmax.f32 %v6165, 0.0
        %v6182 = vmax.f32 %v6166, 0.0
        %v6183 = vmax.f32 %v6167, 0.0
        %v6184 = vmax.f32 %v6168, 0.0
        %v6185 = vmax.f32 %v6169, 0.0
        %6186 = vst [vmem:[%s589] sm:$0xff] %v6170
        %6187 = vst [vmem:[%s589 + $0x8] sm:$0xff] %v6171
        %6188 = vst [vmem:[%s589 + $0x10] sm:$0xff] %v6172
        %6189 = vst [vmem:[%s589 + $0x18] sm:$0xff] %v6173
        %6190 = vst [vmem:[%s589 + $0x20] sm:$0xff] %v6174
        %6191 = vst [vmem:[%s589 + $0x28] sm:$0xff] %v6175
        %6192 = vst [vmem:[%s589 + $0x30] sm:$0xff] %v6176
        %6193 = vst [vmem:[%s589 + $0x38] sm:$0xff] %v6177
        %6194 = vst [vmem:[%s589 + $0x40] sm:$0xff] %v6178
        %6195 = vst [vmem:[%s589 + $0x48] sm:$0xff] %v6179
        %6196 = vst [vmem:[%s589 + $0x50] sm:$0xff] %v6180
        %6197 = vst [vmem:[%s589 + $0x58] sm:$0xff] %v6181
        %6198 = vst [vmem:[%s589 + $0x60] sm:$0xff] %v6182
        %6199 = vst [vmem:[%s589 + $0x68] sm:$0xff] %v6183
        %6200 = vst [vmem:[%s589 + $0x70] sm:$0xff] %v6184
        %6201 = vst [vmem:[%s589 + $0x78] sm:$0xff] %v6185
        %v6202 = vld [vmem:[#allocation8] sm:$0xff]
        %v6203 = vld [vmem:[#allocation8 + $0x8] sm:$0xff]
        %v6204 = vld [vmem:[#allocation8 + $0x10] sm:$0xff]
        %v6205 = vld [vmem:[#allocation8 + $0x18] sm:$0xff]
        %v6206 = vld [vmem:[#allocation8 + $0x20] sm:$0xff]
        %v6207 = vld [vmem:[#allocation8 + $0x28] sm:$0xff]
        %v6208 = vld [vmem:[#allocation8 + $0x30] sm:$0xff]
        %v6209 = vld [vmem:[#allocation8 + $0x38] sm:$0xff]
        %v6210 = vld [vmem:[#allocation8 + $0x40] sm:$0xff]
        %v6211 = vld [vmem:[#allocation8 + $0x48] sm:$0xff]
        %v6212 = vld [vmem:[#allocation8 + $0x50] sm:$0xff]
        %v6213 = vld [vmem:[#allocation8 + $0x58] sm:$0xff]
        %v6214 = vld [vmem:[%s9] sm:$0xff]
        %v6215 = vld [vmem:[%s9 + $0x8] sm:$0xff]
        %v6216 = vld [vmem:[%s9 + $0x10] sm:$0xff]
        %v6217 = vld [vmem:[%s9 + $0x18] sm:$0xff]
        %6218 = vrot.lane.b32.xlu0 %v6170, 17
        %v6219 = vpop.permute.xlu0 %6218
        %6220 = vrot.lane.b32.xlu0 %v6174, 17
        %v6221 = vpop.permute.xlu0 %6220
        %6222 = vrot.lane.b32.xlu0 %v6178, 17
        %v6223 = vpop.permute.xlu0 %6222
        %6224 = vrot.lane.b32.xlu0 %v6182, 17
        %v6225 = vpop.permute.xlu0 %6224
        %6226 = vrot.lane.b32.xlu0 %v6171, 17
        %v6227 = vpop.permute.xlu0 %6226
        %6228 = vrot.lane.b32.xlu0 %v6175, 17
        %v6229 = vpop.permute.xlu0 %6228
        %6230 = vrot.lane.b32.xlu0 %v6179, 17
        %v6231 = vpop.permute.xlu0 %6230
        %6232 = vrot.lane.b32.xlu0 %v6183, 17
        %v6233 = vpop.permute.xlu0 %6232
        %6234 = vrot.lane.b32.xlu0 %v6172, 17
        %v6235 = vpop.permute.xlu0 %6234
        %6236 = vrot.lane.b32.xlu0 %v6176, 17
        %v6237 = vpop.permute.xlu0 %6236
        %6238 = vrot.lane.b32.xlu0 %v6180, 17
        %v6239 = vpop.permute.xlu0 %6238
        %6240 = vrot.lane.b32.xlu0 %v6184, 17
        %v6241 = vpop.permute.xlu0 %6240
        %6242 = vrot.lane.b32.xlu0 %v6173, 17
        %v6243 = vpop.permute.xlu0 %6242
        %6244 = vrot.lane.b32.xlu0 %v6177, 17
        %v6245 = vpop.permute.xlu0 %6244
        %6246 = vrot.lane.b32.xlu0 %v6181, 17
        %v6247 = vpop.permute.xlu0 %6246
        %6248 = vrot.lane.b32.xlu0 %v6185, 17
        %v6249 = vpop.permute.xlu0 %6248
        %v6250 = vsel %vm659, %v6235, %v6243
        %v6251 = vsel %vm659, %v6237, %v6245
        %v6252 = vsel %vm659, %v6239, %v6247
        %v6253 = vsel %vm659, %v6241, %v6249
        %v6254 = vsel %vm659, %v6227, %v6235
        %v6255 = vsel %vm659, %v6229, %v6237
        %v6256 = vsel %vm659, %v6231, %v6239
        %v6257 = vsel %vm659, %v6233, %v6241
        %v6258 = vsel %vm659, %v6219, %v6227
        %v6259 = vsel %vm659, %v6221, %v6229
        %v6260 = vsel %vm659, %v6223, %v6231
        %v6261 = vsel %vm659, %v6225, %v6233
        %v6262 = vsel %vm659, %v6243, %v6219
        %v6263 = vsel %vm659, %v6245, %v6221
        %v6264 = vsel %vm659, %v6247, %v6223
        %v6265 = vsel %vm659, %v6249, %v6225
        %v6266 = vmul.f32 %v6262, %v668
        %v6267 = vmul.f32 %v6258, %v672
        %v6268 = vmul.f32 %v6254, %v676
        %v6269 = vmul.f32 %v6250, %v680
        %v6270 = vmul.f32 %v6263, %v668
        %v6271 = vmul.f32 %v6259, %v672
        %v6272 = vmul.f32 %v6255, %v676
        %v6273 = vmul.f32 %v6251, %v680
        %v6274 = vmul.f32 %v6264, %v668
        %v6275 = vmul.f32 %v6260, %v672
        %v6276 = vmul.f32 %v6256, %v676
        %v6277 = vmul.f32 %v6252, %v680
        %v6278 = vmul.f32 %v6265, %v668
        %v6279 = vmul.f32 %v6261, %v672
        %v6280 = vmul.f32 %v6257, %v676
        %v6281 = vmul.f32 %v6253, %v680
        %6282 = vrot.lane.b32.xlu0 %v6170, 16
        %v6283 = vpop.permute.xlu0 %6282
        %6284 = vrot.lane.b32.xlu0 %v6174, 16
        %v6285 = vpop.permute.xlu0 %6284
        %6286 = vrot.lane.b32.xlu0 %v6178, 16
        %v6287 = vpop.permute.xlu0 %6286
        %6288 = vrot.lane.b32.xlu0 %v6182, 16
        %v6289 = vpop.permute.xlu0 %6288
        %6290 = vrot.lane.b32.xlu0 %v6171, 16
        %v6291 = vpop.permute.xlu0 %6290
        %6292 = vrot.lane.b32.xlu0 %v6175, 16
        %v6293 = vpop.permute.xlu0 %6292
        %6294 = vrot.lane.b32.xlu0 %v6179, 16
        %v6295 = vpop.permute.xlu0 %6294
        %6296 = vrot.lane.b32.xlu0 %v6183, 16
        %v6297 = vpop.permute.xlu0 %6296
        %6298 = vrot.lane.b32.xlu0 %v6172, 16
        %v6299 = vpop.permute.xlu0 %6298
        %6300 = vrot.lane.b32.xlu0 %v6176, 16
        %v6301 = vpop.permute.xlu0 %6300
        %6302 = vrot.lane.b32.xlu0 %v6180, 16
        %v6303 = vpop.permute.xlu0 %6302
        %6304 = vrot.lane.b32.xlu0 %v6184, 16
        %v6305 = vpop.permute.xlu0 %6304
        %6306 = vrot.lane.b32.xlu0 %v6173, 16
        %v6307 = vpop.permute.xlu0 %6306
        %6308 = vrot.lane.b32.xlu0 %v6177, 16
        %v6309 = vpop.permute.xlu0 %6308
        %6310 = vrot.lane.b32.xlu0 %v6181, 16
        %v6311 = vpop.permute.xlu0 %6310
        %6312 = vrot.lane.b32.xlu0 %v6185, 16
        %v6313 = vpop.permute.xlu0 %6312
        %v6314 = vsel %vm697, %v6299, %v6307
        %v6315 = vsel %vm697, %v6301, %v6309
        %v6316 = vsel %vm697, %v6303, %v6311
        %v6317 = vsel %vm697, %v6305, %v6313
        %v6318 = vsel %vm697, %v6291, %v6299
        %v6319 = vsel %vm697, %v6293, %v6301
        %v6320 = vsel %vm697, %v6295, %v6303
        %v6321 = vsel %vm697, %v6297, %v6305
        %v6322 = vsel %vm697, %v6283, %v6291
        %v6323 = vsel %vm697, %v6285, %v6293
        %v6324 = vsel %vm697, %v6287, %v6295
        %v6325 = vsel %vm697, %v6289, %v6297
        %v6326 = vsel %vm697, %v6307, %v6283
        %v6327 = vsel %vm697, %v6309, %v6285
        %v6328 = vsel %vm697, %v6311, %v6287
        %v6329 = vsel %vm697, %v6313, %v6289
        %v6330 = vmul.f32 %v6326, %v706
        %v6331 = vmul.f32 %v6322, %v710
        %v6332 = vmul.f32 %v6318, %v714
        %v6333 = vmul.f32 %v6314, %v718
        %v6334 = vmul.f32 %v6327, %v706
        %v6335 = vmul.f32 %v6323, %v710
        %v6336 = vmul.f32 %v6319, %v714
        %v6337 = vmul.f32 %v6315, %v718
        %v6338 = vmul.f32 %v6328, %v706
        %v6339 = vmul.f32 %v6324, %v710
        %v6340 = vmul.f32 %v6320, %v714
        %v6341 = vmul.f32 %v6316, %v718
        %v6342 = vmul.f32 %v6329, %v706
        %v6343 = vmul.f32 %v6325, %v710
        %v6344 = vmul.f32 %v6321, %v714
        %v6345 = vmul.f32 %v6317, %v718
        %6350 = vrot.lane.b32.xlu0 %v6202, 96
        %v6351 = vpop.permute.xlu0 %6350
        %6352 = vrot.lane.b32.xlu0 %v6205, 96
        %v6353 = vpop.permute.xlu0 %6352
        %6354 = vrot.lane.b32.xlu0 %v6208, 96
        %v6355 = vpop.permute.xlu0 %6354
        %6356 = vrot.lane.b32.xlu0 %v6211, 96
        %v6357 = vpop.permute.xlu0 %6356
        %v6358 = vsel %vm1473, %v6351, 0
        %v6360 = vsel %vm1473, %v6353, 0
        %v6362 = vsel %vm1473, %v6355, 0
        %v6364 = vsel %vm1473, %v6357, 0
        %6366 = vmatprep.subr.mxu0 0.0
        %6367 = vmatpush1.msra.mxu0 0.0
        %6368 = vmatprep.subr.mxu0 0.0
        %6369 = vmatpush1.msra.mxu0 0.0
        %6370 = vmatprep.subr.mxu0 0.0
        %6371 = vmatpush1.msra.mxu0 0.0
        %6372 = vmatprep.subr.mxu0 0.0
        %6373 = vmatpush1.msra.mxu0 0.0
        %6374 = vmatprep.subr.mxu0 0.0
        %6375 = vmatpush1.msra.mxu0 0.0
        %6376 = vmatprep.subr.mxu0 0.0
        %6377 = vmatpush1.msra.mxu0 0.0
        %6378 = vmatprep.subr.mxu0 0.0
        %6379 = vmatpush1.msra.mxu0 0.0
        %6380 = vmatprep.subr.mxu0 0.0
        %6381 = vmatpush1.msra.mxu0 0.0
        %6382 = vmatprep.subr.mxu0 0.0
        %6383 = vmatpush1.msra.mxu0 0.0
        %6384 = vmatprep.subr.mxu0 0.0
        %6385 = vmatpush1.msra.mxu0 0.0
        %6386 = vmatprep.subr.mxu0 0.0
        %6387 = vmatpush1.msra.mxu0 0.0
        %6388 = vmatprep.subr.mxu0 0.0
        %6389 = vmatpush1.msra.mxu0 0.0
        %6390 = vmatprep.subr.mxu0 %v6343
        %6391 = vmatpush1.msra.mxu0 %v6342
        %6392 = vmatprep.subr.mxu0 %v6339
        %6393 = vmatpush1.msra.mxu0 %v6338
        %6394 = vmatprep.subr.mxu0 %v6335
        %6395 = vmatpush1.msra.mxu0 %v6334
        %6396 = vmatprep.subr.mxu0 %v6331
        %6397 = vmatpush1.msra.mxu0 %v6330
        %6398 = vmatprep.subr.mxu0 0.0
        %6399 = vmatpush2.msra.mxu0 0.0
        %6400 = vmatprep.subr.mxu0 0.0
        %6401 = vmatpush2.msra.mxu0 0.0
        %6402 = vmatprep.subr.mxu0 0.0
        %6403 = vmatpush2.msra.mxu0 0.0
        %6404 = vmatprep.subr.mxu0 0.0
        %6405 = vmatpush2.msra.mxu0 0.0
        %6406 = vmatprep.subr.mxu0 0.0
        %6407 = vmatpush2.msra.mxu0 0.0
        %6408 = vmatprep.subr.mxu0 0.0
        %6409 = vmatpush2.msra.mxu0 0.0
        %6410 = vmatprep.subr.mxu0 0.0
        %6411 = vmatpush2.msra.mxu0 0.0
        %6412 = vmatprep.subr.mxu0 0.0
        %6413 = vmatpush2.msra.mxu0 0.0
        %6414 = vmatprep.subr.mxu0 0.0
        %6415 = vmatpush2.msra.mxu0 0.0
        %6416 = vmatprep.subr.mxu0 0.0
        %6417 = vmatpush2.msra.mxu0 0.0
        %6418 = vmatprep.subr.mxu0 0.0
        %6419 = vmatpush2.msra.mxu0 0.0
        %6420 = vmatprep.subr.mxu0 0.0
        %6421 = vmatpush2.msra.mxu0 0.0
        %6422 = vmatprep.subr.mxu0 0.0
        %6423 = vmatpush2.msra.mxu0 0.0
        %6424 = vmatprep.subr.mxu0 0.0
        %6425 = vmatpush2.msra.mxu0 0.0
        %6426 = vmatprep.subr.mxu0 0.0
        %6427 = vmatpush2.msra.mxu0 0.0
        %6428 = vmatprep.subr.mxu0 0.0
        %6429 = vmatpush2.msra.mxu0 0.0
        %6430 = vmatprep.mubr.f32.mxu0 0.0
        %6431 = vmatmul.mubr.f32.gmra.mxu0 %v6358
        %v6432 = vpop.f32.mrf.mxu0
        %v6433 = vadd.f32 0.0, %v6432
        %v6434 = vpop.f32.mrf.mxu0
        %v6435 = vadd.f32 0.0, %v6434
        %6436 = vmatprep.mubr.f32.mxu0 0.0
        %6437 = vmatmul.mubr.f32.gmra.mxu0 %v6360
        %v6438 = vpop.f32.mrf.mxu0
        %v6439 = vadd.f32 0.0, %v6438
        %v6440 = vpop.f32.mrf.mxu0
        %v6441 = vadd.f32 0.0, %v6440
        %6442 = vmatprep.mubr.f32.mxu0 0.0
        %6443 = vmatmul.mubr.f32.gmra.mxu0 %v6362
        %v6444 = vpop.f32.mrf.mxu0
        %v6445 = vadd.f32 0.0, %v6444
        %v6446 = vpop.f32.mrf.mxu0
        %v6447 = vadd.f32 0.0, %v6446
        %6448 = vmatprep.mubr.f32.mxu0 0.0
        %6449 = vmatmul.mubr.f32.gmra.mxu0 %v6364
        %v6450 = vpop.f32.mrf.mxu0
        %v6451 = vadd.f32 0.0, %v6450
        %v6452 = vpop.f32.mrf.mxu0
        %v6453 = vadd.f32 0.0, %v6452
        %6454 = vdwg.mxu0
        %6455 = vmatprep.subr.mxu0 0.0
        %6456 = vmatpush1.msra.mxu0 0.0
        %6457 = vmatprep.subr.mxu0 0.0
        %6458 = vmatpush1.msra.mxu0 0.0
        %6459 = vmatprep.subr.mxu0 0.0
        %6460 = vmatpush1.msra.mxu0 0.0
        %6461 = vmatprep.subr.mxu0 0.0
        %6462 = vmatpush1.msra.mxu0 0.0
        %6463 = vmatprep.subr.mxu0 0.0
        %6464 = vmatpush1.msra.mxu0 0.0
        %6465 = vmatprep.subr.mxu0 0.0
        %6466 = vmatpush1.msra.mxu0 0.0
        %6467 = vmatprep.subr.mxu0 0.0
        %6468 = vmatpush1.msra.mxu0 0.0
        %6469 = vmatprep.subr.mxu0 0.0
        %6470 = vmatpush1.msra.mxu0 0.0
        %6471 = vmatprep.subr.mxu0 0.0
        %6472 = vmatpush1.msra.mxu0 0.0
        %6473 = vmatprep.subr.mxu0 0.0
        %6474 = vmatpush1.msra.mxu0 0.0
        %6475 = vmatprep.subr.mxu0 0.0
        %6476 = vmatpush1.msra.mxu0 0.0
        %6477 = vmatprep.subr.mxu0 0.0
        %6478 = vmatpush1.msra.mxu0 0.0
        %6479 = vmatprep.subr.mxu0 %v6345
        %6480 = vmatpush1.msra.mxu0 %v6344
        %6481 = vmatprep.subr.mxu0 %v6341
        %6482 = vmatpush1.msra.mxu0 %v6340
        %6483 = vmatprep.subr.mxu0 %v6337
        %6484 = vmatpush1.msra.mxu0 %v6336
        %6485 = vmatprep.subr.mxu0 %v6333
        %6486 = vmatpush1.msra.mxu0 %v6332
        %6487 = vmatprep.subr.mxu0 0.0
        %6488 = vmatpush2.msra.mxu0 0.0
        %6489 = vmatprep.subr.mxu0 0.0
        %6490 = vmatpush2.msra.mxu0 0.0
        %6491 = vmatprep.subr.mxu0 0.0
        %6492 = vmatpush2.msra.mxu0 0.0
        %6493 = vmatprep.subr.mxu0 0.0
        %6494 = vmatpush2.msra.mxu0 0.0
        %6495 = vmatprep.subr.mxu0 0.0
        %6496 = vmatpush2.msra.mxu0 0.0
        %6497 = vmatprep.subr.mxu0 0.0
        %6498 = vmatpush2.msra.mxu0 0.0
        %6499 = vmatprep.subr.mxu0 0.0
        %6500 = vmatpush2.msra.mxu0 0.0
        %6501 = vmatprep.subr.mxu0 0.0
        %6502 = vmatpush2.msra.mxu0 0.0
        %6503 = vmatprep.subr.mxu0 0.0
        %6504 = vmatpush2.msra.mxu0 0.0
        %6505 = vmatprep.subr.mxu0 0.0
        %6506 = vmatpush2.msra.mxu0 0.0
        %6507 = vmatprep.subr.mxu0 0.0
        %6508 = vmatpush2.msra.mxu0 0.0
        %6509 = vmatprep.subr.mxu0 0.0
        %6510 = vmatpush2.msra.mxu0 0.0
        %6511 = vmatprep.subr.mxu0 0.0
        %6512 = vmatpush2.msra.mxu0 0.0
        %6513 = vmatprep.subr.mxu0 0.0
        %6514 = vmatpush2.msra.mxu0 0.0
        %6515 = vmatprep.subr.mxu0 0.0
        %6516 = vmatpush2.msra.mxu0 0.0
        %6517 = vmatprep.subr.mxu0 0.0
        %6518 = vmatpush2.msra.mxu0 0.0
        %6519 = vmatprep.mubr.f32.mxu0 0.0
        %6520 = vmatmul.mubr.f32.gmra.mxu0 %v6358
        %v6521 = vpop.f32.mrf.mxu0
        %v6522 = vadd.f32 0.0, %v6521
        %v6523 = vpop.f32.mrf.mxu0
        %v6524 = vadd.f32 0.0, %v6523
        %6525 = vmatprep.mubr.f32.mxu0 0.0
        %6526 = vmatmul.mubr.f32.gmra.mxu0 %v6360
        %v6527 = vpop.f32.mrf.mxu0
        %v6528 = vadd.f32 0.0, %v6527
        %v6529 = vpop.f32.mrf.mxu0
        %v6530 = vadd.f32 0.0, %v6529
        %6531 = vmatprep.mubr.f32.mxu0 0.0
        %6532 = vmatmul.mubr.f32.gmra.mxu0 %v6362
        %v6533 = vpop.f32.mrf.mxu0
        %v6534 = vadd.f32 0.0, %v6533
        %v6535 = vpop.f32.mrf.mxu0
        %v6536 = vadd.f32 0.0, %v6535
        %6537 = vmatprep.mubr.f32.mxu0 0.0
        %6538 = vmatmul.mubr.f32.gmra.mxu0 %v6364
        %v6539 = vpop.f32.mrf.mxu0
        %v6540 = vadd.f32 0.0, %v6539
        %v6541 = vpop.f32.mrf.mxu0
        %v6542 = vadd.f32 0.0, %v6541
        %6543 = vdwg.mxu0
        %v6544 = vsel %vm1473, %v6202, 0
        %v6546 = vsel %vm1473, %v6205, 0
        %v6548 = vsel %vm1473, %v6208, 0
        %v6550 = vsel %vm1473, %v6211, 0
        %6552 = vmatprep.subr.mxu0 0.0
        %6553 = vmatpush1.msra.mxu0 0.0
        %6554 = vmatprep.subr.mxu0 0.0
        %6555 = vmatpush1.msra.mxu0 0.0
        %6556 = vmatprep.subr.mxu0 0.0
        %6557 = vmatpush1.msra.mxu0 0.0
        %6558 = vmatprep.subr.mxu0 0.0
        %6559 = vmatpush1.msra.mxu0 0.0
        %6560 = vmatprep.subr.mxu0 0.0
        %6561 = vmatpush1.msra.mxu0 0.0
        %6562 = vmatprep.subr.mxu0 0.0
        %6563 = vmatpush1.msra.mxu0 0.0
        %6564 = vmatprep.subr.mxu0 0.0
        %6565 = vmatpush1.msra.mxu0 0.0
        %6566 = vmatprep.subr.mxu0 0.0
        %6567 = vmatpush1.msra.mxu0 0.0
        %6568 = vmatprep.subr.mxu0 0.0
        %6569 = vmatpush1.msra.mxu0 0.0
        %6570 = vmatprep.subr.mxu0 0.0
        %6571 = vmatpush1.msra.mxu0 0.0
        %6572 = vmatprep.subr.mxu0 0.0
        %6573 = vmatpush1.msra.mxu0 0.0
        %6574 = vmatprep.subr.mxu0 0.0
        %6575 = vmatpush1.msra.mxu0 0.0
        %6576 = vmatprep.subr.mxu0 %v6279
        %6577 = vmatpush1.msra.mxu0 %v6278
        %6578 = vmatprep.subr.mxu0 %v6275
        %6579 = vmatpush1.msra.mxu0 %v6274
        %6580 = vmatprep.subr.mxu0 %v6271
        %6581 = vmatpush1.msra.mxu0 %v6270
        %6582 = vmatprep.subr.mxu0 %v6267
        %6583 = vmatpush1.msra.mxu0 %v6266
        %6584 = vmatprep.subr.mxu0 0.0
        %6585 = vmatpush2.msra.mxu0 0.0
        %6586 = vmatprep.subr.mxu0 0.0
        %6587 = vmatpush2.msra.mxu0 0.0
        %6588 = vmatprep.subr.mxu0 0.0
        %6589 = vmatpush2.msra.mxu0 0.0
        %6590 = vmatprep.subr.mxu0 0.0
        %6591 = vmatpush2.msra.mxu0 0.0
        %6592 = vmatprep.subr.mxu0 0.0
        %6593 = vmatpush2.msra.mxu0 0.0
        %6594 = vmatprep.subr.mxu0 0.0
        %6595 = vmatpush2.msra.mxu0 0.0
        %6596 = vmatprep.subr.mxu0 0.0
        %6597 = vmatpush2.msra.mxu0 0.0
        %6598 = vmatprep.subr.mxu0 0.0
        %6599 = vmatpush2.msra.mxu0 0.0
        %6600 = vmatprep.subr.mxu0 0.0
        %6601 = vmatpush2.msra.mxu0 0.0
        %6602 = vmatprep.subr.mxu0 0.0
        %6603 = vmatpush2.msra.mxu0 0.0
        %6604 = vmatprep.subr.mxu0 0.0
        %6605 = vmatpush2.msra.mxu0 0.0
        %6606 = vmatprep.subr.mxu0 0.0
        %6607 = vmatpush2.msra.mxu0 0.0
        %6608 = vmatprep.subr.mxu0 0.0
        %6609 = vmatpush2.msra.mxu0 0.0
        %6610 = vmatprep.subr.mxu0 0.0
        %6611 = vmatpush2.msra.mxu0 0.0
        %6612 = vmatprep.subr.mxu0 0.0
        %6613 = vmatpush2.msra.mxu0 0.0
        %6614 = vmatprep.subr.mxu0 0.0
        %6615 = vmatpush2.msra.mxu0 0.0
        %6616 = vmatprep.mubr.f32.mxu0 0.0
        %6617 = vmatmul.mubr.f32.gmra.mxu0 %v6544
        %v6618 = vpop.f32.mrf.mxu0
        %v6619 = vadd.f32 %v6433, %v6618
        %v6620 = vpop.f32.mrf.mxu0
        %v6621 = vadd.f32 %v6435, %v6620
        %6622 = vmatprep.mubr.f32.mxu0 0.0
        %6623 = vmatmul.mubr.f32.gmra.mxu0 %v6546
        %v6624 = vpop.f32.mrf.mxu0
        %v6625 = vadd.f32 %v6439, %v6624
        %v6626 = vpop.f32.mrf.mxu0
        %v6627 = vadd.f32 %v6441, %v6626
        %6628 = vmatprep.mubr.f32.mxu0 0.0
        %6629 = vmatmul.mubr.f32.gmra.mxu0 %v6548
        %v6630 = vpop.f32.mrf.mxu0
        %v6631 = vadd.f32 %v6445, %v6630
        %v6632 = vpop.f32.mrf.mxu0
        %v6633 = vadd.f32 %v6447, %v6632
        %6634 = vmatprep.mubr.f32.mxu0 0.0
        %6635 = vmatmul.mubr.f32.gmra.mxu0 %v6550
        %v6636 = vpop.f32.mrf.mxu0
        %v6637 = vadd.f32 %v6451, %v6636
        %v6638 = vpop.f32.mrf.mxu0
        %v6639 = vadd.f32 %v6453, %v6638
        %6640 = vdwg.mxu0
        %6641 = vmatprep.subr.mxu0 0.0
        %6642 = vmatpush1.msra.mxu0 0.0
        %6643 = vmatprep.subr.mxu0 0.0
        %6644 = vmatpush1.msra.mxu0 0.0
        %6645 = vmatprep.subr.mxu0 0.0
        %6646 = vmatpush1.msra.mxu0 0.0
        %6647 = vmatprep.subr.mxu0 0.0
        %6648 = vmatpush1.msra.mxu0 0.0
        %6649 = vmatprep.subr.mxu0 0.0
        %6650 = vmatpush1.msra.mxu0 0.0
        %6651 = vmatprep.subr.mxu0 0.0
        %6652 = vmatpush1.msra.mxu0 0.0
        %6653 = vmatprep.subr.mxu0 0.0
        %6654 = vmatpush1.msra.mxu0 0.0
        %6655 = vmatprep.subr.mxu0 0.0
        %6656 = vmatpush1.msra.mxu0 0.0
        %6657 = vmatprep.subr.mxu0 0.0
        %6658 = vmatpush1.msra.mxu0 0.0
        %6659 = vmatprep.subr.mxu0 0.0
        %6660 = vmatpush1.msra.mxu0 0.0
        %6661 = vmatprep.subr.mxu0 0.0
        %6662 = vmatpush1.msra.mxu0 0.0
        %6663 = vmatprep.subr.mxu0 0.0
        %6664 = vmatpush1.msra.mxu0 0.0
        %6665 = vmatprep.subr.mxu0 %v6281
        %6666 = vmatpush1.msra.mxu0 %v6280
        %6667 = vmatprep.subr.mxu0 %v6277
        %6668 = vmatpush1.msra.mxu0 %v6276
        %6669 = vmatprep.subr.mxu0 %v6273
        %6670 = vmatpush1.msra.mxu0 %v6272
        %6671 = vmatprep.subr.mxu0 %v6269
        %6672 = vmatpush1.msra.mxu0 %v6268
        %6673 = vmatprep.subr.mxu0 0.0
        %6674 = vmatpush2.msra.mxu0 0.0
        %6675 = vmatprep.subr.mxu0 0.0
        %6676 = vmatpush2.msra.mxu0 0.0
        %6677 = vmatprep.subr.mxu0 0.0
        %6678 = vmatpush2.msra.mxu0 0.0
        %6679 = vmatprep.subr.mxu0 0.0
        %6680 = vmatpush2.msra.mxu0 0.0
        %6681 = vmatprep.subr.mxu0 0.0
        %6682 = vmatpush2.msra.mxu0 0.0
        %6683 = vmatprep.subr.mxu0 0.0
        %6684 = vmatpush2.msra.mxu0 0.0
        %6685 = vmatprep.subr.mxu0 0.0
        %6686 = vmatpush2.msra.mxu0 0.0
        %6687 = vmatprep.subr.mxu0 0.0
        %6688 = vmatpush2.msra.mxu0 0.0
        %6689 = vmatprep.subr.mxu0 0.0
        %6690 = vmatpush2.msra.mxu0 0.0
        %6691 = vmatprep.subr.mxu0 0.0
        %6692 = vmatpush2.msra.mxu0 0.0
        %6693 = vmatprep.subr.mxu0 0.0
        %6694 = vmatpush2.msra.mxu0 0.0
        %6695 = vmatprep.subr.mxu0 0.0
        %6696 = vmatpush2.msra.mxu0 0.0
        %6697 = vmatprep.subr.mxu0 0.0
        %6698 = vmatpush2.msra.mxu0 0.0
        %6699 = vmatprep.subr.mxu0 0.0
        %6700 = vmatpush2.msra.mxu0 0.0
        %6701 = vmatprep.subr.mxu0 0.0
        %6702 = vmatpush2.msra.mxu0 0.0
        %6703 = vmatprep.subr.mxu0 0.0
        %6704 = vmatpush2.msra.mxu0 0.0
        %6705 = vmatprep.mubr.f32.mxu0 0.0
        %6706 = vmatmul.mubr.f32.gmra.mxu0 %v6544
        %v6707 = vpop.f32.mrf.mxu0
        %v6708 = vadd.f32 %v6522, %v6707
        %v6709 = vpop.f32.mrf.mxu0
        %v6710 = vadd.f32 %v6524, %v6709
        %6711 = vmatprep.mubr.f32.mxu0 0.0
        %6712 = vmatmul.mubr.f32.gmra.mxu0 %v6546
        %v6713 = vpop.f32.mrf.mxu0
        %v6714 = vadd.f32 %v6528, %v6713
        %v6715 = vpop.f32.mrf.mxu0
        %v6716 = vadd.f32 %v6530, %v6715
        %6717 = vmatprep.mubr.f32.mxu0 0.0
        %6718 = vmatmul.mubr.f32.gmra.mxu0 %v6548
        %v6719 = vpop.f32.mrf.mxu0
        %v6720 = vadd.f32 %v6534, %v6719
        %v6721 = vpop.f32.mrf.mxu0
        %v6722 = vadd.f32 %v6536, %v6721
        %6723 = vmatprep.mubr.f32.mxu0 0.0
        %6724 = vmatmul.mubr.f32.gmra.mxu0 %v6550
        %v6725 = vpop.f32.mrf.mxu0
        %v6726 = vadd.f32 %v6540, %v6725
        %v6727 = vpop.f32.mrf.mxu0
        %v6728 = vadd.f32 %v6542, %v6727
        %6729 = vdwg.mxu0
        %6730 = vrot.lane.b32.xlu0 %v6170, 15
        %v6731 = vpop.permute.xlu0 %6730
        %6732 = vrot.lane.b32.xlu0 %v6174, 15
        %v6733 = vpop.permute.xlu0 %6732
        %6734 = vrot.lane.b32.xlu0 %v6178, 15
        %v6735 = vpop.permute.xlu0 %6734
        %6736 = vrot.lane.b32.xlu0 %v6182, 15
        %v6737 = vpop.permute.xlu0 %6736
        %6738 = vrot.lane.b32.xlu0 %v6171, 15
        %v6739 = vpop.permute.xlu0 %6738
        %6740 = vrot.lane.b32.xlu0 %v6175, 15
        %v6741 = vpop.permute.xlu0 %6740
        %6742 = vrot.lane.b32.xlu0 %v6179, 15
        %v6743 = vpop.permute.xlu0 %6742
        %6744 = vrot.lane.b32.xlu0 %v6183, 15
        %v6745 = vpop.permute.xlu0 %6744
        %6746 = vrot.lane.b32.xlu0 %v6172, 15
        %v6747 = vpop.permute.xlu0 %6746
        %6748 = vrot.lane.b32.xlu0 %v6176, 15
        %v6749 = vpop.permute.xlu0 %6748
        %6750 = vrot.lane.b32.xlu0 %v6180, 15
        %v6751 = vpop.permute.xlu0 %6750
        %6752 = vrot.lane.b32.xlu0 %v6184, 15
        %v6753 = vpop.permute.xlu0 %6752
        %6754 = vrot.lane.b32.xlu0 %v6173, 15
        %v6755 = vpop.permute.xlu0 %6754
        %6756 = vrot.lane.b32.xlu0 %v6177, 15
        %v6757 = vpop.permute.xlu0 %6756
        %6758 = vrot.lane.b32.xlu0 %v6181, 15
        %v6759 = vpop.permute.xlu0 %6758
        %6760 = vrot.lane.b32.xlu0 %v6185, 15
        %v6761 = vpop.permute.xlu0 %6760
        %v6762 = vsel %vm735, %v6747, %v6755
        %v6763 = vsel %vm735, %v6749, %v6757
        %v6764 = vsel %vm735, %v6751, %v6759
        %v6765 = vsel %vm735, %v6753, %v6761
        %v6766 = vsel %vm735, %v6739, %v6747
        %v6767 = vsel %vm735, %v6741, %v6749
        %v6768 = vsel %vm735, %v6743, %v6751
        %v6769 = vsel %vm735, %v6745, %v6753
        %v6770 = vsel %vm735, %v6731, %v6739
        %v6771 = vsel %vm735, %v6733, %v6741
        %v6772 = vsel %vm735, %v6735, %v6743
        %v6773 = vsel %vm735, %v6737, %v6745
        %v6774 = vsel %vm735, %v6755, %v6731
        %v6775 = vsel %vm735, %v6757, %v6733
        %v6776 = vsel %vm735, %v6759, %v6735
        %v6777 = vsel %vm735, %v6761, %v6737
        %v6778 = vmul.f32 %v6774, %v744
        %v6779 = vmul.f32 %v6770, %v748
        %v6780 = vmul.f32 %v6766, %v752
        %v6781 = vmul.f32 %v6762, %v756
        %v6782 = vmul.f32 %v6775, %v744
        %v6783 = vmul.f32 %v6771, %v748
        %v6784 = vmul.f32 %v6767, %v752
        %v6785 = vmul.f32 %v6763, %v756
        %v6786 = vmul.f32 %v6776, %v744
        %v6787 = vmul.f32 %v6772, %v748
        %v6788 = vmul.f32 %v6768, %v752
        %v6789 = vmul.f32 %v6764, %v756
        %v6790 = vmul.f32 %v6777, %v744
        %v6791 = vmul.f32 %v6773, %v748
        %v6792 = vmul.f32 %v6769, %v752
        %v6793 = vmul.f32 %v6765, %v756
        %6794 = vrot.lane.b32.xlu0 %v6202, 64
        %v6795 = vpop.permute.xlu0 %6794
        %6796 = vrot.lane.b32.xlu0 %v6205, 64
        %v6797 = vpop.permute.xlu0 %6796
        %6798 = vrot.lane.b32.xlu0 %v6208, 64
        %v6799 = vpop.permute.xlu0 %6798
        %6800 = vrot.lane.b32.xlu0 %v6211, 64
        %v6801 = vpop.permute.xlu0 %6800
        %v6802 = vsel %vm1473, %v6795, 0
        %v6804 = vsel %vm1473, %v6797, 0
        %v6806 = vsel %vm1473, %v6799, 0
        %v6808 = vsel %vm1473, %v6801, 0
        %6810 = vmatprep.subr.mxu0 0.0
        %6811 = vmatpush1.msra.mxu0 0.0
        %6812 = vmatprep.subr.mxu0 0.0
        %6813 = vmatpush1.msra.mxu0 0.0
        %6814 = vmatprep.subr.mxu0 0.0
        %6815 = vmatpush1.msra.mxu0 0.0
        %6816 = vmatprep.subr.mxu0 0.0
        %6817 = vmatpush1.msra.mxu0 0.0
        %6818 = vmatprep.subr.mxu0 0.0
        %6819 = vmatpush1.msra.mxu0 0.0
        %6820 = vmatprep.subr.mxu0 0.0
        %6821 = vmatpush1.msra.mxu0 0.0
        %6822 = vmatprep.subr.mxu0 0.0
        %6823 = vmatpush1.msra.mxu0 0.0
        %6824 = vmatprep.subr.mxu0 0.0
        %6825 = vmatpush1.msra.mxu0 0.0
        %6826 = vmatprep.subr.mxu0 0.0
        %6827 = vmatpush1.msra.mxu0 0.0
        %6828 = vmatprep.subr.mxu0 0.0
        %6829 = vmatpush1.msra.mxu0 0.0
        %6830 = vmatprep.subr.mxu0 0.0
        %6831 = vmatpush1.msra.mxu0 0.0
        %6832 = vmatprep.subr.mxu0 0.0
        %6833 = vmatpush1.msra.mxu0 0.0
        %6834 = vmatprep.subr.mxu0 %v6791
        %6835 = vmatpush1.msra.mxu0 %v6790
        %6836 = vmatprep.subr.mxu0 %v6787
        %6837 = vmatpush1.msra.mxu0 %v6786
        %6838 = vmatprep.subr.mxu0 %v6783
        %6839 = vmatpush1.msra.mxu0 %v6782
        %6840 = vmatprep.subr.mxu0 %v6779
        %6841 = vmatpush1.msra.mxu0 %v6778
        %6842 = vmatprep.subr.mxu0 0.0
        %6843 = vmatpush2.msra.mxu0 0.0
        %6844 = vmatprep.subr.mxu0 0.0
        %6845 = vmatpush2.msra.mxu0 0.0
        %6846 = vmatprep.subr.mxu0 0.0
        %6847 = vmatpush2.msra.mxu0 0.0
        %6848 = vmatprep.subr.mxu0 0.0
        %6849 = vmatpush2.msra.mxu0 0.0
        %6850 = vmatprep.subr.mxu0 0.0
        %6851 = vmatpush2.msra.mxu0 0.0
        %6852 = vmatprep.subr.mxu0 0.0
        %6853 = vmatpush2.msra.mxu0 0.0
        %6854 = vmatprep.subr.mxu0 0.0
        %6855 = vmatpush2.msra.mxu0 0.0
        %6856 = vmatprep.subr.mxu0 0.0
        %6857 = vmatpush2.msra.mxu0 0.0
        %6858 = vmatprep.subr.mxu0 0.0
        %6859 = vmatpush2.msra.mxu0 0.0
        %6860 = vmatprep.subr.mxu0 0.0
        %6861 = vmatpush2.msra.mxu0 0.0
        %6862 = vmatprep.subr.mxu0 0.0
        %6863 = vmatpush2.msra.mxu0 0.0
        %6864 = vmatprep.subr.mxu0 0.0
        %6865 = vmatpush2.msra.mxu0 0.0
        %6866 = vmatprep.subr.mxu0 0.0
        %6867 = vmatpush2.msra.mxu0 0.0
        %6868 = vmatprep.subr.mxu0 0.0
        %6869 = vmatpush2.msra.mxu0 0.0
        %6870 = vmatprep.subr.mxu0 0.0
        %6871 = vmatpush2.msra.mxu0 0.0
        %6872 = vmatprep.subr.mxu0 0.0
        %6873 = vmatpush2.msra.mxu0 0.0
        %6874 = vmatprep.mubr.f32.mxu0 0.0
        %6875 = vmatmul.mubr.f32.gmra.mxu0 %v6802
        %v6876 = vpop.f32.mrf.mxu0
        %v6877 = vadd.f32 0.0, %v6876
        %v6878 = vpop.f32.mrf.mxu0
        %v6879 = vadd.f32 0.0, %v6878
        %6880 = vmatprep.mubr.f32.mxu0 0.0
        %6881 = vmatmul.mubr.f32.gmra.mxu0 %v6804
        %v6882 = vpop.f32.mrf.mxu0
        %v6883 = vadd.f32 0.0, %v6882
        %v6884 = vpop.f32.mrf.mxu0
        %v6885 = vadd.f32 0.0, %v6884
        %6886 = vmatprep.mubr.f32.mxu0 0.0
        %6887 = vmatmul.mubr.f32.gmra.mxu0 %v6806
        %v6888 = vpop.f32.mrf.mxu0
        %v6889 = vadd.f32 0.0, %v6888
        %v6890 = vpop.f32.mrf.mxu0
        %v6891 = vadd.f32 0.0, %v6890
        %6892 = vmatprep.mubr.f32.mxu0 0.0
        %6893 = vmatmul.mubr.f32.gmra.mxu0 %v6808
        %v6894 = vpop.f32.mrf.mxu0
        %v6895 = vadd.f32 0.0, %v6894
        %v6896 = vpop.f32.mrf.mxu0
        %v6897 = vadd.f32 0.0, %v6896
        %6898 = vdwg.mxu0
        %6899 = vmatprep.subr.mxu0 0.0
        %6900 = vmatpush1.msra.mxu0 0.0
        %6901 = vmatprep.subr.mxu0 0.0
        %6902 = vmatpush1.msra.mxu0 0.0
        %6903 = vmatprep.subr.mxu0 0.0
        %6904 = vmatpush1.msra.mxu0 0.0
        %6905 = vmatprep.subr.mxu0 0.0
        %6906 = vmatpush1.msra.mxu0 0.0
        %6907 = vmatprep.subr.mxu0 0.0
        %6908 = vmatpush1.msra.mxu0 0.0
        %6909 = vmatprep.subr.mxu0 0.0
        %6910 = vmatpush1.msra.mxu0 0.0
        %6911 = vmatprep.subr.mxu0 0.0
        %6912 = vmatpush1.msra.mxu0 0.0
        %6913 = vmatprep.subr.mxu0 0.0
        %6914 = vmatpush1.msra.mxu0 0.0
        %6915 = vmatprep.subr.mxu0 0.0
        %6916 = vmatpush1.msra.mxu0 0.0
        %6917 = vmatprep.subr.mxu0 0.0
        %6918 = vmatpush1.msra.mxu0 0.0
        %6919 = vmatprep.subr.mxu0 0.0
        %6920 = vmatpush1.msra.mxu0 0.0
        %6921 = vmatprep.subr.mxu0 0.0
        %6922 = vmatpush1.msra.mxu0 0.0
        %6923 = vmatprep.subr.mxu0 %v6793
        %6924 = vmatpush1.msra.mxu0 %v6792
        %6925 = vmatprep.subr.mxu0 %v6789
        %6926 = vmatpush1.msra.mxu0 %v6788
        %6927 = vmatprep.subr.mxu0 %v6785
        %6928 = vmatpush1.msra.mxu0 %v6784
        %6929 = vmatprep.subr.mxu0 %v6781
        %6930 = vmatpush1.msra.mxu0 %v6780
        %6931 = vmatprep.subr.mxu0 0.0
        %6932 = vmatpush2.msra.mxu0 0.0
        %6933 = vmatprep.subr.mxu0 0.0
        %6934 = vmatpush2.msra.mxu0 0.0
        %6935 = vmatprep.subr.mxu0 0.0
        %6936 = vmatpush2.msra.mxu0 0.0
        %6937 = vmatprep.subr.mxu0 0.0
        %6938 = vmatpush2.msra.mxu0 0.0
        %6939 = vmatprep.subr.mxu0 0.0
        %6940 = vmatpush2.msra.mxu0 0.0
        %6941 = vmatprep.subr.mxu0 0.0
        %6942 = vmatpush2.msra.mxu0 0.0
        %6943 = vmatprep.subr.mxu0 0.0
        %6944 = vmatpush2.msra.mxu0 0.0
        %6945 = vmatprep.subr.mxu0 0.0
        %6946 = vmatpush2.msra.mxu0 0.0
        %6947 = vmatprep.subr.mxu0 0.0
        %6948 = vmatpush2.msra.mxu0 0.0
        %6949 = vmatprep.subr.mxu0 0.0
        %6950 = vmatpush2.msra.mxu0 0.0
        %6951 = vmatprep.subr.mxu0 0.0
        %6952 = vmatpush2.msra.mxu0 0.0
        %6953 = vmatprep.subr.mxu0 0.0
        %6954 = vmatpush2.msra.mxu0 0.0
        %6955 = vmatprep.subr.mxu0 0.0
        %6956 = vmatpush2.msra.mxu0 0.0
        %6957 = vmatprep.subr.mxu0 0.0
        %6958 = vmatpush2.msra.mxu0 0.0
        %6959 = vmatprep.subr.mxu0 0.0
        %6960 = vmatpush2.msra.mxu0 0.0
        %6961 = vmatprep.subr.mxu0 0.0
        %6962 = vmatpush2.msra.mxu0 0.0
        %6963 = vmatprep.mubr.f32.mxu0 0.0
        %6964 = vmatmul.mubr.f32.gmra.mxu0 %v6802
        %v6965 = vpop.f32.mrf.mxu0
        %v6966 = vadd.f32 0.0, %v6965
        %v6967 = vpop.f32.mrf.mxu0
        %v6968 = vadd.f32 0.0, %v6967
        %6969 = vmatprep.mubr.f32.mxu0 0.0
        %6970 = vmatmul.mubr.f32.gmra.mxu0 %v6804
        %v6971 = vpop.f32.mrf.mxu0
        %v6972 = vadd.f32 0.0, %v6971
        %v6973 = vpop.f32.mrf.mxu0
        %v6974 = vadd.f32 0.0, %v6973
        %6975 = vmatprep.mubr.f32.mxu0 0.0
        %6976 = vmatmul.mubr.f32.gmra.mxu0 %v6806
        %v6977 = vpop.f32.mrf.mxu0
        %v6978 = vadd.f32 0.0, %v6977
        %v6979 = vpop.f32.mrf.mxu0
        %v6980 = vadd.f32 0.0, %v6979
        %6981 = vmatprep.mubr.f32.mxu0 0.0
        %6982 = vmatmul.mubr.f32.gmra.mxu0 %v6808
        %v6983 = vpop.f32.mrf.mxu0
        %v6984 = vadd.f32 0.0, %v6983
        %v6985 = vpop.f32.mrf.mxu0
        %v6986 = vadd.f32 0.0, %v6985
        %6987 = vdwg.mxu0
        %v6988 = vadd.f32 %v6619, %v6877
        %v6989 = vadd.f32 %v6621, %v6879
        %v6990 = vadd.f32 %v6708, %v6966
        %v6991 = vadd.f32 %v6710, %v6968
        %v6992 = vadd.f32 %v6625, %v6883
        %v6993 = vadd.f32 %v6627, %v6885
        %v6994 = vadd.f32 %v6714, %v6972
        %v6995 = vadd.f32 %v6716, %v6974
        %v6996 = vadd.f32 %v6631, %v6889
        %v6997 = vadd.f32 %v6633, %v6891
        %v6998 = vadd.f32 %v6720, %v6978
        %v6999 = vadd.f32 %v6722, %v6980
        %v7000 = vadd.f32 %v6637, %v6895
        %v7001 = vadd.f32 %v6639, %v6897
        %v7002 = vadd.f32 %v6726, %v6984
        %v7003 = vadd.f32 %v6728, %v6986
        %7004 = vrot.lane.b32.xlu0 %v6170, 1
        %v7005 = vpop.permute.xlu0 %7004
        %7006 = vrot.lane.b32.xlu0 %v6174, 1
        %v7007 = vpop.permute.xlu0 %7006
        %7008 = vrot.lane.b32.xlu0 %v6178, 1
        %v7009 = vpop.permute.xlu0 %7008
        %7010 = vrot.lane.b32.xlu0 %v6182, 1
        %v7011 = vpop.permute.xlu0 %7010
        %7012 = vrot.lane.b32.xlu0 %v6171, 1
        %v7013 = vpop.permute.xlu0 %7012
        %7014 = vrot.lane.b32.xlu0 %v6175, 1
        %v7015 = vpop.permute.xlu0 %7014
        %7016 = vrot.lane.b32.xlu0 %v6179, 1
        %v7017 = vpop.permute.xlu0 %7016
        %7018 = vrot.lane.b32.xlu0 %v6183, 1
        %v7019 = vpop.permute.xlu0 %7018
        %7020 = vrot.lane.b32.xlu0 %v6172, 1
        %v7021 = vpop.permute.xlu0 %7020
        %7022 = vrot.lane.b32.xlu0 %v6176, 1
        %v7023 = vpop.permute.xlu0 %7022
        %7024 = vrot.lane.b32.xlu0 %v6180, 1
        %v7025 = vpop.permute.xlu0 %7024
        %7026 = vrot.lane.b32.xlu0 %v6184, 1
        %v7027 = vpop.permute.xlu0 %7026
        %7028 = vrot.lane.b32.xlu0 %v6173, 1
        %v7029 = vpop.permute.xlu0 %7028
        %7030 = vrot.lane.b32.xlu0 %v6177, 1
        %v7031 = vpop.permute.xlu0 %7030
        %7032 = vrot.lane.b32.xlu0 %v6181, 1
        %v7033 = vpop.permute.xlu0 %7032
        %7034 = vrot.lane.b32.xlu0 %v6185, 1
        %v7035 = vpop.permute.xlu0 %7034
        %v7036 = vsel %vm773, %v7021, %v7029
        %v7037 = vsel %vm773, %v7023, %v7031
        %v7038 = vsel %vm773, %v7025, %v7033
        %v7039 = vsel %vm773, %v7027, %v7035
        %v7040 = vsel %vm773, %v7013, %v7021
        %v7041 = vsel %vm773, %v7015, %v7023
        %v7042 = vsel %vm773, %v7017, %v7025
        %v7043 = vsel %vm773, %v7019, %v7027
        %v7044 = vsel %vm773, %v7005, %v7013
        %v7045 = vsel %vm773, %v7007, %v7015
        %v7046 = vsel %vm773, %v7009, %v7017
        %v7047 = vsel %vm773, %v7011, %v7019
        %v7048 = vsel %vm773, %v7029, %v7005
        %v7049 = vsel %vm773, %v7031, %v7007
        %v7050 = vsel %vm773, %v7033, %v7009
        %v7051 = vsel %vm773, %v7035, %v7011
        %v7052 = vmul.f32 %v7048, %v782
        %v7053 = vmul.f32 %v7044, %v786
        %v7054 = vmul.f32 %v7040, %v790
        %v7055 = vmul.f32 %v7036, %v794
        %v7056 = vmul.f32 %v7049, %v782
        %v7057 = vmul.f32 %v7045, %v786
        %v7058 = vmul.f32 %v7041, %v790
        %v7059 = vmul.f32 %v7037, %v794
        %v7060 = vmul.f32 %v7050, %v782
        %v7061 = vmul.f32 %v7046, %v786
        %v7062 = vmul.f32 %v7042, %v790
        %v7063 = vmul.f32 %v7038, %v794
        %v7064 = vmul.f32 %v7051, %v782
        %v7065 = vmul.f32 %v7047, %v786
        %v7066 = vmul.f32 %v7043, %v790
        %v7067 = vmul.f32 %v7039, %v794
        %7068 = vrot.lane.b32.xlu0 %v6202, 32
        %v7069 = vpop.permute.xlu0 %7068
        %7070 = vrot.lane.b32.xlu0 %v6205, 32
        %v7071 = vpop.permute.xlu0 %7070
        %7072 = vrot.lane.b32.xlu0 %v6208, 32
        %v7073 = vpop.permute.xlu0 %7072
        %7074 = vrot.lane.b32.xlu0 %v6211, 32
        %v7075 = vpop.permute.xlu0 %7074
        %v7076 = vsel %vm1473, %v7069, 0
        %v7078 = vsel %vm1473, %v7071, 0
        %v7080 = vsel %vm1473, %v7073, 0
        %v7082 = vsel %vm1473, %v7075, 0
        %7084 = vmatprep.subr.mxu0 0.0
        %7085 = vmatpush1.msra.mxu0 0.0
        %7086 = vmatprep.subr.mxu0 0.0
        %7087 = vmatpush1.msra.mxu0 0.0
        %7088 = vmatprep.subr.mxu0 0.0
        %7089 = vmatpush1.msra.mxu0 0.0
        %7090 = vmatprep.subr.mxu0 0.0
        %7091 = vmatpush1.msra.mxu0 0.0
        %7092 = vmatprep.subr.mxu0 0.0
        %7093 = vmatpush1.msra.mxu0 0.0
        %7094 = vmatprep.subr.mxu0 0.0
        %7095 = vmatpush1.msra.mxu0 0.0
        %7096 = vmatprep.subr.mxu0 0.0
        %7097 = vmatpush1.msra.mxu0 0.0
        %7098 = vmatprep.subr.mxu0 0.0
        %7099 = vmatpush1.msra.mxu0 0.0
        %7100 = vmatprep.subr.mxu0 0.0
        %7101 = vmatpush1.msra.mxu0 0.0
        %7102 = vmatprep.subr.mxu0 0.0
        %7103 = vmatpush1.msra.mxu0 0.0
        %7104 = vmatprep.subr.mxu0 0.0
        %7105 = vmatpush1.msra.mxu0 0.0
        %7106 = vmatprep.subr.mxu0 0.0
        %7107 = vmatpush1.msra.mxu0 0.0
        %7108 = vmatprep.subr.mxu0 %v7065
        %7109 = vmatpush1.msra.mxu0 %v7064
        %7110 = vmatprep.subr.mxu0 %v7061
        %7111 = vmatpush1.msra.mxu0 %v7060
        %7112 = vmatprep.subr.mxu0 %v7057
        %7113 = vmatpush1.msra.mxu0 %v7056
        %7114 = vmatprep.subr.mxu0 %v7053
        %7115 = vmatpush1.msra.mxu0 %v7052
        %7116 = vmatprep.subr.mxu0 0.0
        %7117 = vmatpush2.msra.mxu0 0.0
        %7118 = vmatprep.subr.mxu0 0.0
        %7119 = vmatpush2.msra.mxu0 0.0
        %7120 = vmatprep.subr.mxu0 0.0
        %7121 = vmatpush2.msra.mxu0 0.0
        %7122 = vmatprep.subr.mxu0 0.0
        %7123 = vmatpush2.msra.mxu0 0.0
        %7124 = vmatprep.subr.mxu0 0.0
        %7125 = vmatpush2.msra.mxu0 0.0
        %7126 = vmatprep.subr.mxu0 0.0
        %7127 = vmatpush2.msra.mxu0 0.0
        %7128 = vmatprep.subr.mxu0 0.0
        %7129 = vmatpush2.msra.mxu0 0.0
        %7130 = vmatprep.subr.mxu0 0.0
        %7131 = vmatpush2.msra.mxu0 0.0
        %7132 = vmatprep.subr.mxu0 0.0
        %7133 = vmatpush2.msra.mxu0 0.0
        %7134 = vmatprep.subr.mxu0 0.0
        %7135 = vmatpush2.msra.mxu0 0.0
        %7136 = vmatprep.subr.mxu0 0.0
        %7137 = vmatpush2.msra.mxu0 0.0
        %7138 = vmatprep.subr.mxu0 0.0
        %7139 = vmatpush2.msra.mxu0 0.0
        %7140 = vmatprep.subr.mxu0 0.0
        %7141 = vmatpush2.msra.mxu0 0.0
        %7142 = vmatprep.subr.mxu0 0.0
        %7143 = vmatpush2.msra.mxu0 0.0
        %7144 = vmatprep.subr.mxu0 0.0
        %7145 = vmatpush2.msra.mxu0 0.0
        %7146 = vmatprep.subr.mxu0 0.0
        %7147 = vmatpush2.msra.mxu0 0.0
        %7148 = vmatprep.mubr.f32.mxu0 0.0
        %7149 = vmatmul.mubr.f32.gmra.mxu0 %v7076
        %v7150 = vpop.f32.mrf.mxu0
        %v7151 = vadd.f32 0.0, %v7150
        %v7152 = vpop.f32.mrf.mxu0
        %v7153 = vadd.f32 0.0, %v7152
        %7154 = vmatprep.mubr.f32.mxu0 0.0
        %7155 = vmatmul.mubr.f32.gmra.mxu0 %v7078
        %v7156 = vpop.f32.mrf.mxu0
        %v7157 = vadd.f32 0.0, %v7156
        %v7158 = vpop.f32.mrf.mxu0
        %v7159 = vadd.f32 0.0, %v7158
        %7160 = vmatprep.mubr.f32.mxu0 0.0
        %7161 = vmatmul.mubr.f32.gmra.mxu0 %v7080
        %v7162 = vpop.f32.mrf.mxu0
        %v7163 = vadd.f32 0.0, %v7162
        %v7164 = vpop.f32.mrf.mxu0
        %v7165 = vadd.f32 0.0, %v7164
        %7166 = vmatprep.mubr.f32.mxu0 0.0
        %7167 = vmatmul.mubr.f32.gmra.mxu0 %v7082
        %v7168 = vpop.f32.mrf.mxu0
        %v7169 = vadd.f32 0.0, %v7168
        %v7170 = vpop.f32.mrf.mxu0
        %v7171 = vadd.f32 0.0, %v7170
        %7172 = vdwg.mxu0
        %7173 = vmatprep.subr.mxu0 0.0
        %7174 = vmatpush1.msra.mxu0 0.0
        %7175 = vmatprep.subr.mxu0 0.0
        %7176 = vmatpush1.msra.mxu0 0.0
        %7177 = vmatprep.subr.mxu0 0.0
        %7178 = vmatpush1.msra.mxu0 0.0
        %7179 = vmatprep.subr.mxu0 0.0
        %7180 = vmatpush1.msra.mxu0 0.0
        %7181 = vmatprep.subr.mxu0 0.0
        %7182 = vmatpush1.msra.mxu0 0.0
        %7183 = vmatprep.subr.mxu0 0.0
        %7184 = vmatpush1.msra.mxu0 0.0
        %7185 = vmatprep.subr.mxu0 0.0
        %7186 = vmatpush1.msra.mxu0 0.0
        %7187 = vmatprep.subr.mxu0 0.0
        %7188 = vmatpush1.msra.mxu0 0.0
        %7189 = vmatprep.subr.mxu0 0.0
        %7190 = vmatpush1.msra.mxu0 0.0
        %7191 = vmatprep.subr.mxu0 0.0
        %7192 = vmatpush1.msra.mxu0 0.0
        %7193 = vmatprep.subr.mxu0 0.0
        %7194 = vmatpush1.msra.mxu0 0.0
        %7195 = vmatprep.subr.mxu0 0.0
        %7196 = vmatpush1.msra.mxu0 0.0
        %7197 = vmatprep.subr.mxu0 %v7067
        %7198 = vmatpush1.msra.mxu0 %v7066
        %7199 = vmatprep.subr.mxu0 %v7063
        %7200 = vmatpush1.msra.mxu0 %v7062
        %7201 = vmatprep.subr.mxu0 %v7059
        %7202 = vmatpush1.msra.mxu0 %v7058
        %7203 = vmatprep.subr.mxu0 %v7055
        %7204 = vmatpush1.msra.mxu0 %v7054
        %7205 = vmatprep.subr.mxu0 0.0
        %7206 = vmatpush2.msra.mxu0 0.0
        %7207 = vmatprep.subr.mxu0 0.0
        %7208 = vmatpush2.msra.mxu0 0.0
        %7209 = vmatprep.subr.mxu0 0.0
        %7210 = vmatpush2.msra.mxu0 0.0
        %7211 = vmatprep.subr.mxu0 0.0
        %7212 = vmatpush2.msra.mxu0 0.0
        %7213 = vmatprep.subr.mxu0 0.0
        %7214 = vmatpush2.msra.mxu0 0.0
        %7215 = vmatprep.subr.mxu0 0.0
        %7216 = vmatpush2.msra.mxu0 0.0
        %7217 = vmatprep.subr.mxu0 0.0
        %7218 = vmatpush2.msra.mxu0 0.0
        %7219 = vmatprep.subr.mxu0 0.0
        %7220 = vmatpush2.msra.mxu0 0.0
        %7221 = vmatprep.subr.mxu0 0.0
        %7222 = vmatpush2.msra.mxu0 0.0
        %7223 = vmatprep.subr.mxu0 0.0
        %7224 = vmatpush2.msra.mxu0 0.0
        %7225 = vmatprep.subr.mxu0 0.0
        %7226 = vmatpush2.msra.mxu0 0.0
        %7227 = vmatprep.subr.mxu0 0.0
        %7228 = vmatpush2.msra.mxu0 0.0
        %7229 = vmatprep.subr.mxu0 0.0
        %7230 = vmatpush2.msra.mxu0 0.0
        %7231 = vmatprep.subr.mxu0 0.0
        %7232 = vmatpush2.msra.mxu0 0.0
        %7233 = vmatprep.subr.mxu0 0.0
        %7234 = vmatpush2.msra.mxu0 0.0
        %7235 = vmatprep.subr.mxu0 0.0
        %7236 = vmatpush2.msra.mxu0 0.0
        %7237 = vmatprep.mubr.f32.mxu0 0.0
        %7238 = vmatmul.mubr.f32.gmra.mxu0 %v7076
        %v7239 = vpop.f32.mrf.mxu0
        %v7240 = vadd.f32 0.0, %v7239
        %v7241 = vpop.f32.mrf.mxu0
        %v7242 = vadd.f32 0.0, %v7241
        %7243 = vmatprep.mubr.f32.mxu0 0.0
        %7244 = vmatmul.mubr.f32.gmra.mxu0 %v7078
        %v7245 = vpop.f32.mrf.mxu0
        %v7246 = vadd.f32 0.0, %v7245
        %v7247 = vpop.f32.mrf.mxu0
        %v7248 = vadd.f32 0.0, %v7247
        %7249 = vmatprep.mubr.f32.mxu0 0.0
        %7250 = vmatmul.mubr.f32.gmra.mxu0 %v7080
        %v7251 = vpop.f32.mrf.mxu0
        %v7252 = vadd.f32 0.0, %v7251
        %v7253 = vpop.f32.mrf.mxu0
        %v7254 = vadd.f32 0.0, %v7253
        %7255 = vmatprep.mubr.f32.mxu0 0.0
        %7256 = vmatmul.mubr.f32.gmra.mxu0 %v7082
        %v7257 = vpop.f32.mrf.mxu0
        %v7258 = vadd.f32 0.0, %v7257
        %v7259 = vpop.f32.mrf.mxu0
        %v7260 = vadd.f32 0.0, %v7259
        %7261 = vdwg.mxu0
        %v7262 = vadd.f32 %v6988, %v7151
        %v7263 = vadd.f32 %v6989, %v7153
        %v7264 = vadd.f32 %v6990, %v7240
        %v7265 = vadd.f32 %v6991, %v7242
        %v7266 = vadd.f32 %v6992, %v7157
        %v7267 = vadd.f32 %v6993, %v7159
        %v7268 = vadd.f32 %v6994, %v7246
        %v7269 = vadd.f32 %v6995, %v7248
        %v7270 = vadd.f32 %v6996, %v7163
        %v7271 = vadd.f32 %v6997, %v7165
        %v7272 = vadd.f32 %v6998, %v7252
        %v7273 = vadd.f32 %v6999, %v7254
        %v7274 = vadd.f32 %v7000, %v7169
        %v7275 = vadd.f32 %v7001, %v7171
        %v7276 = vadd.f32 %v7002, %v7258
        %v7277 = vadd.f32 %v7003, %v7260
        %v7279 = vsel %vm1473, %v6203, 0
        %v7282 = vsel %vm1473, %v6206, 0
        %v7285 = vsel %vm1473, %v6209, 0
        %v7288 = vsel %vm1473, %v6212, 0
        %7290 = vmatprep.subr.mxu0 0.0
        %7291 = vmatpush1.msra.mxu0 0.0
        %7292 = vmatprep.subr.mxu0 0.0
        %7293 = vmatpush1.msra.mxu0 0.0
        %7294 = vmatprep.subr.mxu0 0.0
        %7295 = vmatpush1.msra.mxu0 0.0
        %7296 = vmatprep.subr.mxu0 0.0
        %7297 = vmatpush1.msra.mxu0 0.0
        %7298 = vmatprep.subr.mxu0 0.0
        %7299 = vmatpush1.msra.mxu0 0.0
        %7300 = vmatprep.subr.mxu0 0.0
        %7301 = vmatpush1.msra.mxu0 0.0
        %7302 = vmatprep.subr.mxu0 0.0
        %7303 = vmatpush1.msra.mxu0 0.0
        %7304 = vmatprep.subr.mxu0 0.0
        %7305 = vmatpush1.msra.mxu0 0.0
        %7306 = vmatprep.subr.mxu0 0.0
        %7307 = vmatpush1.msra.mxu0 0.0
        %7308 = vmatprep.subr.mxu0 0.0
        %7309 = vmatpush1.msra.mxu0 0.0
        %7310 = vmatprep.subr.mxu0 0.0
        %7311 = vmatpush1.msra.mxu0 0.0
        %7312 = vmatprep.subr.mxu0 0.0
        %7313 = vmatpush1.msra.mxu0 0.0
        %7314 = vmatprep.subr.mxu0 %v6183
        %7315 = vmatpush1.msra.mxu0 %v6182
        %7316 = vmatprep.subr.mxu0 %v6179
        %7317 = vmatpush1.msra.mxu0 %v6178
        %7318 = vmatprep.subr.mxu0 %v6175
        %7319 = vmatpush1.msra.mxu0 %v6174
        %7320 = vmatprep.subr.mxu0 %v6171
        %7321 = vmatpush1.msra.mxu0 %v6170
        %7322 = vmatprep.subr.mxu0 0.0
        %7323 = vmatpush2.msra.mxu0 0.0
        %7324 = vmatprep.subr.mxu0 0.0
        %7325 = vmatpush2.msra.mxu0 0.0
        %7326 = vmatprep.subr.mxu0 0.0
        %7327 = vmatpush2.msra.mxu0 0.0
        %7328 = vmatprep.subr.mxu0 0.0
        %7329 = vmatpush2.msra.mxu0 0.0
        %7330 = vmatprep.subr.mxu0 0.0
        %7331 = vmatpush2.msra.mxu0 0.0
        %7332 = vmatprep.subr.mxu0 0.0
        %7333 = vmatpush2.msra.mxu0 0.0
        %7334 = vmatprep.subr.mxu0 0.0
        %7335 = vmatpush2.msra.mxu0 0.0
        %7336 = vmatprep.subr.mxu0 0.0
        %7337 = vmatpush2.msra.mxu0 0.0
        %7338 = vmatprep.subr.mxu0 0.0
        %7339 = vmatpush2.msra.mxu0 0.0
        %7340 = vmatprep.subr.mxu0 0.0
        %7341 = vmatpush2.msra.mxu0 0.0
        %7342 = vmatprep.subr.mxu0 0.0
        %7343 = vmatpush2.msra.mxu0 0.0
        %7344 = vmatprep.subr.mxu0 0.0
        %7345 = vmatpush2.msra.mxu0 0.0
        %7346 = vmatprep.subr.mxu0 0.0
        %7347 = vmatpush2.msra.mxu0 0.0
        %7348 = vmatprep.subr.mxu0 0.0
        %7349 = vmatpush2.msra.mxu0 0.0
        %7350 = vmatprep.subr.mxu0 0.0
        %7351 = vmatpush2.msra.mxu0 0.0
        %7352 = vmatprep.subr.mxu0 0.0
        %7353 = vmatpush2.msra.mxu0 0.0
        %7354 = vmatprep.mubr.f32.mxu0 0.0
        %7355 = vmatmul.mubr.f32.gmra.mxu0 %v7279
        %v7356 = vpop.f32.mrf.mxu0
        %v7357 = vadd.f32 0.0, %v7356
        %v7358 = vpop.f32.mrf.mxu0
        %v7359 = vadd.f32 0.0, %v7358
        %7360 = vmatprep.mubr.f32.mxu0 0.0
        %7361 = vmatmul.mubr.f32.gmra.mxu0 %v7282
        %v7362 = vpop.f32.mrf.mxu0
        %v7363 = vadd.f32 0.0, %v7362
        %v7364 = vpop.f32.mrf.mxu0
        %v7365 = vadd.f32 0.0, %v7364
        %7366 = vmatprep.mubr.f32.mxu0 0.0
        %7367 = vmatmul.mubr.f32.gmra.mxu0 %v7285
        %v7368 = vpop.f32.mrf.mxu0
        %v7369 = vadd.f32 0.0, %v7368
        %v7370 = vpop.f32.mrf.mxu0
        %v7371 = vadd.f32 0.0, %v7370
        %7372 = vmatprep.mubr.f32.mxu0 0.0
        %7373 = vmatmul.mubr.f32.gmra.mxu0 %v7288
        %v7374 = vpop.f32.mrf.mxu0
        %v7375 = vadd.f32 0.0, %v7374
        %v7376 = vpop.f32.mrf.mxu0
        %v7377 = vadd.f32 0.0, %v7376
        %7378 = vdwg.mxu0
        %7379 = vmatprep.subr.mxu0 0.0
        %7380 = vmatpush1.msra.mxu0 0.0
        %7381 = vmatprep.subr.mxu0 0.0
        %7382 = vmatpush1.msra.mxu0 0.0
        %7383 = vmatprep.subr.mxu0 0.0
        %7384 = vmatpush1.msra.mxu0 0.0
        %7385 = vmatprep.subr.mxu0 0.0
        %7386 = vmatpush1.msra.mxu0 0.0
        %7387 = vmatprep.subr.mxu0 0.0
        %7388 = vmatpush1.msra.mxu0 0.0
        %7389 = vmatprep.subr.mxu0 0.0
        %7390 = vmatpush1.msra.mxu0 0.0
        %7391 = vmatprep.subr.mxu0 0.0
        %7392 = vmatpush1.msra.mxu0 0.0
        %7393 = vmatprep.subr.mxu0 0.0
        %7394 = vmatpush1.msra.mxu0 0.0
        %7395 = vmatprep.subr.mxu0 0.0
        %7396 = vmatpush1.msra.mxu0 0.0
        %7397 = vmatprep.subr.mxu0 0.0
        %7398 = vmatpush1.msra.mxu0 0.0
        %7399 = vmatprep.subr.mxu0 0.0
        %7400 = vmatpush1.msra.mxu0 0.0
        %7401 = vmatprep.subr.mxu0 0.0
        %7402 = vmatpush1.msra.mxu0 0.0
        %7403 = vmatprep.subr.mxu0 %v6185
        %7404 = vmatpush1.msra.mxu0 %v6184
        %7405 = vmatprep.subr.mxu0 %v6181
        %7406 = vmatpush1.msra.mxu0 %v6180
        %7407 = vmatprep.subr.mxu0 %v6177
        %7408 = vmatpush1.msra.mxu0 %v6176
        %7409 = vmatprep.subr.mxu0 %v6173
        %7410 = vmatpush1.msra.mxu0 %v6172
        %7411 = vmatprep.subr.mxu0 0.0
        %7412 = vmatpush2.msra.mxu0 0.0
        %7413 = vmatprep.subr.mxu0 0.0
        %7414 = vmatpush2.msra.mxu0 0.0
        %7415 = vmatprep.subr.mxu0 0.0
        %7416 = vmatpush2.msra.mxu0 0.0
        %7417 = vmatprep.subr.mxu0 0.0
        %7418 = vmatpush2.msra.mxu0 0.0
        %7419 = vmatprep.subr.mxu0 0.0
        %7420 = vmatpush2.msra.mxu0 0.0
        %7421 = vmatprep.subr.mxu0 0.0
        %7422 = vmatpush2.msra.mxu0 0.0
        %7423 = vmatprep.subr.mxu0 0.0
        %7424 = vmatpush2.msra.mxu0 0.0
        %7425 = vmatprep.subr.mxu0 0.0
        %7426 = vmatpush2.msra.mxu0 0.0
        %7427 = vmatprep.subr.mxu0 0.0
        %7428 = vmatpush2.msra.mxu0 0.0
        %7429 = vmatprep.subr.mxu0 0.0
        %7430 = vmatpush2.msra.mxu0 0.0
        %7431 = vmatprep.subr.mxu0 0.0
        %7432 = vmatpush2.msra.mxu0 0.0
        %7433 = vmatprep.subr.mxu0 0.0
        %7434 = vmatpush2.msra.mxu0 0.0
        %7435 = vmatprep.subr.mxu0 0.0
        %7436 = vmatpush2.msra.mxu0 0.0
        %7437 = vmatprep.subr.mxu0 0.0
        %7438 = vmatpush2.msra.mxu0 0.0
        %7439 = vmatprep.subr.mxu0 0.0
        %7440 = vmatpush2.msra.mxu0 0.0
        %7441 = vmatprep.subr.mxu0 0.0
        %7442 = vmatpush2.msra.mxu0 0.0
        %7443 = vmatprep.mubr.f32.mxu0 0.0
        %7444 = vmatmul.mubr.f32.gmra.mxu0 %v7279
        %v7445 = vpop.f32.mrf.mxu0
        %v7446 = vadd.f32 0.0, %v7445
        %v7447 = vpop.f32.mrf.mxu0
        %v7448 = vadd.f32 0.0, %v7447
        %7449 = vmatprep.mubr.f32.mxu0 0.0
        %7450 = vmatmul.mubr.f32.gmra.mxu0 %v7282
        %v7451 = vpop.f32.mrf.mxu0
        %v7452 = vadd.f32 0.0, %v7451
        %v7453 = vpop.f32.mrf.mxu0
        %v7454 = vadd.f32 0.0, %v7453
        %7455 = vmatprep.mubr.f32.mxu0 0.0
        %7456 = vmatmul.mubr.f32.gmra.mxu0 %v7285
        %v7457 = vpop.f32.mrf.mxu0
        %v7458 = vadd.f32 0.0, %v7457
        %v7459 = vpop.f32.mrf.mxu0
        %v7460 = vadd.f32 0.0, %v7459
        %7461 = vmatprep.mubr.f32.mxu0 0.0
        %7462 = vmatmul.mubr.f32.gmra.mxu0 %v7288
        %v7463 = vpop.f32.mrf.mxu0
        %v7464 = vadd.f32 0.0, %v7463
        %v7465 = vpop.f32.mrf.mxu0
        %v7466 = vadd.f32 0.0, %v7465
        %7467 = vdwg.mxu0
        %v7468 = vadd.f32 %v7262, %v7357
        %v7469 = vadd.f32 %v7263, %v7359
        %v7470 = vadd.f32 %v7264, %v7446
        %v7471 = vadd.f32 %v7265, %v7448
        %v7472 = vadd.f32 %v7266, %v7363
        %v7473 = vadd.f32 %v7267, %v7365
        %v7474 = vadd.f32 %v7268, %v7452
        %v7475 = vadd.f32 %v7269, %v7454
        %v7476 = vadd.f32 %v7270, %v7369
        %v7477 = vadd.f32 %v7271, %v7371
        %v7478 = vadd.f32 %v7272, %v7458
        %v7479 = vadd.f32 %v7273, %v7460
        %v7480 = vadd.f32 %v7274, %v7375
        %v7481 = vadd.f32 %v7275, %v7377
        %v7482 = vadd.f32 %v7276, %v7464
        %v7483 = vadd.f32 %v7277, %v7466
        %7484 = vrot.lane.b32.xlu0 %v6170, 127
        %v7485 = vpop.permute.xlu0 %7484
        %7486 = vrot.lane.b32.xlu0 %v6174, 127
        %v7487 = vpop.permute.xlu0 %7486
        %7488 = vrot.lane.b32.xlu0 %v6178, 127
        %v7489 = vpop.permute.xlu0 %7488
        %7490 = vrot.lane.b32.xlu0 %v6182, 127
        %v7491 = vpop.permute.xlu0 %7490
        %7492 = vrot.lane.b32.xlu0 %v6171, 127
        %v7493 = vpop.permute.xlu0 %7492
        %7494 = vrot.lane.b32.xlu0 %v6175, 127
        %v7495 = vpop.permute.xlu0 %7494
        %7496 = vrot.lane.b32.xlu0 %v6179, 127
        %v7497 = vpop.permute.xlu0 %7496
        %7498 = vrot.lane.b32.xlu0 %v6183, 127
        %v7499 = vpop.permute.xlu0 %7498
        %7500 = vrot.lane.b32.xlu0 %v6172, 127
        %v7501 = vpop.permute.xlu0 %7500
        %7502 = vrot.lane.b32.xlu0 %v6176, 127
        %v7503 = vpop.permute.xlu0 %7502
        %7504 = vrot.lane.b32.xlu0 %v6180, 127
        %v7505 = vpop.permute.xlu0 %7504
        %7506 = vrot.lane.b32.xlu0 %v6184, 127
        %v7507 = vpop.permute.xlu0 %7506
        %7508 = vrot.lane.b32.xlu0 %v6173, 127
        %v7509 = vpop.permute.xlu0 %7508
        %7510 = vrot.lane.b32.xlu0 %v6177, 127
        %v7511 = vpop.permute.xlu0 %7510
        %7512 = vrot.lane.b32.xlu0 %v6181, 127
        %v7513 = vpop.permute.xlu0 %7512
        %7514 = vrot.lane.b32.xlu0 %v6185, 127
        %v7515 = vpop.permute.xlu0 %7514
        %v7516 = vsel %vm811, %v7501, %v7509
        %v7517 = vsel %vm811, %v7503, %v7511
        %v7518 = vsel %vm811, %v7505, %v7513
        %v7519 = vsel %vm811, %v7507, %v7515
        %v7520 = vsel %vm811, %v7493, %v7501
        %v7521 = vsel %vm811, %v7495, %v7503
        %v7522 = vsel %vm811, %v7497, %v7505
        %v7523 = vsel %vm811, %v7499, %v7507
        %v7524 = vsel %vm811, %v7485, %v7493
        %v7525 = vsel %vm811, %v7487, %v7495
        %v7526 = vsel %vm811, %v7489, %v7497
        %v7527 = vsel %vm811, %v7491, %v7499
        %v7528 = vsel %vm811, %v7509, %v7485
        %v7529 = vsel %vm811, %v7511, %v7487
        %v7530 = vsel %vm811, %v7513, %v7489
        %v7531 = vsel %vm811, %v7515, %v7491
        %v7532 = vmul.f32 %v7524, %v820
        %v7533 = vmul.f32 %v7520, %v824
        %v7534 = vmul.f32 %v7516, %v828
        %v7535 = vmul.f32 %v7528, %v832
        %v7536 = vmul.f32 %v7525, %v820
        %v7537 = vmul.f32 %v7521, %v824
        %v7538 = vmul.f32 %v7517, %v828
        %v7539 = vmul.f32 %v7529, %v832
        %v7540 = vmul.f32 %v7526, %v820
        %v7541 = vmul.f32 %v7522, %v824
        %v7542 = vmul.f32 %v7518, %v828
        %v7543 = vmul.f32 %v7530, %v832
        %v7544 = vmul.f32 %v7527, %v820
        %v7545 = vmul.f32 %v7523, %v824
        %v7546 = vmul.f32 %v7519, %v828
        %v7547 = vmul.f32 %v7531, %v832
        %7548 = vrot.lane.b32.xlu0 %v6203, 96
        %v7549 = vpop.permute.xlu0 %7548
        %7550 = vrot.lane.b32.xlu0 %v6206, 96
        %v7551 = vpop.permute.xlu0 %7550
        %7552 = vrot.lane.b32.xlu0 %v6209, 96
        %v7553 = vpop.permute.xlu0 %7552
        %7554 = vrot.lane.b32.xlu0 %v6212, 96
        %v7555 = vpop.permute.xlu0 %7554
        %v7556 = vsel %vm1473, %v7549, 0
        %v7558 = vsel %vm1473, %v7551, 0
        %v7560 = vsel %vm1473, %v7553, 0
        %v7562 = vsel %vm1473, %v7555, 0
        %7564 = vmatprep.subr.mxu0 0.0
        %7565 = vmatpush1.msra.mxu0 0.0
        %7566 = vmatprep.subr.mxu0 0.0
        %7567 = vmatpush1.msra.mxu0 0.0
        %7568 = vmatprep.subr.mxu0 0.0
        %7569 = vmatpush1.msra.mxu0 0.0
        %7570 = vmatprep.subr.mxu0 0.0
        %7571 = vmatpush1.msra.mxu0 0.0
        %7572 = vmatprep.subr.mxu0 0.0
        %7573 = vmatpush1.msra.mxu0 0.0
        %7574 = vmatprep.subr.mxu0 0.0
        %7575 = vmatpush1.msra.mxu0 0.0
        %7576 = vmatprep.subr.mxu0 0.0
        %7577 = vmatpush1.msra.mxu0 0.0
        %7578 = vmatprep.subr.mxu0 0.0
        %7579 = vmatpush1.msra.mxu0 0.0
        %7580 = vmatprep.subr.mxu0 0.0
        %7581 = vmatpush1.msra.mxu0 0.0
        %7582 = vmatprep.subr.mxu0 0.0
        %7583 = vmatpush1.msra.mxu0 0.0
        %7584 = vmatprep.subr.mxu0 0.0
        %7585 = vmatpush1.msra.mxu0 0.0
        %7586 = vmatprep.subr.mxu0 0.0
        %7587 = vmatpush1.msra.mxu0 0.0
        %7588 = vmatprep.subr.mxu0 %v7545
        %7589 = vmatpush1.msra.mxu0 %v7544
        %7590 = vmatprep.subr.mxu0 %v7541
        %7591 = vmatpush1.msra.mxu0 %v7540
        %7592 = vmatprep.subr.mxu0 %v7537
        %7593 = vmatpush1.msra.mxu0 %v7536
        %7594 = vmatprep.subr.mxu0 %v7533
        %7595 = vmatpush1.msra.mxu0 %v7532
        %7596 = vmatprep.subr.mxu0 0.0
        %7597 = vmatpush2.msra.mxu0 0.0
        %7598 = vmatprep.subr.mxu0 0.0
        %7599 = vmatpush2.msra.mxu0 0.0
        %7600 = vmatprep.subr.mxu0 0.0
        %7601 = vmatpush2.msra.mxu0 0.0
        %7602 = vmatprep.subr.mxu0 0.0
        %7603 = vmatpush2.msra.mxu0 0.0
        %7604 = vmatprep.subr.mxu0 0.0
        %7605 = vmatpush2.msra.mxu0 0.0
        %7606 = vmatprep.subr.mxu0 0.0
        %7607 = vmatpush2.msra.mxu0 0.0
        %7608 = vmatprep.subr.mxu0 0.0
        %7609 = vmatpush2.msra.mxu0 0.0
        %7610 = vmatprep.subr.mxu0 0.0
        %7611 = vmatpush2.msra.mxu0 0.0
        %7612 = vmatprep.subr.mxu0 0.0
        %7613 = vmatpush2.msra.mxu0 0.0
        %7614 = vmatprep.subr.mxu0 0.0
        %7615 = vmatpush2.msra.mxu0 0.0
        %7616 = vmatprep.subr.mxu0 0.0
        %7617 = vmatpush2.msra.mxu0 0.0
        %7618 = vmatprep.subr.mxu0 0.0
        %7619 = vmatpush2.msra.mxu0 0.0
        %7620 = vmatprep.subr.mxu0 0.0
        %7621 = vmatpush2.msra.mxu0 0.0
        %7622 = vmatprep.subr.mxu0 0.0
        %7623 = vmatpush2.msra.mxu0 0.0
        %7624 = vmatprep.subr.mxu0 0.0
        %7625 = vmatpush2.msra.mxu0 0.0
        %7626 = vmatprep.subr.mxu0 0.0
        %7627 = vmatpush2.msra.mxu0 0.0
        %7628 = vmatprep.mubr.f32.mxu0 0.0
        %7629 = vmatmul.mubr.f32.gmra.mxu0 %v7556
        %v7630 = vpop.f32.mrf.mxu0
        %v7631 = vadd.f32 0.0, %v7630
        %v7632 = vpop.f32.mrf.mxu0
        %v7633 = vadd.f32 0.0, %v7632
        %7634 = vmatprep.mubr.f32.mxu0 0.0
        %7635 = vmatmul.mubr.f32.gmra.mxu0 %v7558
        %v7636 = vpop.f32.mrf.mxu0
        %v7637 = vadd.f32 0.0, %v7636
        %v7638 = vpop.f32.mrf.mxu0
        %v7639 = vadd.f32 0.0, %v7638
        %7640 = vmatprep.mubr.f32.mxu0 0.0
        %7641 = vmatmul.mubr.f32.gmra.mxu0 %v7560
        %v7642 = vpop.f32.mrf.mxu0
        %v7643 = vadd.f32 0.0, %v7642
        %v7644 = vpop.f32.mrf.mxu0
        %v7645 = vadd.f32 0.0, %v7644
        %7646 = vmatprep.mubr.f32.mxu0 0.0
        %7647 = vmatmul.mubr.f32.gmra.mxu0 %v7562
        %v7648 = vpop.f32.mrf.mxu0
        %v7649 = vadd.f32 0.0, %v7648
        %v7650 = vpop.f32.mrf.mxu0
        %v7651 = vadd.f32 0.0, %v7650
        %7652 = vdwg.mxu0
        %7653 = vmatprep.subr.mxu0 0.0
        %7654 = vmatpush1.msra.mxu0 0.0
        %7655 = vmatprep.subr.mxu0 0.0
        %7656 = vmatpush1.msra.mxu0 0.0
        %7657 = vmatprep.subr.mxu0 0.0
        %7658 = vmatpush1.msra.mxu0 0.0
        %7659 = vmatprep.subr.mxu0 0.0
        %7660 = vmatpush1.msra.mxu0 0.0
        %7661 = vmatprep.subr.mxu0 0.0
        %7662 = vmatpush1.msra.mxu0 0.0
        %7663 = vmatprep.subr.mxu0 0.0
        %7664 = vmatpush1.msra.mxu0 0.0
        %7665 = vmatprep.subr.mxu0 0.0
        %7666 = vmatpush1.msra.mxu0 0.0
        %7667 = vmatprep.subr.mxu0 0.0
        %7668 = vmatpush1.msra.mxu0 0.0
        %7669 = vmatprep.subr.mxu0 0.0
        %7670 = vmatpush1.msra.mxu0 0.0
        %7671 = vmatprep.subr.mxu0 0.0
        %7672 = vmatpush1.msra.mxu0 0.0
        %7673 = vmatprep.subr.mxu0 0.0
        %7674 = vmatpush1.msra.mxu0 0.0
        %7675 = vmatprep.subr.mxu0 0.0
        %7676 = vmatpush1.msra.mxu0 0.0
        %7677 = vmatprep.subr.mxu0 %v7547
        %7678 = vmatpush1.msra.mxu0 %v7546
        %7679 = vmatprep.subr.mxu0 %v7543
        %7680 = vmatpush1.msra.mxu0 %v7542
        %7681 = vmatprep.subr.mxu0 %v7539
        %7682 = vmatpush1.msra.mxu0 %v7538
        %7683 = vmatprep.subr.mxu0 %v7535
        %7684 = vmatpush1.msra.mxu0 %v7534
        %7685 = vmatprep.subr.mxu0 0.0
        %7686 = vmatpush2.msra.mxu0 0.0
        %7687 = vmatprep.subr.mxu0 0.0
        %7688 = vmatpush2.msra.mxu0 0.0
        %7689 = vmatprep.subr.mxu0 0.0
        %7690 = vmatpush2.msra.mxu0 0.0
        %7691 = vmatprep.subr.mxu0 0.0
        %7692 = vmatpush2.msra.mxu0 0.0
        %7693 = vmatprep.subr.mxu0 0.0
        %7694 = vmatpush2.msra.mxu0 0.0
        %7695 = vmatprep.subr.mxu0 0.0
        %7696 = vmatpush2.msra.mxu0 0.0
        %7697 = vmatprep.subr.mxu0 0.0
        %7698 = vmatpush2.msra.mxu0 0.0
        %7699 = vmatprep.subr.mxu0 0.0
        %7700 = vmatpush2.msra.mxu0 0.0
        %7701 = vmatprep.subr.mxu0 0.0
        %7702 = vmatpush2.msra.mxu0 0.0
        %7703 = vmatprep.subr.mxu0 0.0
        %7704 = vmatpush2.msra.mxu0 0.0
        %7705 = vmatprep.subr.mxu0 0.0
        %7706 = vmatpush2.msra.mxu0 0.0
        %7707 = vmatprep.subr.mxu0 0.0
        %7708 = vmatpush2.msra.mxu0 0.0
        %7709 = vmatprep.subr.mxu0 0.0
        %7710 = vmatpush2.msra.mxu0 0.0
        %7711 = vmatprep.subr.mxu0 0.0
        %7712 = vmatpush2.msra.mxu0 0.0
        %7713 = vmatprep.subr.mxu0 0.0
        %7714 = vmatpush2.msra.mxu0 0.0
        %7715 = vmatprep.subr.mxu0 0.0
        %7716 = vmatpush2.msra.mxu0 0.0
        %7717 = vmatprep.mubr.f32.mxu0 0.0
        %7718 = vmatmul.mubr.f32.gmra.mxu0 %v7556
        %v7719 = vpop.f32.mrf.mxu0
        %v7720 = vadd.f32 0.0, %v7719
        %v7721 = vpop.f32.mrf.mxu0
        %v7722 = vadd.f32 0.0, %v7721
        %7723 = vmatprep.mubr.f32.mxu0 0.0
        %7724 = vmatmul.mubr.f32.gmra.mxu0 %v7558
        %v7725 = vpop.f32.mrf.mxu0
        %v7726 = vadd.f32 0.0, %v7725
        %v7727 = vpop.f32.mrf.mxu0
        %v7728 = vadd.f32 0.0, %v7727
        %7729 = vmatprep.mubr.f32.mxu0 0.0
        %7730 = vmatmul.mubr.f32.gmra.mxu0 %v7560
        %v7731 = vpop.f32.mrf.mxu0
        %v7732 = vadd.f32 0.0, %v7731
        %v7733 = vpop.f32.mrf.mxu0
        %v7734 = vadd.f32 0.0, %v7733
        %7735 = vmatprep.mubr.f32.mxu0 0.0
        %7736 = vmatmul.mubr.f32.gmra.mxu0 %v7562
        %v7737 = vpop.f32.mrf.mxu0
        %v7738 = vadd.f32 0.0, %v7737
        %v7739 = vpop.f32.mrf.mxu0
        %v7740 = vadd.f32 0.0, %v7739
        %7741 = vdwg.mxu0
        %v7742 = vadd.f32 %v7468, %v7631
        %v7743 = vadd.f32 %v7469, %v7633
        %v7744 = vadd.f32 %v7470, %v7720
        %v7745 = vadd.f32 %v7471, %v7722
        %v7746 = vadd.f32 %v7472, %v7637
        %v7747 = vadd.f32 %v7473, %v7639
        %v7748 = vadd.f32 %v7474, %v7726
        %v7749 = vadd.f32 %v7475, %v7728
        %v7750 = vadd.f32 %v7476, %v7643
        %v7751 = vadd.f32 %v7477, %v7645
        %v7752 = vadd.f32 %v7478, %v7732
        %v7753 = vadd.f32 %v7479, %v7734
        %v7754 = vadd.f32 %v7480, %v7649
        %v7755 = vadd.f32 %v7481, %v7651
        %v7756 = vadd.f32 %v7482, %v7738
        %v7757 = vadd.f32 %v7483, %v7740
        %7758 = vrot.lane.b32.xlu0 %v6170, 113
        %v7759 = vpop.permute.xlu0 %7758
        %7760 = vrot.lane.b32.xlu0 %v6174, 113
        %v7761 = vpop.permute.xlu0 %7760
        %7762 = vrot.lane.b32.xlu0 %v6178, 113
        %v7763 = vpop.permute.xlu0 %7762
        %7764 = vrot.lane.b32.xlu0 %v6182, 113
        %v7765 = vpop.permute.xlu0 %7764
        %7766 = vrot.lane.b32.xlu0 %v6171, 113
        %v7767 = vpop.permute.xlu0 %7766
        %7768 = vrot.lane.b32.xlu0 %v6175, 113
        %v7769 = vpop.permute.xlu0 %7768
        %7770 = vrot.lane.b32.xlu0 %v6179, 113
        %v7771 = vpop.permute.xlu0 %7770
        %7772 = vrot.lane.b32.xlu0 %v6183, 113
        %v7773 = vpop.permute.xlu0 %7772
        %7774 = vrot.lane.b32.xlu0 %v6172, 113
        %v7775 = vpop.permute.xlu0 %7774
        %7776 = vrot.lane.b32.xlu0 %v6176, 113
        %v7777 = vpop.permute.xlu0 %7776
        %7778 = vrot.lane.b32.xlu0 %v6180, 113
        %v7779 = vpop.permute.xlu0 %7778
        %7780 = vrot.lane.b32.xlu0 %v6184, 113
        %v7781 = vpop.permute.xlu0 %7780
        %7782 = vrot.lane.b32.xlu0 %v6173, 113
        %v7783 = vpop.permute.xlu0 %7782
        %7784 = vrot.lane.b32.xlu0 %v6177, 113
        %v7785 = vpop.permute.xlu0 %7784
        %7786 = vrot.lane.b32.xlu0 %v6181, 113
        %v7787 = vpop.permute.xlu0 %7786
        %7788 = vrot.lane.b32.xlu0 %v6185, 113
        %v7789 = vpop.permute.xlu0 %7788
        %v7790 = vsel %vm849, %v7775, %v7783
        %v7791 = vsel %vm849, %v7777, %v7785
        %v7792 = vsel %vm849, %v7779, %v7787
        %v7793 = vsel %vm849, %v7781, %v7789
        %v7794 = vsel %vm849, %v7767, %v7775
        %v7795 = vsel %vm849, %v7769, %v7777
        %v7796 = vsel %vm849, %v7771, %v7779
        %v7797 = vsel %vm849, %v7773, %v7781
        %v7798 = vsel %vm849, %v7759, %v7767
        %v7799 = vsel %vm849, %v7761, %v7769
        %v7800 = vsel %vm849, %v7763, %v7771
        %v7801 = vsel %vm849, %v7765, %v7773
        %v7802 = vsel %vm849, %v7783, %v7759
        %v7803 = vsel %vm849, %v7785, %v7761
        %v7804 = vsel %vm849, %v7787, %v7763
        %v7805 = vsel %vm849, %v7789, %v7765
        %v7806 = vmul.f32 %v7798, %v858
        %v7807 = vmul.f32 %v7794, %v862
        %v7808 = vmul.f32 %v7790, %v866
        %v7809 = vmul.f32 %v7802, %v870
        %v7810 = vmul.f32 %v7799, %v858
        %v7811 = vmul.f32 %v7795, %v862
        %v7812 = vmul.f32 %v7791, %v866
        %v7813 = vmul.f32 %v7803, %v870
        %v7814 = vmul.f32 %v7800, %v858
        %v7815 = vmul.f32 %v7796, %v862
        %v7816 = vmul.f32 %v7792, %v866
        %v7817 = vmul.f32 %v7804, %v870
        %v7818 = vmul.f32 %v7801, %v858
        %v7819 = vmul.f32 %v7797, %v862
        %v7820 = vmul.f32 %v7793, %v866
        %v7821 = vmul.f32 %v7805, %v870
        %7822 = vrot.lane.b32.xlu0 %v6203, 64
        %v7823 = vpop.permute.xlu0 %7822
        %7824 = vrot.lane.b32.xlu0 %v6206, 64
        %v7825 = vpop.permute.xlu0 %7824
        %7826 = vrot.lane.b32.xlu0 %v6209, 64
        %v7827 = vpop.permute.xlu0 %7826
        %7828 = vrot.lane.b32.xlu0 %v6212, 64
        %v7829 = vpop.permute.xlu0 %7828
        %v7830 = vsel %vm1473, %v7823, 0
        %v7832 = vsel %vm1473, %v7825, 0
        %v7834 = vsel %vm1473, %v7827, 0
        %v7836 = vsel %vm1473, %v7829, 0
        %7838 = vmatprep.subr.mxu0 0.0
        %7839 = vmatpush1.msra.mxu0 0.0
        %7840 = vmatprep.subr.mxu0 0.0
        %7841 = vmatpush1.msra.mxu0 0.0
        %7842 = vmatprep.subr.mxu0 0.0
        %7843 = vmatpush1.msra.mxu0 0.0
        %7844 = vmatprep.subr.mxu0 0.0
        %7845 = vmatpush1.msra.mxu0 0.0
        %7846 = vmatprep.subr.mxu0 0.0
        %7847 = vmatpush1.msra.mxu0 0.0
        %7848 = vmatprep.subr.mxu0 0.0
        %7849 = vmatpush1.msra.mxu0 0.0
        %7850 = vmatprep.subr.mxu0 0.0
        %7851 = vmatpush1.msra.mxu0 0.0
        %7852 = vmatprep.subr.mxu0 0.0
        %7853 = vmatpush1.msra.mxu0 0.0
        %7854 = vmatprep.subr.mxu0 0.0
        %7855 = vmatpush1.msra.mxu0 0.0
        %7856 = vmatprep.subr.mxu0 0.0
        %7857 = vmatpush1.msra.mxu0 0.0
        %7858 = vmatprep.subr.mxu0 0.0
        %7859 = vmatpush1.msra.mxu0 0.0
        %7860 = vmatprep.subr.mxu0 0.0
        %7861 = vmatpush1.msra.mxu0 0.0
        %7862 = vmatprep.subr.mxu0 %v7819
        %7863 = vmatpush1.msra.mxu0 %v7818
        %7864 = vmatprep.subr.mxu0 %v7815
        %7865 = vmatpush1.msra.mxu0 %v7814
        %7866 = vmatprep.subr.mxu0 %v7811
        %7867 = vmatpush1.msra.mxu0 %v7810
        %7868 = vmatprep.subr.mxu0 %v7807
        %7869 = vmatpush1.msra.mxu0 %v7806
        %7870 = vmatprep.subr.mxu0 0.0
        %7871 = vmatpush2.msra.mxu0 0.0
        %7872 = vmatprep.subr.mxu0 0.0
        %7873 = vmatpush2.msra.mxu0 0.0
        %7874 = vmatprep.subr.mxu0 0.0
        %7875 = vmatpush2.msra.mxu0 0.0
        %7876 = vmatprep.subr.mxu0 0.0
        %7877 = vmatpush2.msra.mxu0 0.0
        %7878 = vmatprep.subr.mxu0 0.0
        %7879 = vmatpush2.msra.mxu0 0.0
        %7880 = vmatprep.subr.mxu0 0.0
        %7881 = vmatpush2.msra.mxu0 0.0
        %7882 = vmatprep.subr.mxu0 0.0
        %7883 = vmatpush2.msra.mxu0 0.0
        %7884 = vmatprep.subr.mxu0 0.0
        %7885 = vmatpush2.msra.mxu0 0.0
        %7886 = vmatprep.subr.mxu0 0.0
        %7887 = vmatpush2.msra.mxu0 0.0
        %7888 = vmatprep.subr.mxu0 0.0
        %7889 = vmatpush2.msra.mxu0 0.0
        %7890 = vmatprep.subr.mxu0 0.0
        %7891 = vmatpush2.msra.mxu0 0.0
        %7892 = vmatprep.subr.mxu0 0.0
        %7893 = vmatpush2.msra.mxu0 0.0
        %7894 = vmatprep.subr.mxu0 0.0
        %7895 = vmatpush2.msra.mxu0 0.0
        %7896 = vmatprep.subr.mxu0 0.0
        %7897 = vmatpush2.msra.mxu0 0.0
        %7898 = vmatprep.subr.mxu0 0.0
        %7899 = vmatpush2.msra.mxu0 0.0
        %7900 = vmatprep.subr.mxu0 0.0
        %7901 = vmatpush2.msra.mxu0 0.0
        %7902 = vmatprep.mubr.f32.mxu0 0.0
        %7903 = vmatmul.mubr.f32.gmra.mxu0 %v7830
        %v7904 = vpop.f32.mrf.mxu0
        %v7905 = vadd.f32 0.0, %v7904
        %v7906 = vpop.f32.mrf.mxu0
        %v7907 = vadd.f32 0.0, %v7906
        %7908 = vmatprep.mubr.f32.mxu0 0.0
        %7909 = vmatmul.mubr.f32.gmra.mxu0 %v7832
        %v7910 = vpop.f32.mrf.mxu0
        %v7911 = vadd.f32 0.0, %v7910
        %v7912 = vpop.f32.mrf.mxu0
        %v7913 = vadd.f32 0.0, %v7912
        %7914 = vmatprep.mubr.f32.mxu0 0.0
        %7915 = vmatmul.mubr.f32.gmra.mxu0 %v7834
        %v7916 = vpop.f32.mrf.mxu0
        %v7917 = vadd.f32 0.0, %v7916
        %v7918 = vpop.f32.mrf.mxu0
        %v7919 = vadd.f32 0.0, %v7918
        %7920 = vmatprep.mubr.f32.mxu0 0.0
        %7921 = vmatmul.mubr.f32.gmra.mxu0 %v7836
        %v7922 = vpop.f32.mrf.mxu0
        %v7923 = vadd.f32 0.0, %v7922
        %v7924 = vpop.f32.mrf.mxu0
        %v7925 = vadd.f32 0.0, %v7924
        %7926 = vdwg.mxu0
        %7927 = vmatprep.subr.mxu0 0.0
        %7928 = vmatpush1.msra.mxu0 0.0
        %7929 = vmatprep.subr.mxu0 0.0
        %7930 = vmatpush1.msra.mxu0 0.0
        %7931 = vmatprep.subr.mxu0 0.0
        %7932 = vmatpush1.msra.mxu0 0.0
        %7933 = vmatprep.subr.mxu0 0.0
        %7934 = vmatpush1.msra.mxu0 0.0
        %7935 = vmatprep.subr.mxu0 0.0
        %7936 = vmatpush1.msra.mxu0 0.0
        %7937 = vmatprep.subr.mxu0 0.0
        %7938 = vmatpush1.msra.mxu0 0.0
        %7939 = vmatprep.subr.mxu0 0.0
        %7940 = vmatpush1.msra.mxu0 0.0
        %7941 = vmatprep.subr.mxu0 0.0
        %7942 = vmatpush1.msra.mxu0 0.0
        %7943 = vmatprep.subr.mxu0 0.0
        %7944 = vmatpush1.msra.mxu0 0.0
        %7945 = vmatprep.subr.mxu0 0.0
        %7946 = vmatpush1.msra.mxu0 0.0
        %7947 = vmatprep.subr.mxu0 0.0
        %7948 = vmatpush1.msra.mxu0 0.0
        %7949 = vmatprep.subr.mxu0 0.0
        %7950 = vmatpush1.msra.mxu0 0.0
        %7951 = vmatprep.subr.mxu0 %v7821
        %7952 = vmatpush1.msra.mxu0 %v7820
        %7953 = vmatprep.subr.mxu0 %v7817
        %7954 = vmatpush1.msra.mxu0 %v7816
        %7955 = vmatprep.subr.mxu0 %v7813
        %7956 = vmatpush1.msra.mxu0 %v7812
        %7957 = vmatprep.subr.mxu0 %v7809
        %7958 = vmatpush1.msra.mxu0 %v7808
        %7959 = vmatprep.subr.mxu0 0.0
        %7960 = vmatpush2.msra.mxu0 0.0
        %7961 = vmatprep.subr.mxu0 0.0
        %7962 = vmatpush2.msra.mxu0 0.0
        %7963 = vmatprep.subr.mxu0 0.0
        %7964 = vmatpush2.msra.mxu0 0.0
        %7965 = vmatprep.subr.mxu0 0.0
        %7966 = vmatpush2.msra.mxu0 0.0
        %7967 = vmatprep.subr.mxu0 0.0
        %7968 = vmatpush2.msra.mxu0 0.0
        %7969 = vmatprep.subr.mxu0 0.0
        %7970 = vmatpush2.msra.mxu0 0.0
        %7971 = vmatprep.subr.mxu0 0.0
        %7972 = vmatpush2.msra.mxu0 0.0
        %7973 = vmatprep.subr.mxu0 0.0
        %7974 = vmatpush2.msra.mxu0 0.0
        %7975 = vmatprep.subr.mxu0 0.0
        %7976 = vmatpush2.msra.mxu0 0.0
        %7977 = vmatprep.subr.mxu0 0.0
        %7978 = vmatpush2.msra.mxu0 0.0
        %7979 = vmatprep.subr.mxu0 0.0
        %7980 = vmatpush2.msra.mxu0 0.0
        %7981 = vmatprep.subr.mxu0 0.0
        %7982 = vmatpush2.msra.mxu0 0.0
        %7983 = vmatprep.subr.mxu0 0.0
        %7984 = vmatpush2.msra.mxu0 0.0
        %7985 = vmatprep.subr.mxu0 0.0
        %7986 = vmatpush2.msra.mxu0 0.0
        %7987 = vmatprep.subr.mxu0 0.0
        %7988 = vmatpush2.msra.mxu0 0.0
        %7989 = vmatprep.subr.mxu0 0.0
        %7990 = vmatpush2.msra.mxu0 0.0
        %7991 = vmatprep.mubr.f32.mxu0 0.0
        %7992 = vmatmul.mubr.f32.gmra.mxu0 %v7830
        %v7993 = vpop.f32.mrf.mxu0
        %v7994 = vadd.f32 0.0, %v7993
        %v7995 = vpop.f32.mrf.mxu0
        %v7996 = vadd.f32 0.0, %v7995
        %7997 = vmatprep.mubr.f32.mxu0 0.0
        %7998 = vmatmul.mubr.f32.gmra.mxu0 %v7832
        %v7999 = vpop.f32.mrf.mxu0
        %v8000 = vadd.f32 0.0, %v7999
        %v8001 = vpop.f32.mrf.mxu0
        %v8002 = vadd.f32 0.0, %v8001
        %8003 = vmatprep.mubr.f32.mxu0 0.0
        %8004 = vmatmul.mubr.f32.gmra.mxu0 %v7834
        %v8005 = vpop.f32.mrf.mxu0
        %v8006 = vadd.f32 0.0, %v8005
        %v8007 = vpop.f32.mrf.mxu0
        %v8008 = vadd.f32 0.0, %v8007
        %8009 = vmatprep.mubr.f32.mxu0 0.0
        %8010 = vmatmul.mubr.f32.gmra.mxu0 %v7836
        %v8011 = vpop.f32.mrf.mxu0
        %v8012 = vadd.f32 0.0, %v8011
        %v8013 = vpop.f32.mrf.mxu0
        %v8014 = vadd.f32 0.0, %v8013
        %8015 = vdwg.mxu0
        %v8016 = vadd.f32 %v7742, %v7905
        %v8017 = vadd.f32 %v7743, %v7907
        %v8018 = vadd.f32 %v7744, %v7994
        %v8019 = vadd.f32 %v7745, %v7996
        %v8020 = vadd.f32 %v7746, %v7911
        %v8021 = vadd.f32 %v7747, %v7913
        %v8022 = vadd.f32 %v7748, %v8000
        %v8023 = vadd.f32 %v7749, %v8002
        %v8024 = vadd.f32 %v7750, %v7917
        %v8025 = vadd.f32 %v7751, %v7919
        %v8026 = vadd.f32 %v7752, %v8006
        %v8027 = vadd.f32 %v7753, %v8008
        %v8028 = vadd.f32 %v7754, %v7923
        %v8029 = vadd.f32 %v7755, %v7925
        %v8030 = vadd.f32 %v7756, %v8012
        %v8031 = vadd.f32 %v7757, %v8014
        %8032 = vrot.lane.b32.xlu0 %v6170, 112
        %v8033 = vpop.permute.xlu0 %8032
        %8034 = vrot.lane.b32.xlu0 %v6174, 112
        %v8035 = vpop.permute.xlu0 %8034
        %8036 = vrot.lane.b32.xlu0 %v6178, 112
        %v8037 = vpop.permute.xlu0 %8036
        %8038 = vrot.lane.b32.xlu0 %v6182, 112
        %v8039 = vpop.permute.xlu0 %8038
        %8040 = vrot.lane.b32.xlu0 %v6171, 112
        %v8041 = vpop.permute.xlu0 %8040
        %8042 = vrot.lane.b32.xlu0 %v6175, 112
        %v8043 = vpop.permute.xlu0 %8042
        %8044 = vrot.lane.b32.xlu0 %v6179, 112
        %v8045 = vpop.permute.xlu0 %8044
        %8046 = vrot.lane.b32.xlu0 %v6183, 112
        %v8047 = vpop.permute.xlu0 %8046
        %8048 = vrot.lane.b32.xlu0 %v6172, 112
        %v8049 = vpop.permute.xlu0 %8048
        %8050 = vrot.lane.b32.xlu0 %v6176, 112
        %v8051 = vpop.permute.xlu0 %8050
        %8052 = vrot.lane.b32.xlu0 %v6180, 112
        %v8053 = vpop.permute.xlu0 %8052
        %8054 = vrot.lane.b32.xlu0 %v6184, 112
        %v8055 = vpop.permute.xlu0 %8054
        %8056 = vrot.lane.b32.xlu0 %v6173, 112
        %v8057 = vpop.permute.xlu0 %8056
        %8058 = vrot.lane.b32.xlu0 %v6177, 112
        %v8059 = vpop.permute.xlu0 %8058
        %8060 = vrot.lane.b32.xlu0 %v6181, 112
        %v8061 = vpop.permute.xlu0 %8060
        %8062 = vrot.lane.b32.xlu0 %v6185, 112
        %v8063 = vpop.permute.xlu0 %8062
        %v8064 = vsel %vm887, %v8049, %v8057
        %v8065 = vsel %vm887, %v8051, %v8059
        %v8066 = vsel %vm887, %v8053, %v8061
        %v8067 = vsel %vm887, %v8055, %v8063
        %v8068 = vsel %vm887, %v8041, %v8049
        %v8069 = vsel %vm887, %v8043, %v8051
        %v8070 = vsel %vm887, %v8045, %v8053
        %v8071 = vsel %vm887, %v8047, %v8055
        %v8072 = vsel %vm887, %v8033, %v8041
        %v8073 = vsel %vm887, %v8035, %v8043
        %v8074 = vsel %vm887, %v8037, %v8045
        %v8075 = vsel %vm887, %v8039, %v8047
        %v8076 = vsel %vm887, %v8057, %v8033
        %v8077 = vsel %vm887, %v8059, %v8035
        %v8078 = vsel %vm887, %v8061, %v8037
        %v8079 = vsel %vm887, %v8063, %v8039
        %v8080 = vmul.f32 %v8072, %v896
        %v8081 = vmul.f32 %v8068, %v900
        %v8082 = vmul.f32 %v8064, %v904
        %v8083 = vmul.f32 %v8076, %v908
        %v8084 = vmul.f32 %v8073, %v896
        %v8085 = vmul.f32 %v8069, %v900
        %v8086 = vmul.f32 %v8065, %v904
        %v8087 = vmul.f32 %v8077, %v908
        %v8088 = vmul.f32 %v8074, %v896
        %v8089 = vmul.f32 %v8070, %v900
        %v8090 = vmul.f32 %v8066, %v904
        %v8091 = vmul.f32 %v8078, %v908
        %v8092 = vmul.f32 %v8075, %v896
        %v8093 = vmul.f32 %v8071, %v900
        %v8094 = vmul.f32 %v8067, %v904
        %v8095 = vmul.f32 %v8079, %v908
        %8096 = vrot.lane.b32.xlu0 %v6203, 32
        %v8097 = vpop.permute.xlu0 %8096
        %8098 = vrot.lane.b32.xlu0 %v6206, 32
        %v8099 = vpop.permute.xlu0 %8098
        %8100 = vrot.lane.b32.xlu0 %v6209, 32
        %v8101 = vpop.permute.xlu0 %8100
        %8102 = vrot.lane.b32.xlu0 %v6212, 32
        %v8103 = vpop.permute.xlu0 %8102
        %v8104 = vsel %vm1473, %v8097, 0
        %v8106 = vsel %vm1473, %v8099, 0
        %v8108 = vsel %vm1473, %v8101, 0
        %v8110 = vsel %vm1473, %v8103, 0
        %8112 = vmatprep.subr.mxu0 0.0
        %8113 = vmatpush1.msra.mxu0 0.0
        %8114 = vmatprep.subr.mxu0 0.0
        %8115 = vmatpush1.msra.mxu0 0.0
        %8116 = vmatprep.subr.mxu0 0.0
        %8117 = vmatpush1.msra.mxu0 0.0
        %8118 = vmatprep.subr.mxu0 0.0
        %8119 = vmatpush1.msra.mxu0 0.0
        %8120 = vmatprep.subr.mxu0 0.0
        %8121 = vmatpush1.msra.mxu0 0.0
        %8122 = vmatprep.subr.mxu0 0.0
        %8123 = vmatpush1.msra.mxu0 0.0
        %8124 = vmatprep.subr.mxu0 0.0
        %8125 = vmatpush1.msra.mxu0 0.0
        %8126 = vmatprep.subr.mxu0 0.0
        %8127 = vmatpush1.msra.mxu0 0.0
        %8128 = vmatprep.subr.mxu0 0.0
        %8129 = vmatpush1.msra.mxu0 0.0
        %8130 = vmatprep.subr.mxu0 0.0
        %8131 = vmatpush1.msra.mxu0 0.0
        %8132 = vmatprep.subr.mxu0 0.0
        %8133 = vmatpush1.msra.mxu0 0.0
        %8134 = vmatprep.subr.mxu0 0.0
        %8135 = vmatpush1.msra.mxu0 0.0
        %8136 = vmatprep.subr.mxu0 %v8093
        %8137 = vmatpush1.msra.mxu0 %v8092
        %8138 = vmatprep.subr.mxu0 %v8089
        %8139 = vmatpush1.msra.mxu0 %v8088
        %8140 = vmatprep.subr.mxu0 %v8085
        %8141 = vmatpush1.msra.mxu0 %v8084
        %8142 = vmatprep.subr.mxu0 %v8081
        %8143 = vmatpush1.msra.mxu0 %v8080
        %8144 = vmatprep.subr.mxu0 0.0
        %8145 = vmatpush2.msra.mxu0 0.0
        %8146 = vmatprep.subr.mxu0 0.0
        %8147 = vmatpush2.msra.mxu0 0.0
        %8148 = vmatprep.subr.mxu0 0.0
        %8149 = vmatpush2.msra.mxu0 0.0
        %8150 = vmatprep.subr.mxu0 0.0
        %8151 = vmatpush2.msra.mxu0 0.0
        %8152 = vmatprep.subr.mxu0 0.0
        %8153 = vmatpush2.msra.mxu0 0.0
        %8154 = vmatprep.subr.mxu0 0.0
        %8155 = vmatpush2.msra.mxu0 0.0
        %8156 = vmatprep.subr.mxu0 0.0
        %8157 = vmatpush2.msra.mxu0 0.0
        %8158 = vmatprep.subr.mxu0 0.0
        %8159 = vmatpush2.msra.mxu0 0.0
        %8160 = vmatprep.subr.mxu0 0.0
        %8161 = vmatpush2.msra.mxu0 0.0
        %8162 = vmatprep.subr.mxu0 0.0
        %8163 = vmatpush2.msra.mxu0 0.0
        %8164 = vmatprep.subr.mxu0 0.0
        %8165 = vmatpush2.msra.mxu0 0.0
        %8166 = vmatprep.subr.mxu0 0.0
        %8167 = vmatpush2.msra.mxu0 0.0
        %8168 = vmatprep.subr.mxu0 0.0
        %8169 = vmatpush2.msra.mxu0 0.0
        %8170 = vmatprep.subr.mxu0 0.0
        %8171 = vmatpush2.msra.mxu0 0.0
        %8172 = vmatprep.subr.mxu0 0.0
        %8173 = vmatpush2.msra.mxu0 0.0
        %8174 = vmatprep.subr.mxu0 0.0
        %8175 = vmatpush2.msra.mxu0 0.0
        %8176 = vmatprep.mubr.f32.mxu0 0.0
        %8177 = vmatmul.mubr.f32.gmra.mxu0 %v8104
        %v8178 = vpop.f32.mrf.mxu0
        %v8179 = vadd.f32 0.0, %v8178
        %v8180 = vpop.f32.mrf.mxu0
        %v8181 = vadd.f32 0.0, %v8180
        %8182 = vmatprep.mubr.f32.mxu0 0.0
        %8183 = vmatmul.mubr.f32.gmra.mxu0 %v8106
        %v8184 = vpop.f32.mrf.mxu0
        %v8185 = vadd.f32 0.0, %v8184
        %v8186 = vpop.f32.mrf.mxu0
        %v8187 = vadd.f32 0.0, %v8186
        %8188 = vmatprep.mubr.f32.mxu0 0.0
        %8189 = vmatmul.mubr.f32.gmra.mxu0 %v8108
        %v8190 = vpop.f32.mrf.mxu0
        %v8191 = vadd.f32 0.0, %v8190
        %v8192 = vpop.f32.mrf.mxu0
        %v8193 = vadd.f32 0.0, %v8192
        %8194 = vmatprep.mubr.f32.mxu0 0.0
        %8195 = vmatmul.mubr.f32.gmra.mxu0 %v8110
        %v8196 = vpop.f32.mrf.mxu0
        %v8197 = vadd.f32 0.0, %v8196
        %v8198 = vpop.f32.mrf.mxu0
        %v8199 = vadd.f32 0.0, %v8198
        %8200 = vdwg.mxu0
        %8201 = vmatprep.subr.mxu0 0.0
        %8202 = vmatpush1.msra.mxu0 0.0
        %8203 = vmatprep.subr.mxu0 0.0
        %8204 = vmatpush1.msra.mxu0 0.0
        %8205 = vmatprep.subr.mxu0 0.0
        %8206 = vmatpush1.msra.mxu0 0.0
        %8207 = vmatprep.subr.mxu0 0.0
        %8208 = vmatpush1.msra.mxu0 0.0
        %8209 = vmatprep.subr.mxu0 0.0
        %8210 = vmatpush1.msra.mxu0 0.0
        %8211 = vmatprep.subr.mxu0 0.0
        %8212 = vmatpush1.msra.mxu0 0.0
        %8213 = vmatprep.subr.mxu0 0.0
        %8214 = vmatpush1.msra.mxu0 0.0
        %8215 = vmatprep.subr.mxu0 0.0
        %8216 = vmatpush1.msra.mxu0 0.0
        %8217 = vmatprep.subr.mxu0 0.0
        %8218 = vmatpush1.msra.mxu0 0.0
        %8219 = vmatprep.subr.mxu0 0.0
        %8220 = vmatpush1.msra.mxu0 0.0
        %8221 = vmatprep.subr.mxu0 0.0
        %8222 = vmatpush1.msra.mxu0 0.0
        %8223 = vmatprep.subr.mxu0 0.0
        %8224 = vmatpush1.msra.mxu0 0.0
        %8225 = vmatprep.subr.mxu0 %v8095
        %8226 = vmatpush1.msra.mxu0 %v8094
        %8227 = vmatprep.subr.mxu0 %v8091
        %8228 = vmatpush1.msra.mxu0 %v8090
        %8229 = vmatprep.subr.mxu0 %v8087
        %8230 = vmatpush1.msra.mxu0 %v8086
        %8231 = vmatprep.subr.mxu0 %v8083
        %8232 = vmatpush1.msra.mxu0 %v8082
        %8233 = vmatprep.subr.mxu0 0.0
        %8234 = vmatpush2.msra.mxu0 0.0
        %8235 = vmatprep.subr.mxu0 0.0
        %8236 = vmatpush2.msra.mxu0 0.0
        %8237 = vmatprep.subr.mxu0 0.0
        %8238 = vmatpush2.msra.mxu0 0.0
        %8239 = vmatprep.subr.mxu0 0.0
        %8240 = vmatpush2.msra.mxu0 0.0
        %8241 = vmatprep.subr.mxu0 0.0
        %8242 = vmatpush2.msra.mxu0 0.0
        %8243 = vmatprep.subr.mxu0 0.0
        %8244 = vmatpush2.msra.mxu0 0.0
        %8245 = vmatprep.subr.mxu0 0.0
        %8246 = vmatpush2.msra.mxu0 0.0
        %8247 = vmatprep.subr.mxu0 0.0
        %8248 = vmatpush2.msra.mxu0 0.0
        %8249 = vmatprep.subr.mxu0 0.0
        %8250 = vmatpush2.msra.mxu0 0.0
        %8251 = vmatprep.subr.mxu0 0.0
        %8252 = vmatpush2.msra.mxu0 0.0
        %8253 = vmatprep.subr.mxu0 0.0
        %8254 = vmatpush2.msra.mxu0 0.0
        %8255 = vmatprep.subr.mxu0 0.0
        %8256 = vmatpush2.msra.mxu0 0.0
        %8257 = vmatprep.subr.mxu0 0.0
        %8258 = vmatpush2.msra.mxu0 0.0
        %8259 = vmatprep.subr.mxu0 0.0
        %8260 = vmatpush2.msra.mxu0 0.0
        %8261 = vmatprep.subr.mxu0 0.0
        %8262 = vmatpush2.msra.mxu0 0.0
        %8263 = vmatprep.subr.mxu0 0.0
        %8264 = vmatpush2.msra.mxu0 0.0
        %8265 = vmatprep.mubr.f32.mxu0 0.0
        %8266 = vmatmul.mubr.f32.gmra.mxu0 %v8104
        %v8267 = vpop.f32.mrf.mxu0
        %v8268 = vadd.f32 0.0, %v8267
        %v8269 = vpop.f32.mrf.mxu0
        %v8270 = vadd.f32 0.0, %v8269
        %8271 = vmatprep.mubr.f32.mxu0 0.0
        %8272 = vmatmul.mubr.f32.gmra.mxu0 %v8106
        %v8273 = vpop.f32.mrf.mxu0
        %v8274 = vadd.f32 0.0, %v8273
        %v8275 = vpop.f32.mrf.mxu0
        %v8276 = vadd.f32 0.0, %v8275
        %8277 = vmatprep.mubr.f32.mxu0 0.0
        %8278 = vmatmul.mubr.f32.gmra.mxu0 %v8108
        %v8279 = vpop.f32.mrf.mxu0
        %v8280 = vadd.f32 0.0, %v8279
        %v8281 = vpop.f32.mrf.mxu0
        %v8282 = vadd.f32 0.0, %v8281
        %8283 = vmatprep.mubr.f32.mxu0 0.0
        %8284 = vmatmul.mubr.f32.gmra.mxu0 %v8110
        %v8285 = vpop.f32.mrf.mxu0
        %v8286 = vadd.f32 0.0, %v8285
        %v8287 = vpop.f32.mrf.mxu0
        %v8288 = vadd.f32 0.0, %v8287
        %8289 = vdwg.mxu0
        %v8290 = vadd.f32 %v8016, %v8179
        %v8291 = vadd.f32 %v8017, %v8181
        %v8292 = vadd.f32 %v8018, %v8268
        %v8293 = vadd.f32 %v8019, %v8270
        %v8294 = vadd.f32 %v8020, %v8185
        %v8295 = vadd.f32 %v8021, %v8187
        %v8296 = vadd.f32 %v8022, %v8274
        %v8297 = vadd.f32 %v8023, %v8276
        %v8298 = vadd.f32 %v8024, %v8191
        %v8299 = vadd.f32 %v8025, %v8193
        %v8300 = vadd.f32 %v8026, %v8280
        %v8301 = vadd.f32 %v8027, %v8282
        %v8302 = vadd.f32 %v8028, %v8197
        %v8303 = vadd.f32 %v8029, %v8199
        %v8304 = vadd.f32 %v8030, %v8286
        %v8305 = vadd.f32 %v8031, %v8288
        %8306 = vrot.lane.b32.xlu0 %v6170, 111
        %v8307 = vpop.permute.xlu0 %8306
        %8308 = vrot.lane.b32.xlu0 %v6174, 111
        %v8309 = vpop.permute.xlu0 %8308
        %8310 = vrot.lane.b32.xlu0 %v6178, 111
        %v8311 = vpop.permute.xlu0 %8310
        %8312 = vrot.lane.b32.xlu0 %v6182, 111
        %v8313 = vpop.permute.xlu0 %8312
        %8314 = vrot.lane.b32.xlu0 %v6171, 111
        %v8315 = vpop.permute.xlu0 %8314
        %8316 = vrot.lane.b32.xlu0 %v6175, 111
        %v8317 = vpop.permute.xlu0 %8316
        %8318 = vrot.lane.b32.xlu0 %v6179, 111
        %v8319 = vpop.permute.xlu0 %8318
        %8320 = vrot.lane.b32.xlu0 %v6183, 111
        %v8321 = vpop.permute.xlu0 %8320
        %8322 = vrot.lane.b32.xlu0 %v6172, 111
        %v8323 = vpop.permute.xlu0 %8322
        %8324 = vrot.lane.b32.xlu0 %v6176, 111
        %v8325 = vpop.permute.xlu0 %8324
        %8326 = vrot.lane.b32.xlu0 %v6180, 111
        %v8327 = vpop.permute.xlu0 %8326
        %8328 = vrot.lane.b32.xlu0 %v6184, 111
        %v8329 = vpop.permute.xlu0 %8328
        %8330 = vrot.lane.b32.xlu0 %v6173, 111
        %v8331 = vpop.permute.xlu0 %8330
        %8332 = vrot.lane.b32.xlu0 %v6177, 111
        %v8333 = vpop.permute.xlu0 %8332
        %8334 = vrot.lane.b32.xlu0 %v6181, 111
        %v8335 = vpop.permute.xlu0 %8334
        %8336 = vrot.lane.b32.xlu0 %v6185, 111
        %v8337 = vpop.permute.xlu0 %8336
        %v8338 = vsel %vm925, %v8323, %v8331
        %v8339 = vsel %vm925, %v8325, %v8333
        %v8340 = vsel %vm925, %v8327, %v8335
        %v8341 = vsel %vm925, %v8329, %v8337
        %v8342 = vsel %vm925, %v8315, %v8323
        %v8343 = vsel %vm925, %v8317, %v8325
        %v8344 = vsel %vm925, %v8319, %v8327
        %v8345 = vsel %vm925, %v8321, %v8329
        %v8346 = vsel %vm925, %v8307, %v8315
        %v8347 = vsel %vm925, %v8309, %v8317
        %v8348 = vsel %vm925, %v8311, %v8319
        %v8349 = vsel %vm925, %v8313, %v8321
        %v8350 = vsel %vm925, %v8331, %v8307
        %v8351 = vsel %vm925, %v8333, %v8309
        %v8352 = vsel %vm925, %v8335, %v8311
        %v8353 = vsel %vm925, %v8337, %v8313
        %v8354 = vmul.f32 %v8346, %v934
        %v8355 = vmul.f32 %v8342, %v938
        %v8356 = vmul.f32 %v8338, %v942
        %v8357 = vmul.f32 %v8350, %v946
        %v8358 = vmul.f32 %v8347, %v934
        %v8359 = vmul.f32 %v8343, %v938
        %v8360 = vmul.f32 %v8339, %v942
        %v8361 = vmul.f32 %v8351, %v946
        %v8362 = vmul.f32 %v8348, %v934
        %v8363 = vmul.f32 %v8344, %v938
        %v8364 = vmul.f32 %v8340, %v942
        %v8365 = vmul.f32 %v8352, %v946
        %v8366 = vmul.f32 %v8349, %v934
        %v8367 = vmul.f32 %v8345, %v938
        %v8368 = vmul.f32 %v8341, %v942
        %v8369 = vmul.f32 %v8353, %v946
        %v8371 = vsel %vm1473, %v6204, 0
        %v8374 = vsel %vm1473, %v6207, 0
        %v8377 = vsel %vm1473, %v6210, 0
        %v8380 = vsel %vm1473, %v6213, 0
        %8382 = vmatprep.subr.mxu0 0.0
        %8383 = vmatpush1.msra.mxu0 0.0
        %8384 = vmatprep.subr.mxu0 0.0
        %8385 = vmatpush1.msra.mxu0 0.0
        %8386 = vmatprep.subr.mxu0 0.0
        %8387 = vmatpush1.msra.mxu0 0.0
        %8388 = vmatprep.subr.mxu0 0.0
        %8389 = vmatpush1.msra.mxu0 0.0
        %8390 = vmatprep.subr.mxu0 0.0
        %8391 = vmatpush1.msra.mxu0 0.0
        %8392 = vmatprep.subr.mxu0 0.0
        %8393 = vmatpush1.msra.mxu0 0.0
        %8394 = vmatprep.subr.mxu0 0.0
        %8395 = vmatpush1.msra.mxu0 0.0
        %8396 = vmatprep.subr.mxu0 0.0
        %8397 = vmatpush1.msra.mxu0 0.0
        %8398 = vmatprep.subr.mxu0 0.0
        %8399 = vmatpush1.msra.mxu0 0.0
        %8400 = vmatprep.subr.mxu0 0.0
        %8401 = vmatpush1.msra.mxu0 0.0
        %8402 = vmatprep.subr.mxu0 0.0
        %8403 = vmatpush1.msra.mxu0 0.0
        %8404 = vmatprep.subr.mxu0 0.0
        %8405 = vmatpush1.msra.mxu0 0.0
        %8406 = vmatprep.subr.mxu0 %v8367
        %8407 = vmatpush1.msra.mxu0 %v8366
        %8408 = vmatprep.subr.mxu0 %v8363
        %8409 = vmatpush1.msra.mxu0 %v8362
        %8410 = vmatprep.subr.mxu0 %v8359
        %8411 = vmatpush1.msra.mxu0 %v8358
        %8412 = vmatprep.subr.mxu0 %v8355
        %8413 = vmatpush1.msra.mxu0 %v8354
        %8414 = vmatprep.subr.mxu0 0.0
        %8415 = vmatpush2.msra.mxu0 0.0
        %8416 = vmatprep.subr.mxu0 0.0
        %8417 = vmatpush2.msra.mxu0 0.0
        %8418 = vmatprep.subr.mxu0 0.0
        %8419 = vmatpush2.msra.mxu0 0.0
        %8420 = vmatprep.subr.mxu0 0.0
        %8421 = vmatpush2.msra.mxu0 0.0
        %8422 = vmatprep.subr.mxu0 0.0
        %8423 = vmatpush2.msra.mxu0 0.0
        %8424 = vmatprep.subr.mxu0 0.0
        %8425 = vmatpush2.msra.mxu0 0.0
        %8426 = vmatprep.subr.mxu0 0.0
        %8427 = vmatpush2.msra.mxu0 0.0
        %8428 = vmatprep.subr.mxu0 0.0
        %8429 = vmatpush2.msra.mxu0 0.0
        %8430 = vmatprep.subr.mxu0 0.0
        %8431 = vmatpush2.msra.mxu0 0.0
        %8432 = vmatprep.subr.mxu0 0.0
        %8433 = vmatpush2.msra.mxu0 0.0
        %8434 = vmatprep.subr.mxu0 0.0
        %8435 = vmatpush2.msra.mxu0 0.0
        %8436 = vmatprep.subr.mxu0 0.0
        %8437 = vmatpush2.msra.mxu0 0.0
        %8438 = vmatprep.subr.mxu0 0.0
        %8439 = vmatpush2.msra.mxu0 0.0
        %8440 = vmatprep.subr.mxu0 0.0
        %8441 = vmatpush2.msra.mxu0 0.0
        %8442 = vmatprep.subr.mxu0 0.0
        %8443 = vmatpush2.msra.mxu0 0.0
        %8444 = vmatprep.subr.mxu0 0.0
        %8445 = vmatpush2.msra.mxu0 0.0
        %8446 = vmatprep.mubr.f32.mxu0 0.0
        %8447 = vmatmul.mubr.f32.gmra.mxu0 %v8371
        %v8448 = vpop.f32.mrf.mxu0
        %v8449 = vadd.f32 0.0, %v8448
        %v8450 = vpop.f32.mrf.mxu0
        %v8451 = vadd.f32 0.0, %v8450
        %8452 = vmatprep.mubr.f32.mxu0 0.0
        %8453 = vmatmul.mubr.f32.gmra.mxu0 %v8374
        %v8454 = vpop.f32.mrf.mxu0
        %v8455 = vadd.f32 0.0, %v8454
        %v8456 = vpop.f32.mrf.mxu0
        %v8457 = vadd.f32 0.0, %v8456
        %8458 = vmatprep.mubr.f32.mxu0 0.0
        %8459 = vmatmul.mubr.f32.gmra.mxu0 %v8377
        %v8460 = vpop.f32.mrf.mxu0
        %v8461 = vadd.f32 0.0, %v8460
        %v8462 = vpop.f32.mrf.mxu0
        %v8463 = vadd.f32 0.0, %v8462
        %8464 = vmatprep.mubr.f32.mxu0 0.0
        %8465 = vmatmul.mubr.f32.gmra.mxu0 %v8380
        %v8466 = vpop.f32.mrf.mxu0
        %v8467 = vadd.f32 0.0, %v8466
        %v8468 = vpop.f32.mrf.mxu0
        %v8469 = vadd.f32 0.0, %v8468
        %8470 = vdwg.mxu0
        %8471 = vmatprep.subr.mxu0 0.0
        %8472 = vmatpush1.msra.mxu0 0.0
        %8473 = vmatprep.subr.mxu0 0.0
        %8474 = vmatpush1.msra.mxu0 0.0
        %8475 = vmatprep.subr.mxu0 0.0
        %8476 = vmatpush1.msra.mxu0 0.0
        %8477 = vmatprep.subr.mxu0 0.0
        %8478 = vmatpush1.msra.mxu0 0.0
        %8479 = vmatprep.subr.mxu0 0.0
        %8480 = vmatpush1.msra.mxu0 0.0
        %8481 = vmatprep.subr.mxu0 0.0
        %8482 = vmatpush1.msra.mxu0 0.0
        %8483 = vmatprep.subr.mxu0 0.0
        %8484 = vmatpush1.msra.mxu0 0.0
        %8485 = vmatprep.subr.mxu0 0.0
        %8486 = vmatpush1.msra.mxu0 0.0
        %8487 = vmatprep.subr.mxu0 0.0
        %8488 = vmatpush1.msra.mxu0 0.0
        %8489 = vmatprep.subr.mxu0 0.0
        %8490 = vmatpush1.msra.mxu0 0.0
        %8491 = vmatprep.subr.mxu0 0.0
        %8492 = vmatpush1.msra.mxu0 0.0
        %8493 = vmatprep.subr.mxu0 0.0
        %8494 = vmatpush1.msra.mxu0 0.0
        %8495 = vmatprep.subr.mxu0 %v8369
        %8496 = vmatpush1.msra.mxu0 %v8368
        %8497 = vmatprep.subr.mxu0 %v8365
        %8498 = vmatpush1.msra.mxu0 %v8364
        %8499 = vmatprep.subr.mxu0 %v8361
        %8500 = vmatpush1.msra.mxu0 %v8360
        %8501 = vmatprep.subr.mxu0 %v8357
        %8502 = vmatpush1.msra.mxu0 %v8356
        %8503 = vmatprep.subr.mxu0 0.0
        %8504 = vmatpush2.msra.mxu0 0.0
        %8505 = vmatprep.subr.mxu0 0.0
        %8506 = vmatpush2.msra.mxu0 0.0
        %8507 = vmatprep.subr.mxu0 0.0
        %8508 = vmatpush2.msra.mxu0 0.0
        %8509 = vmatprep.subr.mxu0 0.0
        %8510 = vmatpush2.msra.mxu0 0.0
        %8511 = vmatprep.subr.mxu0 0.0
        %8512 = vmatpush2.msra.mxu0 0.0
        %8513 = vmatprep.subr.mxu0 0.0
        %8514 = vmatpush2.msra.mxu0 0.0
        %8515 = vmatprep.subr.mxu0 0.0
        %8516 = vmatpush2.msra.mxu0 0.0
        %8517 = vmatprep.subr.mxu0 0.0
        %8518 = vmatpush2.msra.mxu0 0.0
        %8519 = vmatprep.subr.mxu0 0.0
        %8520 = vmatpush2.msra.mxu0 0.0
        %8521 = vmatprep.subr.mxu0 0.0
        %8522 = vmatpush2.msra.mxu0 0.0
        %8523 = vmatprep.subr.mxu0 0.0
        %8524 = vmatpush2.msra.mxu0 0.0
        %8525 = vmatprep.subr.mxu0 0.0
        %8526 = vmatpush2.msra.mxu0 0.0
        %8527 = vmatprep.subr.mxu0 0.0
        %8528 = vmatpush2.msra.mxu0 0.0
        %8529 = vmatprep.subr.mxu0 0.0
        %8530 = vmatpush2.msra.mxu0 0.0
        %8531 = vmatprep.subr.mxu0 0.0
        %8532 = vmatpush2.msra.mxu0 0.0
        %8533 = vmatprep.subr.mxu0 0.0
        %8534 = vmatpush2.msra.mxu0 0.0
        %8535 = vmatprep.mubr.f32.mxu0 0.0
        %8536 = vmatmul.mubr.f32.gmra.mxu0 %v8371
        %v8537 = vpop.f32.mrf.mxu0
        %v8538 = vadd.f32 0.0, %v8537
        %v8539 = vpop.f32.mrf.mxu0
        %v8540 = vadd.f32 0.0, %v8539
        %8541 = vmatprep.mubr.f32.mxu0 0.0
        %8542 = vmatmul.mubr.f32.gmra.mxu0 %v8374
        %v8543 = vpop.f32.mrf.mxu0
        %v8544 = vadd.f32 0.0, %v8543
        %v8545 = vpop.f32.mrf.mxu0
        %v8546 = vadd.f32 0.0, %v8545
        %8547 = vmatprep.mubr.f32.mxu0 0.0
        %8548 = vmatmul.mubr.f32.gmra.mxu0 %v8377
        %v8549 = vpop.f32.mrf.mxu0
        %v8550 = vadd.f32 0.0, %v8549
        %v8551 = vpop.f32.mrf.mxu0
        %v8552 = vadd.f32 0.0, %v8551
        %8553 = vmatprep.mubr.f32.mxu0 0.0
        %8554 = vmatmul.mubr.f32.gmra.mxu0 %v8380
        %v8555 = vpop.f32.mrf.mxu0
        %v8556 = vadd.f32 0.0, %v8555
        %v8557 = vpop.f32.mrf.mxu0
        %v8558 = vadd.f32 0.0, %v8557
        %8559 = vdwg.mxu0
        %v8560 = vadd.f32 %v8290, %v8449
        %v8561 = vadd.f32 %v8291, %v8451
        %v8562 = vadd.f32 %v8292, %v8538
        %v8563 = vadd.f32 %v8293, %v8540
        %v8564 = vadd.f32 %v8294, %v8455
        %v8565 = vadd.f32 %v8295, %v8457
        %v8566 = vadd.f32 %v8296, %v8544
        %v8567 = vadd.f32 %v8297, %v8546
        %v8568 = vadd.f32 %v8298, %v8461
        %v8569 = vadd.f32 %v8299, %v8463
        %v8570 = vadd.f32 %v8300, %v8550
        %v8571 = vadd.f32 %v8301, %v8552
        %v8572 = vadd.f32 %v8302, %v8467
        %v8573 = vadd.f32 %v8303, %v8469
        %v8574 = vadd.f32 %v8304, %v8556
        %v8575 = vadd.f32 %v8305, %v8558
        %8577 = vset.pattern.permute.xlu0 0
        %8578 = vperm.xlu0 %8577, %v6214
        %v8579 = vpop.permute.xlu0 %8578
        %8582 = vset.pattern.permute.xlu0 0
        %8583 = vperm.xlu0 %8582, %v6215
        %v8584 = vpop.permute.xlu0 %8583
        %8587 = vset.pattern.permute.xlu0 0
        %8588 = vperm.xlu0 %8587, %v6216
        %v8589 = vpop.permute.xlu0 %8588
        %8592 = vset.pattern.permute.xlu0 0
        %8593 = vperm.xlu0 %8592, %v6217
        %v8594 = vpop.permute.xlu0 %8593
        %v8596 = vadd.f32 %v8560, %v8579
        %v8597 = vadd.f32 %v8561, %v8579
        %v8598 = vadd.f32 %v8562, %v8579
        %v8599 = vadd.f32 %v8563, %v8579
        %v8600 = vadd.f32 %v8564, %v8584
        %v8601 = vadd.f32 %v8565, %v8584
        %v8602 = vadd.f32 %v8566, %v8584
        %v8603 = vadd.f32 %v8567, %v8584
        %v8604 = vadd.f32 %v8568, %v8589
        %v8605 = vadd.f32 %v8569, %v8589
        %v8606 = vadd.f32 %v8570, %v8589
        %v8607 = vadd.f32 %v8571, %v8589
        %v8608 = vadd.f32 %v8572, %v8594
        %v8609 = vadd.f32 %v8573, %v8594
        %v8610 = vadd.f32 %v8574, %v8594
        %v8611 = vadd.f32 %v8575, %v8594
        %v8612 = vmax.f32 %v8596, 0.0
        %v8613 = vmax.f32 %v8597, 0.0
        %v8614 = vmax.f32 %v8598, 0.0
        %v8615 = vmax.f32 %v8599, 0.0
        %v8616 = vmax.f32 %v8600, 0.0
        %v8617 = vmax.f32 %v8601, 0.0
        %v8618 = vmax.f32 %v8602, 0.0
        %v8619 = vmax.f32 %v8603, 0.0
        %v8620 = vmax.f32 %v8604, 0.0
        %v8621 = vmax.f32 %v8605, 0.0
        %v8622 = vmax.f32 %v8606, 0.0
        %v8623 = vmax.f32 %v8607, 0.0
        %v8624 = vmax.f32 %v8608, 0.0
        %v8625 = vmax.f32 %v8609, 0.0
        %v8626 = vmax.f32 %v8610, 0.0
        %v8627 = vmax.f32 %v8611, 0.0
        %8628 = vst [vmem:[%s596] sm:$0xff] %v8612
        %8629 = vst [vmem:[%s596 + $0x8] sm:$0xff] %v8613
        %8630 = vst [vmem:[%s596 + $0x10] sm:$0xff] %v8614
        %8631 = vst [vmem:[%s596 + $0x18] sm:$0xff] %v8615
        %8632 = vst [vmem:[%s596 + $0x20] sm:$0xff] %v8616
        %8633 = vst [vmem:[%s596 + $0x28] sm:$0xff] %v8617
        %8634 = vst [vmem:[%s596 + $0x30] sm:$0xff] %v8618
        %8635 = vst [vmem:[%s596 + $0x38] sm:$0xff] %v8619
        %8636 = vst [vmem:[%s596 + $0x40] sm:$0xff] %v8620
        %8637 = vst [vmem:[%s596 + $0x48] sm:$0xff] %v8621
        %8638 = vst [vmem:[%s596 + $0x50] sm:$0xff] %v8622
        %8639 = vst [vmem:[%s596 + $0x58] sm:$0xff] %v8623
        %8640 = vst [vmem:[%s596 + $0x60] sm:$0xff] %v8624
        %8641 = vst [vmem:[%s596 + $0x68] sm:$0xff] %v8625
        %8642 = vst [vmem:[%s596 + $0x70] sm:$0xff] %v8626
        %8643 = vst [vmem:[%s596 + $0x78] sm:$0xff] %v8627
        %v8644 = vld [vmem:[%s10] sm:$0x7]
        %v8645 = vld [vmem:[#allocation2] sm:$0x1]
        %8646 = vrot.lane.b32.xlu0 %v8612, 17
        %v8647 = vpop.permute.xlu0 %8646
        %8648 = vrot.lane.b32.xlu0 %v8616, 17
        %v8649 = vpop.permute.xlu0 %8648
        %8650 = vrot.lane.b32.xlu0 %v8620, 17
        %v8651 = vpop.permute.xlu0 %8650
        %8652 = vrot.lane.b32.xlu0 %v8624, 17
        %v8653 = vpop.permute.xlu0 %8652
        %8654 = vrot.lane.b32.xlu0 %v8613, 17
        %v8655 = vpop.permute.xlu0 %8654
        %8656 = vrot.lane.b32.xlu0 %v8617, 17
        %v8657 = vpop.permute.xlu0 %8656
        %8658 = vrot.lane.b32.xlu0 %v8621, 17
        %v8659 = vpop.permute.xlu0 %8658
        %8660 = vrot.lane.b32.xlu0 %v8625, 17
        %v8661 = vpop.permute.xlu0 %8660
        %8662 = vrot.lane.b32.xlu0 %v8614, 17
        %v8663 = vpop.permute.xlu0 %8662
        %8664 = vrot.lane.b32.xlu0 %v8618, 17
        %v8665 = vpop.permute.xlu0 %8664
        %8666 = vrot.lane.b32.xlu0 %v8622, 17
        %v8667 = vpop.permute.xlu0 %8666
        %8668 = vrot.lane.b32.xlu0 %v8626, 17
        %v8669 = vpop.permute.xlu0 %8668
        %8670 = vrot.lane.b32.xlu0 %v8615, 17
        %v8671 = vpop.permute.xlu0 %8670
        %8672 = vrot.lane.b32.xlu0 %v8619, 17
        %v8673 = vpop.permute.xlu0 %8672
        %8674 = vrot.lane.b32.xlu0 %v8623, 17
        %v8675 = vpop.permute.xlu0 %8674
        %8676 = vrot.lane.b32.xlu0 %v8627, 17
        %v8677 = vpop.permute.xlu0 %8676
        %v8678 = vsel %vm659, %v8663, %v8671
        %v8679 = vsel %vm659, %v8665, %v8673
        %v8680 = vsel %vm659, %v8667, %v8675
        %v8681 = vsel %vm659, %v8669, %v8677
        %v8682 = vsel %vm659, %v8655, %v8663
        %v8683 = vsel %vm659, %v8657, %v8665
        %v8684 = vsel %vm659, %v8659, %v8667
        %v8685 = vsel %vm659, %v8661, %v8669
        %v8686 = vsel %vm659, %v8647, %v8655
        %v8687 = vsel %vm659, %v8649, %v8657
        %v8688 = vsel %vm659, %v8651, %v8659
        %v8689 = vsel %vm659, %v8653, %v8661
        %v8690 = vsel %vm659, %v8671, %v8647
        %v8691 = vsel %vm659, %v8673, %v8649
        %v8692 = vsel %vm659, %v8675, %v8651
        %v8693 = vsel %vm659, %v8677, %v8653
        %v8694 = vmul.f32 %v8690, %v668
        %v8695 = vmul.f32 %v8686, %v672
        %v8696 = vmul.f32 %v8682, %v676
        %v8697 = vmul.f32 %v8678, %v680
        %v8698 = vmul.f32 %v8691, %v668
        %v8699 = vmul.f32 %v8687, %v672
        %v8700 = vmul.f32 %v8683, %v676
        %v8701 = vmul.f32 %v8679, %v680
        %v8702 = vmul.f32 %v8692, %v668
        %v8703 = vmul.f32 %v8688, %v672
        %v8704 = vmul.f32 %v8684, %v676
        %v8705 = vmul.f32 %v8680, %v680
        %v8706 = vmul.f32 %v8693, %v668
        %v8707 = vmul.f32 %v8689, %v672
        %v8708 = vmul.f32 %v8685, %v676
        %v8709 = vmul.f32 %v8681, %v680
        %8710 = vrot.lane.b32.xlu0 %v8612, 16
        %v8711 = vpop.permute.xlu0 %8710
        %8712 = vrot.lane.b32.xlu0 %v8616, 16
        %v8713 = vpop.permute.xlu0 %8712
        %8714 = vrot.lane.b32.xlu0 %v8620, 16
        %v8715 = vpop.permute.xlu0 %8714
        %8716 = vrot.lane.b32.xlu0 %v8624, 16
        %v8717 = vpop.permute.xlu0 %8716
        %8718 = vrot.lane.b32.xlu0 %v8613, 16
        %v8719 = vpop.permute.xlu0 %8718
        %8720 = vrot.lane.b32.xlu0 %v8617, 16
        %v8721 = vpop.permute.xlu0 %8720
        %8722 = vrot.lane.b32.xlu0 %v8621, 16
        %v8723 = vpop.permute.xlu0 %8722
        %8724 = vrot.lane.b32.xlu0 %v8625, 16
        %v8725 = vpop.permute.xlu0 %8724
        %8726 = vrot.lane.b32.xlu0 %v8614, 16
        %v8727 = vpop.permute.xlu0 %8726
        %8728 = vrot.lane.b32.xlu0 %v8618, 16
        %v8729 = vpop.permute.xlu0 %8728
        %8730 = vrot.lane.b32.xlu0 %v8622, 16
        %v8731 = vpop.permute.xlu0 %8730
        %8732 = vrot.lane.b32.xlu0 %v8626, 16
        %v8733 = vpop.permute.xlu0 %8732
        %8734 = vrot.lane.b32.xlu0 %v8615, 16
        %v8735 = vpop.permute.xlu0 %8734
        %8736 = vrot.lane.b32.xlu0 %v8619, 16
        %v8737 = vpop.permute.xlu0 %8736
        %8738 = vrot.lane.b32.xlu0 %v8623, 16
        %v8739 = vpop.permute.xlu0 %8738
        %8740 = vrot.lane.b32.xlu0 %v8627, 16
        %v8741 = vpop.permute.xlu0 %8740
        %v8742 = vsel %vm697, %v8727, %v8735
        %v8743 = vsel %vm697, %v8729, %v8737
        %v8744 = vsel %vm697, %v8731, %v8739
        %v8745 = vsel %vm697, %v8733, %v8741
        %v8746 = vsel %vm697, %v8719, %v8727
        %v8747 = vsel %vm697, %v8721, %v8729
        %v8748 = vsel %vm697, %v8723, %v8731
        %v8749 = vsel %vm697, %v8725, %v8733
        %v8750 = vsel %vm697, %v8711, %v8719
        %v8751 = vsel %vm697, %v8713, %v8721
        %v8752 = vsel %vm697, %v8715, %v8723
        %v8753 = vsel %vm697, %v8717, %v8725
        %v8754 = vsel %vm697, %v8735, %v8711
        %v8755 = vsel %vm697, %v8737, %v8713
        %v8756 = vsel %vm697, %v8739, %v8715
        %v8757 = vsel %vm697, %v8741, %v8717
        %v8758 = vmul.f32 %v8754, %v706
        %v8759 = vmul.f32 %v8750, %v710
        %v8760 = vmul.f32 %v8746, %v714
        %v8761 = vmul.f32 %v8742, %v718
        %v8762 = vmul.f32 %v8755, %v706
        %v8763 = vmul.f32 %v8751, %v710
        %v8764 = vmul.f32 %v8747, %v714
        %v8765 = vmul.f32 %v8743, %v718
        %v8766 = vmul.f32 %v8756, %v706
        %v8767 = vmul.f32 %v8752, %v710
        %v8768 = vmul.f32 %v8748, %v714
        %v8769 = vmul.f32 %v8744, %v718
        %v8770 = vmul.f32 %v8757, %v706
        %v8771 = vmul.f32 %v8753, %v710
        %v8772 = vmul.f32 %v8749, %v714
        %v8773 = vmul.f32 %v8745, %v718
        %v8775 = vlaneseq
        %v8776 = vshrl.u32 %v8775, 7
        %v8777 = vsub.s32 0, %v8776
        %v8778 = vrot.slane %v8644, %v8777
        %8779 = vrot.lane.b32.xlu0 %v8778, 96
        %v8780 = vpop.permute.xlu0 %8779
        %v8781 = vsel %vm1473, %v8780, 0
        %8783 = vmatprep.subr.mxu0 0.0
        %8784 = vmatpush1.msra.mxu0 0.0
        %8785 = vmatprep.subr.mxu0 0.0
        %8786 = vmatpush1.msra.mxu0 0.0
        %8787 = vmatprep.subr.mxu0 0.0
        %8788 = vmatpush1.msra.mxu0 0.0
        %8789 = vmatprep.subr.mxu0 0.0
        %8790 = vmatpush1.msra.mxu0 0.0
        %8791 = vmatprep.subr.mxu0 0.0
        %8792 = vmatpush1.msra.mxu0 0.0
        %8793 = vmatprep.subr.mxu0 0.0
        %8794 = vmatpush1.msra.mxu0 0.0
        %8795 = vmatprep.subr.mxu0 0.0
        %8796 = vmatpush1.msra.mxu0 0.0
        %8797 = vmatprep.subr.mxu0 0.0
        %8798 = vmatpush1.msra.mxu0 0.0
        %8799 = vmatprep.subr.mxu0 0.0
        %8800 = vmatpush1.msra.mxu0 0.0
        %8801 = vmatprep.subr.mxu0 0.0
        %8802 = vmatpush1.msra.mxu0 0.0
        %8803 = vmatprep.subr.mxu0 0.0
        %8804 = vmatpush1.msra.mxu0 0.0
        %8805 = vmatprep.subr.mxu0 0.0
        %8806 = vmatpush1.msra.mxu0 0.0
        %8807 = vmatprep.subr.mxu0 %v8771
        %8808 = vmatpush1.msra.mxu0 %v8770
        %8809 = vmatprep.subr.mxu0 %v8767
        %8810 = vmatpush1.msra.mxu0 %v8766
        %8811 = vmatprep.subr.mxu0 %v8763
        %8812 = vmatpush1.msra.mxu0 %v8762
        %8813 = vmatprep.subr.mxu0 %v8759
        %8814 = vmatpush1.msra.mxu0 %v8758
        %8815 = vmatprep.subr.mxu0 0.0
        %8816 = vmatpush2.msra.mxu0 0.0
        %8817 = vmatprep.subr.mxu0 0.0
        %8818 = vmatpush2.msra.mxu0 0.0
        %8819 = vmatprep.subr.mxu0 0.0
        %8820 = vmatpush2.msra.mxu0 0.0
        %8821 = vmatprep.subr.mxu0 0.0
        %8822 = vmatpush2.msra.mxu0 0.0
        %8823 = vmatprep.subr.mxu0 0.0
        %8824 = vmatpush2.msra.mxu0 0.0
        %8825 = vmatprep.subr.mxu0 0.0
        %8826 = vmatpush2.msra.mxu0 0.0
        %8827 = vmatprep.subr.mxu0 0.0
        %8828 = vmatpush2.msra.mxu0 0.0
        %8829 = vmatprep.subr.mxu0 0.0
        %8830 = vmatpush2.msra.mxu0 0.0
        %8831 = vmatprep.subr.mxu0 0.0
        %8832 = vmatpush2.msra.mxu0 0.0
        %8833 = vmatprep.subr.mxu0 0.0
        %8834 = vmatpush2.msra.mxu0 0.0
        %8835 = vmatprep.subr.mxu0 0.0
        %8836 = vmatpush2.msra.mxu0 0.0
        %8837 = vmatprep.subr.mxu0 0.0
        %8838 = vmatpush2.msra.mxu0 0.0
        %8839 = vmatprep.subr.mxu0 0.0
        %8840 = vmatpush2.msra.mxu0 0.0
        %8841 = vmatprep.subr.mxu0 0.0
        %8842 = vmatpush2.msra.mxu0 0.0
        %8843 = vmatprep.subr.mxu0 0.0
        %8844 = vmatpush2.msra.mxu0 0.0
        %8845 = vmatprep.subr.mxu0 0.0
        %8846 = vmatpush2.msra.mxu0 0.0
        %8847 = vmatprep.mubr.f32.mxu0 0.0
        %8848 = vmatmul.mubr.f32.gmra.mxu0 %v8781
        %v8849 = vpop.f32.mrf.mxu0
        %v8850 = vadd.f32 0.0, %v8849
        %v8851 = vpop.f32.mrf.mxu0
        %v8852 = vadd.f32 0.0, %v8851
        %8853 = vdwg.mxu0
        %8854 = vmatprep.subr.mxu0 0.0
        %8855 = vmatpush1.msra.mxu0 0.0
        %8856 = vmatprep.subr.mxu0 0.0
        %8857 = vmatpush1.msra.mxu0 0.0
        %8858 = vmatprep.subr.mxu0 0.0
        %8859 = vmatpush1.msra.mxu0 0.0
        %8860 = vmatprep.subr.mxu0 0.0
        %8861 = vmatpush1.msra.mxu0 0.0
        %8862 = vmatprep.subr.mxu0 0.0
        %8863 = vmatpush1.msra.mxu0 0.0
        %8864 = vmatprep.subr.mxu0 0.0
        %8865 = vmatpush1.msra.mxu0 0.0
        %8866 = vmatprep.subr.mxu0 0.0
        %8867 = vmatpush1.msra.mxu0 0.0
        %8868 = vmatprep.subr.mxu0 0.0
        %8869 = vmatpush1.msra.mxu0 0.0
        %8870 = vmatprep.subr.mxu0 0.0
        %8871 = vmatpush1.msra.mxu0 0.0
        %8872 = vmatprep.subr.mxu0 0.0
        %8873 = vmatpush1.msra.mxu0 0.0
        %8874 = vmatprep.subr.mxu0 0.0
        %8875 = vmatpush1.msra.mxu0 0.0
        %8876 = vmatprep.subr.mxu0 0.0
        %8877 = vmatpush1.msra.mxu0 0.0
        %8878 = vmatprep.subr.mxu0 %v8773
        %8879 = vmatpush1.msra.mxu0 %v8772
        %8880 = vmatprep.subr.mxu0 %v8769
        %8881 = vmatpush1.msra.mxu0 %v8768
        %8882 = vmatprep.subr.mxu0 %v8765
        %8883 = vmatpush1.msra.mxu0 %v8764
        %8884 = vmatprep.subr.mxu0 %v8761
        %8885 = vmatpush1.msra.mxu0 %v8760
        %8886 = vmatprep.subr.mxu0 0.0
        %8887 = vmatpush2.msra.mxu0 0.0
        %8888 = vmatprep.subr.mxu0 0.0
        %8889 = vmatpush2.msra.mxu0 0.0
        %8890 = vmatprep.subr.mxu0 0.0
        %8891 = vmatpush2.msra.mxu0 0.0
        %8892 = vmatprep.subr.mxu0 0.0
        %8893 = vmatpush2.msra.mxu0 0.0
        %8894 = vmatprep.subr.mxu0 0.0
        %8895 = vmatpush2.msra.mxu0 0.0
        %8896 = vmatprep.subr.mxu0 0.0
        %8897 = vmatpush2.msra.mxu0 0.0
        %8898 = vmatprep.subr.mxu0 0.0
        %8899 = vmatpush2.msra.mxu0 0.0
        %8900 = vmatprep.subr.mxu0 0.0
        %8901 = vmatpush2.msra.mxu0 0.0
        %8902 = vmatprep.subr.mxu0 0.0
        %8903 = vmatpush2.msra.mxu0 0.0
        %8904 = vmatprep.subr.mxu0 0.0
        %8905 = vmatpush2.msra.mxu0 0.0
        %8906 = vmatprep.subr.mxu0 0.0
        %8907 = vmatpush2.msra.mxu0 0.0
        %8908 = vmatprep.subr.mxu0 0.0
        %8909 = vmatpush2.msra.mxu0 0.0
        %8910 = vmatprep.subr.mxu0 0.0
        %8911 = vmatpush2.msra.mxu0 0.0
        %8912 = vmatprep.subr.mxu0 0.0
        %8913 = vmatpush2.msra.mxu0 0.0
        %8914 = vmatprep.subr.mxu0 0.0
        %8915 = vmatpush2.msra.mxu0 0.0
        %8916 = vmatprep.subr.mxu0 0.0
        %8917 = vmatpush2.msra.mxu0 0.0
        %8918 = vmatprep.mubr.f32.mxu0 0.0
        %8919 = vmatmul.mubr.f32.gmra.mxu0 %v8781
        %v8920 = vpop.f32.mrf.mxu0
        %v8921 = vadd.f32 0.0, %v8920
        %v8922 = vpop.f32.mrf.mxu0
        %v8923 = vadd.f32 0.0, %v8922
        %8924 = vdwg.mxu0
        %v8925 = vsel %vm1473, %v8644, 0
        %8927 = vmatprep.subr.mxu0 0.0
        %8928 = vmatpush1.msra.mxu0 0.0
        %8929 = vmatprep.subr.mxu0 0.0
        %8930 = vmatpush1.msra.mxu0 0.0
        %8931 = vmatprep.subr.mxu0 0.0
        %8932 = vmatpush1.msra.mxu0 0.0
        %8933 = vmatprep.subr.mxu0 0.0
        %8934 = vmatpush1.msra.mxu0 0.0
        %8935 = vmatprep.subr.mxu0 0.0
        %8936 = vmatpush1.msra.mxu0 0.0
        %8937 = vmatprep.subr.mxu0 0.0
        %8938 = vmatpush1.msra.mxu0 0.0
        %8939 = vmatprep.subr.mxu0 0.0
        %8940 = vmatpush1.msra.mxu0 0.0
        %8941 = vmatprep.subr.mxu0 0.0
        %8942 = vmatpush1.msra.mxu0 0.0
        %8943 = vmatprep.subr.mxu0 0.0
        %8944 = vmatpush1.msra.mxu0 0.0
        %8945 = vmatprep.subr.mxu0 0.0
        %8946 = vmatpush1.msra.mxu0 0.0
        %8947 = vmatprep.subr.mxu0 0.0
        %8948 = vmatpush1.msra.mxu0 0.0
        %8949 = vmatprep.subr.mxu0 0.0
        %8950 = vmatpush1.msra.mxu0 0.0
        %8951 = vmatprep.subr.mxu0 %v8707
        %8952 = vmatpush1.msra.mxu0 %v8706
        %8953 = vmatprep.subr.mxu0 %v8703
        %8954 = vmatpush1.msra.mxu0 %v8702
        %8955 = vmatprep.subr.mxu0 %v8699
        %8956 = vmatpush1.msra.mxu0 %v8698
        %8957 = vmatprep.subr.mxu0 %v8695
        %8958 = vmatpush1.msra.mxu0 %v8694
        %8959 = vmatprep.subr.mxu0 0.0
        %8960 = vmatpush2.msra.mxu0 0.0
        %8961 = vmatprep.subr.mxu0 0.0
        %8962 = vmatpush2.msra.mxu0 0.0
        %8963 = vmatprep.subr.mxu0 0.0
        %8964 = vmatpush2.msra.mxu0 0.0
        %8965 = vmatprep.subr.mxu0 0.0
        %8966 = vmatpush2.msra.mxu0 0.0
        %8967 = vmatprep.subr.mxu0 0.0
        %8968 = vmatpush2.msra.mxu0 0.0
        %8969 = vmatprep.subr.mxu0 0.0
        %8970 = vmatpush2.msra.mxu0 0.0
        %8971 = vmatprep.subr.mxu0 0.0
        %8972 = vmatpush2.msra.mxu0 0.0
        %8973 = vmatprep.subr.mxu0 0.0
        %8974 = vmatpush2.msra.mxu0 0.0
        %8975 = vmatprep.subr.mxu0 0.0
        %8976 = vmatpush2.msra.mxu0 0.0
        %8977 = vmatprep.subr.mxu0 0.0
        %8978 = vmatpush2.msra.mxu0 0.0
        %8979 = vmatprep.subr.mxu0 0.0
        %8980 = vmatpush2.msra.mxu0 0.0
        %8981 = vmatprep.subr.mxu0 0.0
        %8982 = vmatpush2.msra.mxu0 0.0
        %8983 = vmatprep.subr.mxu0 0.0
        %8984 = vmatpush2.msra.mxu0 0.0
        %8985 = vmatprep.subr.mxu0 0.0
        %8986 = vmatpush2.msra.mxu0 0.0
        %8987 = vmatprep.subr.mxu0 0.0
        %8988 = vmatpush2.msra.mxu0 0.0
        %8989 = vmatprep.subr.mxu0 0.0
        %8990 = vmatpush2.msra.mxu0 0.0
        %8991 = vmatprep.mubr.f32.mxu0 0.0
        %8992 = vmatmul.mubr.f32.gmra.mxu0 %v8925
        %v8993 = vpop.f32.mrf.mxu0
        %v8994 = vadd.f32 %v8850, %v8993
        %v8995 = vpop.f32.mrf.mxu0
        %v8996 = vadd.f32 %v8852, %v8995
        %8997 = vdwg.mxu0
        %8998 = vmatprep.subr.mxu0 0.0
        %8999 = vmatpush1.msra.mxu0 0.0
        %9000 = vmatprep.subr.mxu0 0.0
        %9001 = vmatpush1.msra.mxu0 0.0
        %9002 = vmatprep.subr.mxu0 0.0
        %9003 = vmatpush1.msra.mxu0 0.0
        %9004 = vmatprep.subr.mxu0 0.0
        %9005 = vmatpush1.msra.mxu0 0.0
        %9006 = vmatprep.subr.mxu0 0.0
        %9007 = vmatpush1.msra.mxu0 0.0
        %9008 = vmatprep.subr.mxu0 0.0
        %9009 = vmatpush1.msra.mxu0 0.0
        %9010 = vmatprep.subr.mxu0 0.0
        %9011 = vmatpush1.msra.mxu0 0.0
        %9012 = vmatprep.subr.mxu0 0.0
        %9013 = vmatpush1.msra.mxu0 0.0
        %9014 = vmatprep.subr.mxu0 0.0
        %9015 = vmatpush1.msra.mxu0 0.0
        %9016 = vmatprep.subr.mxu0 0.0
        %9017 = vmatpush1.msra.mxu0 0.0
        %9018 = vmatprep.subr.mxu0 0.0
        %9019 = vmatpush1.msra.mxu0 0.0
        %9020 = vmatprep.subr.mxu0 0.0
        %9021 = vmatpush1.msra.mxu0 0.0
        %9022 = vmatprep.subr.mxu0 %v8709
        %9023 = vmatpush1.msra.mxu0 %v8708
        %9024 = vmatprep.subr.mxu0 %v8705
        %9025 = vmatpush1.msra.mxu0 %v8704
        %9026 = vmatprep.subr.mxu0 %v8701
        %9027 = vmatpush1.msra.mxu0 %v8700
        %9028 = vmatprep.subr.mxu0 %v8697
        %9029 = vmatpush1.msra.mxu0 %v8696
        %9030 = vmatprep.subr.mxu0 0.0
        %9031 = vmatpush2.msra.mxu0 0.0
        %9032 = vmatprep.subr.mxu0 0.0
        %9033 = vmatpush2.msra.mxu0 0.0
        %9034 = vmatprep.subr.mxu0 0.0
        %9035 = vmatpush2.msra.mxu0 0.0
        %9036 = vmatprep.subr.mxu0 0.0
        %9037 = vmatpush2.msra.mxu0 0.0
        %9038 = vmatprep.subr.mxu0 0.0
        %9039 = vmatpush2.msra.mxu0 0.0
        %9040 = vmatprep.subr.mxu0 0.0
        %9041 = vmatpush2.msra.mxu0 0.0
        %9042 = vmatprep.subr.mxu0 0.0
        %9043 = vmatpush2.msra.mxu0 0.0
        %9044 = vmatprep.subr.mxu0 0.0
        %9045 = vmatpush2.msra.mxu0 0.0
        %9046 = vmatprep.subr.mxu0 0.0
        %9047 = vmatpush2.msra.mxu0 0.0
        %9048 = vmatprep.subr.mxu0 0.0
        %9049 = vmatpush2.msra.mxu0 0.0
        %9050 = vmatprep.subr.mxu0 0.0
        %9051 = vmatpush2.msra.mxu0 0.0
        %9052 = vmatprep.subr.mxu0 0.0
        %9053 = vmatpush2.msra.mxu0 0.0
        %9054 = vmatprep.subr.mxu0 0.0
        %9055 = vmatpush2.msra.mxu0 0.0
        %9056 = vmatprep.subr.mxu0 0.0
        %9057 = vmatpush2.msra.mxu0 0.0
        %9058 = vmatprep.subr.mxu0 0.0
        %9059 = vmatpush2.msra.mxu0 0.0
        %9060 = vmatprep.subr.mxu0 0.0
        %9061 = vmatpush2.msra.mxu0 0.0
        %9062 = vmatprep.mubr.f32.mxu0 0.0
        %9063 = vmatmul.mubr.f32.gmra.mxu0 %v8925
        %v9064 = vpop.f32.mrf.mxu0
        %v9065 = vadd.f32 %v8921, %v9064
        %v9066 = vpop.f32.mrf.mxu0
        %v9067 = vadd.f32 %v8923, %v9066
        %9068 = vdwg.mxu0
        %9069 = vrot.lane.b32.xlu0 %v8612, 15
        %v9070 = vpop.permute.xlu0 %9069
        %9071 = vrot.lane.b32.xlu0 %v8616, 15
        %v9072 = vpop.permute.xlu0 %9071
        %9073 = vrot.lane.b32.xlu0 %v8620, 15
        %v9074 = vpop.permute.xlu0 %9073
        %9075 = vrot.lane.b32.xlu0 %v8624, 15
        %v9076 = vpop.permute.xlu0 %9075
        %9077 = vrot.lane.b32.xlu0 %v8613, 15
        %v9078 = vpop.permute.xlu0 %9077
        %9079 = vrot.lane.b32.xlu0 %v8617, 15
        %v9080 = vpop.permute.xlu0 %9079
        %9081 = vrot.lane.b32.xlu0 %v8621, 15
        %v9082 = vpop.permute.xlu0 %9081
        %9083 = vrot.lane.b32.xlu0 %v8625, 15
        %v9084 = vpop.permute.xlu0 %9083
        %9085 = vrot.lane.b32.xlu0 %v8614, 15
        %v9086 = vpop.permute.xlu0 %9085
        %9087 = vrot.lane.b32.xlu0 %v8618, 15
        %v9088 = vpop.permute.xlu0 %9087
        %9089 = vrot.lane.b32.xlu0 %v8622, 15
        %v9090 = vpop.permute.xlu0 %9089
        %9091 = vrot.lane.b32.xlu0 %v8626, 15
        %v9092 = vpop.permute.xlu0 %9091
        %9093 = vrot.lane.b32.xlu0 %v8615, 15
        %v9094 = vpop.permute.xlu0 %9093
        %9095 = vrot.lane.b32.xlu0 %v8619, 15
        %v9096 = vpop.permute.xlu0 %9095
        %9097 = vrot.lane.b32.xlu0 %v8623, 15
        %v9098 = vpop.permute.xlu0 %9097
        %9099 = vrot.lane.b32.xlu0 %v8627, 15
        %v9100 = vpop.permute.xlu0 %9099
        %v9101 = vsel %vm735, %v9086, %v9094
        %v9102 = vsel %vm735, %v9088, %v9096
        %v9103 = vsel %vm735, %v9090, %v9098
        %v9104 = vsel %vm735, %v9092, %v9100
        %v9105 = vsel %vm735, %v9078, %v9086
        %v9106 = vsel %vm735, %v9080, %v9088
        %v9107 = vsel %vm735, %v9082, %v9090
        %v9108 = vsel %vm735, %v9084, %v9092
        %v9109 = vsel %vm735, %v9070, %v9078
        %v9110 = vsel %vm735, %v9072, %v9080
        %v9111 = vsel %vm735, %v9074, %v9082
        %v9112 = vsel %vm735, %v9076, %v9084
        %v9113 = vsel %vm735, %v9094, %v9070
        %v9114 = vsel %vm735, %v9096, %v9072
        %v9115 = vsel %vm735, %v9098, %v9074
        %v9116 = vsel %vm735, %v9100, %v9076
        %v9117 = vmul.f32 %v9113, %v744
        %v9118 = vmul.f32 %v9109, %v748
        %v9119 = vmul.f32 %v9105, %v752
        %v9120 = vmul.f32 %v9101, %v756
        %v9121 = vmul.f32 %v9114, %v744
        %v9122 = vmul.f32 %v9110, %v748
        %v9123 = vmul.f32 %v9106, %v752
        %v9124 = vmul.f32 %v9102, %v756
        %v9125 = vmul.f32 %v9115, %v744
        %v9126 = vmul.f32 %v9111, %v748
        %v9127 = vmul.f32 %v9107, %v752
        %v9128 = vmul.f32 %v9103, %v756
        %v9129 = vmul.f32 %v9116, %v744
        %v9130 = vmul.f32 %v9112, %v748
        %v9131 = vmul.f32 %v9108, %v752
        %v9132 = vmul.f32 %v9104, %v756
        %9133 = vrot.lane.b32.xlu0 %v8778, 64
        %v9134 = vpop.permute.xlu0 %9133
        %v9135 = vsel %vm1473, %v9134, 0
        %9137 = vmatprep.subr.mxu0 0.0
        %9138 = vmatpush1.msra.mxu0 0.0
        %9139 = vmatprep.subr.mxu0 0.0
        %9140 = vmatpush1.msra.mxu0 0.0
        %9141 = vmatprep.subr.mxu0 0.0
        %9142 = vmatpush1.msra.mxu0 0.0
        %9143 = vmatprep.subr.mxu0 0.0
        %9144 = vmatpush1.msra.mxu0 0.0
        %9145 = vmatprep.subr.mxu0 0.0
        %9146 = vmatpush1.msra.mxu0 0.0
        %9147 = vmatprep.subr.mxu0 0.0
        %9148 = vmatpush1.msra.mxu0 0.0
        %9149 = vmatprep.subr.mxu0 0.0
        %9150 = vmatpush1.msra.mxu0 0.0
        %9151 = vmatprep.subr.mxu0 0.0
        %9152 = vmatpush1.msra.mxu0 0.0
        %9153 = vmatprep.subr.mxu0 0.0
        %9154 = vmatpush1.msra.mxu0 0.0
        %9155 = vmatprep.subr.mxu0 0.0
        %9156 = vmatpush1.msra.mxu0 0.0
        %9157 = vmatprep.subr.mxu0 0.0
        %9158 = vmatpush1.msra.mxu0 0.0
        %9159 = vmatprep.subr.mxu0 0.0
        %9160 = vmatpush1.msra.mxu0 0.0
        %9161 = vmatprep.subr.mxu0 %v9130
        %9162 = vmatpush1.msra.mxu0 %v9129
        %9163 = vmatprep.subr.mxu0 %v9126
        %9164 = vmatpush1.msra.mxu0 %v9125
        %9165 = vmatprep.subr.mxu0 %v9122
        %9166 = vmatpush1.msra.mxu0 %v9121
        %9167 = vmatprep.subr.mxu0 %v9118
        %9168 = vmatpush1.msra.mxu0 %v9117
        %9169 = vmatprep.subr.mxu0 0.0
        %9170 = vmatpush2.msra.mxu0 0.0
        %9171 = vmatprep.subr.mxu0 0.0
        %9172 = vmatpush2.msra.mxu0 0.0
        %9173 = vmatprep.subr.mxu0 0.0
        %9174 = vmatpush2.msra.mxu0 0.0
        %9175 = vmatprep.subr.mxu0 0.0
        %9176 = vmatpush2.msra.mxu0 0.0
        %9177 = vmatprep.subr.mxu0 0.0
        %9178 = vmatpush2.msra.mxu0 0.0
        %9179 = vmatprep.subr.mxu0 0.0
        %9180 = vmatpush2.msra.mxu0 0.0
        %9181 = vmatprep.subr.mxu0 0.0
        %9182 = vmatpush2.msra.mxu0 0.0
        %9183 = vmatprep.subr.mxu0 0.0
        %9184 = vmatpush2.msra.mxu0 0.0
        %9185 = vmatprep.subr.mxu0 0.0
        %9186 = vmatpush2.msra.mxu0 0.0
        %9187 = vmatprep.subr.mxu0 0.0
        %9188 = vmatpush2.msra.mxu0 0.0
        %9189 = vmatprep.subr.mxu0 0.0
        %9190 = vmatpush2.msra.mxu0 0.0
        %9191 = vmatprep.subr.mxu0 0.0
        %9192 = vmatpush2.msra.mxu0 0.0
        %9193 = vmatprep.subr.mxu0 0.0
        %9194 = vmatpush2.msra.mxu0 0.0
        %9195 = vmatprep.subr.mxu0 0.0
        %9196 = vmatpush2.msra.mxu0 0.0
        %9197 = vmatprep.subr.mxu0 0.0
        %9198 = vmatpush2.msra.mxu0 0.0
        %9199 = vmatprep.subr.mxu0 0.0
        %9200 = vmatpush2.msra.mxu0 0.0
        %9201 = vmatprep.mubr.f32.mxu0 0.0
        %9202 = vmatmul.mubr.f32.gmra.mxu0 %v9135
        %v9203 = vpop.f32.mrf.mxu0
        %v9204 = vadd.f32 0.0, %v9203
        %v9205 = vpop.f32.mrf.mxu0
        %v9206 = vadd.f32 0.0, %v9205
        %9207 = vdwg.mxu0
        %9208 = vmatprep.subr.mxu0 0.0
        %9209 = vmatpush1.msra.mxu0 0.0
        %9210 = vmatprep.subr.mxu0 0.0
        %9211 = vmatpush1.msra.mxu0 0.0
        %9212 = vmatprep.subr.mxu0 0.0
        %9213 = vmatpush1.msra.mxu0 0.0
        %9214 = vmatprep.subr.mxu0 0.0
        %9215 = vmatpush1.msra.mxu0 0.0
        %9216 = vmatprep.subr.mxu0 0.0
        %9217 = vmatpush1.msra.mxu0 0.0
        %9218 = vmatprep.subr.mxu0 0.0
        %9219 = vmatpush1.msra.mxu0 0.0
        %9220 = vmatprep.subr.mxu0 0.0
        %9221 = vmatpush1.msra.mxu0 0.0
        %9222 = vmatprep.subr.mxu0 0.0
        %9223 = vmatpush1.msra.mxu0 0.0
        %9224 = vmatprep.subr.mxu0 0.0
        %9225 = vmatpush1.msra.mxu0 0.0
        %9226 = vmatprep.subr.mxu0 0.0
        %9227 = vmatpush1.msra.mxu0 0.0
        %9228 = vmatprep.subr.mxu0 0.0
        %9229 = vmatpush1.msra.mxu0 0.0
        %9230 = vmatprep.subr.mxu0 0.0
        %9231 = vmatpush1.msra.mxu0 0.0
        %9232 = vmatprep.subr.mxu0 %v9132
        %9233 = vmatpush1.msra.mxu0 %v9131
        %9234 = vmatprep.subr.mxu0 %v9128
        %9235 = vmatpush1.msra.mxu0 %v9127
        %9236 = vmatprep.subr.mxu0 %v9124
        %9237 = vmatpush1.msra.mxu0 %v9123
        %9238 = vmatprep.subr.mxu0 %v9120
        %9239 = vmatpush1.msra.mxu0 %v9119
        %9240 = vmatprep.subr.mxu0 0.0
        %9241 = vmatpush2.msra.mxu0 0.0
        %9242 = vmatprep.subr.mxu0 0.0
        %9243 = vmatpush2.msra.mxu0 0.0
        %9244 = vmatprep.subr.mxu0 0.0
        %9245 = vmatpush2.msra.mxu0 0.0
        %9246 = vmatprep.subr.mxu0 0.0
        %9247 = vmatpush2.msra.mxu0 0.0
        %9248 = vmatprep.subr.mxu0 0.0
        %9249 = vmatpush2.msra.mxu0 0.0
        %9250 = vmatprep.subr.mxu0 0.0
        %9251 = vmatpush2.msra.mxu0 0.0
        %9252 = vmatprep.subr.mxu0 0.0
        %9253 = vmatpush2.msra.mxu0 0.0
        %9254 = vmatprep.subr.mxu0 0.0
        %9255 = vmatpush2.msra.mxu0 0.0
        %9256 = vmatprep.subr.mxu0 0.0
        %9257 = vmatpush2.msra.mxu0 0.0
        %9258 = vmatprep.subr.mxu0 0.0
        %9259 = vmatpush2.msra.mxu0 0.0
        %9260 = vmatprep.subr.mxu0 0.0
        %9261 = vmatpush2.msra.mxu0 0.0
        %9262 = vmatprep.subr.mxu0 0.0
        %9263 = vmatpush2.msra.mxu0 0.0
        %9264 = vmatprep.subr.mxu0 0.0
        %9265 = vmatpush2.msra.mxu0 0.0
        %9266 = vmatprep.subr.mxu0 0.0
        %9267 = vmatpush2.msra.mxu0 0.0
        %9268 = vmatprep.subr.mxu0 0.0
        %9269 = vmatpush2.msra.mxu0 0.0
        %9270 = vmatprep.subr.mxu0 0.0
        %9271 = vmatpush2.msra.mxu0 0.0
        %9272 = vmatprep.mubr.f32.mxu0 0.0
        %9273 = vmatmul.mubr.f32.gmra.mxu0 %v9135
        %v9274 = vpop.f32.mrf.mxu0
        %v9275 = vadd.f32 0.0, %v9274
        %v9276 = vpop.f32.mrf.mxu0
        %v9277 = vadd.f32 0.0, %v9276
        %9278 = vdwg.mxu0
        %v9279 = vadd.f32 %v8994, %v9204
        %v9280 = vadd.f32 %v8996, %v9206
        %v9281 = vadd.f32 %v9065, %v9275
        %v9282 = vadd.f32 %v9067, %v9277
        %9283 = vrot.lane.b32.xlu0 %v8612, 1
        %v9284 = vpop.permute.xlu0 %9283
        %9285 = vrot.lane.b32.xlu0 %v8616, 1
        %v9286 = vpop.permute.xlu0 %9285
        %9287 = vrot.lane.b32.xlu0 %v8620, 1
        %v9288 = vpop.permute.xlu0 %9287
        %9289 = vrot.lane.b32.xlu0 %v8624, 1
        %v9290 = vpop.permute.xlu0 %9289
        %9291 = vrot.lane.b32.xlu0 %v8613, 1
        %v9292 = vpop.permute.xlu0 %9291
        %9293 = vrot.lane.b32.xlu0 %v8617, 1
        %v9294 = vpop.permute.xlu0 %9293
        %9295 = vrot.lane.b32.xlu0 %v8621, 1
        %v9296 = vpop.permute.xlu0 %9295
        %9297 = vrot.lane.b32.xlu0 %v8625, 1
        %v9298 = vpop.permute.xlu0 %9297
        %9299 = vrot.lane.b32.xlu0 %v8614, 1
        %v9300 = vpop.permute.xlu0 %9299
        %9301 = vrot.lane.b32.xlu0 %v8618, 1
        %v9302 = vpop.permute.xlu0 %9301
        %9303 = vrot.lane.b32.xlu0 %v8622, 1
        %v9304 = vpop.permute.xlu0 %9303
        %9305 = vrot.lane.b32.xlu0 %v8626, 1
        %v9306 = vpop.permute.xlu0 %9305
        %9307 = vrot.lane.b32.xlu0 %v8615, 1
        %v9308 = vpop.permute.xlu0 %9307
        %9309 = vrot.lane.b32.xlu0 %v8619, 1
        %v9310 = vpop.permute.xlu0 %9309
        %9311 = vrot.lane.b32.xlu0 %v8623, 1
        %v9312 = vpop.permute.xlu0 %9311
        %9313 = vrot.lane.b32.xlu0 %v8627, 1
        %v9314 = vpop.permute.xlu0 %9313
        %v9315 = vsel %vm773, %v9300, %v9308
        %v9316 = vsel %vm773, %v9302, %v9310
        %v9317 = vsel %vm773, %v9304, %v9312
        %v9318 = vsel %vm773, %v9306, %v9314
        %v9319 = vsel %vm773, %v9292, %v9300
        %v9320 = vsel %vm773, %v9294, %v9302
        %v9321 = vsel %vm773, %v9296, %v9304
        %v9322 = vsel %vm773, %v9298, %v9306
        %v9323 = vsel %vm773, %v9284, %v9292
        %v9324 = vsel %vm773, %v9286, %v9294
        %v9325 = vsel %vm773, %v9288, %v9296
        %v9326 = vsel %vm773, %v9290, %v9298
        %v9327 = vsel %vm773, %v9308, %v9284
        %v9328 = vsel %vm773, %v9310, %v9286
        %v9329 = vsel %vm773, %v9312, %v9288
        %v9330 = vsel %vm773, %v9314, %v9290
        %v9331 = vmul.f32 %v9327, %v782
        %v9332 = vmul.f32 %v9323, %v786
        %v9333 = vmul.f32 %v9319, %v790
        %v9334 = vmul.f32 %v9315, %v794
        %v9335 = vmul.f32 %v9328, %v782
        %v9336 = vmul.f32 %v9324, %v786
        %v9337 = vmul.f32 %v9320, %v790
        %v9338 = vmul.f32 %v9316, %v794
        %v9339 = vmul.f32 %v9329, %v782
        %v9340 = vmul.f32 %v9325, %v786
        %v9341 = vmul.f32 %v9321, %v790
        %v9342 = vmul.f32 %v9317, %v794
        %v9343 = vmul.f32 %v9330, %v782
        %v9344 = vmul.f32 %v9326, %v786
        %v9345 = vmul.f32 %v9322, %v790
        %v9346 = vmul.f32 %v9318, %v794
        %9347 = vrot.lane.b32.xlu0 %v8778, 32
        %v9348 = vpop.permute.xlu0 %9347
        %v9349 = vsel %vm1473, %v9348, 0
        %9351 = vmatprep.subr.mxu0 0.0
        %9352 = vmatpush1.msra.mxu0 0.0
        %9353 = vmatprep.subr.mxu0 0.0
        %9354 = vmatpush1.msra.mxu0 0.0
        %9355 = vmatprep.subr.mxu0 0.0
        %9356 = vmatpush1.msra.mxu0 0.0
        %9357 = vmatprep.subr.mxu0 0.0
        %9358 = vmatpush1.msra.mxu0 0.0
        %9359 = vmatprep.subr.mxu0 0.0
        %9360 = vmatpush1.msra.mxu0 0.0
        %9361 = vmatprep.subr.mxu0 0.0
        %9362 = vmatpush1.msra.mxu0 0.0
        %9363 = vmatprep.subr.mxu0 0.0
        %9364 = vmatpush1.msra.mxu0 0.0
        %9365 = vmatprep.subr.mxu0 0.0
        %9366 = vmatpush1.msra.mxu0 0.0
        %9367 = vmatprep.subr.mxu0 0.0
        %9368 = vmatpush1.msra.mxu0 0.0
        %9369 = vmatprep.subr.mxu0 0.0
        %9370 = vmatpush1.msra.mxu0 0.0
        %9371 = vmatprep.subr.mxu0 0.0
        %9372 = vmatpush1.msra.mxu0 0.0
        %9373 = vmatprep.subr.mxu0 0.0
        %9374 = vmatpush1.msra.mxu0 0.0
        %9375 = vmatprep.subr.mxu0 %v9344
        %9376 = vmatpush1.msra.mxu0 %v9343
        %9377 = vmatprep.subr.mxu0 %v9340
        %9378 = vmatpush1.msra.mxu0 %v9339
        %9379 = vmatprep.subr.mxu0 %v9336
        %9380 = vmatpush1.msra.mxu0 %v9335
        %9381 = vmatprep.subr.mxu0 %v9332
        %9382 = vmatpush1.msra.mxu0 %v9331
        %9383 = vmatprep.subr.mxu0 0.0
        %9384 = vmatpush2.msra.mxu0 0.0
        %9385 = vmatprep.subr.mxu0 0.0
        %9386 = vmatpush2.msra.mxu0 0.0
        %9387 = vmatprep.subr.mxu0 0.0
        %9388 = vmatpush2.msra.mxu0 0.0
        %9389 = vmatprep.subr.mxu0 0.0
        %9390 = vmatpush2.msra.mxu0 0.0
        %9391 = vmatprep.subr.mxu0 0.0
        %9392 = vmatpush2.msra.mxu0 0.0
        %9393 = vmatprep.subr.mxu0 0.0
        %9394 = vmatpush2.msra.mxu0 0.0
        %9395 = vmatprep.subr.mxu0 0.0
        %9396 = vmatpush2.msra.mxu0 0.0
        %9397 = vmatprep.subr.mxu0 0.0
        %9398 = vmatpush2.msra.mxu0 0.0
        %9399 = vmatprep.subr.mxu0 0.0
        %9400 = vmatpush2.msra.mxu0 0.0
        %9401 = vmatprep.subr.mxu0 0.0
        %9402 = vmatpush2.msra.mxu0 0.0
        %9403 = vmatprep.subr.mxu0 0.0
        %9404 = vmatpush2.msra.mxu0 0.0
        %9405 = vmatprep.subr.mxu0 0.0
        %9406 = vmatpush2.msra.mxu0 0.0
        %9407 = vmatprep.subr.mxu0 0.0
        %9408 = vmatpush2.msra.mxu0 0.0
        %9409 = vmatprep.subr.mxu0 0.0
        %9410 = vmatpush2.msra.mxu0 0.0
        %9411 = vmatprep.subr.mxu0 0.0
        %9412 = vmatpush2.msra.mxu0 0.0
        %9413 = vmatprep.subr.mxu0 0.0
        %9414 = vmatpush2.msra.mxu0 0.0
        %9415 = vmatprep.mubr.f32.mxu0 0.0
        %9416 = vmatmul.mubr.f32.gmra.mxu0 %v9349
        %v9417 = vpop.f32.mrf.mxu0
        %v9418 = vadd.f32 0.0, %v9417
        %v9419 = vpop.f32.mrf.mxu0
        %v9420 = vadd.f32 0.0, %v9419
        %9421 = vdwg.mxu0
        %9422 = vmatprep.subr.mxu0 0.0
        %9423 = vmatpush1.msra.mxu0 0.0
        %9424 = vmatprep.subr.mxu0 0.0
        %9425 = vmatpush1.msra.mxu0 0.0
        %9426 = vmatprep.subr.mxu0 0.0
        %9427 = vmatpush1.msra.mxu0 0.0
        %9428 = vmatprep.subr.mxu0 0.0
        %9429 = vmatpush1.msra.mxu0 0.0
        %9430 = vmatprep.subr.mxu0 0.0
        %9431 = vmatpush1.msra.mxu0 0.0
        %9432 = vmatprep.subr.mxu0 0.0
        %9433 = vmatpush1.msra.mxu0 0.0
        %9434 = vmatprep.subr.mxu0 0.0
        %9435 = vmatpush1.msra.mxu0 0.0
        %9436 = vmatprep.subr.mxu0 0.0
        %9437 = vmatpush1.msra.mxu0 0.0
        %9438 = vmatprep.subr.mxu0 0.0
        %9439 = vmatpush1.msra.mxu0 0.0
        %9440 = vmatprep.subr.mxu0 0.0
        %9441 = vmatpush1.msra.mxu0 0.0
        %9442 = vmatprep.subr.mxu0 0.0
        %9443 = vmatpush1.msra.mxu0 0.0
        %9444 = vmatprep.subr.mxu0 0.0
        %9445 = vmatpush1.msra.mxu0 0.0
        %9446 = vmatprep.subr.mxu0 %v9346
        %9447 = vmatpush1.msra.mxu0 %v9345
        %9448 = vmatprep.subr.mxu0 %v9342
        %9449 = vmatpush1.msra.mxu0 %v9341
        %9450 = vmatprep.subr.mxu0 %v9338
        %9451 = vmatpush1.msra.mxu0 %v9337
        %9452 = vmatprep.subr.mxu0 %v9334
        %9453 = vmatpush1.msra.mxu0 %v9333
        %9454 = vmatprep.subr.mxu0 0.0
        %9455 = vmatpush2.msra.mxu0 0.0
        %9456 = vmatprep.subr.mxu0 0.0
        %9457 = vmatpush2.msra.mxu0 0.0
        %9458 = vmatprep.subr.mxu0 0.0
        %9459 = vmatpush2.msra.mxu0 0.0
        %9460 = vmatprep.subr.mxu0 0.0
        %9461 = vmatpush2.msra.mxu0 0.0
        %9462 = vmatprep.subr.mxu0 0.0
        %9463 = vmatpush2.msra.mxu0 0.0
        %9464 = vmatprep.subr.mxu0 0.0
        %9465 = vmatpush2.msra.mxu0 0.0
        %9466 = vmatprep.subr.mxu0 0.0
        %9467 = vmatpush2.msra.mxu0 0.0
        %9468 = vmatprep.subr.mxu0 0.0
        %9469 = vmatpush2.msra.mxu0 0.0
        %9470 = vmatprep.subr.mxu0 0.0
        %9471 = vmatpush2.msra.mxu0 0.0
        %9472 = vmatprep.subr.mxu0 0.0
        %9473 = vmatpush2.msra.mxu0 0.0
        %9474 = vmatprep.subr.mxu0 0.0
        %9475 = vmatpush2.msra.mxu0 0.0
        %9476 = vmatprep.subr.mxu0 0.0
        %9477 = vmatpush2.msra.mxu0 0.0
        %9478 = vmatprep.subr.mxu0 0.0
        %9479 = vmatpush2.msra.mxu0 0.0
        %9480 = vmatprep.subr.mxu0 0.0
        %9481 = vmatpush2.msra.mxu0 0.0
        %9482 = vmatprep.subr.mxu0 0.0
        %9483 = vmatpush2.msra.mxu0 0.0
        %9484 = vmatprep.subr.mxu0 0.0
        %9485 = vmatpush2.msra.mxu0 0.0
        %9486 = vmatprep.mubr.f32.mxu0 0.0
        %9487 = vmatmul.mubr.f32.gmra.mxu0 %v9349
        %v9488 = vpop.f32.mrf.mxu0
        %v9489 = vadd.f32 0.0, %v9488
        %v9490 = vpop.f32.mrf.mxu0
        %v9491 = vadd.f32 0.0, %v9490
        %9492 = vdwg.mxu0
        %v9493 = vadd.f32 %v9279, %v9418
        %v9494 = vadd.f32 %v9280, %v9420
        %v9495 = vadd.f32 %v9281, %v9489
        %v9496 = vadd.f32 %v9282, %v9491
        %v9497 = vlaneseq
        %v9498 = vshrl.u32 %v9497, 7
        %v9499 = vsub.s32 1, %v9498
        %v9500 = vrot.slane %v8644, %v9499
        %v9501 = vsel %vm1473, %v9500, 0
        %9503 = vmatprep.subr.mxu0 0.0
        %9504 = vmatpush1.msra.mxu0 0.0
        %9505 = vmatprep.subr.mxu0 0.0
        %9506 = vmatpush1.msra.mxu0 0.0
        %9507 = vmatprep.subr.mxu0 0.0
        %9508 = vmatpush1.msra.mxu0 0.0
        %9509 = vmatprep.subr.mxu0 0.0
        %9510 = vmatpush1.msra.mxu0 0.0
        %9511 = vmatprep.subr.mxu0 0.0
        %9512 = vmatpush1.msra.mxu0 0.0
        %9513 = vmatprep.subr.mxu0 0.0
        %9514 = vmatpush1.msra.mxu0 0.0
        %9515 = vmatprep.subr.mxu0 0.0
        %9516 = vmatpush1.msra.mxu0 0.0
        %9517 = vmatprep.subr.mxu0 0.0
        %9518 = vmatpush1.msra.mxu0 0.0
        %9519 = vmatprep.subr.mxu0 0.0
        %9520 = vmatpush1.msra.mxu0 0.0
        %9521 = vmatprep.subr.mxu0 0.0
        %9522 = vmatpush1.msra.mxu0 0.0
        %9523 = vmatprep.subr.mxu0 0.0
        %9524 = vmatpush1.msra.mxu0 0.0
        %9525 = vmatprep.subr.mxu0 0.0
        %9526 = vmatpush1.msra.mxu0 0.0
        %9527 = vmatprep.subr.mxu0 %v8625
        %9528 = vmatpush1.msra.mxu0 %v8624
        %9529 = vmatprep.subr.mxu0 %v8621
        %9530 = vmatpush1.msra.mxu0 %v8620
        %9531 = vmatprep.subr.mxu0 %v8617
        %9532 = vmatpush1.msra.mxu0 %v8616
        %9533 = vmatprep.subr.mxu0 %v8613
        %9534 = vmatpush1.msra.mxu0 %v8612
        %9535 = vmatprep.subr.mxu0 0.0
        %9536 = vmatpush2.msra.mxu0 0.0
        %9537 = vmatprep.subr.mxu0 0.0
        %9538 = vmatpush2.msra.mxu0 0.0
        %9539 = vmatprep.subr.mxu0 0.0
        %9540 = vmatpush2.msra.mxu0 0.0
        %9541 = vmatprep.subr.mxu0 0.0
        %9542 = vmatpush2.msra.mxu0 0.0
        %9543 = vmatprep.subr.mxu0 0.0
        %9544 = vmatpush2.msra.mxu0 0.0
        %9545 = vmatprep.subr.mxu0 0.0
        %9546 = vmatpush2.msra.mxu0 0.0
        %9547 = vmatprep.subr.mxu0 0.0
        %9548 = vmatpush2.msra.mxu0 0.0
        %9549 = vmatprep.subr.mxu0 0.0
        %9550 = vmatpush2.msra.mxu0 0.0
        %9551 = vmatprep.subr.mxu0 0.0
        %9552 = vmatpush2.msra.mxu0 0.0
        %9553 = vmatprep.subr.mxu0 0.0
        %9554 = vmatpush2.msra.mxu0 0.0
        %9555 = vmatprep.subr.mxu0 0.0
        %9556 = vmatpush2.msra.mxu0 0.0
        %9557 = vmatprep.subr.mxu0 0.0
        %9558 = vmatpush2.msra.mxu0 0.0
        %9559 = vmatprep.subr.mxu0 0.0
        %9560 = vmatpush2.msra.mxu0 0.0
        %9561 = vmatprep.subr.mxu0 0.0
        %9562 = vmatpush2.msra.mxu0 0.0
        %9563 = vmatprep.subr.mxu0 0.0
        %9564 = vmatpush2.msra.mxu0 0.0
        %9565 = vmatprep.subr.mxu0 0.0
        %9566 = vmatpush2.msra.mxu0 0.0
        %9567 = vmatprep.mubr.f32.mxu0 0.0
        %9568 = vmatmul.mubr.f32.gmra.mxu0 %v9501
        %v9569 = vpop.f32.mrf.mxu0
        %v9570 = vadd.f32 0.0, %v9569
        %v9571 = vpop.f32.mrf.mxu0
        %v9572 = vadd.f32 0.0, %v9571
        %9573 = vdwg.mxu0
        %9574 = vmatprep.subr.mxu0 0.0
        %9575 = vmatpush1.msra.mxu0 0.0
        %9576 = vmatprep.subr.mxu0 0.0
        %9577 = vmatpush1.msra.mxu0 0.0
        %9578 = vmatprep.subr.mxu0 0.0
        %9579 = vmatpush1.msra.mxu0 0.0
        %9580 = vmatprep.subr.mxu0 0.0
        %9581 = vmatpush1.msra.mxu0 0.0
        %9582 = vmatprep.subr.mxu0 0.0
        %9583 = vmatpush1.msra.mxu0 0.0
        %9584 = vmatprep.subr.mxu0 0.0
        %9585 = vmatpush1.msra.mxu0 0.0
        %9586 = vmatprep.subr.mxu0 0.0
        %9587 = vmatpush1.msra.mxu0 0.0
        %9588 = vmatprep.subr.mxu0 0.0
        %9589 = vmatpush1.msra.mxu0 0.0
        %9590 = vmatprep.subr.mxu0 0.0
        %9591 = vmatpush1.msra.mxu0 0.0
        %9592 = vmatprep.subr.mxu0 0.0
        %9593 = vmatpush1.msra.mxu0 0.0
        %9594 = vmatprep.subr.mxu0 0.0
        %9595 = vmatpush1.msra.mxu0 0.0
        %9596 = vmatprep.subr.mxu0 0.0
        %9597 = vmatpush1.msra.mxu0 0.0
        %9598 = vmatprep.subr.mxu0 %v8627
        %9599 = vmatpush1.msra.mxu0 %v8626
        %9600 = vmatprep.subr.mxu0 %v8623
        %9601 = vmatpush1.msra.mxu0 %v8622
        %9602 = vmatprep.subr.mxu0 %v8619
        %9603 = vmatpush1.msra.mxu0 %v8618
        %9604 = vmatprep.subr.mxu0 %v8615
        %9605 = vmatpush1.msra.mxu0 %v8614
        %9606 = vmatprep.subr.mxu0 0.0
        %9607 = vmatpush2.msra.mxu0 0.0
        %9608 = vmatprep.subr.mxu0 0.0
        %9609 = vmatpush2.msra.mxu0 0.0
        %9610 = vmatprep.subr.mxu0 0.0
        %9611 = vmatpush2.msra.mxu0 0.0
        %9612 = vmatprep.subr.mxu0 0.0
        %9613 = vmatpush2.msra.mxu0 0.0
        %9614 = vmatprep.subr.mxu0 0.0
        %9615 = vmatpush2.msra.mxu0 0.0
        %9616 = vmatprep.subr.mxu0 0.0
        %9617 = vmatpush2.msra.mxu0 0.0
        %9618 = vmatprep.subr.mxu0 0.0
        %9619 = vmatpush2.msra.mxu0 0.0
        %9620 = vmatprep.subr.mxu0 0.0
        %9621 = vmatpush2.msra.mxu0 0.0
        %9622 = vmatprep.subr.mxu0 0.0
        %9623 = vmatpush2.msra.mxu0 0.0
        %9624 = vmatprep.subr.mxu0 0.0
        %9625 = vmatpush2.msra.mxu0 0.0
        %9626 = vmatprep.subr.mxu0 0.0
        %9627 = vmatpush2.msra.mxu0 0.0
        %9628 = vmatprep.subr.mxu0 0.0
        %9629 = vmatpush2.msra.mxu0 0.0
        %9630 = vmatprep.subr.mxu0 0.0
        %9631 = vmatpush2.msra.mxu0 0.0
        %9632 = vmatprep.subr.mxu0 0.0
        %9633 = vmatpush2.msra.mxu0 0.0
        %9634 = vmatprep.subr.mxu0 0.0
        %9635 = vmatpush2.msra.mxu0 0.0
        %9636 = vmatprep.subr.mxu0 0.0
        %9637 = vmatpush2.msra.mxu0 0.0
        %9638 = vmatprep.mubr.f32.mxu0 0.0
        %9639 = vmatmul.mubr.f32.gmra.mxu0 %v9501
        %v9640 = vpop.f32.mrf.mxu0
        %v9641 = vadd.f32 0.0, %v9640
        %v9642 = vpop.f32.mrf.mxu0
        %v9643 = vadd.f32 0.0, %v9642
        %9644 = vdwg.mxu0
        %v9645 = vadd.f32 %v9493, %v9570
        %v9646 = vadd.f32 %v9494, %v9572
        %v9647 = vadd.f32 %v9495, %v9641
        %v9648 = vadd.f32 %v9496, %v9643
        %9649 = vrot.lane.b32.xlu0 %v8612, 127
        %v9650 = vpop.permute.xlu0 %9649
        %9651 = vrot.lane.b32.xlu0 %v8616, 127
        %v9652 = vpop.permute.xlu0 %9651
        %9653 = vrot.lane.b32.xlu0 %v8620, 127
        %v9654 = vpop.permute.xlu0 %9653
        %9655 = vrot.lane.b32.xlu0 %v8624, 127
        %v9656 = vpop.permute.xlu0 %9655
        %9657 = vrot.lane.b32.xlu0 %v8613, 127
        %v9658 = vpop.permute.xlu0 %9657
        %9659 = vrot.lane.b32.xlu0 %v8617, 127
        %v9660 = vpop.permute.xlu0 %9659
        %9661 = vrot.lane.b32.xlu0 %v8621, 127
        %v9662 = vpop.permute.xlu0 %9661
        %9663 = vrot.lane.b32.xlu0 %v8625, 127
        %v9664 = vpop.permute.xlu0 %9663
        %9665 = vrot.lane.b32.xlu0 %v8614, 127
        %v9666 = vpop.permute.xlu0 %9665
        %9667 = vrot.lane.b32.xlu0 %v8618, 127
        %v9668 = vpop.permute.xlu0 %9667
        %9669 = vrot.lane.b32.xlu0 %v8622, 127
        %v9670 = vpop.permute.xlu0 %9669
        %9671 = vrot.lane.b32.xlu0 %v8626, 127
        %v9672 = vpop.permute.xlu0 %9671
        %9673 = vrot.lane.b32.xlu0 %v8615, 127
        %v9674 = vpop.permute.xlu0 %9673
        %9675 = vrot.lane.b32.xlu0 %v8619, 127
        %v9676 = vpop.permute.xlu0 %9675
        %9677 = vrot.lane.b32.xlu0 %v8623, 127
        %v9678 = vpop.permute.xlu0 %9677
        %9679 = vrot.lane.b32.xlu0 %v8627, 127
        %v9680 = vpop.permute.xlu0 %9679
        %v9681 = vsel %vm811, %v9666, %v9674
        %v9682 = vsel %vm811, %v9668, %v9676
        %v9683 = vsel %vm811, %v9670, %v9678
        %v9684 = vsel %vm811, %v9672, %v9680
        %v9685 = vsel %vm811, %v9658, %v9666
        %v9686 = vsel %vm811, %v9660, %v9668
        %v9687 = vsel %vm811, %v9662, %v9670
        %v9688 = vsel %vm811, %v9664, %v9672
        %v9689 = vsel %vm811, %v9650, %v9658
        %v9690 = vsel %vm811, %v9652, %v9660
        %v9691 = vsel %vm811, %v9654, %v9662
        %v9692 = vsel %vm811, %v9656, %v9664
        %v9693 = vsel %vm811, %v9674, %v9650
        %v9694 = vsel %vm811, %v9676, %v9652
        %v9695 = vsel %vm811, %v9678, %v9654
        %v9696 = vsel %vm811, %v9680, %v9656
        %v9697 = vmul.f32 %v9689, %v820
        %v9698 = vmul.f32 %v9685, %v824
        %v9699 = vmul.f32 %v9681, %v828
        %v9700 = vmul.f32 %v9693, %v832
        %v9701 = vmul.f32 %v9690, %v820
        %v9702 = vmul.f32 %v9686, %v824
        %v9703 = vmul.f32 %v9682, %v828
        %v9704 = vmul.f32 %v9694, %v832
        %v9705 = vmul.f32 %v9691, %v820
        %v9706 = vmul.f32 %v9687, %v824
        %v9707 = vmul.f32 %v9683, %v828
        %v9708 = vmul.f32 %v9695, %v832
        %v9709 = vmul.f32 %v9692, %v820
        %v9710 = vmul.f32 %v9688, %v824
        %v9711 = vmul.f32 %v9684, %v828
        %v9712 = vmul.f32 %v9696, %v832
        %9713 = vrot.lane.b32.xlu0 %v9500, 96
        %v9714 = vpop.permute.xlu0 %9713
        %v9715 = vsel %vm1473, %v9714, 0
        %9717 = vmatprep.subr.mxu0 0.0
        %9718 = vmatpush1.msra.mxu0 0.0
        %9719 = vmatprep.subr.mxu0 0.0
        %9720 = vmatpush1.msra.mxu0 0.0
        %9721 = vmatprep.subr.mxu0 0.0
        %9722 = vmatpush1.msra.mxu0 0.0
        %9723 = vmatprep.subr.mxu0 0.0
        %9724 = vmatpush1.msra.mxu0 0.0
        %9725 = vmatprep.subr.mxu0 0.0
        %9726 = vmatpush1.msra.mxu0 0.0
        %9727 = vmatprep.subr.mxu0 0.0
        %9728 = vmatpush1.msra.mxu0 0.0
        %9729 = vmatprep.subr.mxu0 0.0
        %9730 = vmatpush1.msra.mxu0 0.0
        %9731 = vmatprep.subr.mxu0 0.0
        %9732 = vmatpush1.msra.mxu0 0.0
        %9733 = vmatprep.subr.mxu0 0.0
        %9734 = vmatpush1.msra.mxu0 0.0
        %9735 = vmatprep.subr.mxu0 0.0
        %9736 = vmatpush1.msra.mxu0 0.0
        %9737 = vmatprep.subr.mxu0 0.0
        %9738 = vmatpush1.msra.mxu0 0.0
        %9739 = vmatprep.subr.mxu0 0.0
        %9740 = vmatpush1.msra.mxu0 0.0
        %9741 = vmatprep.subr.mxu0 %v9710
        %9742 = vmatpush1.msra.mxu0 %v9709
        %9743 = vmatprep.subr.mxu0 %v9706
        %9744 = vmatpush1.msra.mxu0 %v9705
        %9745 = vmatprep.subr.mxu0 %v9702
        %9746 = vmatpush1.msra.mxu0 %v9701
        %9747 = vmatprep.subr.mxu0 %v9698
        %9748 = vmatpush1.msra.mxu0 %v9697
        %9749 = vmatprep.subr.mxu0 0.0
        %9750 = vmatpush2.msra.mxu0 0.0
        %9751 = vmatprep.subr.mxu0 0.0
        %9752 = vmatpush2.msra.mxu0 0.0
        %9753 = vmatprep.subr.mxu0 0.0
        %9754 = vmatpush2.msra.mxu0 0.0
        %9755 = vmatprep.subr.mxu0 0.0
        %9756 = vmatpush2.msra.mxu0 0.0
        %9757 = vmatprep.subr.mxu0 0.0
        %9758 = vmatpush2.msra.mxu0 0.0
        %9759 = vmatprep.subr.mxu0 0.0
        %9760 = vmatpush2.msra.mxu0 0.0
        %9761 = vmatprep.subr.mxu0 0.0
        %9762 = vmatpush2.msra.mxu0 0.0
        %9763 = vmatprep.subr.mxu0 0.0
        %9764 = vmatpush2.msra.mxu0 0.0
        %9765 = vmatprep.subr.mxu0 0.0
        %9766 = vmatpush2.msra.mxu0 0.0
        %9767 = vmatprep.subr.mxu0 0.0
        %9768 = vmatpush2.msra.mxu0 0.0
        %9769 = vmatprep.subr.mxu0 0.0
        %9770 = vmatpush2.msra.mxu0 0.0
        %9771 = vmatprep.subr.mxu0 0.0
        %9772 = vmatpush2.msra.mxu0 0.0
        %9773 = vmatprep.subr.mxu0 0.0
        %9774 = vmatpush2.msra.mxu0 0.0
        %9775 = vmatprep.subr.mxu0 0.0
        %9776 = vmatpush2.msra.mxu0 0.0
        %9777 = vmatprep.subr.mxu0 0.0
        %9778 = vmatpush2.msra.mxu0 0.0
        %9779 = vmatprep.subr.mxu0 0.0
        %9780 = vmatpush2.msra.mxu0 0.0
        %9781 = vmatprep.mubr.f32.mxu0 0.0
        %9782 = vmatmul.mubr.f32.gmra.mxu0 %v9715
        %v9783 = vpop.f32.mrf.mxu0
        %v9784 = vadd.f32 0.0, %v9783
        %v9785 = vpop.f32.mrf.mxu0
        %v9786 = vadd.f32 0.0, %v9785
        %9787 = vdwg.mxu0
        %9788 = vmatprep.subr.mxu0 0.0
        %9789 = vmatpush1.msra.mxu0 0.0
        %9790 = vmatprep.subr.mxu0 0.0
        %9791 = vmatpush1.msra.mxu0 0.0
        %9792 = vmatprep.subr.mxu0 0.0
        %9793 = vmatpush1.msra.mxu0 0.0
        %9794 = vmatprep.subr.mxu0 0.0
        %9795 = vmatpush1.msra.mxu0 0.0
        %9796 = vmatprep.subr.mxu0 0.0
        %9797 = vmatpush1.msra.mxu0 0.0
        %9798 = vmatprep.subr.mxu0 0.0
        %9799 = vmatpush1.msra.mxu0 0.0
        %9800 = vmatprep.subr.mxu0 0.0
        %9801 = vmatpush1.msra.mxu0 0.0
        %9802 = vmatprep.subr.mxu0 0.0
        %9803 = vmatpush1.msra.mxu0 0.0
        %9804 = vmatprep.subr.mxu0 0.0
        %9805 = vmatpush1.msra.mxu0 0.0
        %9806 = vmatprep.subr.mxu0 0.0
        %9807 = vmatpush1.msra.mxu0 0.0
        %9808 = vmatprep.subr.mxu0 0.0
        %9809 = vmatpush1.msra.mxu0 0.0
        %9810 = vmatprep.subr.mxu0 0.0
        %9811 = vmatpush1.msra.mxu0 0.0
        %9812 = vmatprep.subr.mxu0 %v9712
        %9813 = vmatpush1.msra.mxu0 %v9711
        %9814 = vmatprep.subr.mxu0 %v9708
        %9815 = vmatpush1.msra.mxu0 %v9707
        %9816 = vmatprep.subr.mxu0 %v9704
        %9817 = vmatpush1.msra.mxu0 %v9703
        %9818 = vmatprep.subr.mxu0 %v9700
        %9819 = vmatpush1.msra.mxu0 %v9699
        %9820 = vmatprep.subr.mxu0 0.0
        %9821 = vmatpush2.msra.mxu0 0.0
        %9822 = vmatprep.subr.mxu0 0.0
        %9823 = vmatpush2.msra.mxu0 0.0
        %9824 = vmatprep.subr.mxu0 0.0
        %9825 = vmatpush2.msra.mxu0 0.0
        %9826 = vmatprep.subr.mxu0 0.0
        %9827 = vmatpush2.msra.mxu0 0.0
        %9828 = vmatprep.subr.mxu0 0.0
        %9829 = vmatpush2.msra.mxu0 0.0
        %9830 = vmatprep.subr.mxu0 0.0
        %9831 = vmatpush2.msra.mxu0 0.0
        %9832 = vmatprep.subr.mxu0 0.0
        %9833 = vmatpush2.msra.mxu0 0.0
        %9834 = vmatprep.subr.mxu0 0.0
        %9835 = vmatpush2.msra.mxu0 0.0
        %9836 = vmatprep.subr.mxu0 0.0
        %9837 = vmatpush2.msra.mxu0 0.0
        %9838 = vmatprep.subr.mxu0 0.0
        %9839 = vmatpush2.msra.mxu0 0.0
        %9840 = vmatprep.subr.mxu0 0.0
        %9841 = vmatpush2.msra.mxu0 0.0
        %9842 = vmatprep.subr.mxu0 0.0
        %9843 = vmatpush2.msra.mxu0 0.0
        %9844 = vmatprep.subr.mxu0 0.0
        %9845 = vmatpush2.msra.mxu0 0.0
        %9846 = vmatprep.subr.mxu0 0.0
        %9847 = vmatpush2.msra.mxu0 0.0
        %9848 = vmatprep.subr.mxu0 0.0
        %9849 = vmatpush2.msra.mxu0 0.0
        %9850 = vmatprep.subr.mxu0 0.0
        %9851 = vmatpush2.msra.mxu0 0.0
        %9852 = vmatprep.mubr.f32.mxu0 0.0
        %9853 = vmatmul.mubr.f32.gmra.mxu0 %v9715
        %v9854 = vpop.f32.mrf.mxu0
        %v9855 = vadd.f32 0.0, %v9854
        %v9856 = vpop.f32.mrf.mxu0
        %v9857 = vadd.f32 0.0, %v9856
        %9858 = vdwg.mxu0
        %v9859 = vadd.f32 %v9645, %v9784
        %v9860 = vadd.f32 %v9646, %v9786
        %v9861 = vadd.f32 %v9647, %v9855
        %v9862 = vadd.f32 %v9648, %v9857
        %9863 = vrot.lane.b32.xlu0 %v8612, 113
        %v9864 = vpop.permute.xlu0 %9863
        %9865 = vrot.lane.b32.xlu0 %v8616, 113
        %v9866 = vpop.permute.xlu0 %9865
        %9867 = vrot.lane.b32.xlu0 %v8620, 113
        %v9868 = vpop.permute.xlu0 %9867
        %9869 = vrot.lane.b32.xlu0 %v8624, 113
        %v9870 = vpop.permute.xlu0 %9869
        %9871 = vrot.lane.b32.xlu0 %v8613, 113
        %v9872 = vpop.permute.xlu0 %9871
        %9873 = vrot.lane.b32.xlu0 %v8617, 113
        %v9874 = vpop.permute.xlu0 %9873
        %9875 = vrot.lane.b32.xlu0 %v8621, 113
        %v9876 = vpop.permute.xlu0 %9875
        %9877 = vrot.lane.b32.xlu0 %v8625, 113
        %v9878 = vpop.permute.xlu0 %9877
        %9879 = vrot.lane.b32.xlu0 %v8614, 113
        %v9880 = vpop.permute.xlu0 %9879
        %9881 = vrot.lane.b32.xlu0 %v8618, 113
        %v9882 = vpop.permute.xlu0 %9881
        %9883 = vrot.lane.b32.xlu0 %v8622, 113
        %v9884 = vpop.permute.xlu0 %9883
        %9885 = vrot.lane.b32.xlu0 %v8626, 113
        %v9886 = vpop.permute.xlu0 %9885
        %9887 = vrot.lane.b32.xlu0 %v8615, 113
        %v9888 = vpop.permute.xlu0 %9887
        %9889 = vrot.lane.b32.xlu0 %v8619, 113
        %v9890 = vpop.permute.xlu0 %9889
        %9891 = vrot.lane.b32.xlu0 %v8623, 113
        %v9892 = vpop.permute.xlu0 %9891
        %9893 = vrot.lane.b32.xlu0 %v8627, 113
        %v9894 = vpop.permute.xlu0 %9893
        %v9895 = vsel %vm849, %v9880, %v9888
        %v9896 = vsel %vm849, %v9882, %v9890
        %v9897 = vsel %vm849, %v9884, %v9892
        %v9898 = vsel %vm849, %v9886, %v9894
        %v9899 = vsel %vm849, %v9872, %v9880
        %v9900 = vsel %vm849, %v9874, %v9882
        %v9901 = vsel %vm849, %v9876, %v9884
        %v9902 = vsel %vm849, %v9878, %v9886
        %v9903 = vsel %vm849, %v9864, %v9872
        %v9904 = vsel %vm849, %v9866, %v9874
        %v9905 = vsel %vm849, %v9868, %v9876
        %v9906 = vsel %vm849, %v9870, %v9878
        %v9907 = vsel %vm849, %v9888, %v9864
        %v9908 = vsel %vm849, %v9890, %v9866
        %v9909 = vsel %vm849, %v9892, %v9868
        %v9910 = vsel %vm849, %v9894, %v9870
        %v9911 = vmul.f32 %v9903, %v858
        %v9912 = vmul.f32 %v9899, %v862
        %v9913 = vmul.f32 %v9895, %v866
        %v9914 = vmul.f32 %v9907, %v870
        %v9915 = vmul.f32 %v9904, %v858
        %v9916 = vmul.f32 %v9900, %v862
        %v9917 = vmul.f32 %v9896, %v866
        %v9918 = vmul.f32 %v9908, %v870
        %v9919 = vmul.f32 %v9905, %v858
        %v9920 = vmul.f32 %v9901, %v862
        %v9921 = vmul.f32 %v9897, %v866
        %v9922 = vmul.f32 %v9909, %v870
        %v9923 = vmul.f32 %v9906, %v858
        %v9924 = vmul.f32 %v9902, %v862
        %v9925 = vmul.f32 %v9898, %v866
        %v9926 = vmul.f32 %v9910, %v870
        %9927 = vrot.lane.b32.xlu0 %v9500, 64
        %v9928 = vpop.permute.xlu0 %9927
        %v9929 = vsel %vm1473, %v9928, 0
        %9931 = vmatprep.subr.mxu0 0.0
        %9932 = vmatpush1.msra.mxu0 0.0
        %9933 = vmatprep.subr.mxu0 0.0
        %9934 = vmatpush1.msra.mxu0 0.0
        %9935 = vmatprep.subr.mxu0 0.0
        %9936 = vmatpush1.msra.mxu0 0.0
        %9937 = vmatprep.subr.mxu0 0.0
        %9938 = vmatpush1.msra.mxu0 0.0
        %9939 = vmatprep.subr.mxu0 0.0
        %9940 = vmatpush1.msra.mxu0 0.0
        %9941 = vmatprep.subr.mxu0 0.0
        %9942 = vmatpush1.msra.mxu0 0.0
        %9943 = vmatprep.subr.mxu0 0.0
        %9944 = vmatpush1.msra.mxu0 0.0
        %9945 = vmatprep.subr.mxu0 0.0
        %9946 = vmatpush1.msra.mxu0 0.0
        %9947 = vmatprep.subr.mxu0 0.0
        %9948 = vmatpush1.msra.mxu0 0.0
        %9949 = vmatprep.subr.mxu0 0.0
        %9950 = vmatpush1.msra.mxu0 0.0
        %9951 = vmatprep.subr.mxu0 0.0
        %9952 = vmatpush1.msra.mxu0 0.0
        %9953 = vmatprep.subr.mxu0 0.0
        %9954 = vmatpush1.msra.mxu0 0.0
        %9955 = vmatprep.subr.mxu0 %v9924
        %9956 = vmatpush1.msra.mxu0 %v9923
        %9957 = vmatprep.subr.mxu0 %v9920
        %9958 = vmatpush1.msra.mxu0 %v9919
        %9959 = vmatprep.subr.mxu0 %v9916
        %9960 = vmatpush1.msra.mxu0 %v9915
        %9961 = vmatprep.subr.mxu0 %v9912
        %9962 = vmatpush1.msra.mxu0 %v9911
        %9963 = vmatprep.subr.mxu0 0.0
        %9964 = vmatpush2.msra.mxu0 0.0
        %9965 = vmatprep.subr.mxu0 0.0
        %9966 = vmatpush2.msra.mxu0 0.0
        %9967 = vmatprep.subr.mxu0 0.0
        %9968 = vmatpush2.msra.mxu0 0.0
        %9969 = vmatprep.subr.mxu0 0.0
        %9970 = vmatpush2.msra.mxu0 0.0
        %9971 = vmatprep.subr.mxu0 0.0
        %9972 = vmatpush2.msra.mxu0 0.0
        %9973 = vmatprep.subr.mxu0 0.0
        %9974 = vmatpush2.msra.mxu0 0.0
        %9975 = vmatprep.subr.mxu0 0.0
        %9976 = vmatpush2.msra.mxu0 0.0
        %9977 = vmatprep.subr.mxu0 0.0
        %9978 = vmatpush2.msra.mxu0 0.0
        %9979 = vmatprep.subr.mxu0 0.0
        %9980 = vmatpush2.msra.mxu0 0.0
        %9981 = vmatprep.subr.mxu0 0.0
        %9982 = vmatpush2.msra.mxu0 0.0
        %9983 = vmatprep.subr.mxu0 0.0
        %9984 = vmatpush2.msra.mxu0 0.0
        %9985 = vmatprep.subr.mxu0 0.0
        %9986 = vmatpush2.msra.mxu0 0.0
        %9987 = vmatprep.subr.mxu0 0.0
        %9988 = vmatpush2.msra.mxu0 0.0
        %9989 = vmatprep.subr.mxu0 0.0
        %9990 = vmatpush2.msra.mxu0 0.0
        %9991 = vmatprep.subr.mxu0 0.0
        %9992 = vmatpush2.msra.mxu0 0.0
        %9993 = vmatprep.subr.mxu0 0.0
        %9994 = vmatpush2.msra.mxu0 0.0
        %9995 = vmatprep.mubr.f32.mxu0 0.0
        %9996 = vmatmul.mubr.f32.gmra.mxu0 %v9929
        %v9997 = vpop.f32.mrf.mxu0
        %v9998 = vadd.f32 0.0, %v9997
        %v9999 = vpop.f32.mrf.mxu0
        %v10000 = vadd.f32 0.0, %v9999
        %10001 = vdwg.mxu0
        %10002 = vmatprep.subr.mxu0 0.0
        %10003 = vmatpush1.msra.mxu0 0.0
        %10004 = vmatprep.subr.mxu0 0.0
        %10005 = vmatpush1.msra.mxu0 0.0
        %10006 = vmatprep.subr.mxu0 0.0
        %10007 = vmatpush1.msra.mxu0 0.0
        %10008 = vmatprep.subr.mxu0 0.0
        %10009 = vmatpush1.msra.mxu0 0.0
        %10010 = vmatprep.subr.mxu0 0.0
        %10011 = vmatpush1.msra.mxu0 0.0
        %10012 = vmatprep.subr.mxu0 0.0
        %10013 = vmatpush1.msra.mxu0 0.0
        %10014 = vmatprep.subr.mxu0 0.0
        %10015 = vmatpush1.msra.mxu0 0.0
        %10016 = vmatprep.subr.mxu0 0.0
        %10017 = vmatpush1.msra.mxu0 0.0
        %10018 = vmatprep.subr.mxu0 0.0
        %10019 = vmatpush1.msra.mxu0 0.0
        %10020 = vmatprep.subr.mxu0 0.0
        %10021 = vmatpush1.msra.mxu0 0.0
        %10022 = vmatprep.subr.mxu0 0.0
        %10023 = vmatpush1.msra.mxu0 0.0
        %10024 = vmatprep.subr.mxu0 0.0
        %10025 = vmatpush1.msra.mxu0 0.0
        %10026 = vmatprep.subr.mxu0 %v9926
        %10027 = vmatpush1.msra.mxu0 %v9925
        %10028 = vmatprep.subr.mxu0 %v9922
        %10029 = vmatpush1.msra.mxu0 %v9921
        %10030 = vmatprep.subr.mxu0 %v9918
        %10031 = vmatpush1.msra.mxu0 %v9917
        %10032 = vmatprep.subr.mxu0 %v9914
        %10033 = vmatpush1.msra.mxu0 %v9913
        %10034 = vmatprep.subr.mxu0 0.0
        %10035 = vmatpush2.msra.mxu0 0.0
        %10036 = vmatprep.subr.mxu0 0.0
        %10037 = vmatpush2.msra.mxu0 0.0
        %10038 = vmatprep.subr.mxu0 0.0
        %10039 = vmatpush2.msra.mxu0 0.0
        %10040 = vmatprep.subr.mxu0 0.0
        %10041 = vmatpush2.msra.mxu0 0.0
        %10042 = vmatprep.subr.mxu0 0.0
        %10043 = vmatpush2.msra.mxu0 0.0
        %10044 = vmatprep.subr.mxu0 0.0
        %10045 = vmatpush2.msra.mxu0 0.0
        %10046 = vmatprep.subr.mxu0 0.0
        %10047 = vmatpush2.msra.mxu0 0.0
        %10048 = vmatprep.subr.mxu0 0.0
        %10049 = vmatpush2.msra.mxu0 0.0
        %10050 = vmatprep.subr.mxu0 0.0
        %10051 = vmatpush2.msra.mxu0 0.0
        %10052 = vmatprep.subr.mxu0 0.0
        %10053 = vmatpush2.msra.mxu0 0.0
        %10054 = vmatprep.subr.mxu0 0.0
        %10055 = vmatpush2.msra.mxu0 0.0
        %10056 = vmatprep.subr.mxu0 0.0
        %10057 = vmatpush2.msra.mxu0 0.0
        %10058 = vmatprep.subr.mxu0 0.0
        %10059 = vmatpush2.msra.mxu0 0.0
        %10060 = vmatprep.subr.mxu0 0.0
        %10061 = vmatpush2.msra.mxu0 0.0
        %10062 = vmatprep.subr.mxu0 0.0
        %10063 = vmatpush2.msra.mxu0 0.0
        %10064 = vmatprep.subr.mxu0 0.0
        %10065 = vmatpush2.msra.mxu0 0.0
        %10066 = vmatprep.mubr.f32.mxu0 0.0
        %10067 = vmatmul.mubr.f32.gmra.mxu0 %v9929
        %v10068 = vpop.f32.mrf.mxu0
        %v10069 = vadd.f32 0.0, %v10068
        %v10070 = vpop.f32.mrf.mxu0
        %v10071 = vadd.f32 0.0, %v10070
        %10072 = vdwg.mxu0
        %v10073 = vadd.f32 %v9859, %v9998
        %v10074 = vadd.f32 %v9860, %v10000
        %v10075 = vadd.f32 %v9861, %v10069
        %v10076 = vadd.f32 %v9862, %v10071
        %10077 = vrot.lane.b32.xlu0 %v8612, 112
        %v10078 = vpop.permute.xlu0 %10077
        %10079 = vrot.lane.b32.xlu0 %v8616, 112
        %v10080 = vpop.permute.xlu0 %10079
        %10081 = vrot.lane.b32.xlu0 %v8620, 112
        %v10082 = vpop.permute.xlu0 %10081
        %10083 = vrot.lane.b32.xlu0 %v8624, 112
        %v10084 = vpop.permute.xlu0 %10083
        %10085 = vrot.lane.b32.xlu0 %v8613, 112
        %v10086 = vpop.permute.xlu0 %10085
        %10087 = vrot.lane.b32.xlu0 %v8617, 112
        %v10088 = vpop.permute.xlu0 %10087
        %10089 = vrot.lane.b32.xlu0 %v8621, 112
        %v10090 = vpop.permute.xlu0 %10089
        %10091 = vrot.lane.b32.xlu0 %v8625, 112
        %v10092 = vpop.permute.xlu0 %10091
        %10093 = vrot.lane.b32.xlu0 %v8614, 112
        %v10094 = vpop.permute.xlu0 %10093
        %10095 = vrot.lane.b32.xlu0 %v8618, 112
        %v10096 = vpop.permute.xlu0 %10095
        %10097 = vrot.lane.b32.xlu0 %v8622, 112
        %v10098 = vpop.permute.xlu0 %10097
        %10099 = vrot.lane.b32.xlu0 %v8626, 112
        %v10100 = vpop.permute.xlu0 %10099
        %10101 = vrot.lane.b32.xlu0 %v8615, 112
        %v10102 = vpop.permute.xlu0 %10101
        %10103 = vrot.lane.b32.xlu0 %v8619, 112
        %v10104 = vpop.permute.xlu0 %10103
        %10105 = vrot.lane.b32.xlu0 %v8623, 112
        %v10106 = vpop.permute.xlu0 %10105
        %10107 = vrot.lane.b32.xlu0 %v8627, 112
        %v10108 = vpop.permute.xlu0 %10107
        %v10109 = vsel %vm887, %v10094, %v10102
        %v10110 = vsel %vm887, %v10096, %v10104
        %v10111 = vsel %vm887, %v10098, %v10106
        %v10112 = vsel %vm887, %v10100, %v10108
        %v10113 = vsel %vm887, %v10086, %v10094
        %v10114 = vsel %vm887, %v10088, %v10096
        %v10115 = vsel %vm887, %v10090, %v10098
        %v10116 = vsel %vm887, %v10092, %v10100
        %v10117 = vsel %vm887, %v10078, %v10086
        %v10118 = vsel %vm887, %v10080, %v10088
        %v10119 = vsel %vm887, %v10082, %v10090
        %v10120 = vsel %vm887, %v10084, %v10092
        %v10121 = vsel %vm887, %v10102, %v10078
        %v10122 = vsel %vm887, %v10104, %v10080
        %v10123 = vsel %vm887, %v10106, %v10082
        %v10124 = vsel %vm887, %v10108, %v10084
        %v10125 = vmul.f32 %v10117, %v896
        %v10126 = vmul.f32 %v10113, %v900
        %v10127 = vmul.f32 %v10109, %v904
        %v10128 = vmul.f32 %v10121, %v908
        %v10129 = vmul.f32 %v10118, %v896
        %v10130 = vmul.f32 %v10114, %v900
        %v10131 = vmul.f32 %v10110, %v904
        %v10132 = vmul.f32 %v10122, %v908
        %v10133 = vmul.f32 %v10119, %v896
        %v10134 = vmul.f32 %v10115, %v900
        %v10135 = vmul.f32 %v10111, %v904
        %v10136 = vmul.f32 %v10123, %v908
        %v10137 = vmul.f32 %v10120, %v896
        %v10138 = vmul.f32 %v10116, %v900
        %v10139 = vmul.f32 %v10112, %v904
        %v10140 = vmul.f32 %v10124, %v908
        %10141 = vrot.lane.b32.xlu0 %v9500, 32
        %v10142 = vpop.permute.xlu0 %10141
        %v10143 = vsel %vm1473, %v10142, 0
        %10145 = vmatprep.subr.mxu0 0.0
        %10146 = vmatpush1.msra.mxu0 0.0
        %10147 = vmatprep.subr.mxu0 0.0
        %10148 = vmatpush1.msra.mxu0 0.0
        %10149 = vmatprep.subr.mxu0 0.0
        %10150 = vmatpush1.msra.mxu0 0.0
        %10151 = vmatprep.subr.mxu0 0.0
        %10152 = vmatpush1.msra.mxu0 0.0
        %10153 = vmatprep.subr.mxu0 0.0
        %10154 = vmatpush1.msra.mxu0 0.0
        %10155 = vmatprep.subr.mxu0 0.0
        %10156 = vmatpush1.msra.mxu0 0.0
        %10157 = vmatprep.subr.mxu0 0.0
        %10158 = vmatpush1.msra.mxu0 0.0
        %10159 = vmatprep.subr.mxu0 0.0
        %10160 = vmatpush1.msra.mxu0 0.0
        %10161 = vmatprep.subr.mxu0 0.0
        %10162 = vmatpush1.msra.mxu0 0.0
        %10163 = vmatprep.subr.mxu0 0.0
        %10164 = vmatpush1.msra.mxu0 0.0
        %10165 = vmatprep.subr.mxu0 0.0
        %10166 = vmatpush1.msra.mxu0 0.0
        %10167 = vmatprep.subr.mxu0 0.0
        %10168 = vmatpush1.msra.mxu0 0.0
        %10169 = vmatprep.subr.mxu0 %v10138
        %10170 = vmatpush1.msra.mxu0 %v10137
        %10171 = vmatprep.subr.mxu0 %v10134
        %10172 = vmatpush1.msra.mxu0 %v10133
        %10173 = vmatprep.subr.mxu0 %v10130
        %10174 = vmatpush1.msra.mxu0 %v10129
        %10175 = vmatprep.subr.mxu0 %v10126
        %10176 = vmatpush1.msra.mxu0 %v10125
        %10177 = vmatprep.subr.mxu0 0.0
        %10178 = vmatpush2.msra.mxu0 0.0
        %10179 = vmatprep.subr.mxu0 0.0
        %10180 = vmatpush2.msra.mxu0 0.0
        %10181 = vmatprep.subr.mxu0 0.0
        %10182 = vmatpush2.msra.mxu0 0.0
        %10183 = vmatprep.subr.mxu0 0.0
        %10184 = vmatpush2.msra.mxu0 0.0
        %10185 = vmatprep.subr.mxu0 0.0
        %10186 = vmatpush2.msra.mxu0 0.0
        %10187 = vmatprep.subr.mxu0 0.0
        %10188 = vmatpush2.msra.mxu0 0.0
        %10189 = vmatprep.subr.mxu0 0.0
        %10190 = vmatpush2.msra.mxu0 0.0
        %10191 = vmatprep.subr.mxu0 0.0
        %10192 = vmatpush2.msra.mxu0 0.0
        %10193 = vmatprep.subr.mxu0 0.0
        %10194 = vmatpush2.msra.mxu0 0.0
        %10195 = vmatprep.subr.mxu0 0.0
        %10196 = vmatpush2.msra.mxu0 0.0
        %10197 = vmatprep.subr.mxu0 0.0
        %10198 = vmatpush2.msra.mxu0 0.0
        %10199 = vmatprep.subr.mxu0 0.0
        %10200 = vmatpush2.msra.mxu0 0.0
        %10201 = vmatprep.subr.mxu0 0.0
        %10202 = vmatpush2.msra.mxu0 0.0
        %10203 = vmatprep.subr.mxu0 0.0
        %10204 = vmatpush2.msra.mxu0 0.0
        %10205 = vmatprep.subr.mxu0 0.0
        %10206 = vmatpush2.msra.mxu0 0.0
        %10207 = vmatprep.subr.mxu0 0.0
        %10208 = vmatpush2.msra.mxu0 0.0
        %10209 = vmatprep.mubr.f32.mxu0 0.0
        %10210 = vmatmul.mubr.f32.gmra.mxu0 %v10143
        %v10211 = vpop.f32.mrf.mxu0
        %v10212 = vadd.f32 0.0, %v10211
        %v10213 = vpop.f32.mrf.mxu0
        %v10214 = vadd.f32 0.0, %v10213
        %10215 = vdwg.mxu0
        %10216 = vmatprep.subr.mxu0 0.0
        %10217 = vmatpush1.msra.mxu0 0.0
        %10218 = vmatprep.subr.mxu0 0.0
        %10219 = vmatpush1.msra.mxu0 0.0
        %10220 = vmatprep.subr.mxu0 0.0
        %10221 = vmatpush1.msra.mxu0 0.0
        %10222 = vmatprep.subr.mxu0 0.0
        %10223 = vmatpush1.msra.mxu0 0.0
        %10224 = vmatprep.subr.mxu0 0.0
        %10225 = vmatpush1.msra.mxu0 0.0
        %10226 = vmatprep.subr.mxu0 0.0
        %10227 = vmatpush1.msra.mxu0 0.0
        %10228 = vmatprep.subr.mxu0 0.0
        %10229 = vmatpush1.msra.mxu0 0.0
        %10230 = vmatprep.subr.mxu0 0.0
        %10231 = vmatpush1.msra.mxu0 0.0
        %10232 = vmatprep.subr.mxu0 0.0
        %10233 = vmatpush1.msra.mxu0 0.0
        %10234 = vmatprep.subr.mxu0 0.0
        %10235 = vmatpush1.msra.mxu0 0.0
        %10236 = vmatprep.subr.mxu0 0.0
        %10237 = vmatpush1.msra.mxu0 0.0
        %10238 = vmatprep.subr.mxu0 0.0
        %10239 = vmatpush1.msra.mxu0 0.0
        %10240 = vmatprep.subr.mxu0 %v10140
        %10241 = vmatpush1.msra.mxu0 %v10139
        %10242 = vmatprep.subr.mxu0 %v10136
        %10243 = vmatpush1.msra.mxu0 %v10135
        %10244 = vmatprep.subr.mxu0 %v10132
        %10245 = vmatpush1.msra.mxu0 %v10131
        %10246 = vmatprep.subr.mxu0 %v10128
        %10247 = vmatpush1.msra.mxu0 %v10127
        %10248 = vmatprep.subr.mxu0 0.0
        %10249 = vmatpush2.msra.mxu0 0.0
        %10250 = vmatprep.subr.mxu0 0.0
        %10251 = vmatpush2.msra.mxu0 0.0
        %10252 = vmatprep.subr.mxu0 0.0
        %10253 = vmatpush2.msra.mxu0 0.0
        %10254 = vmatprep.subr.mxu0 0.0
        %10255 = vmatpush2.msra.mxu0 0.0
        %10256 = vmatprep.subr.mxu0 0.0
        %10257 = vmatpush2.msra.mxu0 0.0
        %10258 = vmatprep.subr.mxu0 0.0
        %10259 = vmatpush2.msra.mxu0 0.0
        %10260 = vmatprep.subr.mxu0 0.0
        %10261 = vmatpush2.msra.mxu0 0.0
        %10262 = vmatprep.subr.mxu0 0.0
        %10263 = vmatpush2.msra.mxu0 0.0
        %10264 = vmatprep.subr.mxu0 0.0
        %10265 = vmatpush2.msra.mxu0 0.0
        %10266 = vmatprep.subr.mxu0 0.0
        %10267 = vmatpush2.msra.mxu0 0.0
        %10268 = vmatprep.subr.mxu0 0.0
        %10269 = vmatpush2.msra.mxu0 0.0
        %10270 = vmatprep.subr.mxu0 0.0
        %10271 = vmatpush2.msra.mxu0 0.0
        %10272 = vmatprep.subr.mxu0 0.0
        %10273 = vmatpush2.msra.mxu0 0.0
        %10274 = vmatprep.subr.mxu0 0.0
        %10275 = vmatpush2.msra.mxu0 0.0
        %10276 = vmatprep.subr.mxu0 0.0
        %10277 = vmatpush2.msra.mxu0 0.0
        %10278 = vmatprep.subr.mxu0 0.0
        %10279 = vmatpush2.msra.mxu0 0.0
        %10280 = vmatprep.mubr.f32.mxu0 0.0
        %10281 = vmatmul.mubr.f32.gmra.mxu0 %v10143
        %v10282 = vpop.f32.mrf.mxu0
        %v10283 = vadd.f32 0.0, %v10282
        %v10284 = vpop.f32.mrf.mxu0
        %v10285 = vadd.f32 0.0, %v10284
        %10286 = vdwg.mxu0
        %v10287 = vadd.f32 %v10073, %v10212
        %v10288 = vadd.f32 %v10074, %v10214
        %v10289 = vadd.f32 %v10075, %v10283
        %v10290 = vadd.f32 %v10076, %v10285
        %10291 = vrot.lane.b32.xlu0 %v8612, 111
        %v10292 = vpop.permute.xlu0 %10291
        %10293 = vrot.lane.b32.xlu0 %v8616, 111
        %v10294 = vpop.permute.xlu0 %10293
        %10295 = vrot.lane.b32.xlu0 %v8620, 111
        %v10296 = vpop.permute.xlu0 %10295
        %10297 = vrot.lane.b32.xlu0 %v8624, 111
        %v10298 = vpop.permute.xlu0 %10297
        %10299 = vrot.lane.b32.xlu0 %v8613, 111
        %v10300 = vpop.permute.xlu0 %10299
        %10301 = vrot.lane.b32.xlu0 %v8617, 111
        %v10302 = vpop.permute.xlu0 %10301
        %10303 = vrot.lane.b32.xlu0 %v8621, 111
        %v10304 = vpop.permute.xlu0 %10303
        %10305 = vrot.lane.b32.xlu0 %v8625, 111
        %v10306 = vpop.permute.xlu0 %10305
        %10307 = vrot.lane.b32.xlu0 %v8614, 111
        %v10308 = vpop.permute.xlu0 %10307
        %10309 = vrot.lane.b32.xlu0 %v8618, 111
        %v10310 = vpop.permute.xlu0 %10309
        %10311 = vrot.lane.b32.xlu0 %v8622, 111
        %v10312 = vpop.permute.xlu0 %10311
        %10313 = vrot.lane.b32.xlu0 %v8626, 111
        %v10314 = vpop.permute.xlu0 %10313
        %10315 = vrot.lane.b32.xlu0 %v8615, 111
        %v10316 = vpop.permute.xlu0 %10315
        %10317 = vrot.lane.b32.xlu0 %v8619, 111
        %v10318 = vpop.permute.xlu0 %10317
        %10319 = vrot.lane.b32.xlu0 %v8623, 111
        %v10320 = vpop.permute.xlu0 %10319
        %10321 = vrot.lane.b32.xlu0 %v8627, 111
        %v10322 = vpop.permute.xlu0 %10321
        %v10323 = vsel %vm925, %v10308, %v10316
        %v10324 = vsel %vm925, %v10310, %v10318
        %v10325 = vsel %vm925, %v10312, %v10320
        %v10326 = vsel %vm925, %v10314, %v10322
        %v10327 = vsel %vm925, %v10300, %v10308
        %v10328 = vsel %vm925, %v10302, %v10310
        %v10329 = vsel %vm925, %v10304, %v10312
        %v10330 = vsel %vm925, %v10306, %v10314
        %v10331 = vsel %vm925, %v10292, %v10300
        %v10332 = vsel %vm925, %v10294, %v10302
        %v10333 = vsel %vm925, %v10296, %v10304
        %v10334 = vsel %vm925, %v10298, %v10306
        %v10335 = vsel %vm925, %v10316, %v10292
        %v10336 = vsel %vm925, %v10318, %v10294
        %v10337 = vsel %vm925, %v10320, %v10296
        %v10338 = vsel %vm925, %v10322, %v10298
        %v10339 = vmul.f32 %v10331, %v934
        %v10340 = vmul.f32 %v10327, %v938
        %v10341 = vmul.f32 %v10323, %v942
        %v10342 = vmul.f32 %v10335, %v946
        %v10343 = vmul.f32 %v10332, %v934
        %v10344 = vmul.f32 %v10328, %v938
        %v10345 = vmul.f32 %v10324, %v942
        %v10346 = vmul.f32 %v10336, %v946
        %v10347 = vmul.f32 %v10333, %v934
        %v10348 = vmul.f32 %v10329, %v938
        %v10349 = vmul.f32 %v10325, %v942
        %v10350 = vmul.f32 %v10337, %v946
        %v10351 = vmul.f32 %v10334, %v934
        %v10352 = vmul.f32 %v10330, %v938
        %v10353 = vmul.f32 %v10326, %v942
        %v10354 = vmul.f32 %v10338, %v946
        %v10355 = vlaneseq
        %v10356 = vshrl.u32 %v10355, 7
        %v10357 = vsub.s32 2, %v10356
        %v10358 = vrot.slane %v8644, %v10357
        %v10359 = vsel %vm1473, %v10358, 0
        %10361 = vmatprep.subr.mxu0 0.0
        %10362 = vmatpush1.msra.mxu0 0.0
        %10363 = vmatprep.subr.mxu0 0.0
        %10364 = vmatpush1.msra.mxu0 0.0
        %10365 = vmatprep.subr.mxu0 0.0
        %10366 = vmatpush1.msra.mxu0 0.0
        %10367 = vmatprep.subr.mxu0 0.0
        %10368 = vmatpush1.msra.mxu0 0.0
        %10369 = vmatprep.subr.mxu0 0.0
        %10370 = vmatpush1.msra.mxu0 0.0
        %10371 = vmatprep.subr.mxu0 0.0
        %10372 = vmatpush1.msra.mxu0 0.0
        %10373 = vmatprep.subr.mxu0 0.0
        %10374 = vmatpush1.msra.mxu0 0.0
        %10375 = vmatprep.subr.mxu0 0.0
        %10376 = vmatpush1.msra.mxu0 0.0
        %10377 = vmatprep.subr.mxu0 0.0
        %10378 = vmatpush1.msra.mxu0 0.0
        %10379 = vmatprep.subr.mxu0 0.0
        %10380 = vmatpush1.msra.mxu0 0.0
        %10381 = vmatprep.subr.mxu0 0.0
        %10382 = vmatpush1.msra.mxu0 0.0
        %10383 = vmatprep.subr.mxu0 0.0
        %10384 = vmatpush1.msra.mxu0 0.0
        %10385 = vmatprep.subr.mxu0 %v10352
        %10386 = vmatpush1.msra.mxu0 %v10351
        %10387 = vmatprep.subr.mxu0 %v10348
        %10388 = vmatpush1.msra.mxu0 %v10347
        %10389 = vmatprep.subr.mxu0 %v10344
        %10390 = vmatpush1.msra.mxu0 %v10343
        %10391 = vmatprep.subr.mxu0 %v10340
        %10392 = vmatpush1.msra.mxu0 %v10339
        %10393 = vmatprep.subr.mxu0 0.0
        %10394 = vmatpush2.msra.mxu0 0.0
        %10395 = vmatprep.subr.mxu0 0.0
        %10396 = vmatpush2.msra.mxu0 0.0
        %10397 = vmatprep.subr.mxu0 0.0
        %10398 = vmatpush2.msra.mxu0 0.0
        %10399 = vmatprep.subr.mxu0 0.0
        %10400 = vmatpush2.msra.mxu0 0.0
        %10401 = vmatprep.subr.mxu0 0.0
        %10402 = vmatpush2.msra.mxu0 0.0
        %10403 = vmatprep.subr.mxu0 0.0
        %10404 = vmatpush2.msra.mxu0 0.0
        %10405 = vmatprep.subr.mxu0 0.0
        %10406 = vmatpush2.msra.mxu0 0.0
        %10407 = vmatprep.subr.mxu0 0.0
        %10408 = vmatpush2.msra.mxu0 0.0
        %10409 = vmatprep.subr.mxu0 0.0
        %10410 = vmatpush2.msra.mxu0 0.0
        %10411 = vmatprep.subr.mxu0 0.0
        %10412 = vmatpush2.msra.mxu0 0.0
        %10413 = vmatprep.subr.mxu0 0.0
        %10414 = vmatpush2.msra.mxu0 0.0
        %10415 = vmatprep.subr.mxu0 0.0
        %10416 = vmatpush2.msra.mxu0 0.0
        %10417 = vmatprep.subr.mxu0 0.0
        %10418 = vmatpush2.msra.mxu0 0.0
        %10419 = vmatprep.subr.mxu0 0.0
        %10420 = vmatpush2.msra.mxu0 0.0
        %10421 = vmatprep.subr.mxu0 0.0
        %10422 = vmatpush2.msra.mxu0 0.0
        %10423 = vmatprep.subr.mxu0 0.0
        %10424 = vmatpush2.msra.mxu0 0.0
        %10425 = vmatprep.mubr.f32.mxu0 0.0
        %10426 = vmatmul.mubr.f32.gmra.mxu0 %v10359
        %v10427 = vpop.f32.mrf.mxu0
        %v10428 = vadd.f32 0.0, %v10427
        %v10429 = vpop.f32.mrf.mxu0
        %v10430 = vadd.f32 0.0, %v10429
        %10431 = vdwg.mxu0
        %10432 = vmatprep.subr.mxu0 0.0
        %10433 = vmatpush1.msra.mxu0 0.0
        %10434 = vmatprep.subr.mxu0 0.0
        %10435 = vmatpush1.msra.mxu0 0.0
        %10436 = vmatprep.subr.mxu0 0.0
        %10437 = vmatpush1.msra.mxu0 0.0
        %10438 = vmatprep.subr.mxu0 0.0
        %10439 = vmatpush1.msra.mxu0 0.0
        %10440 = vmatprep.subr.mxu0 0.0
        %10441 = vmatpush1.msra.mxu0 0.0
        %10442 = vmatprep.subr.mxu0 0.0
        %10443 = vmatpush1.msra.mxu0 0.0
        %10444 = vmatprep.subr.mxu0 0.0
        %10445 = vmatpush1.msra.mxu0 0.0
        %10446 = vmatprep.subr.mxu0 0.0
        %10447 = vmatpush1.msra.mxu0 0.0
        %10448 = vmatprep.subr.mxu0 0.0
        %10449 = vmatpush1.msra.mxu0 0.0
        %10450 = vmatprep.subr.mxu0 0.0
        %10451 = vmatpush1.msra.mxu0 0.0
        %10452 = vmatprep.subr.mxu0 0.0
        %10453 = vmatpush1.msra.mxu0 0.0
        %10454 = vmatprep.subr.mxu0 0.0
        %10455 = vmatpush1.msra.mxu0 0.0
        %10456 = vmatprep.subr.mxu0 %v10354
        %10457 = vmatpush1.msra.mxu0 %v10353
        %10458 = vmatprep.subr.mxu0 %v10350
        %10459 = vmatpush1.msra.mxu0 %v10349
        %10460 = vmatprep.subr.mxu0 %v10346
        %10461 = vmatpush1.msra.mxu0 %v10345
        %10462 = vmatprep.subr.mxu0 %v10342
        %10463 = vmatpush1.msra.mxu0 %v10341
        %10464 = vmatprep.subr.mxu0 0.0
        %10465 = vmatpush2.msra.mxu0 0.0
        %10466 = vmatprep.subr.mxu0 0.0
        %10467 = vmatpush2.msra.mxu0 0.0
        %10468 = vmatprep.subr.mxu0 0.0
        %10469 = vmatpush2.msra.mxu0 0.0
        %10470 = vmatprep.subr.mxu0 0.0
        %10471 = vmatpush2.msra.mxu0 0.0
        %10472 = vmatprep.subr.mxu0 0.0
        %10473 = vmatpush2.msra.mxu0 0.0
        %10474 = vmatprep.subr.mxu0 0.0
        %10475 = vmatpush2.msra.mxu0 0.0
        %10476 = vmatprep.subr.mxu0 0.0
        %10477 = vmatpush2.msra.mxu0 0.0
        %10478 = vmatprep.subr.mxu0 0.0
        %10479 = vmatpush2.msra.mxu0 0.0
        %10480 = vmatprep.subr.mxu0 0.0
        %10481 = vmatpush2.msra.mxu0 0.0
        %10482 = vmatprep.subr.mxu0 0.0
        %10483 = vmatpush2.msra.mxu0 0.0
        %10484 = vmatprep.subr.mxu0 0.0
        %10485 = vmatpush2.msra.mxu0 0.0
        %10486 = vmatprep.subr.mxu0 0.0
        %10487 = vmatpush2.msra.mxu0 0.0
        %10488 = vmatprep.subr.mxu0 0.0
        %10489 = vmatpush2.msra.mxu0 0.0
        %10490 = vmatprep.subr.mxu0 0.0
        %10491 = vmatpush2.msra.mxu0 0.0
        %10492 = vmatprep.subr.mxu0 0.0
        %10493 = vmatpush2.msra.mxu0 0.0
        %10494 = vmatprep.subr.mxu0 0.0
        %10495 = vmatpush2.msra.mxu0 0.0
        %10496 = vmatprep.mubr.f32.mxu0 0.0
        %10497 = vmatmul.mubr.f32.gmra.mxu0 %v10359
        %v10498 = vpop.f32.mrf.mxu0
        %v10499 = vadd.f32 0.0, %v10498
        %v10500 = vpop.f32.mrf.mxu0
        %v10501 = vadd.f32 0.0, %v10500
        %10502 = vdwg.mxu0
        %v10503 = vadd.f32 %v10287, %v10428
        %v10504 = vadd.f32 %v10288, %v10430
        %v10505 = vadd.f32 %v10289, %v10499
        %v10506 = vadd.f32 %v10290, %v10501
        %10508 = vset.pattern.permute.xlu0 0
        %10509 = vperm.xlu0 %10508, %v8645
        %v10510 = vpop.permute.xlu0 %10509
        %v10512 = vlaneseq
        %v10513 = vshrl.u32 %v10512, 7
        %v10514 = vsub.s32 0, %v10513
        %v10515 = vrot.slane %v10510, %v10514
        %v10516 = vadd.f32 %v10503, %v10515
        %v10517 = vadd.f32 %v10504, %v10515
        %v10518 = vadd.f32 %v10505, %v10515
        %v10519 = vadd.f32 %v10506, %v10515
        %v10524 = vcombine.low %v10516, %v10517
        %v10525 = vcombine.low %v10518, %v10519
        %v10527 = vunpack.c.l.s4 1966171168
        %v10528 = vunpack.c.0.s8 %v10527
        %v10529 = vlaneseq
        %v10530 = vshrl.u32 %v10529, 7
        %v10531 = vsub.s32 %v10528, %v10530
        %v10532 = vrot.slane %v10524, %v10531
        %v10534 = vunpack.c.l.s4 1966171168
        %v10535 = vunpack.c.0.s8 %v10534
        %v10536 = vlaneseq
        %v10537 = vshrl.u32 %v10536, 7
        %v10538 = vsub.s32 %v10535, %v10537
        %v10539 = vrot.slane %v10525, %v10538
        %v10540 = vcombine.low %v10532, %v10539
        %v10542 = vunpack.c.l.s4 1966171168
        %v10543 = vunpack.c.0.s8 %v10542
        %v10544 = vlaneseq
        %v10545 = vshrl.u32 %v10544, 7
        %v10546 = vsub.s32 %v10543, %v10545
        %v10547 = vrot.slane %v10540, %v10546
        %v10549 = vlaneseq
        %vm10550 = vcmp.ge.s32.totalorder %v10549, 0
        %vm10551 = vcmp.lt.s32.totalorder %v10549, 512
        %vm10552 = vmand %vm10550, %vm10551
        %10553 = vst.msk [vmem:[%s603] sm:$0xf] %vm10552, %v10547
        %s10554 = sand.u32 %s308, 1
        %s10555 = scalar_lea.sflag [#allocation5], %s10554
        %s10556 = sand.u32 %s308, 1
        %s10557 = smul.addr %s10556, 128
        %s10558 = scalar_lea.vmem [#allocation9], %s10557
        %s10559 = sand.u32 %s43, 1
        %s10560 = scalar_lea.sflag [#allocation11], %s10559
        %s10561 = sand.u32 %s334, 1
        %s10562 = smul.addr %s10561, 128
        %s10563 = scalar_lea.vmem [#allocation10], %s10562
        %s10564 = sand.u32 %s43, 1
        %s10565 = scalar_lea.sflag [#allocation11], %s10564
        %s10566 = sand.u32 %s360, 1
        %s10567 = smul.addr %s10566, 128
        %s10568 = scalar_lea.vmem [#allocation12], %s10567
        %s10569 = sand.u32 %s43, 1
        %s10570 = scalar_lea.sflag [#allocation14], %s10569
        %s10571 = sand.u32 %s386, 1
        %s10572 = smul.addr %s10571, 128
        %s10573 = scalar_lea.vmem [#allocation13], %s10572
        %s10574 = sand.u32 %s43, 1
        %s10575 = scalar_lea.sflag [#allocation14], %s10574
        %s10576 = sand.u32 %s412, 1
        %s10577 = smul.addr %s10576, 4
        %s10578 = scalar_lea.vmem [#allocation15], %s10577
        // Predicated region
        $region81: #{tpu_custom_call.1} parent=67 // pred_check
          %p10579 = pneg %p318
        $region82: #{tpu_custom_call.1} parent=67 // pred_check_branch
          %10581 = sbr.rel (%p10579) target = $region84
        $region83: #{tpu_custom_call.1} parent=67 // pred_region
          %s10583 = ssub.s32 2048, 2048
          %10584 = vsyncadd %s10555, %s10583
          %s10585 = smul.addr %s43, 16
          %s10586 = smul.addr %s10585, 128
          %s10587 = scalar_lea.hbm %s12, %s10586
          %s10588 = sshll.u32 %s10558, 4
          %s10589 = int_to_ptr.vmem [resolvable:$true] %s10588
          %10594 = dma.vmem_to_hbm [thread:$0]  %s10589, 2048, %s10587, %s10555, 512, 512, 32
        $region84: #{tpu_custom_call.1} parent=67 // pred_fallthru
          _
        // Predicated region
        $region85: #{tpu_custom_call.1} parent=67 // pred_check
          %p10595 = pneg %p344
        $region86: #{tpu_custom_call.1} parent=67 // pred_check_branch
          %10597 = sbr.rel (%p10595) target = $region88
        $region87: #{tpu_custom_call.1} parent=67 // pred_region
          %s10599 = ssub.s32 2048, 2048
          %10600 = vsyncadd %s10560, %s10599
          %s10601 = smul.addr %s43, 16
          %s10602 = smul.addr %s10601, 128
          %s10603 = scalar_lea.hbm %s13, %s10602
          %s10604 = sshll.u32 %s10563, 4
          %s10605 = int_to_ptr.vmem [resolvable:$true] %s10604
          %10610 = dma.vmem_to_hbm [thread:$0]  %s10605, 2048, %s10603, %s10560, 512, 512, 32
        $region88: #{tpu_custom_call.1} parent=67 // pred_fallthru
          _
        // Predicated region
        $region89: #{tpu_custom_call.1} parent=67 // pred_check
          %p10611 = pneg %p370
        $region90: #{tpu_custom_call.1} parent=67 // pred_check_branch
          %10613 = sbr.rel (%p10611) target = $region92
        $region91: #{tpu_custom_call.1} parent=67 // pred_region
          %s10615 = ssub.s32 2048, 2048
          %10616 = vsyncadd %s10565, %s10615
          %s10617 = smul.addr %s43, 16
          %s10618 = smul.addr %s10617, 128
          %s10619 = scalar_lea.hbm %s14, %s10618
          %s10620 = sshll.u32 %s10568, 4
          %s10621 = int_to_ptr.vmem [resolvable:$true] %s10620
          %10626 = dma.vmem_to_hbm [thread:$0]  %s10621, 2048, %s10619, %s10565, 512, 512, 32
        $region92: #{tpu_custom_call.1} parent=67 // pred_fallthru
          _
        // Predicated region
        $region93: #{tpu_custom_call.1} parent=67 // pred_check
          %p10627 = pneg %p396
        $region94: #{tpu_custom_call.1} parent=67 // pred_check_branch
          %10629 = sbr.rel (%p10627) target = $region96
        $region95: #{tpu_custom_call.1} parent=67 // pred_region
          %s10631 = ssub.s32 2048, 2048
          %10632 = vsyncadd %s10570, %s10631
          %s10633 = smul.addr %s43, 16
          %s10634 = smul.addr %s10633, 128
          %s10635 = scalar_lea.hbm %s15, %s10634
          %s10636 = sshll.u32 %s10573, 4
          %s10637 = int_to_ptr.vmem [resolvable:$true] %s10636
          %10642 = dma.vmem_to_hbm [thread:$0]  %s10637, 2048, %s10635, %s10570, 512, 512, 32
        $region96: #{tpu_custom_call.1} parent=67 // pred_fallthru
          _
        // Predicated region
        $region97: #{tpu_custom_call.1} parent=67 // pred_check
          %p10643 = pneg %p422
        $region98: #{tpu_custom_call.1} parent=67 // pred_check_branch
          %10645 = sbr.rel (%p10643) target = $region100
        $region99: #{tpu_custom_call.1} parent=67 // pred_region
          %s10647 = ssub.s32 64, 64
          %10648 = vsyncadd %s10575, %s10647
          %s10649 = smul.addr %s43, 4
          %s10650 = smul.addr %s10649, 16
          %s10651 = scalar_lea.hbm %s16, %s10650
          %s10653 = sshll.u32 %s10578, 4
          %s10654 = int_to_ptr.vmem [resolvable:$true] %s10653
          %10656 = dma.vmem_to_hbm [thread:$0]  %s10654, 64, %s10651, %s10575
        $region100: #{tpu_custom_call.1} parent=67 // pred_fallthru
          _
      $region68: #{tpu_custom_call.1} parent=5 // pred_fallthru
        _
      %p10657 = scmp.le.s32.totalorder 2, %s38
      // Predicated region
      $region101: #{tpu_custom_call.1} parent=5 // pred_check
        %p10658 = pneg %p10657
      $region102: #{tpu_custom_call.1} parent=5 // pred_check_branch
        %10660 = sbr.rel (%p10658) target = $region104
      $region103: #{tpu_custom_call.1} parent=5 // pred_region
        %s10661 = ssub.s32 %s38, 2
        // Predicated region
        $region105: #{tpu_custom_call.1} parent=103 // pred_check
          %p10662 = pneg %p324
        $region106: #{tpu_custom_call.1} parent=103 // pred_check_branch
          %10664 = sbr.rel (%p10662) target = $region108
        $region107: #{tpu_custom_call.1} parent=103 // pred_region
          %s10665 = sand.u32 %s309, 1
          %s10666 = scalar_lea.sflag [#allocation5], %s10665
          %s10667 = sand.u32 %s309, 1
          %s10668 = smul.addr %s10667, 128
          %s10669 = scalar_lea.vmem [#allocation9], %s10668
          %10670 = dma.done %s10666, 2048
        $region108: #{tpu_custom_call.1} parent=103 // pred_fallthru
          _
        // Predicated region
        $region109: #{tpu_custom_call.1} parent=103 // pred_check
          %p10671 = pneg %p350
        $region110: #{tpu_custom_call.1} parent=103 // pred_check_branch
          %10673 = sbr.rel (%p10671) target = $region112
        $region111: #{tpu_custom_call.1} parent=103 // pred_region
          %s10674 = sand.u32 %s44, 1
          %s10675 = scalar_lea.sflag [#allocation11], %s10674
          %s10676 = sand.u32 %s335, 1
          %s10677 = smul.addr %s10676, 128
          %s10678 = scalar_lea.vmem [#allocation10], %s10677
          %10679 = dma.done %s10675, 2048
        $region112: #{tpu_custom_call.1} parent=103 // pred_fallthru
          _
        // Predicated region
        $region113: #{tpu_custom_call.1} parent=103 // pred_check
          %p10680 = pneg %p376
        $region114: #{tpu_custom_call.1} parent=103 // pred_check_branch
          %10682 = sbr.rel (%p10680) target = $region116
        $region115: #{tpu_custom_call.1} parent=103 // pred_region
          %s10683 = sand.u32 %s44, 1
          %s10684 = scalar_lea.sflag [#allocation11], %s10683
          %s10685 = sand.u32 %s361, 1
          %s10686 = smul.addr %s10685, 128
          %s10687 = scalar_lea.vmem [#allocation12], %s10686
          %10688 = dma.done %s10684, 2048
        $region116: #{tpu_custom_call.1} parent=103 // pred_fallthru
          _
        // Predicated region
        $region117: #{tpu_custom_call.1} parent=103 // pred_check
          %p10689 = pneg %p402
        $region118: #{tpu_custom_call.1} parent=103 // pred_check_branch
          %10691 = sbr.rel (%p10689) target = $region120
        $region119: #{tpu_custom_call.1} parent=103 // pred_region
          %s10692 = sand.u32 %s44, 1
          %s10693 = scalar_lea.sflag [#allocation14], %s10692
          %s10694 = sand.u32 %s387, 1
          %s10695 = smul.addr %s10694, 128
          %s10696 = scalar_lea.vmem [#allocation13], %s10695
          %10697 = dma.done %s10693, 2048
        $region120: #{tpu_custom_call.1} parent=103 // pred_fallthru
          _
        // Predicated region
        $region121: #{tpu_custom_call.1} parent=103 // pred_check
          %p10698 = pneg %p428
        $region122: #{tpu_custom_call.1} parent=103 // pred_check_branch
          %10700 = sbr.rel (%p10698) target = $region124
        $region123: #{tpu_custom_call.1} parent=103 // pred_region
          %s10701 = sand.u32 %s44, 1
          %s10702 = scalar_lea.sflag [#allocation14], %s10701
          %s10703 = sand.u32 %s413, 1
          %s10704 = smul.addr %s10703, 4
          %s10705 = scalar_lea.vmem [#allocation15], %s10704
          %10706 = dma.done %s10702, 64
        $region124: #{tpu_custom_call.1} parent=103 // pred_fallthru
          _
      $region104: #{tpu_custom_call.1} parent=5 // pred_fallthru
        _
    $region6: #{tpu_custom_call.1} parent=1 // loop_footer
      %s42 = sadd.s32 1, %s38
    $region7: #{tpu_custom_call.1} parent=1 // loop_footer_branch
      %37 = sbr.rel target = $region3
    $region8: #{tpu_custom_call.1} parent=1 // loop_exit
      _
    %10707 = vsyncpa [#allocation4], 1
    %s10708 = scalar_lea.sflag [#allocation4], 1
    %10709 = vsyncpa %s10708, 1
    %10710 = vsyncpa [#allocation7], 1
    %10711 = vsyncpa [#allocation5], 1
    %s10712 = scalar_lea.sflag [#allocation5], 1
    %10713 = vsyncpa %s10712, 1
    %10714 = vsyncpa [#allocation11], 1
    %s10715 = scalar_lea.sflag [#allocation11], 1
    %10716 = vsyncpa %s10715, 1
    %10717 = vsyncpa [#allocation14], 1
    %s10718 = scalar_lea.sflag [#allocation14], 1
    %10719 = vsyncpa %s10718, 1

</llo_original>
